<compile_context>
chip_gen: v7x
topology: tpu7x:2x2x1
jax: 0.10.0
libtpu: 0.0.40
codegen_flags: <defaults>
</compile_context>

<pallas_src>
import functools
import math

import jax
import jax.numpy as jnp
from jax import lax
from jax.experimental import pallas as pl
from jax.experimental.pallas import tpu as pltpu


BATCH_TILE = 8      # fp32 sublane-friendly batch tile
_MAX_UNROLL = 8     # bounded unroll of the serial recurrence


# ----------------------------------------------------------------------------
# Fused bidirectional LSTM layer kernel (optionally with max-pool+Linear head)
# ----------------------------------------------------------------------------
def _bilstm_kernel(*refs, seq_len, batch_tile, hidden, pool_head):
    """One bidirectional LSTM layer over a (T, TB, Din) batch tile.

    pool_head=False : single x input, two (T, TB, H) outputs (fwd / bwd).
    pool_head=True  : split (xf, xb) inputs, fused max-pool-over-time + Linear
                      head, single (TB, C) logits output.
    """
    T, B, H = seq_len, batch_tile, hidden
    G = 4 * H  # per-direction gate width

    if pool_head:
        (ml_ref, xf_ref, xb_ref, wih_ref, b_ref, whh_ref, len_ref,
         wlin_ref, blin_ref, out_ref,
         xp_sc, h_sc, cf_sc, cb_sc, max_sc) = refs
    else:
        (ml_ref, x_ref, wih_ref, b_ref, whh_ref, len_ref,
         outf_ref, outb_ref,
         xp_sc, h_sc, cf_sc, cb_sc) = refs

    # --- Hoisted fused input projection: one big bf16 MXU matmul for every
    # --- timestep and both directions, fp32 accumulate, bias folded in.
    wih = wih_ref[...]                                         # (Din, 8H) bf16
    if pool_head:
        # Previous layer's fwd / bwd halves arrive as two separate slabs; the
        # contraction splits accordingly (no lane concat needed).
        xf2 = xf_ref[...].reshape(T * B, H).astype(jnp.bfloat16)
        xb2 = xb_ref[...].reshape(T * B, H).astype(jnp.bfloat16)
        xp = (jnp.dot(xf2, wih[0:H, :], preferred_element_type=jnp.float32)
              + jnp.dot(xb2, wih[H:2 * H, :],
                        preferred_element_type=jnp.float32))
    else:
        din = x_ref.shape[-1]
        x2 = x_ref[...].reshape(T * B, din).astype(jnp.bfloat16)
        xp = jnp.dot(x2, wih, preferred_element_type=jnp.float32)
    xp = xp + b_ref[...]                                       # fp32 bias add
    xp_sc[...] = xp.reshape(T, B, 2 * G).astype(xp_sc.dtype)   # bf16 scratch
    # TODO(synk): at very large T the (T,TB,8H) xp scratch could be computed in
    # double-buffered time chunks instead of one slab (v7x VMEM headroom).

    # --- State init ---
    h_sc[...] = jnp.zeros_like(h_sc)        # (TB, 2H) = [h_fwd | h_bwd]
    cf_sc[...] = jnp.zeros_like(cf_sc)
    cb_sc[...] = jnp.zeros_like(cb_sc)
    if pool_head:
        max_sc[...] = jnp.full(max_sc.shape, -jnp.inf, max_sc.dtype)
    else:
        outf_ref[...] = jnp.zeros_like(outf_ref)   # skipped steps emit zeros
        outb_ref[...] = jnp.zeros_like(outb_ref)

    lens = len_ref[...]          # (TB, 1) int32 lengths (vector masks)
    maxlen = ml_ref[0]           # SMEM scalar: pad_packed truncation length
    whh = whh_ref[...]           # (2H, 8H) bf16 block-diag [fwd ; bwd]

    def cell_gates(g, c_prev):
        # PyTorch gate order i, f, g, o — fp32 elementwise math.
        i = jax.nn.sigmoid(g[:, 0 * H:1 * H])
        f = jax.nn.sigmoid(g[:, 1 * H:2 * H])
        gg = jnp.tanh(g[:, 2 * H:3 * H])
        o = jax.nn.sigmoid(g[:, 3 * H:4 * H])
        c_new = f * c_prev + i * gg
        h_new = o * jnp.tanh(c_new)
        return h_new, c_new

    def step(s, carry):
        t_f = s                  # forward-direction time index
        t_b = (T - 1) - s        # backward-direction time index

        # Skip steps that are dead for BOTH directions (only non-empty when
        # the caller over-padded beyond max(lengths)).
        @pl.when(jnp.logical_or(t_f < maxlen, t_b < maxlen))
        def _():
            # Merged fwd+bwd recurrent matmul: one bf16 MXU op per step.
            h_prev = h_sc[...]
            hh = jnp.dot(h_prev.astype(jnp.bfloat16), whh,
                         preferred_element_type=jnp.float32)   # (TB, 8H) f32
            g_f = xp_sc[t_f, :, 0:G] + hh[:, 0:G]
            g_b = xp_sc[t_b, :, G:2 * G] + hh[:, G:2 * G]

            hf, cf = cell_gates(g_f, cf_sc[...])
            hb, cb = cell_gates(g_b, cb_sc[...])

            mf = t_f < lens      # (TB, 1) packed-sequence validity masks
            mb = t_b < lens
            hf = jnp.where(mf, hf, h_prev[:, 0:H])
            hb = jnp.where(mb, hb, h_prev[:, H:2 * H])
            cf_sc[...] = jnp.where(mf, cf, cf_sc[...])
            cb_sc[...] = jnp.where(mb, cb, cb_sc[...])
            h_sc[...] = jnp.concatenate([hf, hb], axis=-1)

            if pool_head:
                # Running max over the (truncated) padded output:
                #   valid -> h ;  len <= t < maxlen -> 0 (torch pad value) ;
                #   t >= maxlen -> -inf (position removed by truncation).
                padf = jnp.where(t_f < maxlen, 0.0, -jnp.inf)
                padb = jnp.where(t_b < maxlen, 0.0, -jnp.inf)
                contrib = jnp.concatenate(
                    [jnp.where(mf, hf, padf), jnp.where(mb, hb, padb)],
                    axis=-1)
                max_sc[...] = jnp.maximum(max_sc[...], contrib)
            else:
                # pad_packed_sequence zero-pads invalid positions.
                outf_ref[t_f] = jnp.where(mf, hf, 0.0).astype(outf_ref.dtype)
                outb_ref[t_b] = jnp.where(mb, hb, 0.0).astype(outb_ref.dtype)
        return carry

    lax.fori_loop(0, T, step, 0, unroll=min(T, _MAX_UNROLL))

    if pool_head:
        pooled = max_sc[...]                                    # (TB, 2H) f32
        out_ref[...] = (jnp.dot(pooled, wlin_ref[...],
                                preferred_element_type=jnp.float32)
                        + blin_ref[...]).astype(out_ref.dtype)


# ----------------------------------------------------------------------------
# Wrappers
# ----------------------------------------------------------------------------
def _nbytes(shape, dtype):
    return math.prod(shape) * jnp.dtype(dtype).itemsize


def _compiler_params(block_bytes, scratch_bytes):
    # Blocks are double-buffered by the pipeline -> 2x; generous headroom.
    est = 2 * block_bytes + scratch_bytes
    limit = int(min(max(2 * est + (8 << 20), 16 << 20), 64 << 20))
    return pltpu.CompilerParams(dimension_semantics=("parallel",),
                                vmem_limit_bytes=limit)


def bilstm_layer(x_tbd, lengths_b1, maxlen, w_ih, b, w_hh_blk,
                 *, batch_tile=BATCH_TILE):
    """One bidirectional LSTM layer: (T, Bp, Din) -> (fwd, bwd) (T, Bp, H)."""
    T, Bp, Din = x_tbd.shape
    H = w_hh_blk.shape[0] // 2
    TB = min(batch_tile, Bp)
    assert Bp % TB == 0
    grid = (Bp // TB,)

    kernel = functools.partial(_bilstm_kernel, seq_len=T, batch_tile=TB,
                               hidden=H, pool_head=False)
    full = lambda i, ml: (0, 0)
    in_specs = [
        pl.BlockSpec((T, TB, Din), lambda i, ml: (0, i, 0)),
        pl.BlockSpec(w_ih.shape, full),
        pl.BlockSpec(b.shape, full),
        pl.BlockSpec(w_hh_blk.shape, full),
        pl.BlockSpec((TB, 1), lambda i, ml: (i, 0)),
    ]
    out_specs = [pl.BlockSpec((T, TB, H), lambda i, ml: (0, i, 0)),
                 pl.BlockSpec((T, TB, H), lambda i, ml: (0, i, 0))]
    out_shape = (jax.ShapeDtypeStruct((T, Bp, H), jnp.bfloat16),
                 jax.ShapeDtypeStruct((T, Bp, H), jnp.bfloat16))
    scratch = [pltpu.VMEM((T, TB, 8 * H), jnp.bfloat16),   # X@W_ih (+b)
               pltpu.VMEM((TB, 2 * H), jnp.float32),       # h state [fwd|bwd]
               pltpu.VMEM((TB, H), jnp.float32),           # c fwd
               pltpu.VMEM((TB, H), jnp.float32)]           # c bwd

    block_bytes = (_nbytes((T, TB, Din), x_tbd.dtype)
                   + _nbytes(w_ih.shape, w_ih.dtype)
                   + _nbytes(b.shape, b.dtype)
                   + _nbytes(w_hh_blk.shape, w_hh_blk.dtype)
                   + _nbytes((TB, 1), jnp.int32)
                   + 2 * _nbytes((T, TB, H), jnp.bfloat16))
    scratch_bytes = (_nbytes((T, TB, 8 * H), jnp.bfloat16)
                     + _nbytes((TB, 2 * H), jnp.float32)
                     + 2 * _nbytes((TB, H), jnp.float32))

    return pl.pallas_call(
        kernel,
        out_shape=out_shape,
        grid_spec=pltpu.PrefetchScalarGridSpec(
            num_scalar_prefetch=1, grid=grid,
            in_specs=in_specs, out_specs=out_specs, scratch_shapes=scratch),
        compiler_params=_compiler_params(block_bytes, scratch_bytes),
    )(maxlen, x_tbd, w_ih, b, w_hh_blk, lengths_b1)


def bilstm_pool_linear(xf, xb, lengths_b1, maxlen, w_ih, b, w_hh_blk,
                       w_lin, b_lin, *, batch_tile=BATCH_TILE):
    """Last bidirectional LSTM layer fused with max-pool-over-time + Linear."""
    T, Bp, H = xf.shape
    C = w_lin.shape[1]
    TB = min(batch_tile, Bp)
    assert Bp % TB == 0
    grid = (Bp // TB,)

    kernel = functools.partial(_bilstm_kernel, seq_len=T, batch_tile=TB,
                               hidden=H, pool_head=True)
    full = lambda i, ml: (0, 0)
    in_specs = [
        pl.BlockSpec((T, TB, H), lambda i, ml: (0, i, 0)),   # xf
        pl.BlockSpec((T, TB, H), lambda i, ml: (0, i, 0)),   # xb
        pl.BlockSpec(w_ih.shape, full),
        pl.BlockSpec(b.shape, full),
        pl.BlockSpec(w_hh_blk.shape, full),
        pl.BlockSpec((TB, 1), lambda i, ml: (i, 0)),
        pl.BlockSpec(w_lin.shape, full),
        pl.BlockSpec(b_lin.shape, full),
    ]
    out_specs = pl.BlockSpec((TB, C), lambda i, ml: (i, 0))
    out_shape = jax.ShapeDtypeStruct((Bp, C), jnp.float32)
    scratch = [pltpu.VMEM((T, TB, 8 * H), jnp.bfloat16),    # X@W_ih (+b)
               pltpu.VMEM((TB, 2 * H), jnp.float32),        # h state
               pltpu.VMEM((TB, H), jnp.float32),            # c fwd
               pltpu.VMEM((TB, H), jnp.float32),            # c bwd
               pltpu.VMEM((TB, 2 * H), jnp.float32)]        # running max

    block_bytes = (2 * _nbytes((T, TB, H), xf.dtype)
                   + _nbytes(w_ih.shape, w_ih.dtype)
                   + _nbytes(b.shape, b.dtype)
                   + _nbytes(w_hh_blk.shape, w_hh_blk.dtype)
                   + _nbytes((TB, 1), jnp.int32)
                   + _nbytes(w_lin.shape, w_lin.dtype)
                   + _nbytes(b_lin.shape, b_lin.dtype)
                   + _nbytes((TB, C), jnp.float32))
    scratch_bytes = (_nbytes((T, TB, 8 * H), jnp.bfloat16)
                     + 2 * _nbytes((TB, 2 * H), jnp.float32)
                     + 2 * _nbytes((TB, H), jnp.float32))

    return pl.pallas_call(
        kernel,
        out_shape=out_shape,
        grid_spec=pltpu.PrefetchScalarGridSpec(
            num_scalar_prefetch=1, grid=grid,
            in_specs=in_specs, out_specs=out_specs, scratch_shapes=scratch),
        compiler_params=_compiler_params(block_bytes, scratch_bytes),
    )(maxlen, xf, xb, w_ih, b, w_hh_blk, lengths_b1, w_lin, b_lin)


# ----------------------------------------------------------------------------
# Parameter init (PyTorch-style; weights pre-transposed for x @ W, both
# directions fused: W_ih -> (Din, 8H) bf16, W_hh -> block-diag (2H, 8H) bf16)
# ----------------------------------------------------------------------------
def init_params(key, vocab_size, embedding_dim, hidden_dim, num_classes):
    keys = jax.random.split(key, 24)
    ki = iter(keys)
    H = hidden_dim
    k = 1.0 / jnp.sqrt(jnp.float32(H))

    def uni(shape):
        return jax.random.uniform(next(ki), shape, jnp.float32, -k, k)

    params = {"embedding": jax.random.normal(
        next(ki), (vocab_size, embedding_dim), jnp.float32)}

    for layer in (0, 1):
        d_in = embedding_dim if layer == 0 else 2 * H
        wih_cols, bias_cols = [], []
        whh_blk = jnp.zeros((2 * H, 8 * H), jnp.float32)
        for d in range(2):                       # 0 = forward, 1 = backward
            wih_cols.append(uni((d_in, 4 * H)))
            whh = uni((H, 4 * H))
            whh_blk = whh_blk.at[d * H:(d + 1) * H,
                                 d * 4 * H:(d + 1) * 4 * H].set(whh)
            bias_cols.append(uni((1, 4 * H)) + uni((1, 4 * H)))   # b_ih + b_hh
        params[f"l{layer}"] = {
            "w_ih": jnp.concatenate(wih_cols, axis=1).astype(jnp.bfloat16),
            "b": jnp.concatenate(bias_cols, axis=1),              # fp32
            "w_hh": whh_blk.astype(jnp.bfloat16),                 # block-diag
        }

    kl = 1.0 / jnp.sqrt(jnp.float32(2 * H))
    params["lin_w"] = jax.random.uniform(
        next(ki), (2 * H, num_classes), jnp.float32, -kl, kl)
    params["lin_b"] = jax.random.uniform(
        next(ki), (1, num_classes), jnp.float32, -kl, kl)
    return params


# ----------------------------------------------------------------------------
# Forward pass equivalent to Net.forward (eval mode) — fully jittable
# ----------------------------------------------------------------------------
def net_forward(params, x_tokens, input_length):
    B = x_tokens.shape[0]

    # Embedding gather directly in time-major (T, B, E) layout; bf16 so the
    # inter-layer activations and hoisted MXU matmuls use the bf16 fast path.
    embeds = jnp.take(params["embedding"], x_tokens.T, axis=0)    # (T, B, E)
    x0 = embeds.astype(jnp.bfloat16)
    # TODO(synk): Dropout(p=0.2) on embeddings and inter-layer LSTM dropout(0.1)
    # are identity in eval mode and are therefore omitted.

    lengths = input_length.astype(jnp.int32)
    maxlen = jnp.maximum(jnp.max(lengths), 1).reshape(1)   # pad_packed length

    # Pad the batch up to a sublane-friendly tile; padded rows have length 0.
    Bp = ((B + BATCH_TILE - 1) // BATCH_TILE) * BATCH_TILE
    if Bp != B:
        x0 = jnp.pad(x0, ((0, 0), (0, Bp - B), (0, 0)))
        lengths = jnp.pad(lengths, ((0, Bp - B),))
    lengths_b1 = lengths.reshape(Bp, 1)

    l0 = params["l0"]
    xf, xb = bilstm_layer(x0, lengths_b1, maxlen,
                          l0["w_ih"], l0["b"], l0["w_hh"])        # (T, Bp, H)x2

    l1 = params["l1"]
    logits = bilstm_pool_linear(xf, xb, lengths_b1, maxlen,
                                l1["w_ih"], l1["b"], l1["w_hh"],
                                params["lin_w"], params["lin_b"])  # (Bp, C)
    return logits[:B, None, :]                                     # (B, 1, C)


if __name__ == "__main__":
    VOCAB, EMB, HID, CLS = 50, 32, 32, 4
    B, T = 2, 8

    key = jax.random.PRNGKey(0)
    k_par, k_tok = jax.random.split(key)
    params = init_params(k_par, VOCAB, EMB, HID, CLS)

    x_tokens = jax.random.randint(k_tok, (B, T), 0, VOCAB, dtype=jnp.int32)
    input_length = jnp.array([8, 5], dtype=jnp.int32)   # padded seq lengths

    fwd = jax.jit(net_forward)
    out = fwd(params, x_tokens, input_length)
    jax.block_until_ready(out)
    assert out.shape == (B, 1, CLS)
    assert bool(jnp.all(jnp.isfinite(out)))
    print("KERNEL_OK")
</pallas_src>

<mosaic_0001>
module attributes {stable_mosaic.version = 11 : i64} {
  func.func @_bilstm_kernel(%arg0: i32, %arg1: memref<1xi32, #tpu.memory_space<smem>>, %arg2: memref<8x8x32xbf16, #tpu.memory_space<vmem>>, %arg3: memref<8x8x32xbf16, #tpu.memory_space<vmem>>, %arg4: memref<64x256xbf16, #tpu.memory_space<vmem>>, %arg5: memref<1x256xf32, #tpu.memory_space<vmem>>, %arg6: memref<64x256xbf16, #tpu.memory_space<vmem>>, %arg7: memref<8x1xi32, #tpu.memory_space<vmem>>, %arg8: memref<64x4xf32, #tpu.memory_space<vmem>>, %arg9: memref<1x4xf32, #tpu.memory_space<vmem>>, %arg10: memref<8x4xf32, #tpu.memory_space<vmem>>, %arg11: memref<8x8x256xbf16, #tpu.memory_space<vmem>>, %arg12: memref<8x64xf32, #tpu.memory_space<vmem>>, %arg13: memref<8x32xf32, #tpu.memory_space<vmem>>, %arg14: memref<8x32xf32, #tpu.memory_space<vmem>>, %arg15: memref<8x64xf32, #tpu.memory_space<vmem>>) attributes {dimension_semantics = [#tpu.dimension_semantics<parallel>], iteration_bounds = array<i64: 1>, scalar_prefetch = 1 : i64, scratch_operands = 5 : i64, tpu.core_type = #tpu.core_type<tc>, window_params = [{transform_indices = @transform_0, window_bounds = array<i64: 8, 8, 32>}, {transform_indices = @transform_1, window_bounds = array<i64: 8, 8, 32>}, {pipeline_mode = #tpu.pipeline_mode<synchronous>, transform_indices = @transform_2, window_bounds = array<i64: 64, 256>}, {pipeline_mode = #tpu.pipeline_mode<synchronous>, transform_indices = @transform_3, window_bounds = array<i64: 1, 256>}, {pipeline_mode = #tpu.pipeline_mode<synchronous>, transform_indices = @transform_4, window_bounds = array<i64: 64, 256>}, {transform_indices = @transform_5, window_bounds = array<i64: 8, 1>}, {pipeline_mode = #tpu.pipeline_mode<synchronous>, transform_indices = @transform_6, window_bounds = array<i64: 64, 4>}, {pipeline_mode = #tpu.pipeline_mode<synchronous>, transform_indices = @transform_7, window_bounds = array<i64: 1, 4>}, {transform_indices = @transform_8, window_bounds = array<i64: 8, 4>}]} {
    %c0 = arith.constant 0 : index
    %c0_0 = arith.constant 0 : index
    %0 = vector.load %arg4[%c0, %c0_0] : memref<64x256xbf16, #tpu.memory_space<vmem>>, vector<64x256xbf16>
    %c0_1 = arith.constant 0 : index
    %c0_2 = arith.constant 0 : index
    %c0_3 = arith.constant 0 : index
    %1 = vector.load %arg2[%c0_1, %c0_2, %c0_3] : memref<8x8x32xbf16, #tpu.memory_space<vmem>>, vector<8x8x32xbf16>
    %2 = vector.shape_cast %1 : vector<8x8x32xbf16> to vector<64x32xbf16>
    %c0_4 = arith.constant 0 : index
    %c0_5 = arith.constant 0 : index
    %c0_6 = arith.constant 0 : index
    %3 = vector.load %arg3[%c0_4, %c0_5, %c0_6] : memref<8x8x32xbf16, #tpu.memory_space<vmem>>, vector<8x8x32xbf16>
    %4 = vector.shape_cast %3 : vector<8x8x32xbf16> to vector<64x32xbf16>
    %5 = vector.extract_strided_slice %0 {offsets = [0, 0], sizes = [32, 256], strides = [1, 1]} : vector<64x256xbf16> to vector<32x256xbf16>
    %cst = arith.constant dense<0.000000e+00> : vector<64x256xf32>
    %6 = tpu.matmul %2, %5, %cst {dimension_numbers = #tpu.dot_dimension_numbers<[1], [0], [0], [1], [0, 0, 1, 1], [], []>} : vector<64x32xbf16>, vector<32x256xbf16>, vector<64x256xf32> -> vector<64x256xf32>
    %7 = vector.extract_strided_slice %0 {offsets = [32, 0], sizes = [32, 256], strides = [1, 1]} : vector<64x256xbf16> to vector<32x256xbf16>
    %cst_7 = arith.constant dense<0.000000e+00> : vector<64x256xf32>
    %8 = tpu.matmul %4, %7, %cst_7 {dimension_numbers = #tpu.dot_dimension_numbers<[1], [0], [0], [1], [0, 0, 1, 1], [], []>} : vector<64x32xbf16>, vector<32x256xbf16>, vector<64x256xf32> -> vector<64x256xf32>
    %9 = arith.addf %6, %8 : vector<64x256xf32>
    %c0_8 = arith.constant 0 : index
    %c0_9 = arith.constant 0 : index
    %10 = vector.load %arg5[%c0_8, %c0_9] : memref<1x256xf32, #tpu.memory_space<vmem>>, vector<1x256xf32>
    %11 = vector.broadcast %10 : vector<1x256xf32> to vector<64x256xf32>
    %12 = arith.addf %9, %11 : vector<64x256xf32>
    %13 = vector.shape_cast %12 : vector<64x256xf32> to vector<8x8x256xf32>
    %14 = arith.truncf %13 : vector<8x8x256xf32> to vector<8x8x256xbf16>
    %c0_10 = arith.constant 0 : index
    %c0_11 = arith.constant 0 : index
    %c0_12 = arith.constant 0 : index
    %15 = vector.load %arg11[%c0_10, %c0_11, %c0_12] : memref<8x8x256xbf16, #tpu.memory_space<vmem>>, vector<8x8x256xbf16>
    tpu.vector_store %arg11[%c0_10, %c0_11, %c0_12], %14 {strides = array<i32>} : memref<8x8x256xbf16, #tpu.memory_space<vmem>>, vector<8x8x256xbf16>,
    %cst_13 = arith.constant 0.000000e+00 : f32
    %16 = vector.broadcast %cst_13 : f32 to vector<8x64xf32>
    %c0_14 = arith.constant 0 : index
    %c0_15 = arith.constant 0 : index
    %17 = vector.load %arg12[%c0_14, %c0_15] : memref<8x64xf32, #tpu.memory_space<vmem>>, vector<8x64xf32>
    tpu.vector_store %arg12[%c0_14, %c0_15], %16 {strides = array<i32>} : memref<8x64xf32, #tpu.memory_space<vmem>>, vector<8x64xf32>,
    %cst_16 = arith.constant 0.000000e+00 : f32
    %18 = vector.broadcast %cst_16 : f32 to vector<8x32xf32>
    %c0_17 = arith.constant 0 : index
    %c0_18 = arith.constant 0 : index
    %19 = vector.load %arg13[%c0_17, %c0_18] : memref<8x32xf32, #tpu.memory_space<vmem>>, vector<8x32xf32>
    tpu.vector_store %arg13[%c0_17, %c0_18], %18 {strides = array<i32>} : memref<8x32xf32, #tpu.memory_space<vmem>>, vector<8x32xf32>,
    %cst_19 = arith.constant 0.000000e+00 : f32
    %20 = vector.broadcast %cst_19 : f32 to vector<8x32xf32>
    %c0_20 = arith.constant 0 : index
    %c0_21 = arith.constant 0 : index
    %21 = vector.load %arg14[%c0_20, %c0_21] : memref<8x32xf32, #tpu.memory_space<vmem>>, vector<8x32xf32>
    tpu.vector_store %arg14[%c0_20, %c0_21], %20 {strides = array<i32>} : memref<8x32xf32, #tpu.memory_space<vmem>>, vector<8x32xf32>,
    %cst_22 = arith.constant 0xFF800000 : f32
    %22 = vector.broadcast %cst_22 : f32 to vector<8x64xf32>
    %c0_23 = arith.constant 0 : index
    %c0_24 = arith.constant 0 : index
    %23 = vector.load %arg15[%c0_23, %c0_24] : memref<8x64xf32, #tpu.memory_space<vmem>>, vector<8x64xf32>
    tpu.vector_store %arg15[%c0_23, %c0_24], %22 {strides = array<i32>} : memref<8x64xf32, #tpu.memory_space<vmem>>, vector<8x64xf32>,
    %c0_25 = arith.constant 0 : index
    %c0_26 = arith.constant 0 : index
    %24 = vector.load %arg7[%c0_25, %c0_26] : memref<8x1xi32, #tpu.memory_space<vmem>>, vector<8x1xi32>
    %c0_27 = arith.constant 0 : index
    %25 = memref.load %arg1[%c0_27] : memref<1xi32, #tpu.memory_space<smem>>
    %c0_28 = arith.constant 0 : index
    %c0_29 = arith.constant 0 : index
    %26 = vector.load %arg6[%c0_28, %c0_29] : memref<64x256xbf16, #tpu.memory_space<vmem>>, vector<64x256xbf16>
    %c0_i32 = arith.constant 0 : i32
    %c7_i32 = arith.constant 7 : i32
    %27 = arith.subi %c7_i32, %c0_i32 : i32
    %28 = arith.cmpi slt, %c0_i32, %25 : i32
    %29 = arith.cmpi slt, %27, %25 : i32
    %30 = arith.ori %28, %29 : i1
    %31 = arith.extui %30 : i1 to i32
    %c0_i32_30 = arith.constant 0 : i32
    %32 = arith.cmpi ne, %31, %c0_i32_30 : i32
    scf.if %32 {
      %c0_55 = arith.constant 0 : index
      %c0_56 = arith.constant 0 : index
      %82 = vector.load %arg12[%c0_55, %c0_56] : memref<8x64xf32, #tpu.memory_space<vmem>>, vector<8x64xf32>
      %83 = arith.truncf %82 : vector<8x64xf32> to vector<8x64xbf16>
      %cst_57 = arith.constant dense<0.000000e+00> : vector<8x256xf32>
      %84 = tpu.matmul %83, %26, %cst_57 {dimension_numbers = #tpu.dot_dimension_numbers<[1], [0], [0], [1], [0, 0, 1, 1], [], []>} : vector<8x64xbf16>, vector<64x256xbf16>, vector<8x256xf32> -> vector<8x256xf32>
      %85 = arith.index_cast %c0_i32 : i32 to index
      %c0_58 = arith.constant 0 : index
      %c0_59 = arith.constant 0 : index
      %86 = vector.load %arg11[%85, %c0_58, %c0_59] : memref<8x8x256xbf16, #tpu.memory_space<vmem>>, vector<1x8x128xbf16>
      %87 = vector.shape_cast %86 : vector<1x8x128xbf16> to vector<8x128xbf16>
      %88 = vector.extract_strided_slice %84 {offsets = [0, 0], sizes = [8, 128], strides = [1, 1]} : vector<8x256xf32> to vector<8x128xf32>
      %89 = arith.extf %87 : vector<8x128xbf16> to vector<8x128xf32>
      %90 = arith.addf %89, %88 : vector<8x128xf32>
      %91 = arith.index_cast %27 : i32 to index
      %c0_60 = arith.constant 0 : index
      %c128 = arith.constant 128 : index
      %92 = vector.load %arg11[%91, %c0_60, %c128] : memref<8x8x256xbf16, #tpu.memory_space<vmem>>, vector<1x8x128xbf16>
      %93 = vector.shape_cast %92 : vector<1x8x128xbf16> to vector<8x128xbf16>
      %94 = vector.extract_strided_slice %84 {offsets = [0, 128], sizes = [8, 128], strides = [1, 1]} : vector<8x256xf32> to vector<8x128xf32>
      %95 = arith.extf %93 : vector<8x128xbf16> to vector<8x128xf32>
      %96 = arith.addf %95, %94 : vector<8x128xf32>
      %c0_61 = arith.constant 0 : index
      %c0_62 = arith.constant 0 : index
      %97 = vector.load %arg13[%c0_61, %c0_62] : memref<8x32xf32, #tpu.memory_space<vmem>>, vector<8x32xf32>
      %98 = vector.extract_strided_slice %90 {offsets = [0, 0], sizes = [8, 32], strides = [1, 1]} : vector<8x128xf32> to vector<8x32xf32>
      %99 = arith.negf %98 : vector<8x32xf32>
      %100 = math.exp %99 : vector<8x32xf32>
      %cst_63 = arith.constant 1.000000e+00 : f32
      %101 = vector.broadcast %cst_63 : f32 to vector<8x32xf32>
      %102 = arith.addf %101, %100 : vector<8x32xf32>
      %103 = arith.divf %101, %102 : vector<8x32xf32>
      %104 = vector.extract_strided_slice %90 {offsets = [0, 32], sizes = [8, 32], strides = [1, 1]} : vector<8x128xf32> to vector<8x32xf32>
      %105 = arith.negf %104 : vector<8x32xf32>
      %106 = math.exp %105 : vector<8x32xf32>
      %cst_64 = arith.constant 1.000000e+00 : f32
      %107 = vector.broadcast %cst_64 : f32 to vector<8x32xf32>
      %108 = arith.addf %107, %106 : vector<8x32xf32>
      %109 = arith.divf %107, %108 : vector<8x32xf32>
      %110 = vector.extract_strided_slice %90 {offsets = [0, 64], sizes = [8, 32], strides = [1, 1]} : vector<8x128xf32> to vector<8x32xf32>
      %111 = math.tanh %110 : vector<8x32xf32>
      %112 = vector.extract_strided_slice %90 {offsets = [0, 96], sizes = [8, 32], strides = [1, 1]} : vector<8x128xf32> to vector<8x32xf32>
      %113 = arith.negf %112 : vector<8x32xf32>
      %114 = math.exp %113 : vector<8x32xf32>
      %cst_65 = arith.constant 1.000000e+00 : f32
      %115 = vector.broadcast %cst_65 : f32 to vector<8x32xf32>
      %116 = arith.addf %115, %114 : vector<8x32xf32>
      %117 = arith.divf %115, %116 : vector<8x32xf32>
      %118 = arith.mulf %109, %97 : vector<8x32xf32>
      %119 = arith.mulf %103, %111 : vector<8x32xf32>
      %120 = arith.addf %118, %119 : vector<8x32xf32>
      %121 = math.tanh %120 : vector<8x32xf32>
      %122 = arith.mulf %117, %121 : vector<8x32xf32>
      %c0_66 = arith.constant 0 : index
      %c0_67 = arith.constant 0 : index
      %123 = vector.load %arg14[%c0_66, %c0_67] : memref<8x32xf32, #tpu.memory_space<vmem>>, vector<8x32xf32>
      %124 = vector.extract_strided_slice %96 {offsets = [0, 0], sizes = [8, 32], strides = [1, 1]} : vector<8x128xf32> to vector<8x32xf32>
      %125 = arith.negf %124 : vector<8x32xf32>
      %126 = math.exp %125 : vector<8x32xf32>
      %cst_68 = arith.constant 1.000000e+00 : f32
      %127 = vector.broadcast %cst_68 : f32 to vector<8x32xf32>
      %128 = arith.addf %127, %126 : vector<8x32xf32>
      %129 = arith.divf %127, %128 : vector<8x32xf32>
      %130 = vector.extract_strided_slice %96 {offsets = [0, 32], sizes = [8, 32], strides = [1, 1]} : vector<8x128xf32> to vector<8x32xf32>
      %131 = arith.negf %130 : vector<8x32xf32>
      %132 = math.exp %131 : vector<8x32xf32>
      %cst_69 = arith.constant 1.000000e+00 : f32
      %133 = vector.broadcast %cst_69 : f32 to vector<8x32xf32>
      %134 = arith.addf %133, %132 : vector<8x32xf32>
      %135 = arith.divf %133, %134 : vector<8x32xf32>
      %136 = vector.extract_strided_slice %96 {offsets = [0, 64], sizes = [8, 32], strides = [1, 1]} : vector<8x128xf32> to vector<8x32xf32>
      %137 = math.tanh %136 : vector<8x32xf32>
      %138 = vector.extract_strided_slice %96 {offsets = [0, 96], sizes = [8, 32], strides = [1, 1]} : vector<8x128xf32> to vector<8x32xf32>
      %139 = arith.negf %138 : vector<8x32xf32>
      %140 = math.exp %139 : vector<8x32xf32>
      %cst_70 = arith.constant 1.000000e+00 : f32
      %141 = vector.broadcast %cst_70 : f32 to vector<8x32xf32>
      %142 = arith.addf %141, %140 : vector<8x32xf32>
      %143 = arith.divf %141, %142 : vector<8x32xf32>
      %144 = arith.mulf %135, %123 : vector<8x32xf32>
      %145 = arith.mulf %129, %137 : vector<8x32xf32>
      %146 = arith.addf %144, %145 : vector<8x32xf32>
      %147 = math.tanh %146 : vector<8x32xf32>
      %148 = arith.mulf %143, %147 : vector<8x32xf32>
      %149 = vector.broadcast %c0_i32 : i32 to vector<8x1xi32>
      %150 = arith.cmpi slt, %149, %24 : vector<8x1xi32>
      %151 = vector.broadcast %27 : i32 to vector<8x1xi32>
      %152 = arith.cmpi slt, %151, %24 : vector<8x1xi32>
      %153 = vector.extract_strided_slice %82 {offsets = [0, 0], sizes = [8, 32], strides = [1, 1]} : vector<8x64xf32> to vector<8x32xf32>
      %154 = vector.shape_cast %150 : vector<8x1xi1> to vector<8x1xi1>
      %155 = vector.broadcast %154 : vector<8x1xi1> to vector<8x32xi1>
      %156 = arith.select %155, %122, %153 : vector<8x32xi1>, vector<8x32xf32>
      %157 = vector.extract_strided_slice %82 {offsets = [0, 32], sizes = [8, 32], strides = [1, 1]} : vector<8x64xf32> to vector<8x32xf32>
      %158 = vector.shape_cast %152 : vector<8x1xi1> to vector<8x1xi1>
      %159 = vector.broadcast %158 : vector<8x1xi1> to vector<8x32xi1>
      %160 = arith.select %159, %148, %157 : vector<8x32xi1>, vector<8x32xf32>
      %c0_71 = arith.constant 0 : index
      %c0_72 = arith.constant 0 : index
      %161 = vector.load %arg13[%c0_71, %c0_72] : memref<8x32xf32, #tpu.memory_space<vmem>>, vector<8x32xf32>
      %162 = vector.shape_cast %150 : vector<8x1xi1> to vector<8x1xi1>
      %163 = vector.broadcast %162 : vector<8x1xi1> to vector<8x32xi1>
      %164 = arith.select %163, %120, %161 : vector<8x32xi1>, vector<8x32xf32>
      %c0_73 = arith.constant 0 : index
      %c0_74 = arith.constant 0 : index
      %165 = vector.load %arg13[%c0_73, %c0_74] : memref<8x32xf32, #tpu.memory_space<vmem>>, vector<8x32xf32>
      tpu.vector_store %arg13[%c0_73, %c0_74], %164 {strides = array<i32>} : memref<8x32xf32, #tpu.memory_space<vmem>>, vector<8x32xf32>,
      %c0_75 = arith.constant 0 : index
      %c0_76 = arith.constant 0 : index
      %166 = vector.load %arg14[%c0_75, %c0_76] : memref<8x32xf32, #tpu.memory_space<vmem>>, vector<8x32xf32>
      %167 = vector.shape_cast %152 : vector<8x1xi1> to vector<8x1xi1>
      %168 = vector.broadcast %167 : vector<8x1xi1> to vector<8x32xi1>
      %169 = arith.select %168, %146, %166 : vector<8x32xi1>, vector<8x32xf32>
      %c0_77 = arith.constant 0 : index
      %c0_78 = arith.constant 0 : index
      %170 = vector.load %arg14[%c0_77, %c0_78] : memref<8x32xf32, #tpu.memory_space<vmem>>, vector<8x32xf32>
      tpu.vector_store %arg14[%c0_77, %c0_78], %169 {strides = array<i32>} : memref<8x32xf32, #tpu.memory_space<vmem>>, vector<8x32xf32>,
      %171 = tpu.concatenate %156, %160 in 1 : vector<8x32xf32>, vector<8x32xf32> -> vector<8x64xf32>
      %c0_79 = arith.constant 0 : index
      %c0_80 = arith.constant 0 : index
      %172 = vector.load %arg12[%c0_79, %c0_80] : memref<8x64xf32, #tpu.memory_space<vmem>>, vector<8x64xf32>
      tpu.vector_store %arg12[%c0_79, %c0_80], %171 {strides = array<i32>} : memref<8x64xf32, #tpu.memory_space<vmem>>, vector<8x64xf32>,
      %173 = arith.cmpi slt, %c0_i32, %25 : i32
      %cst_81 = arith.constant 0.000000e+00 : f32
      %cst_82 = arith.constant 0xFF800000 : f32
      %174 = arith.select %173, %cst_81, %cst_82 : f32
      %175 = arith.cmpi slt, %27, %25 : i32
      %cst_83 = arith.constant 0.000000e+00 : f32
      %cst_84 = arith.constant 0xFF800000 : f32
      %176 = arith.select %175, %cst_83, %cst_84 : f32
      %177 = vector.shape_cast %150 : vector<8x1xi1> to vector<8x1xi1>
      %178 = vector.broadcast %177 : vector<8x1xi1> to vector<8x32xi1>
      %179 = vector.broadcast %174 : f32 to vector<8x32xf32>
      %180 = arith.select %178, %156, %179 : vector<8x32xi1>, vector<8x32xf32>
      %181 = vector.shape_cast %152 : vector<8x1xi1> to vector<8x1xi1>
      %182 = vector.broadcast %181 : vector<8x1xi1> to vector<8x32xi1>
      %183 = vector.broadcast %176 : f32 to vector<8x32xf32>
      %184 = arith.select %182, %160, %183 : vector<8x32xi1>, vector<8x32xf32>
      %185 = tpu.concatenate %180, %184 in 1 : vector<8x32xf32>, vector<8x32xf32> -> vector<8x64xf32>
      %c0_85 = arith.constant 0 : index
      %c0_86 = arith.constant 0 : index
      %186 = vector.load %arg15[%c0_85, %c0_86] : memref<8x64xf32, #tpu.memory_space<vmem>>, vector<8x64xf32>
      %187 = arith.maximumf %186, %185 : vector<8x64xf32>
      %c0_87 = arith.constant 0 : index
      %c0_88 = arith.constant 0 : index
      %188 = vector.load %arg15[%c0_87, %c0_88] : memref<8x64xf32, #tpu.memory_space<vmem>>, vector<8x64xf32>
      tpu.vector_store %arg15[%c0_87, %c0_88], %187 {strides = array<i32>} : memref<8x64xf32, #tpu.memory_space<vmem>>, vector<8x64xf32>,
    } else {
    }
    %c1_i32 = arith.constant 1 : i32
    %c7_i32_31 = arith.constant 7 : i32
    %33 = arith.subi %c7_i32_31, %c1_i32 : i32
    %34 = arith.cmpi slt, %c1_i32, %25 : i32
    %35 = arith.cmpi slt, %33, %25 : i32
    %36 = arith.ori %34, %35 : i1
    %37 = arith.extui %36 : i1 to i32
    %c0_i32_32 = arith.constant 0 : i32
    %38 = arith.cmpi ne, %37, %c0_i32_32 : i32
    scf.if %38 {
      %c0_55 = arith.constant 0 : index
      %c0_56 = arith.constant 0 : index
      %82 = vector.load %arg12[%c0_55, %c0_56] : memref<8x64xf32, #tpu.memory_space<vmem>>, vector<8x64xf32>
      %83 = arith.truncf %82 : vector<8x64xf32> to vector<8x64xbf16>
      %cst_57 = arith.constant dense<0.000000e+00> : vector<8x256xf32>
      %84 = tpu.matmul %83, %26, %cst_57 {dimension_numbers = #tpu.dot_dimension_numbers<[1], [0], [0], [1], [0, 0, 1, 1], [], []>} : vector<8x64xbf16>, vector<64x256xbf16>, vector<8x256xf32> -> vector<8x256xf32>
      %85 = arith.index_cast %c1_i32 : i32 to index
      %c0_58 = arith.constant 0 : index
      %c0_59 = arith.constant 0 : index
      %86 = vector.load %arg11[%85, %c0_58, %c0_59] : memref<8x8x256xbf16, #tpu.memory_space<vmem>>, vector<1x8x128xbf16>
      %87 = vector.shape_cast %86 : vector<1x8x128xbf16> to vector<8x128xbf16>
      %88 = vector.extract_strided_slice %84 {offsets = [0, 0], sizes = [8, 128], strides = [1, 1]} : vector<8x256xf32> to vector<8x128xf32>
      %89 = arith.extf %87 : vector<8x128xbf16> to vector<8x128xf32>
      %90 = arith.addf %89, %88 : vector<8x128xf32>
      %91 = arith.index_cast %33 : i32 to index
      %c0_60 = arith.constant 0 : index
      %c128 = arith.constant 128 : index
      %92 = vector.load %arg11[%91, %c0_60, %c128] : memref<8x8x256xbf16, #tpu.memory_space<vmem>>, vector<1x8x128xbf16>
      %93 = vector.shape_cast %92 : vector<1x8x128xbf16> to vector<8x128xbf16>
      %94 = vector.extract_strided_slice %84 {offsets = [0, 128], sizes = [8, 128], strides = [1, 1]} : vector<8x256xf32> to vector<8x128xf32>
      %95 = arith.extf %93 : vector<8x128xbf16> to vector<8x128xf32>
      %96 = arith.addf %95, %94 : vector<8x128xf32>
      %c0_61 = arith.constant 0 : index
      %c0_62 = arith.constant 0 : index
      %97 = vector.load %arg13[%c0_61, %c0_62] : memref<8x32xf32, #tpu.memory_space<vmem>>, vector<8x32xf32>
      %98 = vector.extract_strided_slice %90 {offsets = [0, 0], sizes = [8, 32], strides = [1, 1]} : vector<8x128xf32> to vector<8x32xf32>
      %99 = arith.negf %98 : vector<8x32xf32>
      %100 = math.exp %99 : vector<8x32xf32>
      %cst_63 = arith.constant 1.000000e+00 : f32
      %101 = vector.broadcast %cst_63 : f32 to vector<8x32xf32>
      %102 = arith.addf %101, %100 : vector<8x32xf32>
      %103 = arith.divf %101, %102 : vector<8x32xf32>
      %104 = vector.extract_strided_slice %90 {offsets = [0, 32], sizes = [8, 32], strides = [1, 1]} : vector<8x128xf32> to vector<8x32xf32>
      %105 = arith.negf %104 : vector<8x32xf32>
      %106 = math.exp %105 : vector<8x32xf32>
      %cst_64 = arith.constant 1.000000e+00 : f32
      %107 = vector.broadcast %cst_64 : f32 to vector<8x32xf32>
      %108 = arith.addf %107, %106 : vector<8x32xf32>
      %109 = arith.divf %107, %108 : vector<8x32xf32>
      %110 = vector.extract_strided_slice %90 {offsets = [0, 64], sizes = [8, 32], strides = [1, 1]} : vector<8x128xf32> to vector<8x32xf32>
      %111 = math.tanh %110 : vector<8x32xf32>
      %112 = vector.extract_strided_slice %90 {offsets = [0, 96], sizes = [8, 32], strides = [1, 1]} : vector<8x128xf32> to vector<8x32xf32>
      %113 = arith.negf %112 : vector<8x32xf32>
      %114 = math.exp %113 : vector<8x32xf32>
      %cst_65 = arith.constant 1.000000e+00 : f32
      %115 = vector.broadcast %cst_65 : f32 to vector<8x32xf32>
      %116 = arith.addf %115, %114 : vector<8x32xf32>
      %117 = arith.divf %115, %116 : vector<8x32xf32>
      %118 = arith.mulf %109, %97 : vector<8x32xf32>
      %119 = arith.mulf %103, %111 : vector<8x32xf32>
      %120 = arith.addf %118, %119 : vector<8x32xf32>
      %121 = math.tanh %120 : vector<8x32xf32>
      %122 = arith.mulf %117, %121 : vector<8x32xf32>
      %c0_66 = arith.constant 0 : index
      %c0_67 = arith.constant 0 : index
      %123 = vector.load %arg14[%c0_66, %c0_67] : memref<8x32xf32, #tpu.memory_space<vmem>>, vector<8x32xf32>
      %124 = vector.extract_strided_slice %96 {offsets = [0, 0], sizes = [8, 32], strides = [1, 1]} : vector<8x128xf32> to vector<8x32xf32>
      %125 = arith.negf %124 : vector<8x32xf32>
      %126 = math.exp %125 : vector<8x32xf32>
      %cst_68 = arith.constant 1.000000e+00 : f32
      %127 = vector.broadcast %cst_68 : f32 to vector<8x32xf32>
      %128 = arith.addf %127, %126 : vector<8x32xf32>
      %129 = arith.divf %127, %128 : vector<8x32xf32>
      %130 = vector.extract_strided_slice %96 {offsets = [0, 32], sizes = [8, 32], strides = [1, 1]} : vector<8x128xf32> to vector<8x32xf32>
      %131 = arith.negf %130 : vector<8x32xf32>
      %132 = math.exp %131 : vector<8x32xf32>
      %cst_69 = arith.constant 1.000000e+00 : f32
      %133 = vector.broadcast %cst_69 : f32 to vector<8x32xf32>
      %134 = arith.addf %133, %132 : vector<8x32xf32>
      %135 = arith.divf %133, %134 : vector<8x32xf32>
      %136 = vector.extract_strided_slice %96 {offsets = [0, 64], sizes = [8, 32], strides = [1, 1]} : vector<8x128xf32> to vector<8x32xf32>
      %137 = math.tanh %136 : vector<8x32xf32>
      %138 = vector.extract_strided_slice %96 {offsets = [0, 96], sizes = [8, 32], strides = [1, 1]} : vector<8x128xf32> to vector<8x32xf32>
      %139 = arith.negf %138 : vector<8x32xf32>
      %140 = math.exp %139 : vector<8x32xf32>
      %cst_70 = arith.constant 1.000000e+00 : f32
      %141 = vector.broadcast %cst_70 : f32 to vector<8x32xf32>
      %142 = arith.addf %141, %140 : vector<8x32xf32>
      %143 = arith.divf %141, %142 : vector<8x32xf32>
      %144 = arith.mulf %135, %123 : vector<8x32xf32>
      %145 = arith.mulf %129, %137 : vector<8x32xf32>
      %146 = arith.addf %144, %145 : vector<8x32xf32>
      %147 = math.tanh %146 : vector<8x32xf32>
      %148 = arith.mulf %143, %147 : vector<8x32xf32>
      %149 = vector.broadcast %c1_i32 : i32 to vector<8x1xi32>
      %150 = arith.cmpi slt, %149, %24 : vector<8x1xi32>
      %151 = vector.broadcast %33 : i32 to vector<8x1xi32>
      %152 = arith.cmpi slt, %151, %24 : vector<8x1xi32>
      %153 = vector.extract_strided_slice %82 {offsets = [0, 0], sizes = [8, 32], strides = [1, 1]} : vector<8x64xf32> to vector<8x32xf32>
      %154 = vector.shape_cast %150 : vector<8x1xi1> to vector<8x1xi1>
      %155 = vector.broadcast %154 : vector<8x1xi1> to vector<8x32xi1>
      %156 = arith.select %155, %122, %153 : vector<8x32xi1>, vector<8x32xf32>
      %157 = vector.extract_strided_slice %82 {offsets = [0, 32], sizes = [8, 32], strides = [1, 1]} : vector<8x64xf32> to vector<8x32xf32>
      %158 = vector.shape_cast %152 : vector<8x1xi1> to vector<8x1xi1>
      %159 = vector.broadcast %158 : vector<8x1xi1> to vector<8x32xi1>
      %160 = arith.select %159, %148, %157 : vector<8x32xi1>, vector<8x32xf32>
      %c0_71 = arith.constant 0 : index
      %c0_72 = arith.constant 0 : index
      %161 = vector.load %arg13[%c0_71, %c0_72] : memref<8x32xf32, #tpu.memory_space<vmem>>, vector<8x32xf32>
      %162 = vector.shape_cast %150 : vector<8x1xi1> to vector<8x1xi1>
      %163 = vector.broadcast %162 : vector<8x1xi1> to vector<8x32xi1>
      %164 = arith.select %163, %120, %161 : vector<8x32xi1>, vector<8x32xf32>
      %c0_73 = arith.constant 0 : index
      %c0_74 = arith.constant 0 : index
      %165 = vector.load %arg13[%c0_73, %c0_74] : memref<8x32xf32, #tpu.memory_space<vmem>>, vector<8x32xf32>
      tpu.vector_store %arg13[%c0_73, %c0_74], %164 {strides = array<i32>} : memref<8x32xf32, #tpu.memory_space<vmem>>, vector<8x32xf32>,
      %c0_75 = arith.constant 0 : index
      %c0_76 = arith.constant 0 : index
      %166 = vector.load %arg14[%c0_75, %c0_76] : memref<8x32xf32, #tpu.memory_space<vmem>>, vector<8x32xf32>
      %167 = vector.shape_cast %152 : vector<8x1xi1> to vector<8x1xi1>
      %168 = vector.broadcast %167 : vector<8x1xi1> to vector<8x32xi1>
      %169 = arith.select %168, %146, %166 : vector<8x32xi1>, vector<8x32xf32>
      %c0_77 = arith.constant 0 : index
      %c0_78 = arith.constant 0 : index
      %170 = vector.load %arg14[%c0_77, %c0_78] : memref<8x32xf32, #tpu.memory_space<vmem>>, vector<8x32xf32>
      tpu.vector_store %arg14[%c0_77, %c0_78], %169 {strides = array<i32>} : memref<8x32xf32, #tpu.memory_space<vmem>>, vector<8x32xf32>,
      %171 = tpu.concatenate %156, %160 in 1 : vector<8x32xf32>, vector<8x32xf32> -> vector<8x64xf32>
      %c0_79 = arith.constant 0 : index
      %c0_80 = arith.constant 0 : index
      %172 = vector.load %arg12[%c0_79, %c0_80] : memref<8x64xf32, #tpu.memory_space<vmem>>, vector<8x64xf32>
      tpu.vector_store %arg12[%c0_79, %c0_80], %171 {strides = array<i32>} : memref<8x64xf32, #tpu.memory_space<vmem>>, vector<8x64xf32>,
      %173 = arith.cmpi slt, %c1_i32, %25 : i32
      %cst_81 = arith.constant 0.000000e+00 : f32
      %cst_82 = arith.constant 0xFF800000 : f32
      %174 = arith.select %173, %cst_81, %cst_82 : f32
      %175 = arith.cmpi slt, %33, %25 : i32
      %cst_83 = arith.constant 0.000000e+00 : f32
      %cst_84 = arith.constant 0xFF800000 : f32
      %176 = arith.select %175, %cst_83, %cst_84 : f32
      %177 = vector.shape_cast %150 : vector<8x1xi1> to vector<8x1xi1>
      %178 = vector.broadcast %177 : vector<8x1xi1> to vector<8x32xi1>
      %179 = vector.broadcast %174 : f32 to vector<8x32xf32>
      %180 = arith.select %178, %156, %179 : vector<8x32xi1>, vector<8x32xf32>
      %181 = vector.shape_cast %152 : vector<8x1xi1> to vector<8x1xi1>
      %182 = vector.broadcast %181 : vector<8x1xi1> to vector<8x32xi1>
      %183 = vector.broadcast %176 : f32 to vector<8x32xf32>
      %184 = arith.select %182, %160, %183 : vector<8x32xi1>, vector<8x32xf32>
      %185 = tpu.concatenate %180, %184 in 1 : vector<8x32xf32>, vector<8x32xf32> -> vector<8x64xf32>
      %c0_85 = arith.constant 0 : index
      %c0_86 = arith.constant 0 : index
      %186 = vector.load %arg15[%c0_85, %c0_86] : memref<8x64xf32, #tpu.memory_space<vmem>>, vector<8x64xf32>
      %187 = arith.maximumf %186, %185 : vector<8x64xf32>
      %c0_87 = arith.constant 0 : index
      %c0_88 = arith.constant 0 : index
      %188 = vector.load %arg15[%c0_87, %c0_88] : memref<8x64xf32, #tpu.memory_space<vmem>>, vector<8x64xf32>
      tpu.vector_store %arg15[%c0_87, %c0_88], %187 {strides = array<i32>} : memref<8x64xf32, #tpu.memory_space<vmem>>, vector<8x64xf32>,
    } else {
    }
    %c2_i32 = arith.constant 2 : i32
    %c7_i32_33 = arith.constant 7 : i32
    %39 = arith.subi %c7_i32_33, %c2_i32 : i32
    %40 = arith.cmpi slt, %c2_i32, %25 : i32
    %41 = arith.cmpi slt, %39, %25 : i32
    %42 = arith.ori %40, %41 : i1
    %43 = arith.extui %42 : i1 to i32
    %c0_i32_34 = arith.constant 0 : i32
    %44 = arith.cmpi ne, %43, %c0_i32_34 : i32
    scf.if %44 {
      %c0_55 = arith.constant 0 : index
      %c0_56 = arith.constant 0 : index
      %82 = vector.load %arg12[%c0_55, %c0_56] : memref<8x64xf32, #tpu.memory_space<vmem>>, vector<8x64xf32>
      %83 = arith.truncf %82 : vector<8x64xf32> to vector<8x64xbf16>
      %cst_57 = arith.constant dense<0.000000e+00> : vector<8x256xf32>
      %84 = tpu.matmul %83, %26, %cst_57 {dimension_numbers = #tpu.dot_dimension_numbers<[1], [0], [0], [1], [0, 0, 1, 1], [], []>} : vector<8x64xbf16>, vector<64x256xbf16>, vector<8x256xf32> -> vector<8x256xf32>
      %85 = arith.index_cast %c2_i32 : i32 to index
      %c0_58 = arith.constant 0 : index
      %c0_59 = arith.constant 0 : index
      %86 = vector.load %arg11[%85, %c0_58, %c0_59] : memref<8x8x256xbf16, #tpu.memory_space<vmem>>, vector<1x8x128xbf16>
      %87 = vector.shape_cast %86 : vector<1x8x128xbf16> to vector<8x128xbf16>
      %88 = vector.extract_strided_slice %84 {offsets = [0, 0], sizes = [8, 128], strides = [1, 1]} : vector<8x256xf32> to vector<8x128xf32>
      %89 = arith.extf %87 : vector<8x128xbf16> to vector<8x128xf32>
      %90 = arith.addf %89, %88 : vector<8x128xf32>
      %91 = arith.index_cast %39 : i32 to index
      %c0_60 = arith.constant 0 : index
      %c128 = arith.constant 128 : index
      %92 = vector.load %arg11[%91, %c0_60, %c128] : memref<8x8x256xbf16, #tpu.memory_space<vmem>>, vector<1x8x128xbf16>
      %93 = vector.shape_cast %92 : vector<1x8x128xbf16> to vector<8x128xbf16>
      %94 = vector.extract_strided_slice %84 {offsets = [0, 128], sizes = [8, 128], strides = [1, 1]} : vector<8x256xf32> to vector<8x128xf32>
      %95 = arith.extf %93 : vector<8x128xbf16> to vector<8x128xf32>
      %96 = arith.addf %95, %94 : vector<8x128xf32>
      %c0_61 = arith.constant 0 : index
      %c0_62 = arith.constant 0 : index
      %97 = vector.load %arg13[%c0_61, %c0_62] : memref<8x32xf32, #tpu.memory_space<vmem>>, vector<8x32xf32>
      %98 = vector.extract_strided_slice %90 {offsets = [0, 0], sizes = [8, 32], strides = [1, 1]} : vector<8x128xf32> to vector<8x32xf32>
      %99 = arith.negf %98 : vector<8x32xf32>
      %100 = math.exp %99 : vector<8x32xf32>
      %cst_63 = arith.constant 1.000000e+00 : f32
      %101 = vector.broadcast %cst_63 : f32 to vector<8x32xf32>
      %102 = arith.addf %101, %100 : vector<8x32xf32>
      %103 = arith.divf %101, %102 : vector<8x32xf32>
      %104 = vector.extract_strided_slice %90 {offsets = [0, 32], sizes = [8, 32], strides = [1, 1]} : vector<8x128xf32> to vector<8x32xf32>
      %105 = arith.negf %104 : vector<8x32xf32>
      %106 = math.exp %105 : vector<8x32xf32>
      %cst_64 = arith.constant 1.000000e+00 : f32
      %107 = vector.broadcast %cst_64 : f32 to vector<8x32xf32>
      %108 = arith.addf %107, %106 : vector<8x32xf32>
      %109 = arith.divf %107, %108 : vector<8x32xf32>
      %110 = vector.extract_strided_slice %90 {offsets = [0, 64], sizes = [8, 32], strides = [1, 1]} : vector<8x128xf32> to vector<8x32xf32>
      %111 = math.tanh %110 : vector<8x32xf32>
      %112 = vector.extract_strided_slice %90 {offsets = [0, 96], sizes = [8, 32], strides = [1, 1]} : vector<8x128xf32> to vector<8x32xf32>
      %113 = arith.negf %112 : vector<8x32xf32>
      %114 = math.exp %113 : vector<8x32xf32>
      %cst_65 = arith.constant 1.000000e+00 : f32
      %115 = vector.broadcast %cst_65 : f32 to vector<8x32xf32>
      %116 = arith.addf %115, %114 : vector<8x32xf32>
      %117 = arith.divf %115, %116 : vector<8x32xf32>
      %118 = arith.mulf %109, %97 : vector<8x32xf32>
      %119 = arith.mulf %103, %111 : vector<8x32xf32>
      %120 = arith.addf %118, %119 : vector<8x32xf32>
      %121 = math.tanh %120 : vector<8x32xf32>
      %122 = arith.mulf %117, %121 : vector<8x32xf32>
      %c0_66 = arith.constant 0 : index
      %c0_67 = arith.constant 0 : index
      %123 = vector.load %arg14[%c0_66, %c0_67] : memref<8x32xf32, #tpu.memory_space<vmem>>, vector<8x32xf32>
      %124 = vector.extract_strided_slice %96 {offsets = [0, 0], sizes = [8, 32], strides = [1, 1]} : vector<8x128xf32> to vector<8x32xf32>
      %125 = arith.negf %124 : vector<8x32xf32>
      %126 = math.exp %125 : vector<8x32xf32>
      %cst_68 = arith.constant 1.000000e+00 : f32
      %127 = vector.broadcast %cst_68 : f32 to vector<8x32xf32>
      %128 = arith.addf %127, %126 : vector<8x32xf32>
      %129 = arith.divf %127, %128 : vector<8x32xf32>
      %130 = vector.extract_strided_slice %96 {offsets = [0, 32], sizes = [8, 32], strides = [1, 1]} : vector<8x128xf32> to vector<8x32xf32>
      %131 = arith.negf %130 : vector<8x32xf32>
      %132 = math.exp %131 : vector<8x32xf32>
      %cst_69 = arith.constant 1.000000e+00 : f32
      %133 = vector.broadcast %cst_69 : f32 to vector<8x32xf32>
      %134 = arith.addf %133, %132 : vector<8x32xf32>
      %135 = arith.divf %133, %134 : vector<8x32xf32>
      %136 = vector.extract_strided_slice %96 {offsets = [0, 64], sizes = [8, 32], strides = [1, 1]} : vector<8x128xf32> to vector<8x32xf32>
      %137 = math.tanh %136 : vector<8x32xf32>
      %138 = vector.extract_strided_slice %96 {offsets = [0, 96], sizes = [8, 32], strides = [1, 1]} : vector<8x128xf32> to vector<8x32xf32>
      %139 = arith.negf %138 : vector<8x32xf32>
      %140 = math.exp %139 : vector<8x32xf32>
      %cst_70 = arith.constant 1.000000e+00 : f32
      %141 = vector.broadcast %cst_70 : f32 to vector<8x32xf32>
      %142 = arith.addf %141, %140 : vector<8x32xf32>
      %143 = arith.divf %141, %142 : vector<8x32xf32>
      %144 = arith.mulf %135, %123 : vector<8x32xf32>
      %145 = arith.mulf %129, %137 : vector<8x32xf32>
      %146 = arith.addf %144, %145 : vector<8x32xf32>
      %147 = math.tanh %146 : vector<8x32xf32>
      %148 = arith.mulf %143, %147 : vector<8x32xf32>
      %149 = vector.broadcast %c2_i32 : i32 to vector<8x1xi32>
      %150 = arith.cmpi slt, %149, %24 : vector<8x1xi32>
      %151 = vector.broadcast %39 : i32 to vector<8x1xi32>
      %152 = arith.cmpi slt, %151, %24 : vector<8x1xi32>
      %153 = vector.extract_strided_slice %82 {offsets = [0, 0], sizes = [8, 32], strides = [1, 1]} : vector<8x64xf32> to vector<8x32xf32>
      %154 = vector.shape_cast %150 : vector<8x1xi1> to vector<8x1xi1>
      %155 = vector.broadcast %154 : vector<8x1xi1> to vector<8x32xi1>
      %156 = arith.select %155, %122, %153 : vector<8x32xi1>, vector<8x32xf32>
      %157 = vector.extract_strided_slice %82 {offsets = [0, 32], sizes = [8, 32], strides = [1, 1]} : vector<8x64xf32> to vector<8x32xf32>
      %158 = vector.shape_cast %152 : vector<8x1xi1> to vector<8x1xi1>
      %159 = vector.broadcast %158 : vector<8x1xi1> to vector<8x32xi1>
      %160 = arith.select %159, %148, %157 : vector<8x32xi1>, vector<8x32xf32>
      %c0_71 = arith.constant 0 : index
      %c0_72 = arith.constant 0 : index
      %161 = vector.load %arg13[%c0_71, %c0_72] : memref<8x32xf32, #tpu.memory_space<vmem>>, vector<8x32xf32>
      %162 = vector.shape_cast %150 : vector<8x1xi1> to vector<8x1xi1>
      %163 = vector.broadcast %162 : vector<8x1xi1> to vector<8x32xi1>
      %164 = arith.select %163, %120, %161 : vector<8x32xi1>, vector<8x32xf32>
      %c0_73 = arith.constant 0 : index
      %c0_74 = arith.constant 0 : index
      %165 = vector.load %arg13[%c0_73, %c0_74] : memref<8x32xf32, #tpu.memory_space<vmem>>, vector<8x32xf32>
      tpu.vector_store %arg13[%c0_73, %c0_74], %164 {strides = array<i32>} : memref<8x32xf32, #tpu.memory_space<vmem>>, vector<8x32xf32>,
      %c0_75 = arith.constant 0 : index
      %c0_76 = arith.constant 0 : index
      %166 = vector.load %arg14[%c0_75, %c0_76] : memref<8x32xf32, #tpu.memory_space<vmem>>, vector<8x32xf32>
      %167 = vector.shape_cast %152 : vector<8x1xi1> to vector<8x1xi1>
      %168 = vector.broadcast %167 : vector<8x1xi1> to vector<8x32xi1>
      %169 = arith.select %168, %146, %166 : vector<8x32xi1>, vector<8x32xf32>
      %c0_77 = arith.constant 0 : index
      %c0_78 = arith.constant 0 : index
      %170 = vector.load %arg14[%c0_77, %c0_78] : memref<8x32xf32, #tpu.memory_space<vmem>>, vector<8x32xf32>
      tpu.vector_store %arg14[%c0_77, %c0_78], %169 {strides = array<i32>} : memref<8x32xf32, #tpu.memory_space<vmem>>, vector<8x32xf32>,
      %171 = tpu.concatenate %156, %160 in 1 : vector<8x32xf32>, vector<8x32xf32> -> vector<8x64xf32>
      %c0_79 = arith.constant 0 : index
      %c0_80 = arith.constant 0 : index
      %172 = vector.load %arg12[%c0_79, %c0_80] : memref<8x64xf32, #tpu.memory_space<vmem>>, vector<8x64xf32>
      tpu.vector_store %arg12[%c0_79, %c0_80], %171 {strides = array<i32>} : memref<8x64xf32, #tpu.memory_space<vmem>>, vector<8x64xf32>,
      %173 = arith.cmpi slt, %c2_i32, %25 : i32
      %cst_81 = arith.constant 0.000000e+00 : f32
      %cst_82 = arith.constant 0xFF800000 : f32
      %174 = arith.select %173, %cst_81, %cst_82 : f32
      %175 = arith.cmpi slt, %39, %25 : i32
      %cst_83 = arith.constant 0.000000e+00 : f32
      %cst_84 = arith.constant 0xFF800000 : f32
      %176 = arith.select %175, %cst_83, %cst_84 : f32
      %177 = vector.shape_cast %150 : vector<8x1xi1> to vector<8x1xi1>
      %178 = vector.broadcast %177 : vector<8x1xi1> to vector<8x32xi1>
      %179 = vector.broadcast %174 : f32 to vector<8x32xf32>
      %180 = arith.select %178, %156, %179 : vector<8x32xi1>, vector<8x32xf32>
      %181 = vector.shape_cast %152 : vector<8x1xi1> to vector<8x1xi1>
      %182 = vector.broadcast %181 : vector<8x1xi1> to vector<8x32xi1>
      %183 = vector.broadcast %176 : f32 to vector<8x32xf32>
      %184 = arith.select %182, %160, %183 : vector<8x32xi1>, vector<8x32xf32>
      %185 = tpu.concatenate %180, %184 in 1 : vector<8x32xf32>, vector<8x32xf32> -> vector<8x64xf32>
      %c0_85 = arith.constant 0 : index
      %c0_86 = arith.constant 0 : index
      %186 = vector.load %arg15[%c0_85, %c0_86] : memref<8x64xf32, #tpu.memory_space<vmem>>, vector<8x64xf32>
      %187 = arith.maximumf %186, %185 : vector<8x64xf32>
      %c0_87 = arith.constant 0 : index
      %c0_88 = arith.constant 0 : index
      %188 = vector.load %arg15[%c0_87, %c0_88] : memref<8x64xf32, #tpu.memory_space<vmem>>, vector<8x64xf32>
      tpu.vector_store %arg15[%c0_87, %c0_88], %187 {strides = array<i32>} : memref<8x64xf32, #tpu.memory_space<vmem>>, vector<8x64xf32>,
    } else {
    }
    %c3_i32 = arith.constant 3 : i32
    %c7_i32_35 = arith.constant 7 : i32
    %45 = arith.subi %c7_i32_35, %c3_i32 : i32
    %46 = arith.cmpi slt, %c3_i32, %25 : i32
    %47 = arith.cmpi slt, %45, %25 : i32
    %48 = arith.ori %46, %47 : i1
    %49 = arith.extui %48 : i1 to i32
    %c0_i32_36 = arith.constant 0 : i32
    %50 = arith.cmpi ne, %49, %c0_i32_36 : i32
    scf.if %50 {
      %c0_55 = arith.constant 0 : index
      %c0_56 = arith.constant 0 : index
      %82 = vector.load %arg12[%c0_55, %c0_56] : memref<8x64xf32, #tpu.memory_space<vmem>>, vector<8x64xf32>
      %83 = arith.truncf %82 : vector<8x64xf32> to vector<8x64xbf16>
      %cst_57 = arith.constant dense<0.000000e+00> : vector<8x256xf32>
      %84 = tpu.matmul %83, %26, %cst_57 {dimension_numbers = #tpu.dot_dimension_numbers<[1], [0], [0], [1], [0, 0, 1, 1], [], []>} : vector<8x64xbf16>, vector<64x256xbf16>, vector<8x256xf32> -> vector<8x256xf32>
      %85 = arith.index_cast %c3_i32 : i32 to index
      %c0_58 = arith.constant 0 : index
      %c0_59 = arith.constant 0 : index
      %86 = vector.load %arg11[%85, %c0_58, %c0_59] : memref<8x8x256xbf16, #tpu.memory_space<vmem>>, vector<1x8x128xbf16>
      %87 = vector.shape_cast %86 : vector<1x8x128xbf16> to vector<8x128xbf16>
      %88 = vector.extract_strided_slice %84 {offsets = [0, 0], sizes = [8, 128], strides = [1, 1]} : vector<8x256xf32> to vector<8x128xf32>
      %89 = arith.extf %87 : vector<8x128xbf16> to vector<8x128xf32>
      %90 = arith.addf %89, %88 : vector<8x128xf32>
      %91 = arith.index_cast %45 : i32 to index
      %c0_60 = arith.constant 0 : index
      %c128 = arith.constant 128 : index
      %92 = vector.load %arg11[%91, %c0_60, %c128] : memref<8x8x256xbf16, #tpu.memory_space<vmem>>, vector<1x8x128xbf16>
      %93 = vector.shape_cast %92 : vector<1x8x128xbf16> to vector<8x128xbf16>
      %94 = vector.extract_strided_slice %84 {offsets = [0, 128], sizes = [8, 128], strides = [1, 1]} : vector<8x256xf32> to vector<8x128xf32>
      %95 = arith.extf %93 : vector<8x128xbf16> to vector<8x128xf32>
      %96 = arith.addf %95, %94 : vector<8x128xf32>
      %c0_61 = arith.constant 0 : index
      %c0_62 = arith.constant 0 : index
      %97 = vector.load %arg13[%c0_61, %c0_62] : memref<8x32xf32, #tpu.memory_space<vmem>>, vector<8x32xf32>
      %98 = vector.extract_strided_slice %90 {offsets = [0, 0], sizes = [8, 32], strides = [1, 1]} : vector<8x128xf32> to vector<8x32xf32>
      %99 = arith.negf %98 : vector<8x32xf32>
      %100 = math.exp %99 : vector<8x32xf32>
      %cst_63 = arith.constant 1.000000e+00 : f32
      %101 = vector.broadcast %cst_63 : f32 to vector<8x32xf32>
      %102 = arith.addf %101, %100 : vector<8x32xf32>
      %103 = arith.divf %101, %102 : vector<8x32xf32>
      %104 = vector.extract_strided_slice %90 {offsets = [0, 32], sizes = [8, 32], strides = [1, 1]} : vector<8x128xf32> to vector<8x32xf32>
      %105 = arith.negf %104 : vector<8x32xf32>
      %106 = math.exp %105 : vector<8x32xf32>
      %cst_64 = arith.constant 1.000000e+00 : f32
      %107 = vector.broadcast %cst_64 : f32 to vector<8x32xf32>
      %108 = arith.addf %107, %106 : vector<8x32xf32>
      %109 = arith.divf %107, %108 : vector<8x32xf32>
      %110 = vector.extract_strided_slice %90 {offsets = [0, 64], sizes = [8, 32], strides = [1, 1]} : vector<8x128xf32> to vector<8x32xf32>
      %111 = math.tanh %110 : vector<8x32xf32>
      %112 = vector.extract_strided_slice %90 {offsets = [0, 96], sizes = [8, 32], strides = [1, 1]} : vector<8x128xf32> to vector<8x32xf32>
      %113 = arith.negf %112 : vector<8x32xf32>
      %114 = math.exp %113 : vector<8x32xf32>
      %cst_65 = arith.constant 1.000000e+00 : f32
      %115 = vector.broadcast %cst_65 : f32 to vector<8x32xf32>
      %116 = arith.addf %115, %114 : vector<8x32xf32>
      %117 = arith.divf %115, %116 : vector<8x32xf32>
      %118 = arith.mulf %109, %97 : vector<8x32xf32>
      %119 = arith.mulf %103, %111 : vector<8x32xf32>
      %120 = arith.addf %118, %119 : vector<8x32xf32>
      %121 = math.tanh %120 : vector<8x32xf32>
      %122 = arith.mulf %117, %121 : vector<8x32xf32>
      %c0_66 = arith.constant 0 : index
      %c0_67 = arith.constant 0 : index
      %123 = vector.load %arg14[%c0_66, %c0_67] : memref<8x32xf32, #tpu.memory_space<vmem>>, vector<8x32xf32>
      %124 = vector.extract_strided_slice %96 {offsets = [0, 0], sizes = [8, 32], strides = [1, 1]} : vector<8x128xf32> to vector<8x32xf32>
      %125 = arith.negf %124 : vector<8x32xf32>
      %126 = math.exp %125 : vector<8x32xf32>
      %cst_68 = arith.constant 1.000000e+00 : f32
      %127 = vector.broadcast %cst_68 : f32 to vector<8x32xf32>
      %128 = arith.addf %127, %126 : vector<8x32xf32>
      %129 = arith.divf %127, %128 : vector<8x32xf32>
      %130 = vector.extract_strided_slice %96 {offsets = [0, 32], sizes = [8, 32], strides = [1, 1]} : vector<8x128xf32> to vector<8x32xf32>
      %131 = arith.negf %130 : vector<8x32xf32>
      %132 = math.exp %131 : vector<8x32xf32>
      %cst_69 = arith.constant 1.000000e+00 : f32
      %133 = vector.broadcast %cst_69 : f32 to vector<8x32xf32>
      %134 = arith.addf %133, %132 : vector<8x32xf32>
      %135 = arith.divf %133, %134 : vector<8x32xf32>
      %136 = vector.extract_strided_slice %96 {offsets = [0, 64], sizes = [8, 32], strides = [1, 1]} : vector<8x128xf32> to vector<8x32xf32>
      %137 = math.tanh %136 : vector<8x32xf32>
      %138 = vector.extract_strided_slice %96 {offsets = [0, 96], sizes = [8, 32], strides = [1, 1]} : vector<8x128xf32> to vector<8x32xf32>
      %139 = arith.negf %138 : vector<8x32xf32>
      %140 = math.exp %139 : vector<8x32xf32>
      %cst_70 = arith.constant 1.000000e+00 : f32
      %141 = vector.broadcast %cst_70 : f32 to vector<8x32xf32>
      %142 = arith.addf %141, %140 : vector<8x32xf32>
      %143 = arith.divf %141, %142 : vector<8x32xf32>
      %144 = arith.mulf %135, %123 : vector<8x32xf32>
      %145 = arith.mulf %129, %137 : vector<8x32xf32>
      %146 = arith.addf %144, %145 : vector<8x32xf32>
      %147 = math.tanh %146 : vector<8x32xf32>
      %148 = arith.mulf %143, %147 : vector<8x32xf32>
      %149 = vector.broadcast %c3_i32 : i32 to vector<8x1xi32>
      %150 = arith.cmpi slt, %149, %24 : vector<8x1xi32>
      %151 = vector.broadcast %45 : i32 to vector<8x1xi32>
      %152 = arith.cmpi slt, %151, %24 : vector<8x1xi32>
      %153 = vector.extract_strided_slice %82 {offsets = [0, 0], sizes = [8, 32], strides = [1, 1]} : vector<8x64xf32> to vector<8x32xf32>
      %154 = vector.shape_cast %150 : vector<8x1xi1> to vector<8x1xi1>
      %155 = vector.broadcast %154 : vector<8x1xi1> to vector<8x32xi1>
      %156 = arith.select %155, %122, %153 : vector<8x32xi1>, vector<8x32xf32>
      %157 = vector.extract_strided_slice %82 {offsets = [0, 32], sizes = [8, 32], strides = [1, 1]} : vector<8x64xf32> to vector<8x32xf32>
      %158 = vector.shape_cast %152 : vector<8x1xi1> to vector<8x1xi1>
      %159 = vector.broadcast %158 : vector<8x1xi1> to vector<8x32xi1>
      %160 = arith.select %159, %148, %157 : vector<8x32xi1>, vector<8x32xf32>
      %c0_71 = arith.constant 0 : index
      %c0_72 = arith.constant 0 : index
      %161 = vector.load %arg13[%c0_71, %c0_72] : memref<8x32xf32, #tpu.memory_space<vmem>>, vector<8x32xf32>
      %162 = vector.shape_cast %150 : vector<8x1xi1> to vector<8x1xi1>
      %163 = vector.broadcast %162 : vector<8x1xi1> to vector<8x32xi1>
      %164 = arith.select %163, %120, %161 : vector<8x32xi1>, vector<8x32xf32>
      %c0_73 = arith.constant 0 : index
      %c0_74 = arith.constant 0 : index
      %165 = vector.load %arg13[%c0_73, %c0_74] : memref<8x32xf32, #tpu.memory_space<vmem>>, vector<8x32xf32>
      tpu.vector_store %arg13[%c0_73, %c0_74], %164 {strides = array<i32>} : memref<8x32xf32, #tpu.memory_space<vmem>>, vector<8x32xf32>,
      %c0_75 = arith.constant 0 : index
      %c0_76 = arith.constant 0 : index
      %166 = vector.load %arg14[%c0_75, %c0_76] : memref<8x32xf32, #tpu.memory_space<vmem>>, vector<8x32xf32>
      %167 = vector.shape_cast %152 : vector<8x1xi1> to vector<8x1xi1>
      %168 = vector.broadcast %167 : vector<8x1xi1> to vector<8x32xi1>
      %169 = arith.select %168, %146, %166 : vector<8x32xi1>, vector<8x32xf32>
      %c0_77 = arith.constant 0 : index
      %c0_78 = arith.constant 0 : index
      %170 = vector.load %arg14[%c0_77, %c0_78] : memref<8x32xf32, #tpu.memory_space<vmem>>, vector<8x32xf32>
      tpu.vector_store %arg14[%c0_77, %c0_78], %169 {strides = array<i32>} : memref<8x32xf32, #tpu.memory_space<vmem>>, vector<8x32xf32>,
      %171 = tpu.concatenate %156, %160 in 1 : vector<8x32xf32>, vector<8x32xf32> -> vector<8x64xf32>
      %c0_79 = arith.constant 0 : index
      %c0_80 = arith.constant 0 : index
      %172 = vector.load %arg12[%c0_79, %c0_80] : memref<8x64xf32, #tpu.memory_space<vmem>>, vector<8x64xf32>
      tpu.vector_store %arg12[%c0_79, %c0_80], %171 {strides = array<i32>} : memref<8x64xf32, #tpu.memory_space<vmem>>, vector<8x64xf32>,
      %173 = arith.cmpi slt, %c3_i32, %25 : i32
      %cst_81 = arith.constant 0.000000e+00 : f32
      %cst_82 = arith.constant 0xFF800000 : f32
      %174 = arith.select %173, %cst_81, %cst_82 : f32
      %175 = arith.cmpi slt, %45, %25 : i32
      %cst_83 = arith.constant 0.000000e+00 : f32
      %cst_84 = arith.constant 0xFF800000 : f32
      %176 = arith.select %175, %cst_83, %cst_84 : f32
      %177 = vector.shape_cast %150 : vector<8x1xi1> to vector<8x1xi1>
      %178 = vector.broadcast %177 : vector<8x1xi1> to vector<8x32xi1>
      %179 = vector.broadcast %174 : f32 to vector<8x32xf32>
      %180 = arith.select %178, %156, %179 : vector<8x32xi1>, vector<8x32xf32>
      %181 = vector.shape_cast %152 : vector<8x1xi1> to vector<8x1xi1>
      %182 = vector.broadcast %181 : vector<8x1xi1> to vector<8x32xi1>
      %183 = vector.broadcast %176 : f32 to vector<8x32xf32>
      %184 = arith.select %182, %160, %183 : vector<8x32xi1>, vector<8x32xf32>
      %185 = tpu.concatenate %180, %184 in 1 : vector<8x32xf32>, vector<8x32xf32> -> vector<8x64xf32>
      %c0_85 = arith.constant 0 : index
      %c0_86 = arith.constant 0 : index
      %186 = vector.load %arg15[%c0_85, %c0_86] : memref<8x64xf32, #tpu.memory_space<vmem>>, vector<8x64xf32>
      %187 = arith.maximumf %186, %185 : vector<8x64xf32>
      %c0_87 = arith.constant 0 : index
      %c0_88 = arith.constant 0 : index
      %188 = vector.load %arg15[%c0_87, %c0_88] : memref<8x64xf32, #tpu.memory_space<vmem>>, vector<8x64xf32>
      tpu.vector_store %arg15[%c0_87, %c0_88], %187 {strides = array<i32>} : memref<8x64xf32, #tpu.memory_space<vmem>>, vector<8x64xf32>,
    } else {
    }
    %c4_i32 = arith.constant 4 : i32
    %c7_i32_37 = arith.constant 7 : i32
    %51 = arith.subi %c7_i32_37, %c4_i32 : i32
    %52 = arith.cmpi slt, %c4_i32, %25 : i32
    %53 = arith.cmpi slt, %51, %25 : i32
    %54 = arith.ori %52, %53 : i1
    %55 = arith.extui %54 : i1 to i32
    %c0_i32_38 = arith.constant 0 : i32
    %56 = arith.cmpi ne, %55, %c0_i32_38 : i32
    scf.if %56 {
      %c0_55 = arith.constant 0 : index
      %c0_56 = arith.constant 0 : index
      %82 = vector.load %arg12[%c0_55, %c0_56] : memref<8x64xf32, #tpu.memory_space<vmem>>, vector<8x64xf32>
      %83 = arith.truncf %82 : vector<8x64xf32> to vector<8x64xbf16>
      %cst_57 = arith.constant dense<0.000000e+00> : vector<8x256xf32>
      %84 = tpu.matmul %83, %26, %cst_57 {dimension_numbers = #tpu.dot_dimension_numbers<[1], [0], [0], [1], [0, 0, 1, 1], [], []>} : vector<8x64xbf16>, vector<64x256xbf16>, vector<8x256xf32> -> vector<8x256xf32>
      %85 = arith.index_cast %c4_i32 : i32 to index
      %c0_58 = arith.constant 0 : index
      %c0_59 = arith.constant 0 : index
      %86 = vector.load %arg11[%85, %c0_58, %c0_59] : memref<8x8x256xbf16, #tpu.memory_space<vmem>>, vector<1x8x128xbf16>
      %87 = vector.shape_cast %86 : vector<1x8x128xbf16> to vector<8x128xbf16>
      %88 = vector.extract_strided_slice %84 {offsets = [0, 0], sizes = [8, 128], strides = [1, 1]} : vector<8x256xf32> to vector<8x128xf32>
      %89 = arith.extf %87 : vector<8x128xbf16> to vector<8x128xf32>
      %90 = arith.addf %89, %88 : vector<8x128xf32>
      %91 = arith.index_cast %51 : i32 to index
      %c0_60 = arith.constant 0 : index
      %c128 = arith.constant 128 : index
      %92 = vector.load %arg11[%91, %c0_60, %c128] : memref<8x8x256xbf16, #tpu.memory_space<vmem>>, vector<1x8x128xbf16>
      %93 = vector.shape_cast %92 : vector<1x8x128xbf16> to vector<8x128xbf16>
      %94 = vector.extract_strided_slice %84 {offsets = [0, 128], sizes = [8, 128], strides = [1, 1]} : vector<8x256xf32> to vector<8x128xf32>
      %95 = arith.extf %93 : vector<8x128xbf16> to vector<8x128xf32>
      %96 = arith.addf %95, %94 : vector<8x128xf32>
      %c0_61 = arith.constant 0 : index
      %c0_62 = arith.constant 0 : index
      %97 = vector.load %arg13[%c0_61, %c0_62] : memref<8x32xf32, #tpu.memory_space<vmem>>, vector<8x32xf32>
      %98 = vector.extract_strided_slice %90 {offsets = [0, 0], sizes = [8, 32], strides = [1, 1]} : vector<8x128xf32> to vector<8x32xf32>
      %99 = arith.negf %98 : vector<8x32xf32>
      %100 = math.exp %99 : vector<8x32xf32>
      %cst_63 = arith.constant 1.000000e+00 : f32
      %101 = vector.broadcast %cst_63 : f32 to vector<8x32xf32>
      %102 = arith.addf %101, %100 : vector<8x32xf32>
      %103 = arith.divf %101, %102 : vector<8x32xf32>
      %104 = vector.extract_strided_slice %90 {offsets = [0, 32], sizes = [8, 32], strides = [1, 1]} : vector<8x128xf32> to vector<8x32xf32>
      %105 = arith.negf %104 : vector<8x32xf32>
      %106 = math.exp %105 : vector<8x32xf32>
      %cst_64 = arith.constant 1.000000e+00 : f32
      %107 = vector.broadcast %cst_64 : f32 to vector<8x32xf32>
      %108 = arith.addf %107, %106 : vector<8x32xf32>
      %109 = arith.divf %107, %108 : vector<8x32xf32>
      %110 = vector.extract_strided_slice %90 {offsets = [0, 64], sizes = [8, 32], strides = [1, 1]} : vector<8x128xf32> to vector<8x32xf32>
      %111 = math.tanh %110 : vector<8x32xf32>
      %112 = vector.extract_strided_slice %90 {offsets = [0, 96], sizes = [8, 32], strides = [1, 1]} : vector<8x128xf32> to vector<8x32xf32>
      %113 = arith.negf %112 : vector<8x32xf32>
      %114 = math.exp %113 : vector<8x32xf32>
      %cst_65 = arith.constant 1.000000e+00 : f32
      %115 = vector.broadcast %cst_65 : f32 to vector<8x32xf32>
      %116 = arith.addf %115, %114 : vector<8x32xf32>
      %117 = arith.divf %115, %116 : vector<8x32xf32>
      %118 = arith.mulf %109, %97 : vector<8x32xf32>
      %119 = arith.mulf %103, %111 : vector<8x32xf32>
      %120 = arith.addf %118, %119 : vector<8x32xf32>
      %121 = math.tanh %120 : vector<8x32xf32>
      %122 = arith.mulf %117, %121 : vector<8x32xf32>
      %c0_66 = arith.constant 0 : index
      %c0_67 = arith.constant 0 : index
      %123 = vector.load %arg14[%c0_66, %c0_67] : memref<8x32xf32, #tpu.memory_space<vmem>>, vector<8x32xf32>
      %124 = vector.extract_strided_slice %96 {offsets = [0, 0], sizes = [8, 32], strides = [1, 1]} : vector<8x128xf32> to vector<8x32xf32>
      %125 = arith.negf %124 : vector<8x32xf32>
      %126 = math.exp %125 : vector<8x32xf32>
      %cst_68 = arith.constant 1.000000e+00 : f32
      %127 = vector.broadcast %cst_68 : f32 to vector<8x32xf32>
      %128 = arith.addf %127, %126 : vector<8x32xf32>
      %129 = arith.divf %127, %128 : vector<8x32xf32>
      %130 = vector.extract_strided_slice %96 {offsets = [0, 32], sizes = [8, 32], strides = [1, 1]} : vector<8x128xf32> to vector<8x32xf32>
      %131 = arith.negf %130 : vector<8x32xf32>
      %132 = math.exp %131 : vector<8x32xf32>
      %cst_69 = arith.constant 1.000000e+00 : f32
      %133 = vector.broadcast %cst_69 : f32 to vector<8x32xf32>
      %134 = arith.addf %133, %132 : vector<8x32xf32>
      %135 = arith.divf %133, %134 : vector<8x32xf32>
      %136 = vector.extract_strided_slice %96 {offsets = [0, 64], sizes = [8, 32], strides = [1, 1]} : vector<8x128xf32> to vector<8x32xf32>
      %137 = math.tanh %136 : vector<8x32xf32>
      %138 = vector.extract_strided_slice %96 {offsets = [0, 96], sizes = [8, 32], strides = [1, 1]} : vector<8x128xf32> to vector<8x32xf32>
      %139 = arith.negf %138 : vector<8x32xf32>
      %140 = math.exp %139 : vector<8x32xf32>
      %cst_70 = arith.constant 1.000000e+00 : f32
      %141 = vector.broadcast %cst_70 : f32 to vector<8x32xf32>
      %142 = arith.addf %141, %140 : vector<8x32xf32>
      %143 = arith.divf %141, %142 : vector<8x32xf32>
      %144 = arith.mulf %135, %123 : vector<8x32xf32>
      %145 = arith.mulf %129, %137 : vector<8x32xf32>
      %146 = arith.addf %144, %145 : vector<8x32xf32>
      %147 = math.tanh %146 : vector<8x32xf32>
      %148 = arith.mulf %143, %147 : vector<8x32xf32>
      %149 = vector.broadcast %c4_i32 : i32 to vector<8x1xi32>
      %150 = arith.cmpi slt, %149, %24 : vector<8x1xi32>
      %151 = vector.broadcast %51 : i32 to vector<8x1xi32>
      %152 = arith.cmpi slt, %151, %24 : vector<8x1xi32>
      %153 = vector.extract_strided_slice %82 {offsets = [0, 0], sizes = [8, 32], strides = [1, 1]} : vector<8x64xf32> to vector<8x32xf32>
      %154 = vector.shape_cast %150 : vector<8x1xi1> to vector<8x1xi1>
      %155 = vector.broadcast %154 : vector<8x1xi1> to vector<8x32xi1>
      %156 = arith.select %155, %122, %153 : vector<8x32xi1>, vector<8x32xf32>
      %157 = vector.extract_strided_slice %82 {offsets = [0, 32], sizes = [8, 32], strides = [1, 1]} : vector<8x64xf32> to vector<8x32xf32>
      %158 = vector.shape_cast %152 : vector<8x1xi1> to vector<8x1xi1>
      %159 = vector.broadcast %158 : vector<8x1xi1> to vector<8x32xi1>
      %160 = arith.select %159, %148, %157 : vector<8x32xi1>, vector<8x32xf32>
      %c0_71 = arith.constant 0 : index
      %c0_72 = arith.constant 0 : index
      %161 = vector.load %arg13[%c0_71, %c0_72] : memref<8x32xf32, #tpu.memory_space<vmem>>, vector<8x32xf32>
      %162 = vector.shape_cast %150 : vector<8x1xi1> to vector<8x1xi1>
      %163 = vector.broadcast %162 : vector<8x1xi1> to vector<8x32xi1>
      %164 = arith.select %163, %120, %161 : vector<8x32xi1>, vector<8x32xf32>
      %c0_73 = arith.constant 0 : index
      %c0_74 = arith.constant 0 : index
      %165 = vector.load %arg13[%c0_73, %c0_74] : memref<8x32xf32, #tpu.memory_space<vmem>>, vector<8x32xf32>
      tpu.vector_store %arg13[%c0_73, %c0_74], %164 {strides = array<i32>} : memref<8x32xf32, #tpu.memory_space<vmem>>, vector<8x32xf32>,
      %c0_75 = arith.constant 0 : index
      %c0_76 = arith.constant 0 : index
      %166 = vector.load %arg14[%c0_75, %c0_76] : memref<8x32xf32, #tpu.memory_space<vmem>>, vector<8x32xf32>
      %167 = vector.shape_cast %152 : vector<8x1xi1> to vector<8x1xi1>
      %168 = vector.broadcast %167 : vector<8x1xi1> to vector<8x32xi1>
      %169 = arith.select %168, %146, %166 : vector<8x32xi1>, vector<8x32xf32>
      %c0_77 = arith.constant 0 : index
      %c0_78 = arith.constant 0 : index
      %170 = vector.load %arg14[%c0_77, %c0_78] : memref<8x32xf32, #tpu.memory_space<vmem>>, vector<8x32xf32>
      tpu.vector_store %arg14[%c0_77, %c0_78], %169 {strides = array<i32>} : memref<8x32xf32, #tpu.memory_space<vmem>>, vector<8x32xf32>,
      %171 = tpu.concatenate %156, %160 in 1 : vector<8x32xf32>, vector<8x32xf32> -> vector<8x64xf32>
      %c0_79 = arith.constant 0 : index
      %c0_80 = arith.constant 0 : index
      %172 = vector.load %arg12[%c0_79, %c0_80] : memref<8x64xf32, #tpu.memory_space<vmem>>, vector<8x64xf32>
      tpu.vector_store %arg12[%c0_79, %c0_80], %171 {strides = array<i32>} : memref<8x64xf32, #tpu.memory_space<vmem>>, vector<8x64xf32>,
      %173 = arith.cmpi slt, %c4_i32, %25 : i32
      %cst_81 = arith.constant 0.000000e+00 : f32
      %cst_82 = arith.constant 0xFF800000 : f32
      %174 = arith.select %173, %cst_81, %cst_82 : f32
      %175 = arith.cmpi slt, %51, %25 : i32
      %cst_83 = arith.constant 0.000000e+00 : f32
      %cst_84 = arith.constant 0xFF800000 : f32
      %176 = arith.select %175, %cst_83, %cst_84 : f32
      %177 = vector.shape_cast %150 : vector<8x1xi1> to vector<8x1xi1>
      %178 = vector.broadcast %177 : vector<8x1xi1> to vector<8x32xi1>
      %179 = vector.broadcast %174 : f32 to vector<8x32xf32>
      %180 = arith.select %178, %156, %179 : vector<8x32xi1>, vector<8x32xf32>
      %181 = vector.shape_cast %152 : vector<8x1xi1> to vector<8x1xi1>
      %182 = vector.broadcast %181 : vector<8x1xi1> to vector<8x32xi1>
      %183 = vector.broadcast %176 : f32 to vector<8x32xf32>
      %184 = arith.select %182, %160, %183 : vector<8x32xi1>, vector<8x32xf32>
      %185 = tpu.concatenate %180, %184 in 1 : vector<8x32xf32>, vector<8x32xf32> -> vector<8x64xf32>
      %c0_85 = arith.constant 0 : index
      %c0_86 = arith.constant 0 : index
      %186 = vector.load %arg15[%c0_85, %c0_86] : memref<8x64xf32, #tpu.memory_space<vmem>>, vector<8x64xf32>
      %187 = arith.maximumf %186, %185 : vector<8x64xf32>
      %c0_87 = arith.constant 0 : index
      %c0_88 = arith.constant 0 : index
      %188 = vector.load %arg15[%c0_87, %c0_88] : memref<8x64xf32, #tpu.memory_space<vmem>>, vector<8x64xf32>
      tpu.vector_store %arg15[%c0_87, %c0_88], %187 {strides = array<i32>} : memref<8x64xf32, #tpu.memory_space<vmem>>, vector<8x64xf32>,
    } else {
    }
    %c5_i32 = arith.constant 5 : i32
    %c7_i32_39 = arith.constant 7 : i32
    %57 = arith.subi %c7_i32_39, %c5_i32 : i32
    %58 = arith.cmpi slt, %c5_i32, %25 : i32
    %59 = arith.cmpi slt, %57, %25 : i32
    %60 = arith.ori %58, %59 : i1
    %61 = arith.extui %60 : i1 to i32
    %c0_i32_40 = arith.constant 0 : i32
    %62 = arith.cmpi ne, %61, %c0_i32_40 : i32
    scf.if %62 {
      %c0_55 = arith.constant 0 : index
      %c0_56 = arith.constant 0 : index
      %82 = vector.load %arg12[%c0_55, %c0_56] : memref<8x64xf32, #tpu.memory_space<vmem>>, vector<8x64xf32>
      %83 = arith.truncf %82 : vector<8x64xf32> to vector<8x64xbf16>
      %cst_57 = arith.constant dense<0.000000e+00> : vector<8x256xf32>
      %84 = tpu.matmul %83, %26, %cst_57 {dimension_numbers = #tpu.dot_dimension_numbers<[1], [0], [0], [1], [0, 0, 1, 1], [], []>} : vector<8x64xbf16>, vector<64x256xbf16>, vector<8x256xf32> -> vector<8x256xf32>
      %85 = arith.index_cast %c5_i32 : i32 to index
      %c0_58 = arith.constant 0 : index
      %c0_59 = arith.constant 0 : index
      %86 = vector.load %arg11[%85, %c0_58, %c0_59] : memref<8x8x256xbf16, #tpu.memory_space<vmem>>, vector<1x8x128xbf16>
      %87 = vector.shape_cast %86 : vector<1x8x128xbf16> to vector<8x128xbf16>
      %88 = vector.extract_strided_slice %84 {offsets = [0, 0], sizes = [8, 128], strides = [1, 1]} : vector<8x256xf32> to vector<8x128xf32>
      %89 = arith.extf %87 : vector<8x128xbf16> to vector<8x128xf32>
      %90 = arith.addf %89, %88 : vector<8x128xf32>
      %91 = arith.index_cast %57 : i32 to index
      %c0_60 = arith.constant 0 : index
      %c128 = arith.constant 128 : index
      %92 = vector.load %arg11[%91, %c0_60, %c128] : memref<8x8x256xbf16, #tpu.memory_space<vmem>>, vector<1x8x128xbf16>
      %93 = vector.shape_cast %92 : vector<1x8x128xbf16> to vector<8x128xbf16>
      %94 = vector.extract_strided_slice %84 {offsets = [0, 128], sizes = [8, 128], strides = [1, 1]} : vector<8x256xf32> to vector<8x128xf32>
      %95 = arith.extf %93 : vector<8x128xbf16> to vector<8x128xf32>
      %96 = arith.addf %95, %94 : vector<8x128xf32>
      %c0_61 = arith.constant 0 : index
      %c0_62 = arith.constant 0 : index
      %97 = vector.load %arg13[%c0_61, %c0_62] : memref<8x32xf32, #tpu.memory_space<vmem>>, vector<8x32xf32>
      %98 = vector.extract_strided_slice %90 {offsets = [0, 0], sizes = [8, 32], strides = [1, 1]} : vector<8x128xf32> to vector<8x32xf32>
      %99 = arith.negf %98 : vector<8x32xf32>
      %100 = math.exp %99 : vector<8x32xf32>
      %cst_63 = arith.constant 1.000000e+00 : f32
      %101 = vector.broadcast %cst_63 : f32 to vector<8x32xf32>
      %102 = arith.addf %101, %100 : vector<8x32xf32>
      %103 = arith.divf %101, %102 : vector<8x32xf32>
      %104 = vector.extract_strided_slice %90 {offsets = [0, 32], sizes = [8, 32], strides = [1, 1]} : vector<8x128xf32> to vector<8x32xf32>
      %105 = arith.negf %104 : vector<8x32xf32>
      %106 = math.exp %105 : vector<8x32xf32>
      %cst_64 = arith.constant 1.000000e+00 : f32
      %107 = vector.broadcast %cst_64 : f32 to vector<8x32xf32>
      %108 = arith.addf %107, %106 : vector<8x32xf32>
      %109 = arith.divf %107, %108 : vector<8x32xf32>
      %110 = vector.extract_strided_slice %90 {offsets = [0, 64], sizes = [8, 32], strides = [1, 1]} : vector<8x128xf32> to vector<8x32xf32>
      %111 = math.tanh %110 : vector<8x32xf32>
      %112 = vector.extract_strided_slice %90 {offsets = [0, 96], sizes = [8, 32], strides = [1, 1]} : vector<8x128xf32> to vector<8x32xf32>
      %113 = arith.negf %112 : vector<8x32xf32>
      %114 = math.exp %113 : vector<8x32xf32>
      %cst_65 = arith.constant 1.000000e+00 : f32
      %115 = vector.broadcast %cst_65 : f32 to vector<8x32xf32>
      %116 = arith.addf %115, %114 : vector<8x32xf32>
      %117 = arith.divf %115, %116 : vector<8x32xf32>
      %118 = arith.mulf %109, %97 : vector<8x32xf32>
      %119 = arith.mulf %103, %111 : vector<8x32xf32>
      %120 = arith.addf %118, %119 : vector<8x32xf32>
      %121 = math.tanh %120 : vector<8x32xf32>
      %122 = arith.mulf %117, %121 : vector<8x32xf32>
      %c0_66 = arith.constant 0 : index
      %c0_67 = arith.constant 0 : index
      %123 = vector.load %arg14[%c0_66, %c0_67] : memref<8x32xf32, #tpu.memory_space<vmem>>, vector<8x32xf32>
      %124 = vector.extract_strided_slice %96 {offsets = [0, 0], sizes = [8, 32], strides = [1, 1]} : vector<8x128xf32> to vector<8x32xf32>
      %125 = arith.negf %124 : vector<8x32xf32>
      %126 = math.exp %125 : vector<8x32xf32>
      %cst_68 = arith.constant 1.000000e+00 : f32
      %127 = vector.broadcast %cst_68 : f32 to vector<8x32xf32>
      %128 = arith.addf %127, %126 : vector<8x32xf32>
      %129 = arith.divf %127, %128 : vector<8x32xf32>
      %130 = vector.extract_strided_slice %96 {offsets = [0, 32], sizes = [8, 32], strides = [1, 1]} : vector<8x128xf32> to vector<8x32xf32>
      %131 = arith.negf %130 : vector<8x32xf32>
      %132 = math.exp %131 : vector<8x32xf32>
      %cst_69 = arith.constant 1.000000e+00 : f32
      %133 = vector.broadcast %cst_69 : f32 to vector<8x32xf32>
      %134 = arith.addf %133, %132 : vector<8x32xf32>
      %135 = arith.divf %133, %134 : vector<8x32xf32>
      %136 = vector.extract_strided_slice %96 {offsets = [0, 64], sizes = [8, 32], strides = [1, 1]} : vector<8x128xf32> to vector<8x32xf32>
      %137 = math.tanh %136 : vector<8x32xf32>
      %138 = vector.extract_strided_slice %96 {offsets = [0, 96], sizes = [8, 32], strides = [1, 1]} : vector<8x128xf32> to vector<8x32xf32>
      %139 = arith.negf %138 : vector<8x32xf32>
      %140 = math.exp %139 : vector<8x32xf32>
      %cst_70 = arith.constant 1.000000e+00 : f32
      %141 = vector.broadcast %cst_70 : f32 to vector<8x32xf32>
      %142 = arith.addf %141, %140 : vector<8x32xf32>
      %143 = arith.divf %141, %142 : vector<8x32xf32>
      %144 = arith.mulf %135, %123 : vector<8x32xf32>
      %145 = arith.mulf %129, %137 : vector<8x32xf32>
      %146 = arith.addf %144, %145 : vector<8x32xf32>
      %147 = math.tanh %146 : vector<8x32xf32>
      %148 = arith.mulf %143, %147 : vector<8x32xf32>
      %149 = vector.broadcast %c5_i32 : i32 to vector<8x1xi32>
      %150 = arith.cmpi slt, %149, %24 : vector<8x1xi32>
      %151 = vector.broadcast %57 : i32 to vector<8x1xi32>
      %152 = arith.cmpi slt, %151, %24 : vector<8x1xi32>
      %153 = vector.extract_strided_slice %82 {offsets = [0, 0], sizes = [8, 32], strides = [1, 1]} : vector<8x64xf32> to vector<8x32xf32>
      %154 = vector.shape_cast %150 : vector<8x1xi1> to vector<8x1xi1>
      %155 = vector.broadcast %154 : vector<8x1xi1> to vector<8x32xi1>
      %156 = arith.select %155, %122, %153 : vector<8x32xi1>, vector<8x32xf32>
      %157 = vector.extract_strided_slice %82 {offsets = [0, 32], sizes = [8, 32], strides = [1, 1]} : vector<8x64xf32> to vector<8x32xf32>
      %158 = vector.shape_cast %152 : vector<8x1xi1> to vector<8x1xi1>
      %159 = vector.broadcast %158 : vector<8x1xi1> to vector<8x32xi1>
      %160 = arith.select %159, %148, %157 : vector<8x32xi1>, vector<8x32xf32>
      %c0_71 = arith.constant 0 : index
      %c0_72 = arith.constant 0 : index
      %161 = vector.load %arg13[%c0_71, %c0_72] : memref<8x32xf32, #tpu.memory_space<vmem>>, vector<8x32xf32>
      %162 = vector.shape_cast %150 : vector<8x1xi1> to vector<8x1xi1>
      %163 = vector.broadcast %162 : vector<8x1xi1> to vector<8x32xi1>
      %164 = arith.select %163, %120, %161 : vector<8x32xi1>, vector<8x32xf32>
      %c0_73 = arith.constant 0 : index
      %c0_74 = arith.constant 0 : index
      %165 = vector.load %arg13[%c0_73, %c0_74] : memref<8x32xf32, #tpu.memory_space<vmem>>, vector<8x32xf32>
      tpu.vector_store %arg13[%c0_73, %c0_74], %164 {strides = array<i32>} : memref<8x32xf32, #tpu.memory_space<vmem>>, vector<8x32xf32>,
      %c0_75 = arith.constant 0 : index
      %c0_76 = arith.constant 0 : index
      %166 = vector.load %arg14[%c0_75, %c0_76] : memref<8x32xf32, #tpu.memory_space<vmem>>, vector<8x32xf32>
      %167 = vector.shape_cast %152 : vector<8x1xi1> to vector<8x1xi1>
      %168 = vector.broadcast %167 : vector<8x1xi1> to vector<8x32xi1>
      %169 = arith.select %168, %146, %166 : vector<8x32xi1>, vector<8x32xf32>
      %c0_77 = arith.constant 0 : index
      %c0_78 = arith.constant 0 : index
      %170 = vector.load %arg14[%c0_77, %c0_78] : memref<8x32xf32, #tpu.memory_space<vmem>>, vector<8x32xf32>
      tpu.vector_store %arg14[%c0_77, %c0_78], %169 {strides = array<i32>} : memref<8x32xf32, #tpu.memory_space<vmem>>, vector<8x32xf32>,
      %171 = tpu.concatenate %156, %160 in 1 : vector<8x32xf32>, vector<8x32xf32> -> vector<8x64xf32>
      %c0_79 = arith.constant 0 : index
      %c0_80 = arith.constant 0 : index
      %172 = vector.load %arg12[%c0_79, %c0_80] : memref<8x64xf32, #tpu.memory_space<vmem>>, vector<8x64xf32>
      tpu.vector_store %arg12[%c0_79, %c0_80], %171 {strides = array<i32>} : memref<8x64xf32, #tpu.memory_space<vmem>>, vector<8x64xf32>,
      %173 = arith.cmpi slt, %c5_i32, %25 : i32
      %cst_81 = arith.constant 0.000000e+00 : f32
      %cst_82 = arith.constant 0xFF800000 : f32
      %174 = arith.select %173, %cst_81, %cst_82 : f32
      %175 = arith.cmpi slt, %57, %25 : i32
      %cst_83 = arith.constant 0.000000e+00 : f32
      %cst_84 = arith.constant 0xFF800000 : f32
      %176 = arith.select %175, %cst_83, %cst_84 : f32
      %177 = vector.shape_cast %150 : vector<8x1xi1> to vector<8x1xi1>
      %178 = vector.broadcast %177 : vector<8x1xi1> to vector<8x32xi1>
      %179 = vector.broadcast %174 : f32 to vector<8x32xf32>
      %180 = arith.select %178, %156, %179 : vector<8x32xi1>, vector<8x32xf32>
      %181 = vector.shape_cast %152 : vector<8x1xi1> to vector<8x1xi1>
      %182 = vector.broadcast %181 : vector<8x1xi1> to vector<8x32xi1>
      %183 = vector.broadcast %176 : f32 to vector<8x32xf32>
      %184 = arith.select %182, %160, %183 : vector<8x32xi1>, vector<8x32xf32>
      %185 = tpu.concatenate %180, %184 in 1 : vector<8x32xf32>, vector<8x32xf32> -> vector<8x64xf32>
      %c0_85 = arith.constant 0 : index
      %c0_86 = arith.constant 0 : index
      %186 = vector.load %arg15[%c0_85, %c0_86] : memref<8x64xf32, #tpu.memory_space<vmem>>, vector<8x64xf32>
      %187 = arith.maximumf %186, %185 : vector<8x64xf32>
      %c0_87 = arith.constant 0 : index
      %c0_88 = arith.constant 0 : index
      %188 = vector.load %arg15[%c0_87, %c0_88] : memref<8x64xf32, #tpu.memory_space<vmem>>, vector<8x64xf32>
      tpu.vector_store %arg15[%c0_87, %c0_88], %187 {strides = array<i32>} : memref<8x64xf32, #tpu.memory_space<vmem>>, vector<8x64xf32>,
    } else {
    }
    %c6_i32 = arith.constant 6 : i32
    %c7_i32_41 = arith.constant 7 : i32
    %63 = arith.subi %c7_i32_41, %c6_i32 : i32
    %64 = arith.cmpi slt, %c6_i32, %25 : i32
    %65 = arith.cmpi slt, %63, %25 : i32
    %66 = arith.ori %64, %65 : i1
    %67 = arith.extui %66 : i1 to i32
    %c0_i32_42 = arith.constant 0 : i32
    %68 = arith.cmpi ne, %67, %c0_i32_42 : i32
    scf.if %68 {
      %c0_55 = arith.constant 0 : index
      %c0_56 = arith.constant 0 : index
      %82 = vector.load %arg12[%c0_55, %c0_56] : memref<8x64xf32, #tpu.memory_space<vmem>>, vector<8x64xf32>
      %83 = arith.truncf %82 : vector<8x64xf32> to vector<8x64xbf16>
      %cst_57 = arith.constant dense<0.000000e+00> : vector<8x256xf32>
      %84 = tpu.matmul %83, %26, %cst_57 {dimension_numbers = #tpu.dot_dimension_numbers<[1], [0], [0], [1], [0, 0, 1, 1], [], []>} : vector<8x64xbf16>, vector<64x256xbf16>, vector<8x256xf32> -> vector<8x256xf32>
      %85 = arith.index_cast %c6_i32 : i32 to index
      %c0_58 = arith.constant 0 : index
      %c0_59 = arith.constant 0 : index
      %86 = vector.load %arg11[%85, %c0_58, %c0_59] : memref<8x8x256xbf16, #tpu.memory_space<vmem>>, vector<1x8x128xbf16>
      %87 = vector.shape_cast %86 : vector<1x8x128xbf16> to vector<8x128xbf16>
      %88 = vector.extract_strided_slice %84 {offsets = [0, 0], sizes = [8, 128], strides = [1, 1]} : vector<8x256xf32> to vector<8x128xf32>
      %89 = arith.extf %87 : vector<8x128xbf16> to vector<8x128xf32>
      %90 = arith.addf %89, %88 : vector<8x128xf32>
      %91 = arith.index_cast %63 : i32 to index
      %c0_60 = arith.constant 0 : index
      %c128 = arith.constant 128 : index
      %92 = vector.load %arg11[%91, %c0_60, %c128] : memref<8x8x256xbf16, #tpu.memory_space<vmem>>, vector<1x8x128xbf16>
      %93 = vector.shape_cast %92 : vector<1x8x128xbf16> to vector<8x128xbf16>
      %94 = vector.extract_strided_slice %84 {offsets = [0, 128], sizes = [8, 128], strides = [1, 1]} : vector<8x256xf32> to vector<8x128xf32>
      %95 = arith.extf %93 : vector<8x128xbf16> to vector<8x128xf32>
      %96 = arith.addf %95, %94 : vector<8x128xf32>
      %c0_61 = arith.constant 0 : index
      %c0_62 = arith.constant 0 : index
      %97 = vector.load %arg13[%c0_61, %c0_62] : memref<8x32xf32, #tpu.memory_space<vmem>>, vector<8x32xf32>
      %98 = vector.extract_strided_slice %90 {offsets = [0, 0], sizes = [8, 32], strides = [1, 1]} : vector<8x128xf32> to vector<8x32xf32>
      %99 = arith.negf %98 : vector<8x32xf32>
      %100 = math.exp %99 : vector<8x32xf32>
      %cst_63 = arith.constant 1.000000e+00 : f32
      %101 = vector.broadcast %cst_63 : f32 to vector<8x32xf32>
      %102 = arith.addf %101, %100 : vector<8x32xf32>
      %103 = arith.divf %101, %102 : vector<8x32xf32>
      %104 = vector.extract_strided_slice %90 {offsets = [0, 32], sizes = [8, 32], strides = [1, 1]} : vector<8x128xf32> to vector<8x32xf32>
      %105 = arith.negf %104 : vector<8x32xf32>
      %106 = math.exp %105 : vector<8x32xf32>
      %cst_64 = arith.constant 1.000000e+00 : f32
      %107 = vector.broadcast %cst_64 : f32 to vector<8x32xf32>
      %108 = arith.addf %107, %106 : vector<8x32xf32>
      %109 = arith.divf %107, %108 : vector<8x32xf32>
      %110 = vector.extract_strided_slice %90 {offsets = [0, 64], sizes = [8, 32], strides = [1, 1]} : vector<8x128xf32> to vector<8x32xf32>
      %111 = math.tanh %110 : vector<8x32xf32>
      %112 = vector.extract_strided_slice %90 {offsets = [0, 96], sizes = [8, 32], strides = [1, 1]} : vector<8x128xf32> to vector<8x32xf32>
      %113 = arith.negf %112 : vector<8x32xf32>
      %114 = math.exp %113 : vector<8x32xf32>
      %cst_65 = arith.constant 1.000000e+00 : f32
      %115 = vector.broadcast %cst_65 : f32 to vector<8x32xf32>
      %116 = arith.addf %115, %114 : vector<8x32xf32>
      %117 = arith.divf %115, %116 : vector<8x32xf32>
      %118 = arith.mulf %109, %97 : vector<8x32xf32>
      %119 = arith.mulf %103, %111 : vector<8x32xf32>
      %120 = arith.addf %118, %119 : vector<8x32xf32>
      %121 = math.tanh %120 : vector<8x32xf32>
      %122 = arith.mulf %117, %121 : vector<8x32xf32>
      %c0_66 = arith.constant 0 : index
      %c0_67 = arith.constant 0 : index
      %123 = vector.load %arg14[%c0_66, %c0_67] : memref<8x32xf32, #tpu.memory_space<vmem>>, vector<8x32xf32>
      %124 = vector.extract_strided_slice %96 {offsets = [0, 0], sizes = [8, 32], strides = [1, 1]} : vector<8x128xf32> to vector<8x32xf32>
      %125 = arith.negf %124 : vector<8x32xf32>
      %126 = math.exp %125 : vector<8x32xf32>
      %cst_68 = arith.constant 1.000000e+00 : f32
      %127 = vector.broadcast %cst_68 : f32 to vector<8x32xf32>
      %128 = arith.addf %127, %126 : vector<8x32xf32>
      %129 = arith.divf %127, %128 : vector<8x32xf32>
      %130 = vector.extract_strided_slice %96 {offsets = [0, 32], sizes = [8, 32], strides = [1, 1]} : vector<8x128xf32> to vector<8x32xf32>
      %131 = arith.negf %130 : vector<8x32xf32>
      %132 = math.exp %131 : vector<8x32xf32>
      %cst_69 = arith.constant 1.000000e+00 : f32
      %133 = vector.broadcast %cst_69 : f32 to vector<8x32xf32>
      %134 = arith.addf %133, %132 : vector<8x32xf32>
      %135 = arith.divf %133, %134 : vector<8x32xf32>
      %136 = vector.extract_strided_slice %96 {offsets = [0, 64], sizes = [8, 32], strides = [1, 1]} : vector<8x128xf32> to vector<8x32xf32>
      %137 = math.tanh %136 : vector<8x32xf32>
      %138 = vector.extract_strided_slice %96 {offsets = [0, 96], sizes = [8, 32], strides = [1, 1]} : vector<8x128xf32> to vector<8x32xf32>
      %139 = arith.negf %138 : vector<8x32xf32>
      %140 = math.exp %139 : vector<8x32xf32>
      %cst_70 = arith.constant 1.000000e+00 : f32
      %141 = vector.broadcast %cst_70 : f32 to vector<8x32xf32>
      %142 = arith.addf %141, %140 : vector<8x32xf32>
      %143 = arith.divf %141, %142 : vector<8x32xf32>
      %144 = arith.mulf %135, %123 : vector<8x32xf32>
      %145 = arith.mulf %129, %137 : vector<8x32xf32>
      %146 = arith.addf %144, %145 : vector<8x32xf32>
      %147 = math.tanh %146 : vector<8x32xf32>
      %148 = arith.mulf %143, %147 : vector<8x32xf32>
      %149 = vector.broadcast %c6_i32 : i32 to vector<8x1xi32>
      %150 = arith.cmpi slt, %149, %24 : vector<8x1xi32>
      %151 = vector.broadcast %63 : i32 to vector<8x1xi32>
      %152 = arith.cmpi slt, %151, %24 : vector<8x1xi32>
      %153 = vector.extract_strided_slice %82 {offsets = [0, 0], sizes = [8, 32], strides = [1, 1]} : vector<8x64xf32> to vector<8x32xf32>
      %154 = vector.shape_cast %150 : vector<8x1xi1> to vector<8x1xi1>
      %155 = vector.broadcast %154 : vector<8x1xi1> to vector<8x32xi1>
      %156 = arith.select %155, %122, %153 : vector<8x32xi1>, vector<8x32xf32>
      %157 = vector.extract_strided_slice %82 {offsets = [0, 32], sizes = [8, 32], strides = [1, 1]} : vector<8x64xf32> to vector<8x32xf32>
      %158 = vector.shape_cast %152 : vector<8x1xi1> to vector<8x1xi1>
      %159 = vector.broadcast %158 : vector<8x1xi1> to vector<8x32xi1>
      %160 = arith.select %159, %148, %157 : vector<8x32xi1>, vector<8x32xf32>
      %c0_71 = arith.constant 0 : index
      %c0_72 = arith.constant 0 : index
      %161 = vector.load %arg13[%c0_71, %c0_72] : memref<8x32xf32, #tpu.memory_space<vmem>>, vector<8x32xf32>
      %162 = vector.shape_cast %150 : vector<8x1xi1> to vector<8x1xi1>
      %163 = vector.broadcast %162 : vector<8x1xi1> to vector<8x32xi1>
      %164 = arith.select %163, %120, %161 : vector<8x32xi1>, vector<8x32xf32>
      %c0_73 = arith.constant 0 : index
      %c0_74 = arith.constant 0 : index
      %165 = vector.load %arg13[%c0_73, %c0_74] : memref<8x32xf32, #tpu.memory_space<vmem>>, vector<8x32xf32>
      tpu.vector_store %arg13[%c0_73, %c0_74], %164 {strides = array<i32>} : memref<8x32xf32, #tpu.memory_space<vmem>>, vector<8x32xf32>,
      %c0_75 = arith.constant 0 : index
      %c0_76 = arith.constant 0 : index
      %166 = vector.load %arg14[%c0_75, %c0_76] : memref<8x32xf32, #tpu.memory_space<vmem>>, vector<8x32xf32>
      %167 = vector.shape_cast %152 : vector<8x1xi1> to vector<8x1xi1>
      %168 = vector.broadcast %167 : vector<8x1xi1> to vector<8x32xi1>
      %169 = arith.select %168, %146, %166 : vector<8x32xi1>, vector<8x32xf32>
      %c0_77 = arith.constant 0 : index
      %c0_78 = arith.constant 0 : index
      %170 = vector.load %arg14[%c0_77, %c0_78] : memref<8x32xf32, #tpu.memory_space<vmem>>, vector<8x32xf32>
      tpu.vector_store %arg14[%c0_77, %c0_78], %169 {strides = array<i32>} : memref<8x32xf32, #tpu.memory_space<vmem>>, vector<8x32xf32>,
      %171 = tpu.concatenate %156, %160 in 1 : vector<8x32xf32>, vector<8x32xf32> -> vector<8x64xf32>
      %c0_79 = arith.constant 0 : index
      %c0_80 = arith.constant 0 : index
      %172 = vector.load %arg12[%c0_79, %c0_80] : memref<8x64xf32, #tpu.memory_space<vmem>>, vector<8x64xf32>
      tpu.vector_store %arg12[%c0_79, %c0_80], %171 {strides = array<i32>} : memref<8x64xf32, #tpu.memory_space<vmem>>, vector<8x64xf32>,
      %173 = arith.cmpi slt, %c6_i32, %25 : i32
      %cst_81 = arith.constant 0.000000e+00 : f32
      %cst_82 = arith.constant 0xFF800000 : f32
      %174 = arith.select %173, %cst_81, %cst_82 : f32
      %175 = arith.cmpi slt, %63, %25 : i32
      %cst_83 = arith.constant 0.000000e+00 : f32
      %cst_84 = arith.constant 0xFF800000 : f32
      %176 = arith.select %175, %cst_83, %cst_84 : f32
      %177 = vector.shape_cast %150 : vector<8x1xi1> to vector<8x1xi1>
      %178 = vector.broadcast %177 : vector<8x1xi1> to vector<8x32xi1>
      %179 = vector.broadcast %174 : f32 to vector<8x32xf32>
      %180 = arith.select %178, %156, %179 : vector<8x32xi1>, vector<8x32xf32>
      %181 = vector.shape_cast %152 : vector<8x1xi1> to vector<8x1xi1>
      %182 = vector.broadcast %181 : vector<8x1xi1> to vector<8x32xi1>
      %183 = vector.broadcast %176 : f32 to vector<8x32xf32>
      %184 = arith.select %182, %160, %183 : vector<8x32xi1>, vector<8x32xf32>
      %185 = tpu.concatenate %180, %184 in 1 : vector<8x32xf32>, vector<8x32xf32> -> vector<8x64xf32>
      %c0_85 = arith.constant 0 : index
      %c0_86 = arith.constant 0 : index
      %186 = vector.load %arg15[%c0_85, %c0_86] : memref<8x64xf32, #tpu.memory_space<vmem>>, vector<8x64xf32>
      %187 = arith.maximumf %186, %185 : vector<8x64xf32>
      %c0_87 = arith.constant 0 : index
      %c0_88 = arith.constant 0 : index
      %188 = vector.load %arg15[%c0_87, %c0_88] : memref<8x64xf32, #tpu.memory_space<vmem>>, vector<8x64xf32>
      tpu.vector_store %arg15[%c0_87, %c0_88], %187 {strides = array<i32>} : memref<8x64xf32, #tpu.memory_space<vmem>>, vector<8x64xf32>,
    } else {
    }
    %c7_i32_43 = arith.constant 7 : i32
    %c7_i32_44 = arith.constant 7 : i32
    %69 = arith.subi %c7_i32_44, %c7_i32_43 : i32
    %70 = arith.cmpi slt, %c7_i32_43, %25 : i32
    %71 = arith.cmpi slt, %69, %25 : i32
    %72 = arith.ori %70, %71 : i1
    %73 = arith.extui %72 : i1 to i32
    %c0_i32_45 = arith.constant 0 : i32
    %74 = arith.cmpi ne, %73, %c0_i32_45 : i32
    scf.if %74 {
      %c0_55 = arith.constant 0 : index
      %c0_56 = arith.constant 0 : index
      %82 = vector.load %arg12[%c0_55, %c0_56] : memref<8x64xf32, #tpu.memory_space<vmem>>, vector<8x64xf32>
      %83 = arith.truncf %82 : vector<8x64xf32> to vector<8x64xbf16>
      %cst_57 = arith.constant dense<0.000000e+00> : vector<8x256xf32>
      %84 = tpu.matmul %83, %26, %cst_57 {dimension_numbers = #tpu.dot_dimension_numbers<[1], [0], [0], [1], [0, 0, 1, 1], [], []>} : vector<8x64xbf16>, vector<64x256xbf16>, vector<8x256xf32> -> vector<8x256xf32>
      %85 = arith.index_cast %c7_i32_43 : i32 to index
      %c0_58 = arith.constant 0 : index
      %c0_59 = arith.constant 0 : index
      %86 = vector.load %arg11[%85, %c0_58, %c0_59] : memref<8x8x256xbf16, #tpu.memory_space<vmem>>, vector<1x8x128xbf16>
      %87 = vector.shape_cast %86 : vector<1x8x128xbf16> to vector<8x128xbf16>
      %88 = vector.extract_strided_slice %84 {offsets = [0, 0], sizes = [8, 128], strides = [1, 1]} : vector<8x256xf32> to vector<8x128xf32>
      %89 = arith.extf %87 : vector<8x128xbf16> to vector<8x128xf32>
      %90 = arith.addf %89, %88 : vector<8x128xf32>
      %91 = arith.index_cast %69 : i32 to index
      %c0_60 = arith.constant 0 : index
      %c128 = arith.constant 128 : index
      %92 = vector.load %arg11[%91, %c0_60, %c128] : memref<8x8x256xbf16, #tpu.memory_space<vmem>>, vector<1x8x128xbf16>
      %93 = vector.shape_cast %92 : vector<1x8x128xbf16> to vector<8x128xbf16>
      %94 = vector.extract_strided_slice %84 {offsets = [0, 128], sizes = [8, 128], strides = [1, 1]} : vector<8x256xf32> to vector<8x128xf32>
      %95 = arith.extf %93 : vector<8x128xbf16> to vector<8x128xf32>
      %96 = arith.addf %95, %94 : vector<8x128xf32>
      %c0_61 = arith.constant 0 : index
      %c0_62 = arith.constant 0 : index
      %97 = vector.load %arg13[%c0_61, %c0_62] : memref<8x32xf32, #tpu.memory_space<vmem>>, vector<8x32xf32>
      %98 = vector.extract_strided_slice %90 {offsets = [0, 0], sizes = [8, 32], strides = [1, 1]} : vector<8x128xf32> to vector<8x32xf32>
      %99 = arith.negf %98 : vector<8x32xf32>
      %100 = math.exp %99 : vector<8x32xf32>
      %cst_63 = arith.constant 1.000000e+00 : f32
      %101 = vector.broadcast %cst_63 : f32 to vector<8x32xf32>
      %102 = arith.addf %101, %100 : vector<8x32xf32>
      %103 = arith.divf %101, %102 : vector<8x32xf32>
      %104 = vector.extract_strided_slice %90 {offsets = [0, 32], sizes = [8, 32], strides = [1, 1]} : vector<8x128xf32> to vector<8x32xf32>
      %105 = arith.negf %104 : vector<8x32xf32>
      %106 = math.exp %105 : vector<8x32xf32>
      %cst_64 = arith.constant 1.000000e+00 : f32
      %107 = vector.broadcast %cst_64 : f32 to vector<8x32xf32>
      %108 = arith.addf %107, %106 : vector<8x32xf32>
      %109 = arith.divf %107, %108 : vector<8x32xf32>
      %110 = vector.extract_strided_slice %90 {offsets = [0, 64], sizes = [8, 32], strides = [1, 1]} : vector<8x128xf32> to vector<8x32xf32>
      %111 = math.tanh %110 : vector<8x32xf32>
      %112 = vector.extract_strided_slice %90 {offsets = [0, 96], sizes = [8, 32], strides = [1, 1]} : vector<8x128xf32> to vector<8x32xf32>
      %113 = arith.negf %112 : vector<8x32xf32>
      %114 = math.exp %113 : vector<8x32xf32>
      %cst_65 = arith.constant 1.000000e+00 : f32
      %115 = vector.broadcast %cst_65 : f32 to vector<8x32xf32>
      %116 = arith.addf %115, %114 : vector<8x32xf32>
      %117 = arith.divf %115, %116 : vector<8x32xf32>
      %118 = arith.mulf %109, %97 : vector<8x32xf32>
      %119 = arith.mulf %103, %111 : vector<8x32xf32>
      %120 = arith.addf %118, %119 : vector<8x32xf32>
      %121 = math.tanh %120 : vector<8x32xf32>
      %122 = arith.mulf %117, %121 : vector<8x32xf32>
      %c0_66 = arith.constant 0 : index
      %c0_67 = arith.constant 0 : index
      %123 = vector.load %arg14[%c0_66, %c0_67] : memref<8x32xf32, #tpu.memory_space<vmem>>, vector<8x32xf32>
      %124 = vector.extract_strided_slice %96 {offsets = [0, 0], sizes = [8, 32], strides = [1, 1]} : vector<8x128xf32> to vector<8x32xf32>
      %125 = arith.negf %124 : vector<8x32xf32>
      %126 = math.exp %125 : vector<8x32xf32>
      %cst_68 = arith.constant 1.000000e+00 : f32
      %127 = vector.broadcast %cst_68 : f32 to vector<8x32xf32>
      %128 = arith.addf %127, %126 : vector<8x32xf32>
      %129 = arith.divf %127, %128 : vector<8x32xf32>
      %130 = vector.extract_strided_slice %96 {offsets = [0, 32], sizes = [8, 32], strides = [1, 1]} : vector<8x128xf32> to vector<8x32xf32>
      %131 = arith.negf %130 : vector<8x32xf32>
      %132 = math.exp %131 : vector<8x32xf32>
      %cst_69 = arith.constant 1.000000e+00 : f32
      %133 = vector.broadcast %cst_69 : f32 to vector<8x32xf32>
      %134 = arith.addf %133, %132 : vector<8x32xf32>
      %135 = arith.divf %133, %134 : vector<8x32xf32>
      %136 = vector.extract_strided_slice %96 {offsets = [0, 64], sizes = [8, 32], strides = [1, 1]} : vector<8x128xf32> to vector<8x32xf32>
      %137 = math.tanh %136 : vector<8x32xf32>
      %138 = vector.extract_strided_slice %96 {offsets = [0, 96], sizes = [8, 32], strides = [1, 1]} : vector<8x128xf32> to vector<8x32xf32>
      %139 = arith.negf %138 : vector<8x32xf32>
      %140 = math.exp %139 : vector<8x32xf32>
      %cst_70 = arith.constant 1.000000e+00 : f32
      %141 = vector.broadcast %cst_70 : f32 to vector<8x32xf32>
      %142 = arith.addf %141, %140 : vector<8x32xf32>
      %143 = arith.divf %141, %142 : vector<8x32xf32>
      %144 = arith.mulf %135, %123 : vector<8x32xf32>
      %145 = arith.mulf %129, %137 : vector<8x32xf32>
      %146 = arith.addf %144, %145 : vector<8x32xf32>
      %147 = math.tanh %146 : vector<8x32xf32>
      %148 = arith.mulf %143, %147 : vector<8x32xf32>
      %149 = vector.broadcast %c7_i32_43 : i32 to vector<8x1xi32>
      %150 = arith.cmpi slt, %149, %24 : vector<8x1xi32>
      %151 = vector.broadcast %69 : i32 to vector<8x1xi32>
      %152 = arith.cmpi slt, %151, %24 : vector<8x1xi32>
      %153 = vector.extract_strided_slice %82 {offsets = [0, 0], sizes = [8, 32], strides = [1, 1]} : vector<8x64xf32> to vector<8x32xf32>
      %154 = vector.shape_cast %150 : vector<8x1xi1> to vector<8x1xi1>
      %155 = vector.broadcast %154 : vector<8x1xi1> to vector<8x32xi1>
      %156 = arith.select %155, %122, %153 : vector<8x32xi1>, vector<8x32xf32>
      %157 = vector.extract_strided_slice %82 {offsets = [0, 32], sizes = [8, 32], strides = [1, 1]} : vector<8x64xf32> to vector<8x32xf32>
      %158 = vector.shape_cast %152 : vector<8x1xi1> to vector<8x1xi1>
      %159 = vector.broadcast %158 : vector<8x1xi1> to vector<8x32xi1>
      %160 = arith.select %159, %148, %157 : vector<8x32xi1>, vector<8x32xf32>
      %c0_71 = arith.constant 0 : index
      %c0_72 = arith.constant 0 : index
      %161 = vector.load %arg13[%c0_71, %c0_72] : memref<8x32xf32, #tpu.memory_space<vmem>>, vector<8x32xf32>
      %162 = vector.shape_cast %150 : vector<8x1xi1> to vector<8x1xi1>
      %163 = vector.broadcast %162 : vector<8x1xi1> to vector<8x32xi1>
      %164 = arith.select %163, %120, %161 : vector<8x32xi1>, vector<8x32xf32>
      %c0_73 = arith.constant 0 : index
      %c0_74 = arith.constant 0 : index
      %165 = vector.load %arg13[%c0_73, %c0_74] : memref<8x32xf32, #tpu.memory_space<vmem>>, vector<8x32xf32>
      tpu.vector_store %arg13[%c0_73, %c0_74], %164 {strides = array<i32>} : memref<8x32xf32, #tpu.memory_space<vmem>>, vector<8x32xf32>,
      %c0_75 = arith.constant 0 : index
      %c0_76 = arith.constant 0 : index
      %166 = vector.load %arg14[%c0_75, %c0_76] : memref<8x32xf32, #tpu.memory_space<vmem>>, vector<8x32xf32>
      %167 = vector.shape_cast %152 : vector<8x1xi1> to vector<8x1xi1>
      %168 = vector.broadcast %167 : vector<8x1xi1> to vector<8x32xi1>
      %169 = arith.select %168, %146, %166 : vector<8x32xi1>, vector<8x32xf32>
      %c0_77 = arith.constant 0 : index
      %c0_78 = arith.constant 0 : index
      %170 = vector.load %arg14[%c0_77, %c0_78] : memref<8x32xf32, #tpu.memory_space<vmem>>, vector<8x32xf32>
      tpu.vector_store %arg14[%c0_77, %c0_78], %169 {strides = array<i32>} : memref<8x32xf32, #tpu.memory_space<vmem>>, vector<8x32xf32>,
      %171 = tpu.concatenate %156, %160 in 1 : vector<8x32xf32>, vector<8x32xf32> -> vector<8x64xf32>
      %c0_79 = arith.constant 0 : index
      %c0_80 = arith.constant 0 : index
      %172 = vector.load %arg12[%c0_79, %c0_80] : memref<8x64xf32, #tpu.memory_space<vmem>>, vector<8x64xf32>
      tpu.vector_store %arg12[%c0_79, %c0_80], %171 {strides = array<i32>} : memref<8x64xf32, #tpu.memory_space<vmem>>, vector<8x64xf32>,
      %173 = arith.cmpi slt, %c7_i32_43, %25 : i32
      %cst_81 = arith.constant 0.000000e+00 : f32
      %cst_82 = arith.constant 0xFF800000 : f32
      %174 = arith.select %173, %cst_81, %cst_82 : f32
      %175 = arith.cmpi slt, %69, %25 : i32
      %cst_83 = arith.constant 0.000000e+00 : f32
      %cst_84 = arith.constant 0xFF800000 : f32
      %176 = arith.select %175, %cst_83, %cst_84 : f32
      %177 = vector.shape_cast %150 : vector<8x1xi1> to vector<8x1xi1>
      %178 = vector.broadcast %177 : vector<8x1xi1> to vector<8x32xi1>
      %179 = vector.broadcast %174 : f32 to vector<8x32xf32>
      %180 = arith.select %178, %156, %179 : vector<8x32xi1>, vector<8x32xf32>
      %181 = vector.shape_cast %152 : vector<8x1xi1> to vector<8x1xi1>
      %182 = vector.broadcast %181 : vector<8x1xi1> to vector<8x32xi1>
      %183 = vector.broadcast %176 : f32 to vector<8x32xf32>
      %184 = arith.select %182, %160, %183 : vector<8x32xi1>, vector<8x32xf32>
      %185 = tpu.concatenate %180, %184 in 1 : vector<8x32xf32>, vector<8x32xf32> -> vector<8x64xf32>
      %c0_85 = arith.constant 0 : index
      %c0_86 = arith.constant 0 : index
      %186 = vector.load %arg15[%c0_85, %c0_86] : memref<8x64xf32, #tpu.memory_space<vmem>>, vector<8x64xf32>
      %187 = arith.maximumf %186, %185 : vector<8x64xf32>
      %c0_87 = arith.constant 0 : index
      %c0_88 = arith.constant 0 : index
      %188 = vector.load %arg15[%c0_87, %c0_88] : memref<8x64xf32, #tpu.memory_space<vmem>>, vector<8x64xf32>
      tpu.vector_store %arg15[%c0_87, %c0_88], %187 {strides = array<i32>} : memref<8x64xf32, #tpu.memory_space<vmem>>, vector<8x64xf32>,
    } else {
    }
    %c8_i32 = arith.constant 8 : i32
    %c0_46 = arith.constant 0 : index
    %c0_47 = arith.constant 0 : index
    %75 = vector.load %arg15[%c0_46, %c0_47] : memref<8x64xf32, #tpu.memory_space<vmem>>, vector<8x64xf32>
    %c0_48 = arith.constant 0 : index
    %c0_49 = arith.constant 0 : index
    %76 = vector.load %arg8[%c0_48, %c0_49] : memref<64x4xf32, #tpu.memory_space<vmem>>, vector<64x4xf32>
    %cst_50 = arith.constant dense<0.000000e+00> : vector<8x4xf32>
    %77 = tpu.matmul %75, %76, %cst_50 {dimension_numbers = #tpu.dot_dimension_numbers<[1], [0], [0], [1], [0, 0, 1, 1], [], []>} : vector<8x64xf32>, vector<64x4xf32>, vector<8x4xf32> -> vector<8x4xf32>
    %c0_51 = arith.constant 0 : index
    %c0_52 = arith.constant 0 : index
    %78 = vector.load %arg9[%c0_51, %c0_52] : memref<1x4xf32, #tpu.memory_space<vmem>>, vector<1x4xf32>
    %79 = vector.broadcast %78 : vector<1x4xf32> to vector<8x4xf32>
    %80 = arith.addf %77, %79 : vector<8x4xf32>
    %c0_53 = arith.constant 0 : index
    %c0_54 = arith.constant 0 : index
    %81 = vector.load %arg10[%c0_53, %c0_54] : memref<8x4xf32, #tpu.memory_space<vmem>>, vector<8x4xf32>
    tpu.vector_store %arg10[%c0_53, %c0_54], %80 {strides = array<i32>} : memref<8x4xf32, #tpu.memory_space<vmem>>, vector<8x4xf32>,
    return
  }
  func.func @transform_0(%arg0: i32, %arg1: memref<1xi32, #tpu.memory_space<smem>>) -> (i32, i32, i32) {
    %c0_i32 = arith.constant 0 : i32
    %c0_i32_0 = arith.constant 0 : i32
    %c0_i32_1 = arith.constant 0 : i32
    return %c0_i32, %arg0, %c0_i32_0 : i32, i32, i32
  }
  func.func @transform_1(%arg0: i32, %arg1: memref<1xi32, #tpu.memory_space<smem>>) -> (i32, i32, i32) {
    %c0_i32 = arith.constant 0 : i32
    %c0_i32_0 = arith.constant 0 : i32
    %c0_i32_1 = arith.constant 0 : i32
    return %c0_i32, %arg0, %c0_i32_0 : i32, i32, i32
  }
  func.func @transform_2(%arg0: i32, %arg1: memref<1xi32, #tpu.memory_space<smem>>) -> (i32, i32) {
    %c0_i32 = arith.constant 0 : i32
    %c0_i32_0 = arith.constant 0 : i32
    %c0_i32_1 = arith.constant 0 : i32
    return %c0_i32, %c0_i32_0 : i32, i32
  }
  func.func @transform_3(%arg0: i32, %arg1: memref<1xi32, #tpu.memory_space<smem>>) -> (i32, i32) {
    %c0_i32 = arith.constant 0 : i32
    %c0_i32_0 = arith.constant 0 : i32
    %c0_i32_1 = arith.constant 0 : i32
    return %c0_i32, %c0_i32_0 : i32, i32
  }
  func.func @transform_4(%arg0: i32, %arg1: memref<1xi32, #tpu.memory_space<smem>>) -> (i32, i32) {
    %c0_i32 = arith.constant 0 : i32
    %c0_i32_0 = arith.constant 0 : i32
    %c0_i32_1 = arith.constant 0 : i32
    return %c0_i32, %c0_i32_0 : i32, i32
  }
  func.func @transform_5(%arg0: i32, %arg1: memref<1xi32, #tpu.memory_space<smem>>) -> (i32, i32) {
    %c0_i32 = arith.constant 0 : i32
    %c0_i32_0 = arith.constant 0 : i32
    return %arg0, %c0_i32 : i32, i32
  }
  func.func @transform_6(%arg0: i32, %arg1: memref<1xi32, #tpu.memory_space<smem>>) -> (i32, i32) {
    %c0_i32 = arith.constant 0 : i32
    %c0_i32_0 = arith.constant 0 : i32
    %c0_i32_1 = arith.constant 0 : i32
    return %c0_i32, %c0_i32_0 : i32, i32
  }
  func.func @transform_7(%arg0: i32, %arg1: memref<1xi32, #tpu.memory_space<smem>>) -> (i32, i32) {
    %c0_i32 = arith.constant 0 : i32
    %c0_i32_0 = arith.constant 0 : i32
    %c0_i32_1 = arith.constant 0 : i32
    return %c0_i32, %c0_i32_0 : i32, i32
  }
  func.func @transform_8(%arg0: i32, %arg1: memref<1xi32, #tpu.memory_space<smem>>) -> (i32, i32) {
    %c0_i32 = arith.constant 0 : i32
    %c0_i32_0 = arith.constant 0 : i32
    return %arg0, %c0_i32 : i32, i32
  }
}

module attributes {stable_mosaic.version = 11 : i64} {
  func.func @_bilstm_kernel(%arg0: i32, %arg1: memref<1xi32, #tpu.memory_space<smem>>, %arg2: memref<8x8x32xbf16, #tpu.memory_space<vmem>>, %arg3: memref<32x256xbf16, #tpu.memory_space<vmem>>, %arg4: memref<1x256xf32, #tpu.memory_space<vmem>>, %arg5: memref<64x256xbf16, #tpu.memory_space<vmem>>, %arg6: memref<8x1xi32, #tpu.memory_space<vmem>>, %arg7: memref<8x8x32xbf16, #tpu.memory_space<vmem>>, %arg8: memref<8x8x32xbf16, #tpu.memory_space<vmem>>, %arg9: memref<8x8x256xbf16, #tpu.memory_space<vmem>>, %arg10: memref<8x64xf32, #tpu.memory_space<vmem>>, %arg11: memref<8x32xf32, #tpu.memory_space<vmem>>, %arg12: memref<8x32xf32, #tpu.memory_space<vmem>>) attributes {dimension_semantics = [#tpu.dimension_semantics<parallel>], iteration_bounds = array<i64: 1>, scalar_prefetch = 1 : i64, scratch_operands = 4 : i64, tpu.core_type = #tpu.core_type<tc>, window_params = [{transform_indices = @transform_0, window_bounds = array<i64: 8, 8, 32>}, {pipeline_mode = #tpu.pipeline_mode<synchronous>, transform_indices = @transform_1, window_bounds = array<i64: 32, 256>}, {pipeline_mode = #tpu.pipeline_mode<synchronous>, transform_indices = @transform_2, window_bounds = array<i64: 1, 256>}, {pipeline_mode = #tpu.pipeline_mode<synchronous>, transform_indices = @transform_3, window_bounds = array<i64: 64, 256>}, {transform_indices = @transform_4, window_bounds = array<i64: 8, 1>}, {transform_indices = @transform_5, window_bounds = array<i64: 8, 8, 32>}, {transform_indices = @transform_6, window_bounds = array<i64: 8, 8, 32>}]} {
    %c0 = arith.constant 0 : index
    %c0_0 = arith.constant 0 : index
    %0 = vector.load %arg3[%c0, %c0_0] : memref<32x256xbf16, #tpu.memory_space<vmem>>, vector<32x256xbf16>
    %c0_1 = arith.constant 0 : index
    %c0_2 = arith.constant 0 : index
    %c0_3 = arith.constant 0 : index
    %1 = vector.load %arg2[%c0_1, %c0_2, %c0_3] : memref<8x8x32xbf16, #tpu.memory_space<vmem>>, vector<8x8x32xbf16>
    %2 = vector.shape_cast %1 : vector<8x8x32xbf16> to vector<64x32xbf16>
    %cst = arith.constant dense<0.000000e+00> : vector<64x256xf32>
    %3 = tpu.matmul %2, %0, %cst {dimension_numbers = #tpu.dot_dimension_numbers<[1], [0], [0], [1], [0, 0, 1, 1], [], []>} : vector<64x32xbf16>, vector<32x256xbf16>, vector<64x256xf32> -> vector<64x256xf32>
    %c0_4 = arith.constant 0 : index
    %c0_5 = arith.constant 0 : index
    %4 = vector.load %arg4[%c0_4, %c0_5] : memref<1x256xf32, #tpu.memory_space<vmem>>, vector<1x256xf32>
    %5 = vector.broadcast %4 : vector<1x256xf32> to vector<64x256xf32>
    %6 = arith.addf %3, %5 : vector<64x256xf32>
    %7 = vector.shape_cast %6 : vector<64x256xf32> to vector<8x8x256xf32>
    %8 = arith.truncf %7 : vector<8x8x256xf32> to vector<8x8x256xbf16>
    %c0_6 = arith.constant 0 : index
    %c0_7 = arith.constant 0 : index
    %c0_8 = arith.constant 0 : index
    %9 = vector.load %arg9[%c0_6, %c0_7, %c0_8] : memref<8x8x256xbf16, #tpu.memory_space<vmem>>, vector<8x8x256xbf16>
    tpu.vector_store %arg9[%c0_6, %c0_7, %c0_8], %8 {strides = array<i32>} : memref<8x8x256xbf16, #tpu.memory_space<vmem>>, vector<8x8x256xbf16>,
    %cst_9 = arith.constant 0.000000e+00 : f32
    %10 = vector.broadcast %cst_9 : f32 to vector<8x64xf32>
    %c0_10 = arith.constant 0 : index
    %c0_11 = arith.constant 0 : index
    %11 = vector.load %arg10[%c0_10, %c0_11] : memref<8x64xf32, #tpu.memory_space<vmem>>, vector<8x64xf32>
    tpu.vector_store %arg10[%c0_10, %c0_11], %10 {strides = array<i32>} : memref<8x64xf32, #tpu.memory_space<vmem>>, vector<8x64xf32>,
    %cst_12 = arith.constant 0.000000e+00 : f32
    %12 = vector.broadcast %cst_12 : f32 to vector<8x32xf32>
    %c0_13 = arith.constant 0 : index
    %c0_14 = arith.constant 0 : index
    %13 = vector.load %arg11[%c0_13, %c0_14] : memref<8x32xf32, #tpu.memory_space<vmem>>, vector<8x32xf32>
    tpu.vector_store %arg11[%c0_13, %c0_14], %12 {strides = array<i32>} : memref<8x32xf32, #tpu.memory_space<vmem>>, vector<8x32xf32>,
    %cst_15 = arith.constant 0.000000e+00 : f32
    %14 = vector.broadcast %cst_15 : f32 to vector<8x32xf32>
    %c0_16 = arith.constant 0 : index
    %c0_17 = arith.constant 0 : index
    %15 = vector.load %arg12[%c0_16, %c0_17] : memref<8x32xf32, #tpu.memory_space<vmem>>, vector<8x32xf32>
    tpu.vector_store %arg12[%c0_16, %c0_17], %14 {strides = array<i32>} : memref<8x32xf32, #tpu.memory_space<vmem>>, vector<8x32xf32>,
    %cst_18 = arith.constant 0.000000e+00 : bf16
    %16 = vector.broadcast %cst_18 : bf16 to vector<8x8x32xbf16>
    %c0_19 = arith.constant 0 : index
    %c0_20 = arith.constant 0 : index
    %c0_21 = arith.constant 0 : index
    %17 = vector.load %arg7[%c0_19, %c0_20, %c0_21] : memref<8x8x32xbf16, #tpu.memory_space<vmem>>, vector<8x8x32xbf16>
    tpu.vector_store %arg7[%c0_19, %c0_20, %c0_21], %16 {strides = array<i32>} : memref<8x8x32xbf16, #tpu.memory_space<vmem>>, vector<8x8x32xbf16>,
    %cst_22 = arith.constant 0.000000e+00 : bf16
    %18 = vector.broadcast %cst_22 : bf16 to vector<8x8x32xbf16>
    %c0_23 = arith.constant 0 : index
    %c0_24 = arith.constant 0 : index
    %c0_25 = arith.constant 0 : index
    %19 = vector.load %arg8[%c0_23, %c0_24, %c0_25] : memref<8x8x32xbf16, #tpu.memory_space<vmem>>, vector<8x8x32xbf16>
    tpu.vector_store %arg8[%c0_23, %c0_24, %c0_25], %18 {strides = array<i32>} : memref<8x8x32xbf16, #tpu.memory_space<vmem>>, vector<8x8x32xbf16>,
    %c0_26 = arith.constant 0 : index
    %c0_27 = arith.constant 0 : index
    %20 = vector.load %arg6[%c0_26, %c0_27] : memref<8x1xi32, #tpu.memory_space<vmem>>, vector<8x1xi32>
    %c0_28 = arith.constant 0 : index
    %21 = memref.load %arg1[%c0_28] : memref<1xi32, #tpu.memory_space<smem>>
    %c0_29 = arith.constant 0 : index
    %c0_30 = arith.constant 0 : index
    %22 = vector.load %arg5[%c0_29, %c0_30] : memref<64x256xbf16, #tpu.memory_space<vmem>>, vector<64x256xbf16>
    %c0_i32 = arith.constant 0 : i32
    %c7_i32 = arith.constant 7 : i32
    %23 = arith.subi %c7_i32, %c0_i32 : i32
    %24 = arith.cmpi slt, %c0_i32, %21 : i32
    %25 = arith.cmpi slt, %23, %21 : i32
    %26 = arith.ori %24, %25 : i1
    %27 = arith.extui %26 : i1 to i32
    %c0_i32_31 = arith.constant 0 : i32
    %28 = arith.cmpi ne, %27, %c0_i32_31 : i32
    scf.if %28 {
      %c0_47 = arith.constant 0 : index
      %c0_48 = arith.constant 0 : index
      %71 = vector.load %arg10[%c0_47, %c0_48] : memref<8x64xf32, #tpu.memory_space<vmem>>, vector<8x64xf32>
      %72 = arith.truncf %71 : vector<8x64xf32> to vector<8x64xbf16>
      %cst_49 = arith.constant dense<0.000000e+00> : vector<8x256xf32>
      %73 = tpu.matmul %72, %22, %cst_49 {dimension_numbers = #tpu.dot_dimension_numbers<[1], [0], [0], [1], [0, 0, 1, 1], [], []>} : vector<8x64xbf16>, vector<64x256xbf16>, vector<8x256xf32> -> vector<8x256xf32>
      %74 = arith.index_cast %c0_i32 : i32 to index
      %c0_50 = arith.constant 0 : index
      %c0_51 = arith.constant 0 : index
      %75 = vector.load %arg9[%74, %c0_50, %c0_51] : memref<8x8x256xbf16, #tpu.memory_space<vmem>>, vector<1x8x128xbf16>
      %76 = vector.shape_cast %75 : vector<1x8x128xbf16> to vector<8x128xbf16>
      %77 = vector.extract_strided_slice %73 {offsets = [0, 0], sizes = [8, 128], strides = [1, 1]} : vector<8x256xf32> to vector<8x128xf32>
      %78 = arith.extf %76 : vector<8x128xbf16> to vector<8x128xf32>
      %79 = arith.addf %78, %77 : vector<8x128xf32>
      %80 = arith.index_cast %23 : i32 to index
      %c0_52 = arith.constant 0 : index
      %c128 = arith.constant 128 : index
      %81 = vector.load %arg9[%80, %c0_52, %c128] : memref<8x8x256xbf16, #tpu.memory_space<vmem>>, vector<1x8x128xbf16>
      %82 = vector.shape_cast %81 : vector<1x8x128xbf16> to vector<8x128xbf16>
      %83 = vector.extract_strided_slice %73 {offsets = [0, 128], sizes = [8, 128], strides = [1, 1]} : vector<8x256xf32> to vector<8x128xf32>
      %84 = arith.extf %82 : vector<8x128xbf16> to vector<8x128xf32>
      %85 = arith.addf %84, %83 : vector<8x128xf32>
      %c0_53 = arith.constant 0 : index
      %c0_54 = arith.constant 0 : index
      %86 = vector.load %arg11[%c0_53, %c0_54] : memref<8x32xf32, #tpu.memory_space<vmem>>, vector<8x32xf32>
      %87 = vector.extract_strided_slice %79 {offsets = [0, 0], sizes = [8, 32], strides = [1, 1]} : vector<8x128xf32> to vector<8x32xf32>
      %88 = arith.negf %87 : vector<8x32xf32>
      %89 = math.exp %88 : vector<8x32xf32>
      %cst_55 = arith.constant 1.000000e+00 : f32
      %90 = vector.broadcast %cst_55 : f32 to vector<8x32xf32>
      %91 = arith.addf %90, %89 : vector<8x32xf32>
      %92 = arith.divf %90, %91 : vector<8x32xf32>
      %93 = vector.extract_strided_slice %79 {offsets = [0, 32], sizes = [8, 32], strides = [1, 1]} : vector<8x128xf32> to vector<8x32xf32>
      %94 = arith.negf %93 : vector<8x32xf32>
      %95 = math.exp %94 : vector<8x32xf32>
      %cst_56 = arith.constant 1.000000e+00 : f32
      %96 = vector.broadcast %cst_56 : f32 to vector<8x32xf32>
      %97 = arith.addf %96, %95 : vector<8x32xf32>
      %98 = arith.divf %96, %97 : vector<8x32xf32>
      %99 = vector.extract_strided_slice %79 {offsets = [0, 64], sizes = [8, 32], strides = [1, 1]} : vector<8x128xf32> to vector<8x32xf32>
      %100 = math.tanh %99 : vector<8x32xf32>
      %101 = vector.extract_strided_slice %79 {offsets = [0, 96], sizes = [8, 32], strides = [1, 1]} : vector<8x128xf32> to vector<8x32xf32>
      %102 = arith.negf %101 : vector<8x32xf32>
      %103 = math.exp %102 : vector<8x32xf32>
      %cst_57 = arith.constant 1.000000e+00 : f32
      %104 = vector.broadcast %cst_57 : f32 to vector<8x32xf32>
      %105 = arith.addf %104, %103 : vector<8x32xf32>
      %106 = arith.divf %104, %105 : vector<8x32xf32>
      %107 = arith.mulf %98, %86 : vector<8x32xf32>
      %108 = arith.mulf %92, %100 : vector<8x32xf32>
      %109 = arith.addf %107, %108 : vector<8x32xf32>
      %110 = math.tanh %109 : vector<8x32xf32>
      %111 = arith.mulf %106, %110 : vector<8x32xf32>
      %c0_58 = arith.constant 0 : index
      %c0_59 = arith.constant 0 : index
      %112 = vector.load %arg12[%c0_58, %c0_59] : memref<8x32xf32, #tpu.memory_space<vmem>>, vector<8x32xf32>
      %113 = vector.extract_strided_slice %85 {offsets = [0, 0], sizes = [8, 32], strides = [1, 1]} : vector<8x128xf32> to vector<8x32xf32>
      %114 = arith.negf %113 : vector<8x32xf32>
      %115 = math.exp %114 : vector<8x32xf32>
      %cst_60 = arith.constant 1.000000e+00 : f32
      %116 = vector.broadcast %cst_60 : f32 to vector<8x32xf32>
      %117 = arith.addf %116, %115 : vector<8x32xf32>
      %118 = arith.divf %116, %117 : vector<8x32xf32>
      %119 = vector.extract_strided_slice %85 {offsets = [0, 32], sizes = [8, 32], strides = [1, 1]} : vector<8x128xf32> to vector<8x32xf32>
      %120 = arith.negf %119 : vector<8x32xf32>
      %121 = math.exp %120 : vector<8x32xf32>
      %cst_61 = arith.constant 1.000000e+00 : f32
      %122 = vector.broadcast %cst_61 : f32 to vector<8x32xf32>
      %123 = arith.addf %122, %121 : vector<8x32xf32>
      %124 = arith.divf %122, %123 : vector<8x32xf32>
      %125 = vector.extract_strided_slice %85 {offsets = [0, 64], sizes = [8, 32], strides = [1, 1]} : vector<8x128xf32> to vector<8x32xf32>
      %126 = math.tanh %125 : vector<8x32xf32>
      %127 = vector.extract_strided_slice %85 {offsets = [0, 96], sizes = [8, 32], strides = [1, 1]} : vector<8x128xf32> to vector<8x32xf32>
      %128 = arith.negf %127 : vector<8x32xf32>
      %129 = math.exp %128 : vector<8x32xf32>
      %cst_62 = arith.constant 1.000000e+00 : f32
      %130 = vector.broadcast %cst_62 : f32 to vector<8x32xf32>
      %131 = arith.addf %130, %129 : vector<8x32xf32>
      %132 = arith.divf %130, %131 : vector<8x32xf32>
      %133 = arith.mulf %124, %112 : vector<8x32xf32>
      %134 = arith.mulf %118, %126 : vector<8x32xf32>
      %135 = arith.addf %133, %134 : vector<8x32xf32>
      %136 = math.tanh %135 : vector<8x32xf32>
      %137 = arith.mulf %132, %136 : vector<8x32xf32>
      %138 = vector.broadcast %c0_i32 : i32 to vector<8x1xi32>
      %139 = arith.cmpi slt, %138, %20 : vector<8x1xi32>
      %140 = vector.broadcast %23 : i32 to vector<8x1xi32>
      %141 = arith.cmpi slt, %140, %20 : vector<8x1xi32>
      %142 = vector.extract_strided_slice %71 {offsets = [0, 0], sizes = [8, 32], strides = [1, 1]} : vector<8x64xf32> to vector<8x32xf32>
      %143 = vector.shape_cast %139 : vector<8x1xi1> to vector<8x1xi1>
      %144 = vector.broadcast %143 : vector<8x1xi1> to vector<8x32xi1>
      %145 = arith.select %144, %111, %142 : vector<8x32xi1>, vector<8x32xf32>
      %146 = vector.extract_strided_slice %71 {offsets = [0, 32], sizes = [8, 32], strides = [1, 1]} : vector<8x64xf32> to vector<8x32xf32>
      %147 = vector.shape_cast %141 : vector<8x1xi1> to vector<8x1xi1>
      %148 = vector.broadcast %147 : vector<8x1xi1> to vector<8x32xi1>
      %149 = arith.select %148, %137, %146 : vector<8x32xi1>, vector<8x32xf32>
      %c0_63 = arith.constant 0 : index
      %c0_64 = arith.constant 0 : index
      %150 = vector.load %arg11[%c0_63, %c0_64] : memref<8x32xf32, #tpu.memory_space<vmem>>, vector<8x32xf32>
      %151 = vector.shape_cast %139 : vector<8x1xi1> to vector<8x1xi1>
      %152 = vector.broadcast %151 : vector<8x1xi1> to vector<8x32xi1>
      %153 = arith.select %152, %109, %150 : vector<8x32xi1>, vector<8x32xf32>
      %c0_65 = arith.constant 0 : index
      %c0_66 = arith.constant 0 : index
      %154 = vector.load %arg11[%c0_65, %c0_66] : memref<8x32xf32, #tpu.memory_space<vmem>>, vector<8x32xf32>
      tpu.vector_store %arg11[%c0_65, %c0_66], %153 {strides = array<i32>} : memref<8x32xf32, #tpu.memory_space<vmem>>, vector<8x32xf32>,
      %c0_67 = arith.constant 0 : index
      %c0_68 = arith.constant 0 : index
      %155 = vector.load %arg12[%c0_67, %c0_68] : memref<8x32xf32, #tpu.memory_space<vmem>>, vector<8x32xf32>
      %156 = vector.shape_cast %141 : vector<8x1xi1> to vector<8x1xi1>
      %157 = vector.broadcast %156 : vector<8x1xi1> to vector<8x32xi1>
      %158 = arith.select %157, %135, %155 : vector<8x32xi1>, vector<8x32xf32>
      %c0_69 = arith.constant 0 : index
      %c0_70 = arith.constant 0 : index
      %159 = vector.load %arg12[%c0_69, %c0_70] : memref<8x32xf32, #tpu.memory_space<vmem>>, vector<8x32xf32>
      tpu.vector_store %arg12[%c0_69, %c0_70], %158 {strides = array<i32>} : memref<8x32xf32, #tpu.memory_space<vmem>>, vector<8x32xf32>,
      %160 = tpu.concatenate %145, %149 in 1 : vector<8x32xf32>, vector<8x32xf32> -> vector<8x64xf32>
      %c0_71 = arith.constant 0 : index
      %c0_72 = arith.constant 0 : index
      %161 = vector.load %arg10[%c0_71, %c0_72] : memref<8x64xf32, #tpu.memory_space<vmem>>, vector<8x64xf32>
      tpu.vector_store %arg10[%c0_71, %c0_72], %160 {strides = array<i32>} : memref<8x64xf32, #tpu.memory_space<vmem>>, vector<8x64xf32>,
      %cst_73 = arith.constant 0.000000e+00 : f32
      %162 = vector.shape_cast %139 : vector<8x1xi1> to vector<8x1xi1>
      %163 = vector.broadcast %162 : vector<8x1xi1> to vector<8x32xi1>
      %164 = vector.broadcast %cst_73 : f32 to vector<8x32xf32>
      %165 = arith.select %163, %145, %164 : vector<8x32xi1>, vector<8x32xf32>
      %166 = arith.truncf %165 : vector<8x32xf32> to vector<8x32xbf16>
      %167 = arith.index_cast %c0_i32 : i32 to index
      %c0_74 = arith.constant 0 : index
      %c0_75 = arith.constant 0 : index
      %168 = vector.load %arg7[%167, %c0_74, %c0_75] : memref<8x8x32xbf16, #tpu.memory_space<vmem>>, vector<1x8x32xbf16>
      %169 = vector.shape_cast %168 : vector<1x8x32xbf16> to vector<8x32xbf16>
      %170 = vector.shape_cast %166 : vector<8x32xbf16> to vector<1x8x32xbf16>
      tpu.vector_store %arg7[%167, %c0_74, %c0_75], %170 {strides = array<i32>} : memref<8x8x32xbf16, #tpu.memory_space<vmem>>, vector<1x8x32xbf16>,
      %cst_76 = arith.constant 0.000000e+00 : f32
      %171 = vector.shape_cast %141 : vector<8x1xi1> to vector<8x1xi1>
      %172 = vector.broadcast %171 : vector<8x1xi1> to vector<8x32xi1>
      %173 = vector.broadcast %cst_76 : f32 to vector<8x32xf32>
      %174 = arith.select %172, %149, %173 : vector<8x32xi1>, vector<8x32xf32>
      %175 = arith.truncf %174 : vector<8x32xf32> to vector<8x32xbf16>
      %176 = arith.index_cast %23 : i32 to index
      %c0_77 = arith.constant 0 : index
      %c0_78 = arith.constant 0 : index
      %177 = vector.load %arg8[%176, %c0_77, %c0_78] : memref<8x8x32xbf16, #tpu.memory_space<vmem>>, vector<1x8x32xbf16>
      %178 = vector.shape_cast %177 : vector<1x8x32xbf16> to vector<8x32xbf16>
      %179 = vector.shape_cast %175 : vector<8x32xbf16> to vector<1x8x32xbf16>
      tpu.vector_store %arg8[%176, %c0_77, %c0_78], %179 {strides = array<i32>} : memref<8x8x32xbf16, #tpu.memory_space<vmem>>, vector<1x8x32xbf16>,
    } else {
    }
    %c1_i32 = arith.constant 1 : i32
    %c7_i32_32 = arith.constant 7 : i32
    %29 = arith.subi %c7_i32_32, %c1_i32 : i32
    %30 = arith.cmpi slt, %c1_i32, %21 : i32
    %31 = arith.cmpi slt, %29, %21 : i32
    %32 = arith.ori %30, %31 : i1
    %33 = arith.extui %32 : i1 to i32
    %c0_i32_33 = arith.constant 0 : i32
    %34 = arith.cmpi ne, %33, %c0_i32_33 : i32
    scf.if %34 {
      %c0_47 = arith.constant 0 : index
      %c0_48 = arith.constant 0 : index
      %71 = vector.load %arg10[%c0_47, %c0_48] : memref<8x64xf32, #tpu.memory_space<vmem>>, vector<8x64xf32>
      %72 = arith.truncf %71 : vector<8x64xf32> to vector<8x64xbf16>
      %cst_49 = arith.constant dense<0.000000e+00> : vector<8x256xf32>
      %73 = tpu.matmul %72, %22, %cst_49 {dimension_numbers = #tpu.dot_dimension_numbers<[1], [0], [0], [1], [0, 0, 1, 1], [], []>} : vector<8x64xbf16>, vector<64x256xbf16>, vector<8x256xf32> -> vector<8x256xf32>
      %74 = arith.index_cast %c1_i32 : i32 to index
      %c0_50 = arith.constant 0 : index
      %c0_51 = arith.constant 0 : index
      %75 = vector.load %arg9[%74, %c0_50, %c0_51] : memref<8x8x256xbf16, #tpu.memory_space<vmem>>, vector<1x8x128xbf16>
      %76 = vector.shape_cast %75 : vector<1x8x128xbf16> to vector<8x128xbf16>
      %77 = vector.extract_strided_slice %73 {offsets = [0, 0], sizes = [8, 128], strides = [1, 1]} : vector<8x256xf32> to vector<8x128xf32>
      %78 = arith.extf %76 : vector<8x128xbf16> to vector<8x128xf32>
      %79 = arith.addf %78, %77 : vector<8x128xf32>
      %80 = arith.index_cast %29 : i32 to index
      %c0_52 = arith.constant 0 : index
      %c128 = arith.constant 128 : index
      %81 = vector.load %arg9[%80, %c0_52, %c128] : memref<8x8x256xbf16, #tpu.memory_space<vmem>>, vector<1x8x128xbf16>
      %82 = vector.shape_cast %81 : vector<1x8x128xbf16> to vector<8x128xbf16>
      %83 = vector.extract_strided_slice %73 {offsets = [0, 128], sizes = [8, 128], strides = [1, 1]} : vector<8x256xf32> to vector<8x128xf32>
      %84 = arith.extf %82 : vector<8x128xbf16> to vector<8x128xf32>
      %85 = arith.addf %84, %83 : vector<8x128xf32>
      %c0_53 = arith.constant 0 : index
      %c0_54 = arith.constant 0 : index
      %86 = vector.load %arg11[%c0_53, %c0_54] : memref<8x32xf32, #tpu.memory_space<vmem>>, vector<8x32xf32>
      %87 = vector.extract_strided_slice %79 {offsets = [0, 0], sizes = [8, 32], strides = [1, 1]} : vector<8x128xf32> to vector<8x32xf32>
      %88 = arith.negf %87 : vector<8x32xf32>
      %89 = math.exp %88 : vector<8x32xf32>
      %cst_55 = arith.constant 1.000000e+00 : f32
      %90 = vector.broadcast %cst_55 : f32 to vector<8x32xf32>
      %91 = arith.addf %90, %89 : vector<8x32xf32>
      %92 = arith.divf %90, %91 : vector<8x32xf32>
      %93 = vector.extract_strided_slice %79 {offsets = [0, 32], sizes = [8, 32], strides = [1, 1]} : vector<8x128xf32> to vector<8x32xf32>
      %94 = arith.negf %93 : vector<8x32xf32>
      %95 = math.exp %94 : vector<8x32xf32>
      %cst_56 = arith.constant 1.000000e+00 : f32
      %96 = vector.broadcast %cst_56 : f32 to vector<8x32xf32>
      %97 = arith.addf %96, %95 : vector<8x32xf32>
      %98 = arith.divf %96, %97 : vector<8x32xf32>
      %99 = vector.extract_strided_slice %79 {offsets = [0, 64], sizes = [8, 32], strides = [1, 1]} : vector<8x128xf32> to vector<8x32xf32>
      %100 = math.tanh %99 : vector<8x32xf32>
      %101 = vector.extract_strided_slice %79 {offsets = [0, 96], sizes = [8, 32], strides = [1, 1]} : vector<8x128xf32> to vector<8x32xf32>
      %102 = arith.negf %101 : vector<8x32xf32>
      %103 = math.exp %102 : vector<8x32xf32>
      %cst_57 = arith.constant 1.000000e+00 : f32
      %104 = vector.broadcast %cst_57 : f32 to vector<8x32xf32>
      %105 = arith.addf %104, %103 : vector<8x32xf32>
      %106 = arith.divf %104, %105 : vector<8x32xf32>
      %107 = arith.mulf %98, %86 : vector<8x32xf32>
      %108 = arith.mulf %92, %100 : vector<8x32xf32>
      %109 = arith.addf %107, %108 : vector<8x32xf32>
      %110 = math.tanh %109 : vector<8x32xf32>
      %111 = arith.mulf %106, %110 : vector<8x32xf32>
      %c0_58 = arith.constant 0 : index
      %c0_59 = arith.constant 0 : index
      %112 = vector.load %arg12[%c0_58, %c0_59] : memref<8x32xf32, #tpu.memory_space<vmem>>, vector<8x32xf32>
      %113 = vector.extract_strided_slice %85 {offsets = [0, 0], sizes = [8, 32], strides = [1, 1]} : vector<8x128xf32> to vector<8x32xf32>
      %114 = arith.negf %113 : vector<8x32xf32>
      %115 = math.exp %114 : vector<8x32xf32>
      %cst_60 = arith.constant 1.000000e+00 : f32
      %116 = vector.broadcast %cst_60 : f32 to vector<8x32xf32>
      %117 = arith.addf %116, %115 : vector<8x32xf32>
      %118 = arith.divf %116, %117 : vector<8x32xf32>
      %119 = vector.extract_strided_slice %85 {offsets = [0, 32], sizes = [8, 32], strides = [1, 1]} : vector<8x128xf32> to vector<8x32xf32>
      %120 = arith.negf %119 : vector<8x32xf32>
      %121 = math.exp %120 : vector<8x32xf32>
      %cst_61 = arith.constant 1.000000e+00 : f32
      %122 = vector.broadcast %cst_61 : f32 to vector<8x32xf32>
      %123 = arith.addf %122, %121 : vector<8x32xf32>
      %124 = arith.divf %122, %123 : vector<8x32xf32>
      %125 = vector.extract_strided_slice %85 {offsets = [0, 64], sizes = [8, 32], strides = [1, 1]} : vector<8x128xf32> to vector<8x32xf32>
      %126 = math.tanh %125 : vector<8x32xf32>
      %127 = vector.extract_strided_slice %85 {offsets = [0, 96], sizes = [8, 32], strides = [1, 1]} : vector<8x128xf32> to vector<8x32xf32>
      %128 = arith.negf %127 : vector<8x32xf32>
      %129 = math.exp %128 : vector<8x32xf32>
      %cst_62 = arith.constant 1.000000e+00 : f32
      %130 = vector.broadcast %cst_62 : f32 to vector<8x32xf32>
      %131 = arith.addf %130, %129 : vector<8x32xf32>
      %132 = arith.divf %130, %131 : vector<8x32xf32>
      %133 = arith.mulf %124, %112 : vector<8x32xf32>
      %134 = arith.mulf %118, %126 : vector<8x32xf32>
      %135 = arith.addf %133, %134 : vector<8x32xf32>
      %136 = math.tanh %135 : vector<8x32xf32>
      %137 = arith.mulf %132, %136 : vector<8x32xf32>
      %138 = vector.broadcast %c1_i32 : i32 to vector<8x1xi32>
      %139 = arith.cmpi slt, %138, %20 : vector<8x1xi32>
      %140 = vector.broadcast %29 : i32 to vector<8x1xi32>
      %141 = arith.cmpi slt, %140, %20 : vector<8x1xi32>
      %142 = vector.extract_strided_slice %71 {offsets = [0, 0], sizes = [8, 32], strides = [1, 1]} : vector<8x64xf32> to vector<8x32xf32>
      %143 = vector.shape_cast %139 : vector<8x1xi1> to vector<8x1xi1>
      %144 = vector.broadcast %143 : vector<8x1xi1> to vector<8x32xi1>
      %145 = arith.select %144, %111, %142 : vector<8x32xi1>, vector<8x32xf32>
      %146 = vector.extract_strided_slice %71 {offsets = [0, 32], sizes = [8, 32], strides = [1, 1]} : vector<8x64xf32> to vector<8x32xf32>
      %147 = vector.shape_cast %141 : vector<8x1xi1> to vector<8x1xi1>
      %148 = vector.broadcast %147 : vector<8x1xi1> to vector<8x32xi1>
      %149 = arith.select %148, %137, %146 : vector<8x32xi1>, vector<8x32xf32>
      %c0_63 = arith.constant 0 : index
      %c0_64 = arith.constant 0 : index
      %150 = vector.load %arg11[%c0_63, %c0_64] : memref<8x32xf32, #tpu.memory_space<vmem>>, vector<8x32xf32>
      %151 = vector.shape_cast %139 : vector<8x1xi1> to vector<8x1xi1>
      %152 = vector.broadcast %151 : vector<8x1xi1> to vector<8x32xi1>
      %153 = arith.select %152, %109, %150 : vector<8x32xi1>, vector<8x32xf32>
      %c0_65 = arith.constant 0 : index
      %c0_66 = arith.constant 0 : index
      %154 = vector.load %arg11[%c0_65, %c0_66] : memref<8x32xf32, #tpu.memory_space<vmem>>, vector<8x32xf32>
      tpu.vector_store %arg11[%c0_65, %c0_66], %153 {strides = array<i32>} : memref<8x32xf32, #tpu.memory_space<vmem>>, vector<8x32xf32>,
      %c0_67 = arith.constant 0 : index
      %c0_68 = arith.constant 0 : index
      %155 = vector.load %arg12[%c0_67, %c0_68] : memref<8x32xf32, #tpu.memory_space<vmem>>, vector<8x32xf32>
      %156 = vector.shape_cast %141 : vector<8x1xi1> to vector<8x1xi1>
      %157 = vector.broadcast %156 : vector<8x1xi1> to vector<8x32xi1>
      %158 = arith.select %157, %135, %155 : vector<8x32xi1>, vector<8x32xf32>
      %c0_69 = arith.constant 0 : index
      %c0_70 = arith.constant 0 : index
      %159 = vector.load %arg12[%c0_69, %c0_70] : memref<8x32xf32, #tpu.memory_space<vmem>>, vector<8x32xf32>
      tpu.vector_store %arg12[%c0_69, %c0_70], %158 {strides = array<i32>} : memref<8x32xf32, #tpu.memory_space<vmem>>, vector<8x32xf32>,
      %160 = tpu.concatenate %145, %149 in 1 : vector<8x32xf32>, vector<8x32xf32> -> vector<8x64xf32>
      %c0_71 = arith.constant 0 : index
      %c0_72 = arith.constant 0 : index
      %161 = vector.load %arg10[%c0_71, %c0_72] : memref<8x64xf32, #tpu.memory_space<vmem>>, vector<8x64xf32>
      tpu.vector_store %arg10[%c0_71, %c0_72], %160 {strides = array<i32>} : memref<8x64xf32, #tpu.memory_space<vmem>>, vector<8x64xf32>,
      %cst_73 = arith.constant 0.000000e+00 : f32
      %162 = vector.shape_cast %139 : vector<8x1xi1> to vector<8x1xi1>
      %163 = vector.broadcast %162 : vector<8x1xi1> to vector<8x32xi1>
      %164 = vector.broadcast %cst_73 : f32 to vector<8x32xf32>
      %165 = arith.select %163, %145, %164 : vector<8x32xi1>, vector<8x32xf32>
      %166 = arith.truncf %165 : vector<8x32xf32> to vector<8x32xbf16>
      %167 = arith.index_cast %c1_i32 : i32 to index
      %c0_74 = arith.constant 0 : index
      %c0_75 = arith.constant 0 : index
      %168 = vector.load %arg7[%167, %c0_74, %c0_75] : memref<8x8x32xbf16, #tpu.memory_space<vmem>>, vector<1x8x32xbf16>
      %169 = vector.shape_cast %168 : vector<1x8x32xbf16> to vector<8x32xbf16>
      %170 = vector.shape_cast %166 : vector<8x32xbf16> to vector<1x8x32xbf16>
      tpu.vector_store %arg7[%167, %c0_74, %c0_75], %170 {strides = array<i32>} : memref<8x8x32xbf16, #tpu.memory_space<vmem>>, vector<1x8x32xbf16>,
      %cst_76 = arith.constant 0.000000e+00 : f32
      %171 = vector.shape_cast %141 : vector<8x1xi1> to vector<8x1xi1>
      %172 = vector.broadcast %171 : vector<8x1xi1> to vector<8x32xi1>
      %173 = vector.broadcast %cst_76 : f32 to vector<8x32xf32>
      %174 = arith.select %172, %149, %173 : vector<8x32xi1>, vector<8x32xf32>
      %175 = arith.truncf %174 : vector<8x32xf32> to vector<8x32xbf16>
      %176 = arith.index_cast %29 : i32 to index
      %c0_77 = arith.constant 0 : index
      %c0_78 = arith.constant 0 : index
      %177 = vector.load %arg8[%176, %c0_77, %c0_78] : memref<8x8x32xbf16, #tpu.memory_space<vmem>>, vector<1x8x32xbf16>
      %178 = vector.shape_cast %177 : vector<1x8x32xbf16> to vector<8x32xbf16>
      %179 = vector.shape_cast %175 : vector<8x32xbf16> to vector<1x8x32xbf16>
      tpu.vector_store %arg8[%176, %c0_77, %c0_78], %179 {strides = array<i32>} : memref<8x8x32xbf16, #tpu.memory_space<vmem>>, vector<1x8x32xbf16>,
    } else {
    }
    %c2_i32 = arith.constant 2 : i32
    %c7_i32_34 = arith.constant 7 : i32
    %35 = arith.subi %c7_i32_34, %c2_i32 : i32
    %36 = arith.cmpi slt, %c2_i32, %21 : i32
    %37 = arith.cmpi slt, %35, %21 : i32
    %38 = arith.ori %36, %37 : i1
    %39 = arith.extui %38 : i1 to i32
    %c0_i32_35 = arith.constant 0 : i32
    %40 = arith.cmpi ne, %39, %c0_i32_35 : i32
    scf.if %40 {
      %c0_47 = arith.constant 0 : index
      %c0_48 = arith.constant 0 : index
      %71 = vector.load %arg10[%c0_47, %c0_48] : memref<8x64xf32, #tpu.memory_space<vmem>>, vector<8x64xf32>
      %72 = arith.truncf %71 : vector<8x64xf32> to vector<8x64xbf16>
      %cst_49 = arith.constant dense<0.000000e+00> : vector<8x256xf32>
      %73 = tpu.matmul %72, %22, %cst_49 {dimension_numbers = #tpu.dot_dimension_numbers<[1], [0], [0], [1], [0, 0, 1, 1], [], []>} : vector<8x64xbf16>, vector<64x256xbf16>, vector<8x256xf32> -> vector<8x256xf32>
      %74 = arith.index_cast %c2_i32 : i32 to index
      %c0_50 = arith.constant 0 : index
      %c0_51 = arith.constant 0 : index
      %75 = vector.load %arg9[%74, %c0_50, %c0_51] : memref<8x8x256xbf16, #tpu.memory_space<vmem>>, vector<1x8x128xbf16>
      %76 = vector.shape_cast %75 : vector<1x8x128xbf16> to vector<8x128xbf16>
      %77 = vector.extract_strided_slice %73 {offsets = [0, 0], sizes = [8, 128], strides = [1, 1]} : vector<8x256xf32> to vector<8x128xf32>
      %78 = arith.extf %76 : vector<8x128xbf16> to vector<8x128xf32>
      %79 = arith.addf %78, %77 : vector<8x128xf32>
      %80 = arith.index_cast %35 : i32 to index
      %c0_52 = arith.constant 0 : index
      %c128 = arith.constant 128 : index
      %81 = vector.load %arg9[%80, %c0_52, %c128] : memref<8x8x256xbf16, #tpu.memory_space<vmem>>, vector<1x8x128xbf16>
      %82 = vector.shape_cast %81 : vector<1x8x128xbf16> to vector<8x128xbf16>
      %83 = vector.extract_strided_slice %73 {offsets = [0, 128], sizes = [8, 128], strides = [1, 1]} : vector<8x256xf32> to vector<8x128xf32>
      %84 = arith.extf %82 : vector<8x128xbf16> to vector<8x128xf32>
      %85 = arith.addf %84, %83 : vector<8x128xf32>
      %c0_53 = arith.constant 0 : index
      %c0_54 = arith.constant 0 : index
      %86 = vector.load %arg11[%c0_53, %c0_54] : memref<8x32xf32, #tpu.memory_space<vmem>>, vector<8x32xf32>
      %87 = vector.extract_strided_slice %79 {offsets = [0, 0], sizes = [8, 32], strides = [1, 1]} : vector<8x128xf32> to vector<8x32xf32>
      %88 = arith.negf %87 : vector<8x32xf32>
      %89 = math.exp %88 : vector<8x32xf32>
      %cst_55 = arith.constant 1.000000e+00 : f32
      %90 = vector.broadcast %cst_55 : f32 to vector<8x32xf32>
      %91 = arith.addf %90, %89 : vector<8x32xf32>
      %92 = arith.divf %90, %91 : vector<8x32xf32>
      %93 = vector.extract_strided_slice %79 {offsets = [0, 32], sizes = [8, 32], strides = [1, 1]} : vector<8x128xf32> to vector<8x32xf32>
      %94 = arith.negf %93 : vector<8x32xf32>
      %95 = math.exp %94 : vector<8x32xf32>
      %cst_56 = arith.constant 1.000000e+00 : f32
      %96 = vector.broadcast %cst_56 : f32 to vector<8x32xf32>
      %97 = arith.addf %96, %95 : vector<8x32xf32>
      %98 = arith.divf %96, %97 : vector<8x32xf32>
      %99 = vector.extract_strided_slice %79 {offsets = [0, 64], sizes = [8, 32], strides = [1, 1]} : vector<8x128xf32> to vector<8x32xf32>
      %100 = math.tanh %99 : vector<8x32xf32>
      %101 = vector.extract_strided_slice %79 {offsets = [0, 96], sizes = [8, 32], strides = [1, 1]} : vector<8x128xf32> to vector<8x32xf32>
      %102 = arith.negf %101 : vector<8x32xf32>
      %103 = math.exp %102 : vector<8x32xf32>
      %cst_57 = arith.constant 1.000000e+00 : f32
      %104 = vector.broadcast %cst_57 : f32 to vector<8x32xf32>
      %105 = arith.addf %104, %103 : vector<8x32xf32>
      %106 = arith.divf %104, %105 : vector<8x32xf32>
      %107 = arith.mulf %98, %86 : vector<8x32xf32>
      %108 = arith.mulf %92, %100 : vector<8x32xf32>
      %109 = arith.addf %107, %108 : vector<8x32xf32>
      %110 = math.tanh %109 : vector<8x32xf32>
      %111 = arith.mulf %106, %110 : vector<8x32xf32>
      %c0_58 = arith.constant 0 : index
      %c0_59 = arith.constant 0 : index
      %112 = vector.load %arg12[%c0_58, %c0_59] : memref<8x32xf32, #tpu.memory_space<vmem>>, vector<8x32xf32>
      %113 = vector.extract_strided_slice %85 {offsets = [0, 0], sizes = [8, 32], strides = [1, 1]} : vector<8x128xf32> to vector<8x32xf32>
      %114 = arith.negf %113 : vector<8x32xf32>
      %115 = math.exp %114 : vector<8x32xf32>
      %cst_60 = arith.constant 1.000000e+00 : f32
      %116 = vector.broadcast %cst_60 : f32 to vector<8x32xf32>
      %117 = arith.addf %116, %115 : vector<8x32xf32>
      %118 = arith.divf %116, %117 : vector<8x32xf32>
      %119 = vector.extract_strided_slice %85 {offsets = [0, 32], sizes = [8, 32], strides = [1, 1]} : vector<8x128xf32> to vector<8x32xf32>
      %120 = arith.negf %119 : vector<8x32xf32>
      %121 = math.exp %120 : vector<8x32xf32>
      %cst_61 = arith.constant 1.000000e+00 : f32
      %122 = vector.broadcast %cst_61 : f32 to vector<8x32xf32>
      %123 = arith.addf %122, %121 : vector<8x32xf32>
      %124 = arith.divf %122, %123 : vector<8x32xf32>
      %125 = vector.extract_strided_slice %85 {offsets = [0, 64], sizes = [8, 32], strides = [1, 1]} : vector<8x128xf32> to vector<8x32xf32>
      %126 = math.tanh %125 : vector<8x32xf32>
      %127 = vector.extract_strided_slice %85 {offsets = [0, 96], sizes = [8, 32], strides = [1, 1]} : vector<8x128xf32> to vector<8x32xf32>
      %128 = arith.negf %127 : vector<8x32xf32>
      %129 = math.exp %128 : vector<8x32xf32>
      %cst_62 = arith.constant 1.000000e+00 : f32
      %130 = vector.broadcast %cst_62 : f32 to vector<8x32xf32>
      %131 = arith.addf %130, %129 : vector<8x32xf32>
      %132 = arith.divf %130, %131 : vector<8x32xf32>
      %133 = arith.mulf %124, %112 : vector<8x32xf32>
      %134 = arith.mulf %118, %126 : vector<8x32xf32>
      %135 = arith.addf %133, %134 : vector<8x32xf32>
      %136 = math.tanh %135 : vector<8x32xf32>
      %137 = arith.mulf %132, %136 : vector<8x32xf32>
      %138 = vector.broadcast %c2_i32 : i32 to vector<8x1xi32>
      %139 = arith.cmpi slt, %138, %20 : vector<8x1xi32>
      %140 = vector.broadcast %35 : i32 to vector<8x1xi32>
      %141 = arith.cmpi slt, %140, %20 : vector<8x1xi32>
      %142 = vector.extract_strided_slice %71 {offsets = [0, 0], sizes = [8, 32], strides = [1, 1]} : vector<8x64xf32> to vector<8x32xf32>
      %143 = vector.shape_cast %139 : vector<8x1xi1> to vector<8x1xi1>
      %144 = vector.broadcast %143 : vector<8x1xi1> to vector<8x32xi1>
      %145 = arith.select %144, %111, %142 : vector<8x32xi1>, vector<8x32xf32>
      %146 = vector.extract_strided_slice %71 {offsets = [0, 32], sizes = [8, 32], strides = [1, 1]} : vector<8x64xf32> to vector<8x32xf32>
      %147 = vector.shape_cast %141 : vector<8x1xi1> to vector<8x1xi1>
      %148 = vector.broadcast %147 : vector<8x1xi1> to vector<8x32xi1>
      %149 = arith.select %148, %137, %146 : vector<8x32xi1>, vector<8x32xf32>
      %c0_63 = arith.constant 0 : index
      %c0_64 = arith.constant 0 : index
      %150 = vector.load %arg11[%c0_63, %c0_64] : memref<8x32xf32, #tpu.memory_space<vmem>>, vector<8x32xf32>
      %151 = vector.shape_cast %139 : vector<8x1xi1> to vector<8x1xi1>
      %152 = vector.broadcast %151 : vector<8x1xi1> to vector<8x32xi1>
      %153 = arith.select %152, %109, %150 : vector<8x32xi1>, vector<8x32xf32>
      %c0_65 = arith.constant 0 : index
      %c0_66 = arith.constant 0 : index
      %154 = vector.load %arg11[%c0_65, %c0_66] : memref<8x32xf32, #tpu.memory_space<vmem>>, vector<8x32xf32>
      tpu.vector_store %arg11[%c0_65, %c0_66], %153 {strides = array<i32>} : memref<8x32xf32, #tpu.memory_space<vmem>>, vector<8x32xf32>,
      %c0_67 = arith.constant 0 : index
      %c0_68 = arith.constant 0 : index
      %155 = vector.load %arg12[%c0_67, %c0_68] : memref<8x32xf32, #tpu.memory_space<vmem>>, vector<8x32xf32>
      %156 = vector.shape_cast %141 : vector<8x1xi1> to vector<8x1xi1>
      %157 = vector.broadcast %156 : vector<8x1xi1> to vector<8x32xi1>
      %158 = arith.select %157, %135, %155 : vector<8x32xi1>, vector<8x32xf32>
      %c0_69 = arith.constant 0 : index
      %c0_70 = arith.constant 0 : index
      %159 = vector.load %arg12[%c0_69, %c0_70] : memref<8x32xf32, #tpu.memory_space<vmem>>, vector<8x32xf32>
      tpu.vector_store %arg12[%c0_69, %c0_70], %158 {strides = array<i32>} : memref<8x32xf32, #tpu.memory_space<vmem>>, vector<8x32xf32>,
      %160 = tpu.concatenate %145, %149 in 1 : vector<8x32xf32>, vector<8x32xf32> -> vector<8x64xf32>
      %c0_71 = arith.constant 0 : index
      %c0_72 = arith.constant 0 : index
      %161 = vector.load %arg10[%c0_71, %c0_72] : memref<8x64xf32, #tpu.memory_space<vmem>>, vector<8x64xf32>
      tpu.vector_store %arg10[%c0_71, %c0_72], %160 {strides = array<i32>} : memref<8x64xf32, #tpu.memory_space<vmem>>, vector<8x64xf32>,
      %cst_73 = arith.constant 0.000000e+00 : f32
      %162 = vector.shape_cast %139 : vector<8x1xi1> to vector<8x1xi1>
      %163 = vector.broadcast %162 : vector<8x1xi1> to vector<8x32xi1>
      %164 = vector.broadcast %cst_73 : f32 to vector<8x32xf32>
      %165 = arith.select %163, %145, %164 : vector<8x32xi1>, vector<8x32xf32>
      %166 = arith.truncf %165 : vector<8x32xf32> to vector<8x32xbf16>
      %167 = arith.index_cast %c2_i32 : i32 to index
      %c0_74 = arith.constant 0 : index
      %c0_75 = arith.constant 0 : index
      %168 = vector.load %arg7[%167, %c0_74, %c0_75] : memref<8x8x32xbf16, #tpu.memory_space<vmem>>, vector<1x8x32xbf16>
      %169 = vector.shape_cast %168 : vector<1x8x32xbf16> to vector<8x32xbf16>
      %170 = vector.shape_cast %166 : vector<8x32xbf16> to vector<1x8x32xbf16>
      tpu.vector_store %arg7[%167, %c0_74, %c0_75], %170 {strides = array<i32>} : memref<8x8x32xbf16, #tpu.memory_space<vmem>>, vector<1x8x32xbf16>,
      %cst_76 = arith.constant 0.000000e+00 : f32
      %171 = vector.shape_cast %141 : vector<8x1xi1> to vector<8x1xi1>
      %172 = vector.broadcast %171 : vector<8x1xi1> to vector<8x32xi1>
      %173 = vector.broadcast %cst_76 : f32 to vector<8x32xf32>
      %174 = arith.select %172, %149, %173 : vector<8x32xi1>, vector<8x32xf32>
      %175 = arith.truncf %174 : vector<8x32xf32> to vector<8x32xbf16>
      %176 = arith.index_cast %35 : i32 to index
      %c0_77 = arith.constant 0 : index
      %c0_78 = arith.constant 0 : index
      %177 = vector.load %arg8[%176, %c0_77, %c0_78] : memref<8x8x32xbf16, #tpu.memory_space<vmem>>, vector<1x8x32xbf16>
      %178 = vector.shape_cast %177 : vector<1x8x32xbf16> to vector<8x32xbf16>
      %179 = vector.shape_cast %175 : vector<8x32xbf16> to vector<1x8x32xbf16>
      tpu.vector_store %arg8[%176, %c0_77, %c0_78], %179 {strides = array<i32>} : memref<8x8x32xbf16, #tpu.memory_space<vmem>>, vector<1x8x32xbf16>,
    } else {
    }
    %c3_i32 = arith.constant 3 : i32
    %c7_i32_36 = arith.constant 7 : i32
    %41 = arith.subi %c7_i32_36, %c3_i32 : i32
    %42 = arith.cmpi slt, %c3_i32, %21 : i32
    %43 = arith.cmpi slt, %41, %21 : i32
    %44 = arith.ori %42, %43 : i1
    %45 = arith.extui %44 : i1 to i32
    %c0_i32_37 = arith.constant 0 : i32
    %46 = arith.cmpi ne, %45, %c0_i32_37 : i32
    scf.if %46 {
      %c0_47 = arith.constant 0 : index
      %c0_48 = arith.constant 0 : index
      %71 = vector.load %arg10[%c0_47, %c0_48] : memref<8x64xf32, #tpu.memory_space<vmem>>, vector<8x64xf32>
      %72 = arith.truncf %71 : vector<8x64xf32> to vector<8x64xbf16>
      %cst_49 = arith.constant dense<0.000000e+00> : vector<8x256xf32>
      %73 = tpu.matmul %72, %22, %cst_49 {dimension_numbers = #tpu.dot_dimension_numbers<[1], [0], [0], [1], [0, 0, 1, 1], [], []>} : vector<8x64xbf16>, vector<64x256xbf16>, vector<8x256xf32> -> vector<8x256xf32>
      %74 = arith.index_cast %c3_i32 : i32 to index
      %c0_50 = arith.constant 0 : index
      %c0_51 = arith.constant 0 : index
      %75 = vector.load %arg9[%74, %c0_50, %c0_51] : memref<8x8x256xbf16, #tpu.memory_space<vmem>>, vector<1x8x128xbf16>
      %76 = vector.shape_cast %75 : vector<1x8x128xbf16> to vector<8x128xbf16>
      %77 = vector.extract_strided_slice %73 {offsets = [0, 0], sizes = [8, 128], strides = [1, 1]} : vector<8x256xf32> to vector<8x128xf32>
      %78 = arith.extf %76 : vector<8x128xbf16> to vector<8x128xf32>
      %79 = arith.addf %78, %77 : vector<8x128xf32>
      %80 = arith.index_cast %41 : i32 to index
      %c0_52 = arith.constant 0 : index
      %c128 = arith.constant 128 : index
      %81 = vector.load %arg9[%80, %c0_52, %c128] : memref<8x8x256xbf16, #tpu.memory_space<vmem>>, vector<1x8x128xbf16>
      %82 = vector.shape_cast %81 : vector<1x8x128xbf16> to vector<8x128xbf16>
      %83 = vector.extract_strided_slice %73 {offsets = [0, 128], sizes = [8, 128], strides = [1, 1]} : vector<8x256xf32> to vector<8x128xf32>
      %84 = arith.extf %82 : vector<8x128xbf16> to vector<8x128xf32>
      %85 = arith.addf %84, %83 : vector<8x128xf32>
      %c0_53 = arith.constant 0 : index
      %c0_54 = arith.constant 0 : index
      %86 = vector.load %arg11[%c0_53, %c0_54] : memref<8x32xf32, #tpu.memory_space<vmem>>, vector<8x32xf32>
      %87 = vector.extract_strided_slice %79 {offsets = [0, 0], sizes = [8, 32], strides = [1, 1]} : vector<8x128xf32> to vector<8x32xf32>
      %88 = arith.negf %87 : vector<8x32xf32>
      %89 = math.exp %88 : vector<8x32xf32>
      %cst_55 = arith.constant 1.000000e+00 : f32
      %90 = vector.broadcast %cst_55 : f32 to vector<8x32xf32>
      %91 = arith.addf %90, %89 : vector<8x32xf32>
      %92 = arith.divf %90, %91 : vector<8x32xf32>
      %93 = vector.extract_strided_slice %79 {offsets = [0, 32], sizes = [8, 32], strides = [1, 1]} : vector<8x128xf32> to vector<8x32xf32>
      %94 = arith.negf %93 : vector<8x32xf32>
      %95 = math.exp %94 : vector<8x32xf32>
      %cst_56 = arith.constant 1.000000e+00 : f32
      %96 = vector.broadcast %cst_56 : f32 to vector<8x32xf32>
      %97 = arith.addf %96, %95 : vector<8x32xf32>
      %98 = arith.divf %96, %97 : vector<8x32xf32>
      %99 = vector.extract_strided_slice %79 {offsets = [0, 64], sizes = [8, 32], strides = [1, 1]} : vector<8x128xf32> to vector<8x32xf32>
      %100 = math.tanh %99 : vector<8x32xf32>
      %101 = vector.extract_strided_slice %79 {offsets = [0, 96], sizes = [8, 32], strides = [1, 1]} : vector<8x128xf32> to vector<8x32xf32>
      %102 = arith.negf %101 : vector<8x32xf32>
      %103 = math.exp %102 : vector<8x32xf32>
      %cst_57 = arith.constant 1.000000e+00 : f32
      %104 = vector.broadcast %cst_57 : f32 to vector<8x32xf32>
      %105 = arith.addf %104, %103 : vector<8x32xf32>
      %106 = arith.divf %104, %105 : vector<8x32xf32>
      %107 = arith.mulf %98, %86 : vector<8x32xf32>
      %108 = arith.mulf %92, %100 : vector<8x32xf32>
      %109 = arith.addf %107, %108 : vector<8x32xf32>
      %110 = math.tanh %109 : vector<8x32xf32>
      %111 = arith.mulf %106, %110 : vector<8x32xf32>
      %c0_58 = arith.constant 0 : index
      %c0_59 = arith.constant 0 : index
      %112 = vector.load %arg12[%c0_58, %c0_59] : memref<8x32xf32, #tpu.memory_space<vmem>>, vector<8x32xf32>
      %113 = vector.extract_strided_slice %85 {offsets = [0, 0], sizes = [8, 32], strides = [1, 1]} : vector<8x128xf32> to vector<8x32xf32>
      %114 = arith.negf %113 : vector<8x32xf32>
      %115 = math.exp %114 : vector<8x32xf32>
      %cst_60 = arith.constant 1.000000e+00 : f32
      %116 = vector.broadcast %cst_60 : f32 to vector<8x32xf32>
      %117 = arith.addf %116, %115 : vector<8x32xf32>
      %118 = arith.divf %116, %117 : vector<8x32xf32>
      %119 = vector.extract_strided_slice %85 {offsets = [0, 32], sizes = [8, 32], strides = [1, 1]} : vector<8x128xf32> to vector<8x32xf32>
      %120 = arith.negf %119 : vector<8x32xf32>
      %121 = math.exp %120 : vector<8x32xf32>
      %cst_61 = arith.constant 1.000000e+00 : f32
      %122 = vector.broadcast %cst_61 : f32 to vector<8x32xf32>
      %123 = arith.addf %122, %121 : vector<8x32xf32>
      %124 = arith.divf %122, %123 : vector<8x32xf32>
      %125 = vector.extract_strided_slice %85 {offsets = [0, 64], sizes = [8, 32], strides = [1, 1]} : vector<8x128xf32> to vector<8x32xf32>
      %126 = math.tanh %125 : vector<8x32xf32>
      %127 = vector.extract_strided_slice %85 {offsets = [0, 96], sizes = [8, 32], strides = [1, 1]} : vector<8x128xf32> to vector<8x32xf32>
      %128 = arith.negf %127 : vector<8x32xf32>
      %129 = math.exp %128 : vector<8x32xf32>
      %cst_62 = arith.constant 1.000000e+00 : f32
      %130 = vector.broadcast %cst_62 : f32 to vector<8x32xf32>
      %131 = arith.addf %130, %129 : vector<8x32xf32>
      %132 = arith.divf %130, %131 : vector<8x32xf32>
      %133 = arith.mulf %124, %112 : vector<8x32xf32>
      %134 = arith.mulf %118, %126 : vector<8x32xf32>
      %135 = arith.addf %133, %134 : vector<8x32xf32>
      %136 = math.tanh %135 : vector<8x32xf32>
      %137 = arith.mulf %132, %136 : vector<8x32xf32>
      %138 = vector.broadcast %c3_i32 : i32 to vector<8x1xi32>
      %139 = arith.cmpi slt, %138, %20 : vector<8x1xi32>
      %140 = vector.broadcast %41 : i32 to vector<8x1xi32>
      %141 = arith.cmpi slt, %140, %20 : vector<8x1xi32>
      %142 = vector.extract_strided_slice %71 {offsets = [0, 0], sizes = [8, 32], strides = [1, 1]} : vector<8x64xf32> to vector<8x32xf32>
      %143 = vector.shape_cast %139 : vector<8x1xi1> to vector<8x1xi1>
      %144 = vector.broadcast %143 : vector<8x1xi1> to vector<8x32xi1>
      %145 = arith.select %144, %111, %142 : vector<8x32xi1>, vector<8x32xf32>
      %146 = vector.extract_strided_slice %71 {offsets = [0, 32], sizes = [8, 32], strides = [1, 1]} : vector<8x64xf32> to vector<8x32xf32>
      %147 = vector.shape_cast %141 : vector<8x1xi1> to vector<8x1xi1>
      %148 = vector.broadcast %147 : vector<8x1xi1> to vector<8x32xi1>
      %149 = arith.select %148, %137, %146 : vector<8x32xi1>, vector<8x32xf32>
      %c0_63 = arith.constant 0 : index
      %c0_64 = arith.constant 0 : index
      %150 = vector.load %arg11[%c0_63, %c0_64] : memref<8x32xf32, #tpu.memory_space<vmem>>, vector<8x32xf32>
      %151 = vector.shape_cast %139 : vector<8x1xi1> to vector<8x1xi1>
      %152 = vector.broadcast %151 : vector<8x1xi1> to vector<8x32xi1>
      %153 = arith.select %152, %109, %150 : vector<8x32xi1>, vector<8x32xf32>
      %c0_65 = arith.constant 0 : index
      %c0_66 = arith.constant 0 : index
      %154 = vector.load %arg11[%c0_65, %c0_66] : memref<8x32xf32, #tpu.memory_space<vmem>>, vector<8x32xf32>
      tpu.vector_store %arg11[%c0_65, %c0_66], %153 {strides = array<i32>} : memref<8x32xf32, #tpu.memory_space<vmem>>, vector<8x32xf32>,
      %c0_67 = arith.constant 0 : index
      %c0_68 = arith.constant 0 : index
      %155 = vector.load %arg12[%c0_67, %c0_68] : memref<8x32xf32, #tpu.memory_space<vmem>>, vector<8x32xf32>
      %156 = vector.shape_cast %141 : vector<8x1xi1> to vector<8x1xi1>
      %157 = vector.broadcast %156 : vector<8x1xi1> to vector<8x32xi1>
      %158 = arith.select %157, %135, %155 : vector<8x32xi1>, vector<8x32xf32>
      %c0_69 = arith.constant 0 : index
      %c0_70 = arith.constant 0 : index
      %159 = vector.load %arg12[%c0_69, %c0_70] : memref<8x32xf32, #tpu.memory_space<vmem>>, vector<8x32xf32>
      tpu.vector_store %arg12[%c0_69, %c0_70], %158 {strides = array<i32>} : memref<8x32xf32, #tpu.memory_space<vmem>>, vector<8x32xf32>,
      %160 = tpu.concatenate %145, %149 in 1 : vector<8x32xf32>, vector<8x32xf32> -> vector<8x64xf32>
      %c0_71 = arith.constant 0 : index
      %c0_72 = arith.constant 0 : index
      %161 = vector.load %arg10[%c0_71, %c0_72] : memref<8x64xf32, #tpu.memory_space<vmem>>, vector<8x64xf32>
      tpu.vector_store %arg10[%c0_71, %c0_72], %160 {strides = array<i32>} : memref<8x64xf32, #tpu.memory_space<vmem>>, vector<8x64xf32>,
      %cst_73 = arith.constant 0.000000e+00 : f32
      %162 = vector.shape_cast %139 : vector<8x1xi1> to vector<8x1xi1>
      %163 = vector.broadcast %162 : vector<8x1xi1> to vector<8x32xi1>
      %164 = vector.broadcast %cst_73 : f32 to vector<8x32xf32>
      %165 = arith.select %163, %145, %164 : vector<8x32xi1>, vector<8x32xf32>
      %166 = arith.truncf %165 : vector<8x32xf32> to vector<8x32xbf16>
      %167 = arith.index_cast %c3_i32 : i32 to index
      %c0_74 = arith.constant 0 : index
      %c0_75 = arith.constant 0 : index
      %168 = vector.load %arg7[%167, %c0_74, %c0_75] : memref<8x8x32xbf16, #tpu.memory_space<vmem>>, vector<1x8x32xbf16>
      %169 = vector.shape_cast %168 : vector<1x8x32xbf16> to vector<8x32xbf16>
      %170 = vector.shape_cast %166 : vector<8x32xbf16> to vector<1x8x32xbf16>
      tpu.vector_store %arg7[%167, %c0_74, %c0_75], %170 {strides = array<i32>} : memref<8x8x32xbf16, #tpu.memory_space<vmem>>, vector<1x8x32xbf16>,
      %cst_76 = arith.constant 0.000000e+00 : f32
      %171 = vector.shape_cast %141 : vector<8x1xi1> to vector<8x1xi1>
      %172 = vector.broadcast %171 : vector<8x1xi1> to vector<8x32xi1>
      %173 = vector.broadcast %cst_76 : f32 to vector<8x32xf32>
      %174 = arith.select %172, %149, %173 : vector<8x32xi1>, vector<8x32xf32>
      %175 = arith.truncf %174 : vector<8x32xf32> to vector<8x32xbf16>
      %176 = arith.index_cast %41 : i32 to index
      %c0_77 = arith.constant 0 : index
      %c0_78 = arith.constant 0 : index
      %177 = vector.load %arg8[%176, %c0_77, %c0_78] : memref<8x8x32xbf16, #tpu.memory_space<vmem>>, vector<1x8x32xbf16>
      %178 = vector.shape_cast %177 : vector<1x8x32xbf16> to vector<8x32xbf16>
      %179 = vector.shape_cast %175 : vector<8x32xbf16> to vector<1x8x32xbf16>
      tpu.vector_store %arg8[%176, %c0_77, %c0_78], %179 {strides = array<i32>} : memref<8x8x32xbf16, #tpu.memory_space<vmem>>, vector<1x8x32xbf16>,
    } else {
    }
    %c4_i32 = arith.constant 4 : i32
    %c7_i32_38 = arith.constant 7 : i32
    %47 = arith.subi %c7_i32_38, %c4_i32 : i32
    %48 = arith.cmpi slt, %c4_i32, %21 : i32
    %49 = arith.cmpi slt, %47, %21 : i32
    %50 = arith.ori %48, %49 : i1
    %51 = arith.extui %50 : i1 to i32
    %c0_i32_39 = arith.constant 0 : i32
    %52 = arith.cmpi ne, %51, %c0_i32_39 : i32
    scf.if %52 {
      %c0_47 = arith.constant 0 : index
      %c0_48 = arith.constant 0 : index
      %71 = vector.load %arg10[%c0_47, %c0_48] : memref<8x64xf32, #tpu.memory_space<vmem>>, vector<8x64xf32>
      %72 = arith.truncf %71 : vector<8x64xf32> to vector<8x64xbf16>
      %cst_49 = arith.constant dense<0.000000e+00> : vector<8x256xf32>
      %73 = tpu.matmul %72, %22, %cst_49 {dimension_numbers = #tpu.dot_dimension_numbers<[1], [0], [0], [1], [0, 0, 1, 1], [], []>} : vector<8x64xbf16>, vector<64x256xbf16>, vector<8x256xf32> -> vector<8x256xf32>
      %74 = arith.index_cast %c4_i32 : i32 to index
      %c0_50 = arith.constant 0 : index
      %c0_51 = arith.constant 0 : index
      %75 = vector.load %arg9[%74, %c0_50, %c0_51] : memref<8x8x256xbf16, #tpu.memory_space<vmem>>, vector<1x8x128xbf16>
      %76 = vector.shape_cast %75 : vector<1x8x128xbf16> to vector<8x128xbf16>
      %77 = vector.extract_strided_slice %73 {offsets = [0, 0], sizes = [8, 128], strides = [1, 1]} : vector<8x256xf32> to vector<8x128xf32>
      %78 = arith.extf %76 : vector<8x128xbf16> to vector<8x128xf32>
      %79 = arith.addf %78, %77 : vector<8x128xf32>
      %80 = arith.index_cast %47 : i32 to index
      %c0_52 = arith.constant 0 : index
      %c128 = arith.constant 128 : index
      %81 = vector.load %arg9[%80, %c0_52, %c128] : memref<8x8x256xbf16, #tpu.memory_space<vmem>>, vector<1x8x128xbf16>
      %82 = vector.shape_cast %81 : vector<1x8x128xbf16> to vector<8x128xbf16>
      %83 = vector.extract_strided_slice %73 {offsets = [0, 128], sizes = [8, 128], strides = [1, 1]} : vector<8x256xf32> to vector<8x128xf32>
      %84 = arith.extf %82 : vector<8x128xbf16> to vector<8x128xf32>
      %85 = arith.addf %84, %83 : vector<8x128xf32>
      %c0_53 = arith.constant 0 : index
      %c0_54 = arith.constant 0 : index
      %86 = vector.load %arg11[%c0_53, %c0_54] : memref<8x32xf32, #tpu.memory_space<vmem>>, vector<8x32xf32>
      %87 = vector.extract_strided_slice %79 {offsets = [0, 0], sizes = [8, 32], strides = [1, 1]} : vector<8x128xf32> to vector<8x32xf32>
      %88 = arith.negf %87 : vector<8x32xf32>
      %89 = math.exp %88 : vector<8x32xf32>
      %cst_55 = arith.constant 1.000000e+00 : f32
      %90 = vector.broadcast %cst_55 : f32 to vector<8x32xf32>
      %91 = arith.addf %90, %89 : vector<8x32xf32>
      %92 = arith.divf %90, %91 : vector<8x32xf32>
      %93 = vector.extract_strided_slice %79 {offsets = [0, 32], sizes = [8, 32], strides = [1, 1]} : vector<8x128xf32> to vector<8x32xf32>
      %94 = arith.negf %93 : vector<8x32xf32>
      %95 = math.exp %94 : vector<8x32xf32>
      %cst_56 = arith.constant 1.000000e+00 : f32
      %96 = vector.broadcast %cst_56 : f32 to vector<8x32xf32>
      %97 = arith.addf %96, %95 : vector<8x32xf32>
      %98 = arith.divf %96, %97 : vector<8x32xf32>
      %99 = vector.extract_strided_slice %79 {offsets = [0, 64], sizes = [8, 32], strides = [1, 1]} : vector<8x128xf32> to vector<8x32xf32>
      %100 = math.tanh %99 : vector<8x32xf32>
      %101 = vector.extract_strided_slice %79 {offsets = [0, 96], sizes = [8, 32], strides = [1, 1]} : vector<8x128xf32> to vector<8x32xf32>
      %102 = arith.negf %101 : vector<8x32xf32>
      %103 = math.exp %102 : vector<8x32xf32>
      %cst_57 = arith.constant 1.000000e+00 : f32
      %104 = vector.broadcast %cst_57 : f32 to vector<8x32xf32>
      %105 = arith.addf %104, %103 : vector<8x32xf32>
      %106 = arith.divf %104, %105 : vector<8x32xf32>
      %107 = arith.mulf %98, %86 : vector<8x32xf32>
      %108 = arith.mulf %92, %100 : vector<8x32xf32>
      %109 = arith.addf %107, %108 : vector<8x32xf32>
      %110 = math.tanh %109 : vector<8x32xf32>
      %111 = arith.mulf %106, %110 : vector<8x32xf32>
      %c0_58 = arith.constant 0 : index
      %c0_59 = arith.constant 0 : index
      %112 = vector.load %arg12[%c0_58, %c0_59] : memref<8x32xf32, #tpu.memory_space<vmem>>, vector<8x32xf32>
      %113 = vector.extract_strided_slice %85 {offsets = [0, 0], sizes = [8, 32], strides = [1, 1]} : vector<8x128xf32> to vector<8x32xf32>
      %114 = arith.negf %113 : vector<8x32xf32>
      %115 = math.exp %114 : vector<8x32xf32>
      %cst_60 = arith.constant 1.000000e+00 : f32
      %116 = vector.broadcast %cst_60 : f32 to vector<8x32xf32>
      %117 = arith.addf %116, %115 : vector<8x32xf32>
      %118 = arith.divf %116, %117 : vector<8x32xf32>
      %119 = vector.extract_strided_slice %85 {offsets = [0, 32], sizes = [8, 32], strides = [1, 1]} : vector<8x128xf32> to vector<8x32xf32>
      %120 = arith.negf %119 : vector<8x32xf32>
      %121 = math.exp %120 : vector<8x32xf32>
      %cst_61 = arith.constant 1.000000e+00 : f32
      %122 = vector.broadcast %cst_61 : f32 to vector<8x32xf32>
      %123 = arith.addf %122, %121 : vector<8x32xf32>
      %124 = arith.divf %122, %123 : vector<8x32xf32>
      %125 = vector.extract_strided_slice %85 {offsets = [0, 64], sizes = [8, 32], strides = [1, 1]} : vector<8x128xf32> to vector<8x32xf32>
      %126 = math.tanh %125 : vector<8x32xf32>
      %127 = vector.extract_strided_slice %85 {offsets = [0, 96], sizes = [8, 32], strides = [1, 1]} : vector<8x128xf32> to vector<8x32xf32>
      %128 = arith.negf %127 : vector<8x32xf32>
      %129 = math.exp %128 : vector<8x32xf32>
      %cst_62 = arith.constant 1.000000e+00 : f32
      %130 = vector.broadcast %cst_62 : f32 to vector<8x32xf32>
      %131 = arith.addf %130, %129 : vector<8x32xf32>
      %132 = arith.divf %130, %131 : vector<8x32xf32>
      %133 = arith.mulf %124, %112 : vector<8x32xf32>
      %134 = arith.mulf %118, %126 : vector<8x32xf32>
      %135 = arith.addf %133, %134 : vector<8x32xf32>
      %136 = math.tanh %135 : vector<8x32xf32>
      %137 = arith.mulf %132, %136 : vector<8x32xf32>
      %138 = vector.broadcast %c4_i32 : i32 to vector<8x1xi32>
      %139 = arith.cmpi slt, %138, %20 : vector<8x1xi32>
      %140 = vector.broadcast %47 : i32 to vector<8x1xi32>
      %141 = arith.cmpi slt, %140, %20 : vector<8x1xi32>
      %142 = vector.extract_strided_slice %71 {offsets = [0, 0], sizes = [8, 32], strides = [1, 1]} : vector<8x64xf32> to vector<8x32xf32>
      %143 = vector.shape_cast %139 : vector<8x1xi1> to vector<8x1xi1>
      %144 = vector.broadcast %143 : vector<8x1xi1> to vector<8x32xi1>
      %145 = arith.select %144, %111, %142 : vector<8x32xi1>, vector<8x32xf32>
      %146 = vector.extract_strided_slice %71 {offsets = [0, 32], sizes = [8, 32], strides = [1, 1]} : vector<8x64xf32> to vector<8x32xf32>
      %147 = vector.shape_cast %141 : vector<8x1xi1> to vector<8x1xi1>
      %148 = vector.broadcast %147 : vector<8x1xi1> to vector<8x32xi1>
      %149 = arith.select %148, %137, %146 : vector<8x32xi1>, vector<8x32xf32>
      %c0_63 = arith.constant 0 : index
      %c0_64 = arith.constant 0 : index
      %150 = vector.load %arg11[%c0_63, %c0_64] : memref<8x32xf32, #tpu.memory_space<vmem>>, vector<8x32xf32>
      %151 = vector.shape_cast %139 : vector<8x1xi1> to vector<8x1xi1>
      %152 = vector.broadcast %151 : vector<8x1xi1> to vector<8x32xi1>
      %153 = arith.select %152, %109, %150 : vector<8x32xi1>, vector<8x32xf32>
      %c0_65 = arith.constant 0 : index
      %c0_66 = arith.constant 0 : index
      %154 = vector.load %arg11[%c0_65, %c0_66] : memref<8x32xf32, #tpu.memory_space<vmem>>, vector<8x32xf32>
      tpu.vector_store %arg11[%c0_65, %c0_66], %153 {strides = array<i32>} : memref<8x32xf32, #tpu.memory_space<vmem>>, vector<8x32xf32>,
      %c0_67 = arith.constant 0 : index
      %c0_68 = arith.constant 0 : index
      %155 = vector.load %arg12[%c0_67, %c0_68] : memref<8x32xf32, #tpu.memory_space<vmem>>, vector<8x32xf32>
      %156 = vector.shape_cast %141 : vector<8x1xi1> to vector<8x1xi1>
      %157 = vector.broadcast %156 : vector<8x1xi1> to vector<8x32xi1>
      %158 = arith.select %157, %135, %155 : vector<8x32xi1>, vector<8x32xf32>
      %c0_69 = arith.constant 0 : index
      %c0_70 = arith.constant 0 : index
      %159 = vector.load %arg12[%c0_69, %c0_70] : memref<8x32xf32, #tpu.memory_space<vmem>>, vector<8x32xf32>
      tpu.vector_store %arg12[%c0_69, %c0_70], %158 {strides = array<i32>} : memref<8x32xf32, #tpu.memory_space<vmem>>, vector<8x32xf32>,
      %160 = tpu.concatenate %145, %149 in 1 : vector<8x32xf32>, vector<8x32xf32> -> vector<8x64xf32>
      %c0_71 = arith.constant 0 : index
      %c0_72 = arith.constant 0 : index
      %161 = vector.load %arg10[%c0_71, %c0_72] : memref<8x64xf32, #tpu.memory_space<vmem>>, vector<8x64xf32>
      tpu.vector_store %arg10[%c0_71, %c0_72], %160 {strides = array<i32>} : memref<8x64xf32, #tpu.memory_space<vmem>>, vector<8x64xf32>,
      %cst_73 = arith.constant 0.000000e+00 : f32
      %162 = vector.shape_cast %139 : vector<8x1xi1> to vector<8x1xi1>
      %163 = vector.broadcast %162 : vector<8x1xi1> to vector<8x32xi1>
      %164 = vector.broadcast %cst_73 : f32 to vector<8x32xf32>
      %165 = arith.select %163, %145, %164 : vector<8x32xi1>, vector<8x32xf32>
      %166 = arith.truncf %165 : vector<8x32xf32> to vector<8x32xbf16>
      %167 = arith.index_cast %c4_i32 : i32 to index
      %c0_74 = arith.constant 0 : index
      %c0_75 = arith.constant 0 : index
      %168 = vector.load %arg7[%167, %c0_74, %c0_75] : memref<8x8x32xbf16, #tpu.memory_space<vmem>>, vector<1x8x32xbf16>
      %169 = vector.shape_cast %168 : vector<1x8x32xbf16> to vector<8x32xbf16>
      %170 = vector.shape_cast %166 : vector<8x32xbf16> to vector<1x8x32xbf16>
      tpu.vector_store %arg7[%167, %c0_74, %c0_75], %170 {strides = array<i32>} : memref<8x8x32xbf16, #tpu.memory_space<vmem>>, vector<1x8x32xbf16>,
      %cst_76 = arith.constant 0.000000e+00 : f32
      %171 = vector.shape_cast %141 : vector<8x1xi1> to vector<8x1xi1>
      %172 = vector.broadcast %171 : vector<8x1xi1> to vector<8x32xi1>
      %173 = vector.broadcast %cst_76 : f32 to vector<8x32xf32>
      %174 = arith.select %172, %149, %173 : vector<8x32xi1>, vector<8x32xf32>
      %175 = arith.truncf %174 : vector<8x32xf32> to vector<8x32xbf16>
      %176 = arith.index_cast %47 : i32 to index
      %c0_77 = arith.constant 0 : index
      %c0_78 = arith.constant 0 : index
      %177 = vector.load %arg8[%176, %c0_77, %c0_78] : memref<8x8x32xbf16, #tpu.memory_space<vmem>>, vector<1x8x32xbf16>
      %178 = vector.shape_cast %177 : vector<1x8x32xbf16> to vector<8x32xbf16>
      %179 = vector.shape_cast %175 : vector<8x32xbf16> to vector<1x8x32xbf16>
      tpu.vector_store %arg8[%176, %c0_77, %c0_78], %179 {strides = array<i32>} : memref<8x8x32xbf16, #tpu.memory_space<vmem>>, vector<1x8x32xbf16>,
    } else {
    }
    %c5_i32 = arith.constant 5 : i32
    %c7_i32_40 = arith.constant 7 : i32
    %53 = arith.subi %c7_i32_40, %c5_i32 : i32
    %54 = arith.cmpi slt, %c5_i32, %21 : i32
    %55 = arith.cmpi slt, %53, %21 : i32
    %56 = arith.ori %54, %55 : i1
    %57 = arith.extui %56 : i1 to i32
    %c0_i32_41 = arith.constant 0 : i32
    %58 = arith.cmpi ne, %57, %c0_i32_41 : i32
    scf.if %58 {
      %c0_47 = arith.constant 0 : index
      %c0_48 = arith.constant 0 : index
      %71 = vector.load %arg10[%c0_47, %c0_48] : memref<8x64xf32, #tpu.memory_space<vmem>>, vector<8x64xf32>
      %72 = arith.truncf %71 : vector<8x64xf32> to vector<8x64xbf16>
      %cst_49 = arith.constant dense<0.000000e+00> : vector<8x256xf32>
      %73 = tpu.matmul %72, %22, %cst_49 {dimension_numbers = #tpu.dot_dimension_numbers<[1], [0], [0], [1], [0, 0, 1, 1], [], []>} : vector<8x64xbf16>, vector<64x256xbf16>, vector<8x256xf32> -> vector<8x256xf32>
      %74 = arith.index_cast %c5_i32 : i32 to index
      %c0_50 = arith.constant 0 : index
      %c0_51 = arith.constant 0 : index
      %75 = vector.load %arg9[%74, %c0_50, %c0_51] : memref<8x8x256xbf16, #tpu.memory_space<vmem>>, vector<1x8x128xbf16>
      %76 = vector.shape_cast %75 : vector<1x8x128xbf16> to vector<8x128xbf16>
      %77 = vector.extract_strided_slice %73 {offsets = [0, 0], sizes = [8, 128], strides = [1, 1]} : vector<8x256xf32> to vector<8x128xf32>
      %78 = arith.extf %76 : vector<8x128xbf16> to vector<8x128xf32>
      %79 = arith.addf %78, %77 : vector<8x128xf32>
      %80 = arith.index_cast %53 : i32 to index
      %c0_52 = arith.constant 0 : index
      %c128 = arith.constant 128 : index
      %81 = vector.load %arg9[%80, %c0_52, %c128] : memref<8x8x256xbf16, #tpu.memory_space<vmem>>, vector<1x8x128xbf16>
      %82 = vector.shape_cast %81 : vector<1x8x128xbf16> to vector<8x128xbf16>
      %83 = vector.extract_strided_slice %73 {offsets = [0, 128], sizes = [8, 128], strides = [1, 1]} : vector<8x256xf32> to vector<8x128xf32>
      %84 = arith.extf %82 : vector<8x128xbf16> to vector<8x128xf32>
      %85 = arith.addf %84, %83 : vector<8x128xf32>
      %c0_53 = arith.constant 0 : index
      %c0_54 = arith.constant 0 : index
      %86 = vector.load %arg11[%c0_53, %c0_54] : memref<8x32xf32, #tpu.memory_space<vmem>>, vector<8x32xf32>
      %87 = vector.extract_strided_slice %79 {offsets = [0, 0], sizes = [8, 32], strides = [1, 1]} : vector<8x128xf32> to vector<8x32xf32>
      %88 = arith.negf %87 : vector<8x32xf32>
      %89 = math.exp %88 : vector<8x32xf32>
      %cst_55 = arith.constant 1.000000e+00 : f32
      %90 = vector.broadcast %cst_55 : f32 to vector<8x32xf32>
      %91 = arith.addf %90, %89 : vector<8x32xf32>
      %92 = arith.divf %90, %91 : vector<8x32xf32>
      %93 = vector.extract_strided_slice %79 {offsets = [0, 32], sizes = [8, 32], strides = [1, 1]} : vector<8x128xf32> to vector<8x32xf32>
      %94 = arith.negf %93 : vector<8x32xf32>
      %95 = math.exp %94 : vector<8x32xf32>
      %cst_56 = arith.constant 1.000000e+00 : f32
      %96 = vector.broadcast %cst_56 : f32 to vector<8x32xf32>
      %97 = arith.addf %96, %95 : vector<8x32xf32>
      %98 = arith.divf %96, %97 : vector<8x32xf32>
      %99 = vector.extract_strided_slice %79 {offsets = [0, 64], sizes = [8, 32], strides = [1, 1]} : vector<8x128xf32> to vector<8x32xf32>
      %100 = math.tanh %99 : vector<8x32xf32>
      %101 = vector.extract_strided_slice %79 {offsets = [0, 96], sizes = [8, 32], strides = [1, 1]} : vector<8x128xf32> to vector<8x32xf32>
      %102 = arith.negf %101 : vector<8x32xf32>
      %103 = math.exp %102 : vector<8x32xf32>
      %cst_57 = arith.constant 1.000000e+00 : f32
      %104 = vector.broadcast %cst_57 : f32 to vector<8x32xf32>
      %105 = arith.addf %104, %103 : vector<8x32xf32>
      %106 = arith.divf %104, %105 : vector<8x32xf32>
      %107 = arith.mulf %98, %86 : vector<8x32xf32>
      %108 = arith.mulf %92, %100 : vector<8x32xf32>
      %109 = arith.addf %107, %108 : vector<8x32xf32>
      %110 = math.tanh %109 : vector<8x32xf32>
      %111 = arith.mulf %106, %110 : vector<8x32xf32>
      %c0_58 = arith.constant 0 : index
      %c0_59 = arith.constant 0 : index
      %112 = vector.load %arg12[%c0_58, %c0_59] : memref<8x32xf32, #tpu.memory_space<vmem>>, vector<8x32xf32>
      %113 = vector.extract_strided_slice %85 {offsets = [0, 0], sizes = [8, 32], strides = [1, 1]} : vector<8x128xf32> to vector<8x32xf32>
      %114 = arith.negf %113 : vector<8x32xf32>
      %115 = math.exp %114 : vector<8x32xf32>
      %cst_60 = arith.constant 1.000000e+00 : f32
      %116 = vector.broadcast %cst_60 : f32 to vector<8x32xf32>
      %117 = arith.addf %116, %115 : vector<8x32xf32>
      %118 = arith.divf %116, %117 : vector<8x32xf32>
      %119 = vector.extract_strided_slice %85 {offsets = [0, 32], sizes = [8, 32], strides = [1, 1]} : vector<8x128xf32> to vector<8x32xf32>
      %120 = arith.negf %119 : vector<8x32xf32>
      %121 = math.exp %120 : vector<8x32xf32>
      %cst_61 = arith.constant 1.000000e+00 : f32
      %122 = vector.broadcast %cst_61 : f32 to vector<8x32xf32>
      %123 = arith.addf %122, %121 : vector<8x32xf32>
      %124 = arith.divf %122, %123 : vector<8x32xf32>
      %125 = vector.extract_strided_slice %85 {offsets = [0, 64], sizes = [8, 32], strides = [1, 1]} : vector<8x128xf32> to vector<8x32xf32>
      %126 = math.tanh %125 : vector<8x32xf32>
      %127 = vector.extract_strided_slice %85 {offsets = [0, 96], sizes = [8, 32], strides = [1, 1]} : vector<8x128xf32> to vector<8x32xf32>
      %128 = arith.negf %127 : vector<8x32xf32>
      %129 = math.exp %128 : vector<8x32xf32>
      %cst_62 = arith.constant 1.000000e+00 : f32
      %130 = vector.broadcast %cst_62 : f32 to vector<8x32xf32>
      %131 = arith.addf %130, %129 : vector<8x32xf32>
      %132 = arith.divf %130, %131 : vector<8x32xf32>
      %133 = arith.mulf %124, %112 : vector<8x32xf32>
      %134 = arith.mulf %118, %126 : vector<8x32xf32>
      %135 = arith.addf %133, %134 : vector<8x32xf32>
      %136 = math.tanh %135 : vector<8x32xf32>
      %137 = arith.mulf %132, %136 : vector<8x32xf32>
      %138 = vector.broadcast %c5_i32 : i32 to vector<8x1xi32>
      %139 = arith.cmpi slt, %138, %20 : vector<8x1xi32>
      %140 = vector.broadcast %53 : i32 to vector<8x1xi32>
      %141 = arith.cmpi slt, %140, %20 : vector<8x1xi32>
      %142 = vector.extract_strided_slice %71 {offsets = [0, 0], sizes = [8, 32], strides = [1, 1]} : vector<8x64xf32> to vector<8x32xf32>
      %143 = vector.shape_cast %139 : vector<8x1xi1> to vector<8x1xi1>
      %144 = vector.broadcast %143 : vector<8x1xi1> to vector<8x32xi1>
      %145 = arith.select %144, %111, %142 : vector<8x32xi1>, vector<8x32xf32>
      %146 = vector.extract_strided_slice %71 {offsets = [0, 32], sizes = [8, 32], strides = [1, 1]} : vector<8x64xf32> to vector<8x32xf32>
      %147 = vector.shape_cast %141 : vector<8x1xi1> to vector<8x1xi1>
      %148 = vector.broadcast %147 : vector<8x1xi1> to vector<8x32xi1>
      %149 = arith.select %148, %137, %146 : vector<8x32xi1>, vector<8x32xf32>
      %c0_63 = arith.constant 0 : index
      %c0_64 = arith.constant 0 : index
      %150 = vector.load %arg11[%c0_63, %c0_64] : memref<8x32xf32, #tpu.memory_space<vmem>>, vector<8x32xf32>
      %151 = vector.shape_cast %139 : vector<8x1xi1> to vector<8x1xi1>
      %152 = vector.broadcast %151 : vector<8x1xi1> to vector<8x32xi1>
      %153 = arith.select %152, %109, %150 : vector<8x32xi1>, vector<8x32xf32>
      %c0_65 = arith.constant 0 : index
      %c0_66 = arith.constant 0 : index
      %154 = vector.load %arg11[%c0_65, %c0_66] : memref<8x32xf32, #tpu.memory_space<vmem>>, vector<8x32xf32>
      tpu.vector_store %arg11[%c0_65, %c0_66], %153 {strides = array<i32>} : memref<8x32xf32, #tpu.memory_space<vmem>>, vector<8x32xf32>,
      %c0_67 = arith.constant 0 : index
      %c0_68 = arith.constant 0 : index
      %155 = vector.load %arg12[%c0_67, %c0_68] : memref<8x32xf32, #tpu.memory_space<vmem>>, vector<8x32xf32>
      %156 = vector.shape_cast %141 : vector<8x1xi1> to vector<8x1xi1>
      %157 = vector.broadcast %156 : vector<8x1xi1> to vector<8x32xi1>
      %158 = arith.select %157, %135, %155 : vector<8x32xi1>, vector<8x32xf32>
      %c0_69 = arith.constant 0 : index
      %c0_70 = arith.constant 0 : index
      %159 = vector.load %arg12[%c0_69, %c0_70] : memref<8x32xf32, #tpu.memory_space<vmem>>, vector<8x32xf32>
      tpu.vector_store %arg12[%c0_69, %c0_70], %158 {strides = array<i32>} : memref<8x32xf32, #tpu.memory_space<vmem>>, vector<8x32xf32>,
      %160 = tpu.concatenate %145, %149 in 1 : vector<8x32xf32>, vector<8x32xf32> -> vector<8x64xf32>
      %c0_71 = arith.constant 0 : index
      %c0_72 = arith.constant 0 : index
      %161 = vector.load %arg10[%c0_71, %c0_72] : memref<8x64xf32, #tpu.memory_space<vmem>>, vector<8x64xf32>
      tpu.vector_store %arg10[%c0_71, %c0_72], %160 {strides = array<i32>} : memref<8x64xf32, #tpu.memory_space<vmem>>, vector<8x64xf32>,
      %cst_73 = arith.constant 0.000000e+00 : f32
      %162 = vector.shape_cast %139 : vector<8x1xi1> to vector<8x1xi1>
      %163 = vector.broadcast %162 : vector<8x1xi1> to vector<8x32xi1>
      %164 = vector.broadcast %cst_73 : f32 to vector<8x32xf32>
      %165 = arith.select %163, %145, %164 : vector<8x32xi1>, vector<8x32xf32>
      %166 = arith.truncf %165 : vector<8x32xf32> to vector<8x32xbf16>
      %167 = arith.index_cast %c5_i32 : i32 to index
      %c0_74 = arith.constant 0 : index
      %c0_75 = arith.constant 0 : index
      %168 = vector.load %arg7[%167, %c0_74, %c0_75] : memref<8x8x32xbf16, #tpu.memory_space<vmem>>, vector<1x8x32xbf16>
      %169 = vector.shape_cast %168 : vector<1x8x32xbf16> to vector<8x32xbf16>
      %170 = vector.shape_cast %166 : vector<8x32xbf16> to vector<1x8x32xbf16>
      tpu.vector_store %arg7[%167, %c0_74, %c0_75], %170 {strides = array<i32>} : memref<8x8x32xbf16, #tpu.memory_space<vmem>>, vector<1x8x32xbf16>,
      %cst_76 = arith.constant 0.000000e+00 : f32
      %171 = vector.shape_cast %141 : vector<8x1xi1> to vector<8x1xi1>
      %172 = vector.broadcast %171 : vector<8x1xi1> to vector<8x32xi1>
      %173 = vector.broadcast %cst_76 : f32 to vector<8x32xf32>
      %174 = arith.select %172, %149, %173 : vector<8x32xi1>, vector<8x32xf32>
      %175 = arith.truncf %174 : vector<8x32xf32> to vector<8x32xbf16>
      %176 = arith.index_cast %53 : i32 to index
      %c0_77 = arith.constant 0 : index
      %c0_78 = arith.constant 0 : index
      %177 = vector.load %arg8[%176, %c0_77, %c0_78] : memref<8x8x32xbf16, #tpu.memory_space<vmem>>, vector<1x8x32xbf16>
      %178 = vector.shape_cast %177 : vector<1x8x32xbf16> to vector<8x32xbf16>
      %179 = vector.shape_cast %175 : vector<8x32xbf16> to vector<1x8x32xbf16>
      tpu.vector_store %arg8[%176, %c0_77, %c0_78], %179 {strides = array<i32>} : memref<8x8x32xbf16, #tpu.memory_space<vmem>>, vector<1x8x32xbf16>,
    } else {
    }
    %c6_i32 = arith.constant 6 : i32
    %c7_i32_42 = arith.constant 7 : i32
    %59 = arith.subi %c7_i32_42, %c6_i32 : i32
    %60 = arith.cmpi slt, %c6_i32, %21 : i32
    %61 = arith.cmpi slt, %59, %21 : i32
    %62 = arith.ori %60, %61 : i1
    %63 = arith.extui %62 : i1 to i32
    %c0_i32_43 = arith.constant 0 : i32
    %64 = arith.cmpi ne, %63, %c0_i32_43 : i32
    scf.if %64 {
      %c0_47 = arith.constant 0 : index
      %c0_48 = arith.constant 0 : index
      %71 = vector.load %arg10[%c0_47, %c0_48] : memref<8x64xf32, #tpu.memory_space<vmem>>, vector<8x64xf32>
      %72 = arith.truncf %71 : vector<8x64xf32> to vector<8x64xbf16>
      %cst_49 = arith.constant dense<0.000000e+00> : vector<8x256xf32>
      %73 = tpu.matmul %72, %22, %cst_49 {dimension_numbers = #tpu.dot_dimension_numbers<[1], [0], [0], [1], [0, 0, 1, 1], [], []>} : vector<8x64xbf16>, vector<64x256xbf16>, vector<8x256xf32> -> vector<8x256xf32>
      %74 = arith.index_cast %c6_i32 : i32 to index
      %c0_50 = arith.constant 0 : index
      %c0_51 = arith.constant 0 : index
      %75 = vector.load %arg9[%74, %c0_50, %c0_51] : memref<8x8x256xbf16, #tpu.memory_space<vmem>>, vector<1x8x128xbf16>
      %76 = vector.shape_cast %75 : vector<1x8x128xbf16> to vector<8x128xbf16>
      %77 = vector.extract_strided_slice %73 {offsets = [0, 0], sizes = [8, 128], strides = [1, 1]} : vector<8x256xf32> to vector<8x128xf32>
      %78 = arith.extf %76 : vector<8x128xbf16> to vector<8x128xf32>
      %79 = arith.addf %78, %77 : vector<8x128xf32>
      %80 = arith.index_cast %59 : i32 to index
      %c0_52 = arith.constant 0 : index
      %c128 = arith.constant 128 : index
      %81 = vector.load %arg9[%80, %c0_52, %c128] : memref<8x8x256xbf16, #tpu.memory_space<vmem>>, vector<1x8x128xbf16>
      %82 = vector.shape_cast %81 : vector<1x8x128xbf16> to vector<8x128xbf16>
      %83 = vector.extract_strided_slice %73 {offsets = [0, 128], sizes = [8, 128], strides = [1, 1]} : vector<8x256xf32> to vector<8x128xf32>
      %84 = arith.extf %82 : vector<8x128xbf16> to vector<8x128xf32>
      %85 = arith.addf %84, %83 : vector<8x128xf32>
      %c0_53 = arith.constant 0 : index
      %c0_54 = arith.constant 0 : index
      %86 = vector.load %arg11[%c0_53, %c0_54] : memref<8x32xf32, #tpu.memory_space<vmem>>, vector<8x32xf32>
      %87 = vector.extract_strided_slice %79 {offsets = [0, 0], sizes = [8, 32], strides = [1, 1]} : vector<8x128xf32> to vector<8x32xf32>
      %88 = arith.negf %87 : vector<8x32xf32>
      %89 = math.exp %88 : vector<8x32xf32>
      %cst_55 = arith.constant 1.000000e+00 : f32
      %90 = vector.broadcast %cst_55 : f32 to vector<8x32xf32>
      %91 = arith.addf %90, %89 : vector<8x32xf32>
      %92 = arith.divf %90, %91 : vector<8x32xf32>
      %93 = vector.extract_strided_slice %79 {offsets = [0, 32], sizes = [8, 32], strides = [1, 1]} : vector<8x128xf32> to vector<8x32xf32>
      %94 = arith.negf %93 : vector<8x32xf32>
      %95 = math.exp %94 : vector<8x32xf32>
      %cst_56 = arith.constant 1.000000e+00 : f32
      %96 = vector.broadcast %cst_56 : f32 to vector<8x32xf32>
      %97 = arith.addf %96, %95 : vector<8x32xf32>
      %98 = arith.divf %96, %97 : vector<8x32xf32>
      %99 = vector.extract_strided_slice %79 {offsets = [0, 64], sizes = [8, 32], strides = [1, 1]} : vector<8x128xf32> to vector<8x32xf32>
      %100 = math.tanh %99 : vector<8x32xf32>
      %101 = vector.extract_strided_slice %79 {offsets = [0, 96], sizes = [8, 32], strides = [1, 1]} : vector<8x128xf32> to vector<8x32xf32>
      %102 = arith.negf %101 : vector<8x32xf32>
      %103 = math.exp %102 : vector<8x32xf32>
      %cst_57 = arith.constant 1.000000e+00 : f32
      %104 = vector.broadcast %cst_57 : f32 to vector<8x32xf32>
      %105 = arith.addf %104, %103 : vector<8x32xf32>
      %106 = arith.divf %104, %105 : vector<8x32xf32>
      %107 = arith.mulf %98, %86 : vector<8x32xf32>
      %108 = arith.mulf %92, %100 : vector<8x32xf32>
      %109 = arith.addf %107, %108 : vector<8x32xf32>
      %110 = math.tanh %109 : vector<8x32xf32>
      %111 = arith.mulf %106, %110 : vector<8x32xf32>
      %c0_58 = arith.constant 0 : index
      %c0_59 = arith.constant 0 : index
      %112 = vector.load %arg12[%c0_58, %c0_59] : memref<8x32xf32, #tpu.memory_space<vmem>>, vector<8x32xf32>
      %113 = vector.extract_strided_slice %85 {offsets = [0, 0], sizes = [8, 32], strides = [1, 1]} : vector<8x128xf32> to vector<8x32xf32>
      %114 = arith.negf %113 : vector<8x32xf32>
      %115 = math.exp %114 : vector<8x32xf32>
      %cst_60 = arith.constant 1.000000e+00 : f32
      %116 = vector.broadcast %cst_60 : f32 to vector<8x32xf32>
      %117 = arith.addf %116, %115 : vector<8x32xf32>
      %118 = arith.divf %116, %117 : vector<8x32xf32>
      %119 = vector.extract_strided_slice %85 {offsets = [0, 32], sizes = [8, 32], strides = [1, 1]} : vector<8x128xf32> to vector<8x32xf32>
      %120 = arith.negf %119 : vector<8x32xf32>
      %121 = math.exp %120 : vector<8x32xf32>
      %cst_61 = arith.constant 1.000000e+00 : f32
      %122 = vector.broadcast %cst_61 : f32 to vector<8x32xf32>
      %123 = arith.addf %122, %121 : vector<8x32xf32>
      %124 = arith.divf %122, %123 : vector<8x32xf32>
      %125 = vector.extract_strided_slice %85 {offsets = [0, 64], sizes = [8, 32], strides = [1, 1]} : vector<8x128xf32> to vector<8x32xf32>
      %126 = math.tanh %125 : vector<8x32xf32>
      %127 = vector.extract_strided_slice %85 {offsets = [0, 96], sizes = [8, 32], strides = [1, 1]} : vector<8x128xf32> to vector<8x32xf32>
      %128 = arith.negf %127 : vector<8x32xf32>
      %129 = math.exp %128 : vector<8x32xf32>
      %cst_62 = arith.constant 1.000000e+00 : f32
      %130 = vector.broadcast %cst_62 : f32 to vector<8x32xf32>
      %131 = arith.addf %130, %129 : vector<8x32xf32>
      %132 = arith.divf %130, %131 : vector<8x32xf32>
      %133 = arith.mulf %124, %112 : vector<8x32xf32>
      %134 = arith.mulf %118, %126 : vector<8x32xf32>
      %135 = arith.addf %133, %134 : vector<8x32xf32>
      %136 = math.tanh %135 : vector<8x32xf32>
      %137 = arith.mulf %132, %136 : vector<8x32xf32>
      %138 = vector.broadcast %c6_i32 : i32 to vector<8x1xi32>
      %139 = arith.cmpi slt, %138, %20 : vector<8x1xi32>
      %140 = vector.broadcast %59 : i32 to vector<8x1xi32>
      %141 = arith.cmpi slt, %140, %20 : vector<8x1xi32>
      %142 = vector.extract_strided_slice %71 {offsets = [0, 0], sizes = [8, 32], strides = [1, 1]} : vector<8x64xf32> to vector<8x32xf32>
      %143 = vector.shape_cast %139 : vector<8x1xi1> to vector<8x1xi1>
      %144 = vector.broadcast %143 : vector<8x1xi1> to vector<8x32xi1>
      %145 = arith.select %144, %111, %142 : vector<8x32xi1>, vector<8x32xf32>
      %146 = vector.extract_strided_slice %71 {offsets = [0, 32], sizes = [8, 32], strides = [1, 1]} : vector<8x64xf32> to vector<8x32xf32>
      %147 = vector.shape_cast %141 : vector<8x1xi1> to vector<8x1xi1>
      %148 = vector.broadcast %147 : vector<8x1xi1> to vector<8x32xi1>
      %149 = arith.select %148, %137, %146 : vector<8x32xi1>, vector<8x32xf32>
      %c0_63 = arith.constant 0 : index
      %c0_64 = arith.constant 0 : index
      %150 = vector.load %arg11[%c0_63, %c0_64] : memref<8x32xf32, #tpu.memory_space<vmem>>, vector<8x32xf32>
      %151 = vector.shape_cast %139 : vector<8x1xi1> to vector<8x1xi1>
      %152 = vector.broadcast %151 : vector<8x1xi1> to vector<8x32xi1>
      %153 = arith.select %152, %109, %150 : vector<8x32xi1>, vector<8x32xf32>
      %c0_65 = arith.constant 0 : index
      %c0_66 = arith.constant 0 : index
      %154 = vector.load %arg11[%c0_65, %c0_66] : memref<8x32xf32, #tpu.memory_space<vmem>>, vector<8x32xf32>
      tpu.vector_store %arg11[%c0_65, %c0_66], %153 {strides = array<i32>} : memref<8x32xf32, #tpu.memory_space<vmem>>, vector<8x32xf32>,
      %c0_67 = arith.constant 0 : index
      %c0_68 = arith.constant 0 : index
      %155 = vector.load %arg12[%c0_67, %c0_68] : memref<8x32xf32, #tpu.memory_space<vmem>>, vector<8x32xf32>
      %156 = vector.shape_cast %141 : vector<8x1xi1> to vector<8x1xi1>
      %157 = vector.broadcast %156 : vector<8x1xi1> to vector<8x32xi1>
      %158 = arith.select %157, %135, %155 : vector<8x32xi1>, vector<8x32xf32>
      %c0_69 = arith.constant 0 : index
      %c0_70 = arith.constant 0 : index
      %159 = vector.load %arg12[%c0_69, %c0_70] : memref<8x32xf32, #tpu.memory_space<vmem>>, vector<8x32xf32>
      tpu.vector_store %arg12[%c0_69, %c0_70], %158 {strides = array<i32>} : memref<8x32xf32, #tpu.memory_space<vmem>>, vector<8x32xf32>,
      %160 = tpu.concatenate %145, %149 in 1 : vector<8x32xf32>, vector<8x32xf32> -> vector<8x64xf32>
      %c0_71 = arith.constant 0 : index
      %c0_72 = arith.constant 0 : index
      %161 = vector.load %arg10[%c0_71, %c0_72] : memref<8x64xf32, #tpu.memory_space<vmem>>, vector<8x64xf32>
      tpu.vector_store %arg10[%c0_71, %c0_72], %160 {strides = array<i32>} : memref<8x64xf32, #tpu.memory_space<vmem>>, vector<8x64xf32>,
      %cst_73 = arith.constant 0.000000e+00 : f32
      %162 = vector.shape_cast %139 : vector<8x1xi1> to vector<8x1xi1>
      %163 = vector.broadcast %162 : vector<8x1xi1> to vector<8x32xi1>
      %164 = vector.broadcast %cst_73 : f32 to vector<8x32xf32>
      %165 = arith.select %163, %145, %164 : vector<8x32xi1>, vector<8x32xf32>
      %166 = arith.truncf %165 : vector<8x32xf32> to vector<8x32xbf16>
      %167 = arith.index_cast %c6_i32 : i32 to index
      %c0_74 = arith.constant 0 : index
      %c0_75 = arith.constant 0 : index
      %168 = vector.load %arg7[%167, %c0_74, %c0_75] : memref<8x8x32xbf16, #tpu.memory_space<vmem>>, vector<1x8x32xbf16>
      %169 = vector.shape_cast %168 : vector<1x8x32xbf16> to vector<8x32xbf16>
      %170 = vector.shape_cast %166 : vector<8x32xbf16> to vector<1x8x32xbf16>
      tpu.vector_store %arg7[%167, %c0_74, %c0_75], %170 {strides = array<i32>} : memref<8x8x32xbf16, #tpu.memory_space<vmem>>, vector<1x8x32xbf16>,
      %cst_76 = arith.constant 0.000000e+00 : f32
      %171 = vector.shape_cast %141 : vector<8x1xi1> to vector<8x1xi1>
      %172 = vector.broadcast %171 : vector<8x1xi1> to vector<8x32xi1>
      %173 = vector.broadcast %cst_76 : f32 to vector<8x32xf32>
      %174 = arith.select %172, %149, %173 : vector<8x32xi1>, vector<8x32xf32>
      %175 = arith.truncf %174 : vector<8x32xf32> to vector<8x32xbf16>
      %176 = arith.index_cast %59 : i32 to index
      %c0_77 = arith.constant 0 : index
      %c0_78 = arith.constant 0 : index
      %177 = vector.load %arg8[%176, %c0_77, %c0_78] : memref<8x8x32xbf16, #tpu.memory_space<vmem>>, vector<1x8x32xbf16>
      %178 = vector.shape_cast %177 : vector<1x8x32xbf16> to vector<8x32xbf16>
      %179 = vector.shape_cast %175 : vector<8x32xbf16> to vector<1x8x32xbf16>
      tpu.vector_store %arg8[%176, %c0_77, %c0_78], %179 {strides = array<i32>} : memref<8x8x32xbf16, #tpu.memory_space<vmem>>, vector<1x8x32xbf16>,
    } else {
    }
    %c7_i32_44 = arith.constant 7 : i32
    %c7_i32_45 = arith.constant 7 : i32
    %65 = arith.subi %c7_i32_45, %c7_i32_44 : i32
    %66 = arith.cmpi slt, %c7_i32_44, %21 : i32
    %67 = arith.cmpi slt, %65, %21 : i32
    %68 = arith.ori %66, %67 : i1
    %69 = arith.extui %68 : i1 to i32
    %c0_i32_46 = arith.constant 0 : i32
    %70 = arith.cmpi ne, %69, %c0_i32_46 : i32
    scf.if %70 {
      %c0_47 = arith.constant 0 : index
      %c0_48 = arith.constant 0 : index
      %71 = vector.load %arg10[%c0_47, %c0_48] : memref<8x64xf32, #tpu.memory_space<vmem>>, vector<8x64xf32>
      %72 = arith.truncf %71 : vector<8x64xf32> to vector<8x64xbf16>
      %cst_49 = arith.constant dense<0.000000e+00> : vector<8x256xf32>
      %73 = tpu.matmul %72, %22, %cst_49 {dimension_numbers = #tpu.dot_dimension_numbers<[1], [0], [0], [1], [0, 0, 1, 1], [], []>} : vector<8x64xbf16>, vector<64x256xbf16>, vector<8x256xf32> -> vector<8x256xf32>
      %74 = arith.index_cast %c7_i32_44 : i32 to index
      %c0_50 = arith.constant 0 : index
      %c0_51 = arith.constant 0 : index
      %75 = vector.load %arg9[%74, %c0_50, %c0_51] : memref<8x8x256xbf16, #tpu.memory_space<vmem>>, vector<1x8x128xbf16>
      %76 = vector.shape_cast %75 : vector<1x8x128xbf16> to vector<8x128xbf16>
      %77 = vector.extract_strided_slice %73 {offsets = [0, 0], sizes = [8, 128], strides = [1, 1]} : vector<8x256xf32> to vector<8x128xf32>
      %78 = arith.extf %76 : vector<8x128xbf16> to vector<8x128xf32>
      %79 = arith.addf %78, %77 : vector<8x128xf32>
      %80 = arith.index_cast %65 : i32 to index
      %c0_52 = arith.constant 0 : index
      %c128 = arith.constant 128 : index
      %81 = vector.load %arg9[%80, %c0_52, %c128] : memref<8x8x256xbf16, #tpu.memory_space<vmem>>, vector<1x8x128xbf16>
      %82 = vector.shape_cast %81 : vector<1x8x128xbf16> to vector<8x128xbf16>
      %83 = vector.extract_strided_slice %73 {offsets = [0, 128], sizes = [8, 128], strides = [1, 1]} : vector<8x256xf32> to vector<8x128xf32>
      %84 = arith.extf %82 : vector<8x128xbf16> to vector<8x128xf32>
      %85 = arith.addf %84, %83 : vector<8x128xf32>
      %c0_53 = arith.constant 0 : index
      %c0_54 = arith.constant 0 : index
      %86 = vector.load %arg11[%c0_53, %c0_54] : memref<8x32xf32, #tpu.memory_space<vmem>>, vector<8x32xf32>
      %87 = vector.extract_strided_slice %79 {offsets = [0, 0], sizes = [8, 32], strides = [1, 1]} : vector<8x128xf32> to vector<8x32xf32>
      %88 = arith.negf %87 : vector<8x32xf32>
      %89 = math.exp %88 : vector<8x32xf32>
      %cst_55 = arith.constant 1.000000e+00 : f32
      %90 = vector.broadcast %cst_55 : f32 to vector<8x32xf32>
      %91 = arith.addf %90, %89 : vector<8x32xf32>
      %92 = arith.divf %90, %91 : vector<8x32xf32>
      %93 = vector.extract_strided_slice %79 {offsets = [0, 32], sizes = [8, 32], strides = [1, 1]} : vector<8x128xf32> to vector<8x32xf32>
      %94 = arith.negf %93 : vector<8x32xf32>
      %95 = math.exp %94 : vector<8x32xf32>
      %cst_56 = arith.constant 1.000000e+00 : f32
      %96 = vector.broadcast %cst_56 : f32 to vector<8x32xf32>
      %97 = arith.addf %96, %95 : vector<8x32xf32>
      %98 = arith.divf %96, %97 : vector<8x32xf32>
      %99 = vector.extract_strided_slice %79 {offsets = [0, 64], sizes = [8, 32], strides = [1, 1]} : vector<8x128xf32> to vector<8x32xf32>
      %100 = math.tanh %99 : vector<8x32xf32>
      %101 = vector.extract_strided_slice %79 {offsets = [0, 96], sizes = [8, 32], strides = [1, 1]} : vector<8x128xf32> to vector<8x32xf32>
      %102 = arith.negf %101 : vector<8x32xf32>
      %103 = math.exp %102 : vector<8x32xf32>
      %cst_57 = arith.constant 1.000000e+00 : f32
      %104 = vector.broadcast %cst_57 : f32 to vector<8x32xf32>
      %105 = arith.addf %104, %103 : vector<8x32xf32>
      %106 = arith.divf %104, %105 : vector<8x32xf32>
      %107 = arith.mulf %98, %86 : vector<8x32xf32>
      %108 = arith.mulf %92, %100 : vector<8x32xf32>
      %109 = arith.addf %107, %108 : vector<8x32xf32>
      %110 = math.tanh %109 : vector<8x32xf32>
      %111 = arith.mulf %106, %110 : vector<8x32xf32>
      %c0_58 = arith.constant 0 : index
      %c0_59 = arith.constant 0 : index
      %112 = vector.load %arg12[%c0_58, %c0_59] : memref<8x32xf32, #tpu.memory_space<vmem>>, vector<8x32xf32>
      %113 = vector.extract_strided_slice %85 {offsets = [0, 0], sizes = [8, 32], strides = [1, 1]} : vector<8x128xf32> to vector<8x32xf32>
      %114 = arith.negf %113 : vector<8x32xf32>
      %115 = math.exp %114 : vector<8x32xf32>
      %cst_60 = arith.constant 1.000000e+00 : f32
      %116 = vector.broadcast %cst_60 : f32 to vector<8x32xf32>
      %117 = arith.addf %116, %115 : vector<8x32xf32>
      %118 = arith.divf %116, %117 : vector<8x32xf32>
      %119 = vector.extract_strided_slice %85 {offsets = [0, 32], sizes = [8, 32], strides = [1, 1]} : vector<8x128xf32> to vector<8x32xf32>
      %120 = arith.negf %119 : vector<8x32xf32>
      %121 = math.exp %120 : vector<8x32xf32>
      %cst_61 = arith.constant 1.000000e+00 : f32
      %122 = vector.broadcast %cst_61 : f32 to vector<8x32xf32>
      %123 = arith.addf %122, %121 : vector<8x32xf32>
      %124 = arith.divf %122, %123 : vector<8x32xf32>
      %125 = vector.extract_strided_slice %85 {offsets = [0, 64], sizes = [8, 32], strides = [1, 1]} : vector<8x128xf32> to vector<8x32xf32>
      %126 = math.tanh %125 : vector<8x32xf32>
      %127 = vector.extract_strided_slice %85 {offsets = [0, 96], sizes = [8, 32], strides = [1, 1]} : vector<8x128xf32> to vector<8x32xf32>
      %128 = arith.negf %127 : vector<8x32xf32>
      %129 = math.exp %128 : vector<8x32xf32>
      %cst_62 = arith.constant 1.000000e+00 : f32
      %130 = vector.broadcast %cst_62 : f32 to vector<8x32xf32>
      %131 = arith.addf %130, %129 : vector<8x32xf32>
      %132 = arith.divf %130, %131 : vector<8x32xf32>
      %133 = arith.mulf %124, %112 : vector<8x32xf32>
      %134 = arith.mulf %118, %126 : vector<8x32xf32>
      %135 = arith.addf %133, %134 : vector<8x32xf32>
      %136 = math.tanh %135 : vector<8x32xf32>
      %137 = arith.mulf %132, %136 : vector<8x32xf32>
      %138 = vector.broadcast %c7_i32_44 : i32 to vector<8x1xi32>
      %139 = arith.cmpi slt, %138, %20 : vector<8x1xi32>
      %140 = vector.broadcast %65 : i32 to vector<8x1xi32>
      %141 = arith.cmpi slt, %140, %20 : vector<8x1xi32>
      %142 = vector.extract_strided_slice %71 {offsets = [0, 0], sizes = [8, 32], strides = [1, 1]} : vector<8x64xf32> to vector<8x32xf32>
      %143 = vector.shape_cast %139 : vector<8x1xi1> to vector<8x1xi1>
      %144 = vector.broadcast %143 : vector<8x1xi1> to vector<8x32xi1>
      %145 = arith.select %144, %111, %142 : vector<8x32xi1>, vector<8x32xf32>
      %146 = vector.extract_strided_slice %71 {offsets = [0, 32], sizes = [8, 32], strides = [1, 1]} : vector<8x64xf32> to vector<8x32xf32>
      %147 = vector.shape_cast %141 : vector<8x1xi1> to vector<8x1xi1>
      %148 = vector.broadcast %147 : vector<8x1xi1> to vector<8x32xi1>
      %149 = arith.select %148, %137, %146 : vector<8x32xi1>, vector<8x32xf32>
      %c0_63 = arith.constant 0 : index
      %c0_64 = arith.constant 0 : index
      %150 = vector.load %arg11[%c0_63, %c0_64] : memref<8x32xf32, #tpu.memory_space<vmem>>, vector<8x32xf32>
      %151 = vector.shape_cast %139 : vector<8x1xi1> to vector<8x1xi1>
      %152 = vector.broadcast %151 : vector<8x1xi1> to vector<8x32xi1>
      %153 = arith.select %152, %109, %150 : vector<8x32xi1>, vector<8x32xf32>
      %c0_65 = arith.constant 0 : index
      %c0_66 = arith.constant 0 : index
      %154 = vector.load %arg11[%c0_65, %c0_66] : memref<8x32xf32, #tpu.memory_space<vmem>>, vector<8x32xf32>
      tpu.vector_store %arg11[%c0_65, %c0_66], %153 {strides = array<i32>} : memref<8x32xf32, #tpu.memory_space<vmem>>, vector<8x32xf32>,
      %c0_67 = arith.constant 0 : index
      %c0_68 = arith.constant 0 : index
      %155 = vector.load %arg12[%c0_67, %c0_68] : memref<8x32xf32, #tpu.memory_space<vmem>>, vector<8x32xf32>
      %156 = vector.shape_cast %141 : vector<8x1xi1> to vector<8x1xi1>
      %157 = vector.broadcast %156 : vector<8x1xi1> to vector<8x32xi1>
      %158 = arith.select %157, %135, %155 : vector<8x32xi1>, vector<8x32xf32>
      %c0_69 = arith.constant 0 : index
      %c0_70 = arith.constant 0 : index
      %159 = vector.load %arg12[%c0_69, %c0_70] : memref<8x32xf32, #tpu.memory_space<vmem>>, vector<8x32xf32>
      tpu.vector_store %arg12[%c0_69, %c0_70], %158 {strides = array<i32>} : memref<8x32xf32, #tpu.memory_space<vmem>>, vector<8x32xf32>,
      %160 = tpu.concatenate %145, %149 in 1 : vector<8x32xf32>, vector<8x32xf32> -> vector<8x64xf32>
      %c0_71 = arith.constant 0 : index
      %c0_72 = arith.constant 0 : index
      %161 = vector.load %arg10[%c0_71, %c0_72] : memref<8x64xf32, #tpu.memory_space<vmem>>, vector<8x64xf32>
      tpu.vector_store %arg10[%c0_71, %c0_72], %160 {strides = array<i32>} : memref<8x64xf32, #tpu.memory_space<vmem>>, vector<8x64xf32>,
      %cst_73 = arith.constant 0.000000e+00 : f32
      %162 = vector.shape_cast %139 : vector<8x1xi1> to vector<8x1xi1>
      %163 = vector.broadcast %162 : vector<8x1xi1> to vector<8x32xi1>
      %164 = vector.broadcast %cst_73 : f32 to vector<8x32xf32>
      %165 = arith.select %163, %145, %164 : vector<8x32xi1>, vector<8x32xf32>
      %166 = arith.truncf %165 : vector<8x32xf32> to vector<8x32xbf16>
      %167 = arith.index_cast %c7_i32_44 : i32 to index
      %c0_74 = arith.constant 0 : index
      %c0_75 = arith.constant 0 : index
      %168 = vector.load %arg7[%167, %c0_74, %c0_75] : memref<8x8x32xbf16, #tpu.memory_space<vmem>>, vector<1x8x32xbf16>
      %169 = vector.shape_cast %168 : vector<1x8x32xbf16> to vector<8x32xbf16>
      %170 = vector.shape_cast %166 : vector<8x32xbf16> to vector<1x8x32xbf16>
      tpu.vector_store %arg7[%167, %c0_74, %c0_75], %170 {strides = array<i32>} : memref<8x8x32xbf16, #tpu.memory_space<vmem>>, vector<1x8x32xbf16>,
      %cst_76 = arith.constant 0.000000e+00 : f32
      %171 = vector.shape_cast %141 : vector<8x1xi1> to vector<8x1xi1>
      %172 = vector.broadcast %171 : vector<8x1xi1> to vector<8x32xi1>
      %173 = vector.broadcast %cst_76 : f32 to vector<8x32xf32>
      %174 = arith.select %172, %149, %173 : vector<8x32xi1>, vector<8x32xf32>
      %175 = arith.truncf %174 : vector<8x32xf32> to vector<8x32xbf16>
      %176 = arith.index_cast %65 : i32 to index
      %c0_77 = arith.constant 0 : index
      %c0_78 = arith.constant 0 : index
      %177 = vector.load %arg8[%176, %c0_77, %c0_78] : memref<8x8x32xbf16, #tpu.memory_space<vmem>>, vector<1x8x32xbf16>
      %178 = vector.shape_cast %177 : vector<1x8x32xbf16> to vector<8x32xbf16>
      %179 = vector.shape_cast %175 : vector<8x32xbf16> to vector<1x8x32xbf16>
      tpu.vector_store %arg8[%176, %c0_77, %c0_78], %179 {strides = array<i32>} : memref<8x8x32xbf16, #tpu.memory_space<vmem>>, vector<1x8x32xbf16>,
    } else {
    }
    %c8_i32 = arith.constant 8 : i32
    return
  }
  func.func @transform_0(%arg0: i32, %arg1: memref<1xi32, #tpu.memory_space<smem>>) -> (i32, i32, i32) {
    %c0_i32 = arith.constant 0 : i32
    %c0_i32_0 = arith.constant 0 : i32
    %c0_i32_1 = arith.constant 0 : i32
    return %c0_i32, %arg0, %c0_i32_0 : i32, i32, i32
  }
  func.func @transform_1(%arg0: i32, %arg1: memref<1xi32, #tpu.memory_space<smem>>) -> (i32, i32) {
    %c0_i32 = arith.constant 0 : i32
    %c0_i32_0 = arith.constant 0 : i32
    %c0_i32_1 = arith.constant 0 : i32
    return %c0_i32, %c0_i32_0 : i32, i32
  }
  func.func @transform_2(%arg0: i32, %arg1: memref<1xi32, #tpu.memory_space<smem>>) -> (i32, i32) {
    %c0_i32 = arith.constant 0 : i32
    %c0_i32_0 = arith.constant 0 : i32
    %c0_i32_1 = arith.constant 0 : i32
    return %c0_i32, %c0_i32_0 : i32, i32
  }
  func.func @transform_3(%arg0: i32, %arg1: memref<1xi32, #tpu.memory_space<smem>>) -> (i32, i32) {
    %c0_i32 = arith.constant 0 : i32
    %c0_i32_0 = arith.constant 0 : i32
    %c0_i32_1 = arith.constant 0 : i32
    return %c0_i32, %c0_i32_0 : i32, i32
  }
  func.func @transform_4(%arg0: i32, %arg1: memref<1xi32, #tpu.memory_space<smem>>) -> (i32, i32) {
    %c0_i32 = arith.constant 0 : i32
    %c0_i32_0 = arith.constant 0 : i32
    return %arg0, %c0_i32 : i32, i32
  }
  func.func @transform_5(%arg0: i32, %arg1: memref<1xi32, #tpu.memory_space<smem>>) -> (i32, i32, i32) {
    %c0_i32 = arith.constant 0 : i32
    %c0_i32_0 = arith.constant 0 : i32
    %c0_i32_1 = arith.constant 0 : i32
    return %c0_i32, %arg0, %c0_i32_0 : i32, i32, i32
  }
  func.func @transform_6(%arg0: i32, %arg1: memref<1xi32, #tpu.memory_space<smem>>) -> (i32, i32, i32) {
    %c0_i32 = arith.constant 0 : i32
    %c0_i32_0 = arith.constant 0 : i32
    %c0_i32_1 = arith.constant 0 : i32
    return %c0_i32, %arg0, %c0_i32_0 : i32, i32, i32
  }
}

</mosaic_0001>

<llo_original>
// kernel: net_forward.2
$region0: #{net_forward.2}
  #allocation0 [shape = 'u32[]', space=smem, size = 0x4, offset = 0x4, fixed_abs, tag = 'smem constant byte address 0x4 - core index']
  #allocation1 [shape = 'u32[144,128]{1,0:T(1,128)}', space=vmem, size = 0x12000, scoped, tag = 'internal scratch']
  #allocation2 [shape = 'bf16[8,8,256]{2,1,0:T(8,128)(2,1)}', space=vmem, size = 0x8000, scoped, tag = 'scratch operand']
  #allocation3 [shape = 'f32[8,64]{1,0:T(8,128)}', space=vmem, size = 0x1000, scoped, tag = 'scratch operand']
  #allocation4 [shape = 'f32[8,32]{1,0:T(8,128)}', space=vmem, size = 0x1000, scoped, tag = 'scratch operand']
  #allocation5 [shape = 'f32[8,32]{1,0:T(8,128)}', space=vmem, size = 0x1000, scoped, tag = 'scratch operand']
  #allocation6 [shape = 's32[1]{0}', space=sflag, size = 0x4, scoped, tag = 'scoped memory for net_forward.2']
  #allocation7 [shape = 's32[1]{0:T(128)S(6)}', space=smem, size = 0x200, scoped, tag = 'prefetched SMEM operand 0']
  %s0 = inlined_call_operand.<no memory space> [shape: s32[1], index: 0, kind: input, shape index: {}]
  %s1 = inlined_call_operand.vmem [shape: bf16[8,8,32], index: 1, kind: input, shape index: {}]
  %s2 = inlined_call_operand.vmem [shape: bf16[32,256], index: 2, kind: input, shape index: {}]
  %s3 = inlined_call_operand.vmem [shape: f32[1,256], index: 3, kind: input, shape index: {}]
  %s4 = inlined_call_operand.vmem [shape: bf16[64,256], index: 4, kind: input, shape index: {}]
  %s5 = inlined_call_operand.vmem [shape: s32[8,1], index: 5, kind: input, shape index: {}]
  %s6 = inlined_call_operand.vmem [shape: bf16[8,8,32], index: 6, kind: output, shape index: {0}]
  %s7 = inlined_call_operand.vmem [shape: bf16[8,8,32], index: 7, kind: output, shape index: {1}]
  %8 = xla_tuple %s6, %s7
  %s9 = sld [smem:[#allocation0]]
  $region66: #{net_forward.2} parent=0
    _
  %s11 = ssub.s32 1, %s9
  %s12 = scalar_select 0, %s11, %s9
  %13 = sst [smem:[#allocation7]] %s0
  // Predicated region
  $region2: #{net_forward.2} parent=0 // pred_check
    _
  $region3: #{net_forward.2} parent=0 // pred_check_branch
    %15 = sbr.rel (0) target = $region5
  $region4: #{net_forward.2} parent=0 // pred_region
    _
  $region5: #{net_forward.2} parent=0 // pred_fallthru
    _
  // Predicated region
  $region6: #{net_forward.2} parent=0 // pred_check
    _
  $region7: #{net_forward.2} parent=0 // pred_check_branch
    %17 = sbr.rel (0) target = $region9
  $region8: #{net_forward.2} parent=0 // pred_region
    _
  $region9: #{net_forward.2} parent=0 // pred_fallthru
    _
  // Predicated region
  $region10: #{net_forward.2} parent=0 // pred_check
    _
  $region11: #{net_forward.2} parent=0 // pred_check_branch
    %19 = sbr.rel (0) target = $region13
  $region12: #{net_forward.2} parent=0 // pred_region
    _
  $region13: #{net_forward.2} parent=0 // pred_fallthru
    _
  // Predicated region
  $region14: #{net_forward.2} parent=0 // pred_check
    _
  $region15: #{net_forward.2} parent=0 // pred_check_branch
    %21 = sbr.rel (0) target = $region17
  $region16: #{net_forward.2} parent=0 // pred_region
    _
  $region17: #{net_forward.2} parent=0 // pred_fallthru
    _
  // Predicated region
  $region18: #{net_forward.2} parent=0 // pred_check
    _
  $region19: #{net_forward.2} parent=0 // pred_check_branch
    %23 = sbr.rel (0) target = $region21
  $region20: #{net_forward.2} parent=0 // pred_region
    _
  $region21: #{net_forward.2} parent=0 // pred_fallthru
    _
  %v25 = vld [vmem:[%s2] sm:$0xff]
  %v26 = vld [vmem:[%s2 + $0x8] sm:$0xff]
  %v27 = vld [vmem:[%s2 + $0x10] sm:$0xff]
  %v28 = vld [vmem:[%s2 + $0x18] sm:$0xff]
  %v29 = vld [vmem:[%s1] sm:$0xf]
  %v30 = vld [vmem:[%s1 + $0x4] sm:$0xf]
  %v31 = vld [vmem:[%s1 + $0x8] sm:$0xf]
  %v32 = vld [vmem:[%s1 + $0xc] sm:$0xf]
  %v33 = vld [vmem:[%s1 + $0x10] sm:$0xf]
  %v34 = vld [vmem:[%s1 + $0x14] sm:$0xf]
  %v35 = vld [vmem:[%s1 + $0x18] sm:$0xf]
  %v36 = vld [vmem:[%s1 + $0x1c] sm:$0xf]
  %v37 = vld [vmem:[%s3] sm:$0x3]
  %v39 = vlaneseq
  %v40 = vshrl.u32 %v39, 7
  %v41 = vsub.s32 0, %v40
  %v42 = vrot.slane %v37, %v41
  %v43 = vlaneseq
  %v44 = vshrl.u32 %v43, 7
  %v45 = vsub.s32 1, %v44
  %v46 = vrot.slane %v37, %v45
  %v57 = vunpack.c.l.b16 %v29
  %v58 = vunpack.c.l.b16 %v30
  %v59 = vunpack.c.l.b16 %v31
  %v60 = vunpack.c.l.b16 %v32
  %v61 = vunpack.c.l.b16 %v33
  %v62 = vunpack.c.l.b16 %v34
  %v63 = vunpack.c.l.b16 %v35
  %v64 = vunpack.c.l.b16 %v36
  %v65 = vpack.c.b16 %v58, %v57
  %v66 = vpack.c.b16 %v60, %v59
  %v67 = vpack.c.b16 %v62, %v61
  %v68 = vpack.c.b16 %v64, %v63
  %v73 = vunpack.c.l.b16 %v25
  %v74 = vunpack.c.h.b16 %v25
  %v75 = vunpack.c.l.b16 %v26
  %v76 = vunpack.c.h.b16 %v26
  %v77 = vunpack.c.l.b16 %v27
  %v78 = vunpack.c.h.b16 %v27
  %v79 = vunpack.c.l.b16 %v28
  %v80 = vunpack.c.h.b16 %v28
  %v81 = vpack.c.b16 %v75, %v73
  %v82 = vpack.c.b16 %v76, %v74
  %v83 = vpack.c.b16 %v79, %v77
  %v84 = vpack.c.b16 %v80, %v78
  %vm89 = vcmask 261120
  %v91 = vsel %vm89, %v65, 0
  %v94 = vsel %vm89, %v66, 0
  %v97 = vsel %vm89, %v67, 0
  %v100 = vsel %vm89, %v68, 0
  %102 = vmatprep.subr.bf16.mxu0 %v82
  %103 = vmatpush1.bf16.msra.mxu0 %v81
  %104 = vmatprep.subr.bf16.mxu0 %v84
  %105 = vmatpush1.bf16.msra.mxu0 %v83
  %106 = vmatprep.subr.bf16.mxu0 0
  %107 = vmatpush1.bf16.msra.mxu0 0
  %108 = vmatprep.subr.bf16.mxu0 0
  %109 = vmatpush1.bf16.msra.mxu0 0
  %110 = vmatprep.subr.bf16.mxu0 0
  %111 = vmatpush1.bf16.msra.mxu0 0
  %112 = vmatprep.subr.bf16.mxu0 0
  %113 = vmatpush1.bf16.msra.mxu0 0
  %114 = vmatprep.subr.bf16.mxu0 0
  %115 = vmatpush1.bf16.msra.mxu0 0
  %116 = vmatprep.subr.bf16.mxu0 0
  %117 = vmatpush1.bf16.msra.mxu0 0
  %118 = vmatprep.subr.bf16.mxu0 0
  %119 = vmatpush1.bf16.msra.mxu0 0
  %120 = vmatprep.subr.bf16.mxu0 0
  %121 = vmatpush1.bf16.msra.mxu0 0
  %122 = vmatprep.subr.bf16.mxu0 0
  %123 = vmatpush1.bf16.msra.mxu0 0
  %124 = vmatprep.subr.bf16.mxu0 0
  %125 = vmatpush1.bf16.msra.mxu0 0
  %126 = vmatprep.subr.bf16.mxu0 0
  %127 = vmatpush1.bf16.msra.mxu0 0
  %128 = vmatprep.subr.bf16.mxu0 0
  %129 = vmatpush1.bf16.msra.mxu0 0
  %130 = vmatprep.subr.bf16.mxu0 0
  %131 = vmatpush1.bf16.msra.mxu0 0
  %132 = vmatprep.subr.bf16.mxu0 0
  %133 = vmatpush1.bf16.msra.mxu0 0
  %134 = vmatprep.mubr.bf16.mxu0 0
  %135 = vmatmul.mubr.bf16.gmra.mrb[0].mxu0 %v91
  %v136 = vpop.f32.mrb[0].mxu0
  %v137 = vadd.f32 %v42, %v136
  %v138 = vpop.f32.mrb[0].mxu0
  %v139 = vadd.f32 %v46, %v138
  %v140 = vpop.f32.mrb[0].mxu0
  %v141 = vadd.f32 %v42, %v140
  %v142 = vpop.f32.mrb[0].mxu0
  %v143 = vadd.f32 %v46, %v142
  %144 = vmatprep.mubr.bf16.mxu0 0
  %145 = vmatmul.mubr.bf16.gmra.mrb[0].mxu0 %v94
  %v146 = vpop.f32.mrb[0].mxu0
  %v147 = vadd.f32 %v42, %v146
  %v148 = vpop.f32.mrb[0].mxu0
  %v149 = vadd.f32 %v46, %v148
  %v150 = vpop.f32.mrb[0].mxu0
  %v151 = vadd.f32 %v42, %v150
  %v152 = vpop.f32.mrb[0].mxu0
  %v153 = vadd.f32 %v46, %v152
  %154 = vmatprep.mubr.bf16.mxu0 0
  %155 = vmatmul.mubr.bf16.gmra.mrb[0].mxu0 %v97
  %v156 = vpop.f32.mrb[0].mxu0
  %v157 = vadd.f32 %v42, %v156
  %v158 = vpop.f32.mrb[0].mxu0
  %v159 = vadd.f32 %v46, %v158
  %v160 = vpop.f32.mrb[0].mxu0
  %v161 = vadd.f32 %v42, %v160
  %v162 = vpop.f32.mrb[0].mxu0
  %v163 = vadd.f32 %v46, %v162
  %164 = vmatprep.mubr.bf16.mxu0 0
  %165 = vmatmul.mubr.bf16.gmra.mrb[0].mxu0 %v100
  %v166 = vpop.f32.mrb[0].mxu0
  %v167 = vadd.f32 %v42, %v166
  %v168 = vpop.f32.mrb[0].mxu0
  %v169 = vadd.f32 %v46, %v168
  %v170 = vpop.f32.mrb[0].mxu0
  %v171 = vadd.f32 %v42, %v170
  %v172 = vpop.f32.mrb[0].mxu0
  %v173 = vadd.f32 %v46, %v172
  %174 = vdwg.mxu0
  %v175 = vpack.c.bf16 %v137, %v137
  %v176 = vpack.c.bf16 %v139, %v139
  %v177 = vpack.c.bf16 %v141, %v141
  %v178 = vpack.c.bf16 %v143, %v143
  %v179 = vpack.c.bf16 %v147, %v147
  %v180 = vpack.c.bf16 %v149, %v149
  %v181 = vpack.c.bf16 %v151, %v151
  %v182 = vpack.c.bf16 %v153, %v153
  %v183 = vpack.c.bf16 %v157, %v157
  %v184 = vpack.c.bf16 %v159, %v159
  %v185 = vpack.c.bf16 %v161, %v161
  %v186 = vpack.c.bf16 %v163, %v163
  %v187 = vpack.c.bf16 %v167, %v167
  %v188 = vpack.c.bf16 %v169, %v169
  %v189 = vpack.c.bf16 %v171, %v171
  %v190 = vpack.c.bf16 %v173, %v173
  %v207 = vunpack.c.l.b16 %v175
  %v208 = vunpack.c.l.b16 %v176
  %v209 = vunpack.c.l.b16 %v177
  %v210 = vunpack.c.l.b16 %v178
  %v211 = vunpack.c.l.b16 %v179
  %v212 = vunpack.c.l.b16 %v180
  %v213 = vunpack.c.l.b16 %v181
  %v214 = vunpack.c.l.b16 %v182
  %v215 = vunpack.c.l.b16 %v183
  %v216 = vunpack.c.l.b16 %v184
  %v217 = vunpack.c.l.b16 %v185
  %v218 = vunpack.c.l.b16 %v186
  %v219 = vunpack.c.l.b16 %v187
  %v220 = vunpack.c.l.b16 %v188
  %v221 = vunpack.c.l.b16 %v189
  %v222 = vunpack.c.l.b16 %v190
  %v223 = vpack.c.b16 %v208, %v207
  %v224 = vpack.c.b16 %v210, %v209
  %v225 = vpack.c.b16 %v212, %v211
  %v226 = vpack.c.b16 %v214, %v213
  %v227 = vpack.c.b16 %v216, %v215
  %v228 = vpack.c.b16 %v218, %v217
  %v229 = vpack.c.b16 %v220, %v219
  %v230 = vpack.c.b16 %v222, %v221
  %239 = vst [vmem:[#allocation2] sm:$0xff] %v223
  %240 = vst [vmem:[#allocation2 + $0x8] sm:$0xff] %v224
  %241 = vst [vmem:[#allocation2 + $0x10] sm:$0xff] %v225
  %242 = vst [vmem:[#allocation2 + $0x18] sm:$0xff] %v226
  %243 = vst [vmem:[#allocation2 + $0x20] sm:$0xff] %v227
  %244 = vst [vmem:[#allocation2 + $0x28] sm:$0xff] %v228
  %245 = vst [vmem:[#allocation2 + $0x30] sm:$0xff] %v229
  %246 = vst [vmem:[#allocation2 + $0x38] sm:$0xff] %v230
  %vm247 = vcmask 523264
  %248 = vst.msk [vmem:[#allocation3] sm:$0xff] %vm247, 0.0
  %249 = vst.msk [vmem:[#allocation4] sm:$0xff] %vm89, 0.0
  %250 = vst.msk [vmem:[#allocation5] sm:$0xff] %vm89, 0.0
  %vm251 = vcmask 257024
  %252 = vst.msk [vmem:[%s6] sm:$0xf] %vm251, 0
  %253 = vst.msk [vmem:[%s6 + $0x4] sm:$0xf] %vm251, 0
  %254 = vst.msk [vmem:[%s6 + $0x8] sm:$0xf] %vm251, 0
  %255 = vst.msk [vmem:[%s6 + $0xc] sm:$0xf] %vm251, 0
  %256 = vst.msk [vmem:[%s6 + $0x10] sm:$0xf] %vm251, 0
  %257 = vst.msk [vmem:[%s6 + $0x14] sm:$0xf] %vm251, 0
  %258 = vst.msk [vmem:[%s6 + $0x18] sm:$0xf] %vm251, 0
  %259 = vst.msk [vmem:[%s6 + $0x1c] sm:$0xf] %vm251, 0
  %260 = vst.msk [vmem:[%s7] sm:$0xf] %vm251, 0
  %261 = vst.msk [vmem:[%s7 + $0x4] sm:$0xf] %vm251, 0
  %262 = vst.msk [vmem:[%s7 + $0x8] sm:$0xf] %vm251, 0
  %263 = vst.msk [vmem:[%s7 + $0xc] sm:$0xf] %vm251, 0
  %264 = vst.msk [vmem:[%s7 + $0x10] sm:$0xf] %vm251, 0
  %265 = vst.msk [vmem:[%s7 + $0x14] sm:$0xf] %vm251, 0
  %266 = vst.msk [vmem:[%s7 + $0x18] sm:$0xf] %vm251, 0
  %267 = vst.msk [vmem:[%s7 + $0x1c] sm:$0xf] %vm251, 0
  %v268 = vld [vmem:[%s5] sm:$0xff]
  %s269 = sld [smem:[#allocation7]]
  %v270 = vld [vmem:[%s4] sm:$0xff]
  %v271 = vld [vmem:[%s4 + $0x8] sm:$0xff]
  %v272 = vld [vmem:[%s4 + $0x10] sm:$0xff]
  %v273 = vld [vmem:[%s4 + $0x18] sm:$0xff]
  %v274 = vld [vmem:[%s4 + $0x20] sm:$0xff]
  %v275 = vld [vmem:[%s4 + $0x28] sm:$0xff]
  %v276 = vld [vmem:[%s4 + $0x30] sm:$0xff]
  %v277 = vld [vmem:[%s4 + $0x38] sm:$0xff]
  %p278 = scmp.gt.s32.totalorder %s269, 0
  %p279 = scmp.gt.s32.totalorder %s269, 7
  %p280 = por %p278, %p279
  // Predicated region
  $region22: #{net_forward.2} parent=0 // pred_check
    %p281 = pneg %p280
  $region23: #{net_forward.2} parent=0 // pred_check_branch
    %283 = sbr.rel (%p281) target = $region25
  $region24: #{net_forward.2} parent=0 // pred_region
    %v284 = vld [vmem:[#allocation3] sm:$0xff]
    %v285 = vpack.c.bf16 %v284, %v284
    %v294 = vunpack.c.l.b16 %v270
    %v295 = vunpack.c.h.b16 %v270
    %v296 = vunpack.c.l.b16 %v271
    %v297 = vunpack.c.h.b16 %v271
    %v298 = vunpack.c.l.b16 %v272
    %v299 = vunpack.c.h.b16 %v272
    %v300 = vunpack.c.l.b16 %v273
    %v301 = vunpack.c.h.b16 %v273
    %v302 = vunpack.c.l.b16 %v274
    %v303 = vunpack.c.h.b16 %v274
    %v304 = vunpack.c.l.b16 %v275
    %v305 = vunpack.c.h.b16 %v275
    %v306 = vunpack.c.l.b16 %v276
    %v307 = vunpack.c.h.b16 %v276
    %v308 = vunpack.c.l.b16 %v277
    %v309 = vunpack.c.h.b16 %v277
    %v310 = vpack.c.b16 %v296, %v294
    %v311 = vpack.c.b16 %v297, %v295
    %v312 = vpack.c.b16 %v300, %v298
    %v313 = vpack.c.b16 %v301, %v299
    %v314 = vpack.c.b16 %v304, %v302
    %v315 = vpack.c.b16 %v305, %v303
    %v316 = vpack.c.b16 %v308, %v306
    %v317 = vpack.c.b16 %v309, %v307
    %v327 = vsel %vm247, %v285, 0
    %329 = vmatprep.subr.bf16.mxu0 %v311
    %330 = vmatpush1.bf16.msra.mxu0 %v310
    %331 = vmatprep.subr.bf16.mxu0 %v313
    %332 = vmatpush1.bf16.msra.mxu0 %v312
    %333 = vmatprep.subr.bf16.mxu0 %v315
    %334 = vmatpush1.bf16.msra.mxu0 %v314
    %335 = vmatprep.subr.bf16.mxu0 %v317
    %336 = vmatpush1.bf16.msra.mxu0 %v316
    %337 = vmatprep.subr.bf16.mxu0 0
    %338 = vmatpush1.bf16.msra.mxu0 0
    %339 = vmatprep.subr.bf16.mxu0 0
    %340 = vmatpush1.bf16.msra.mxu0 0
    %341 = vmatprep.subr.bf16.mxu0 0
    %342 = vmatpush1.bf16.msra.mxu0 0
    %343 = vmatprep.subr.bf16.mxu0 0
    %344 = vmatpush1.bf16.msra.mxu0 0
    %345 = vmatprep.subr.bf16.mxu0 0
    %346 = vmatpush1.bf16.msra.mxu0 0
    %347 = vmatprep.subr.bf16.mxu0 0
    %348 = vmatpush1.bf16.msra.mxu0 0
    %349 = vmatprep.subr.bf16.mxu0 0
    %350 = vmatpush1.bf16.msra.mxu0 0
    %351 = vmatprep.subr.bf16.mxu0 0
    %352 = vmatpush1.bf16.msra.mxu0 0
    %353 = vmatprep.subr.bf16.mxu0 0
    %354 = vmatpush1.bf16.msra.mxu0 0
    %355 = vmatprep.subr.bf16.mxu0 0
    %356 = vmatpush1.bf16.msra.mxu0 0
    %357 = vmatprep.subr.bf16.mxu0 0
    %358 = vmatpush1.bf16.msra.mxu0 0
    %359 = vmatprep.subr.bf16.mxu0 0
    %360 = vmatpush1.bf16.msra.mxu0 0
    %361 = vmatprep.mubr.bf16.mxu0 0
    %362 = vmatmul.mubr.bf16.gmra.mrb[0].mxu0 %v327
    %v363 = vpop.f32.mrb[0].mxu0
    %v364 = vadd.f32 0.0, %v363
    %v365 = vpop.f32.mrb[0].mxu0
    %v366 = vadd.f32 0.0, %v365
    %v367 = vpop.f32.mrb[0].mxu0
    %v368 = vpop.f32.mrb[0].mxu0
    %369 = vdwg.mxu0
    %v370 = vld [vmem:[#allocation2] sm:$0xf]
    %v371 = vunpack.c.l.bf16 %v370
    %v372 = vadd.f32 %v371, %v364
    %s373 = scalar_lea.vmem [#allocation2], 56
    %v374 = vld [vmem:[%s373 + $0x4] sm:$0xf]
    %v375 = vunpack.c.l.bf16 %v374
    %v376 = vadd.f32 %v375, %v366
    %v377 = vld [vmem:[#allocation4] sm:$0xff]
    %v378 = vxor.u32 %v372, 2147483648
    %v379 = vmul.f32 %v378, 1.442695
    %v380 = vpow.pop %v379
    %v381 = vadd.f32 %v380, 1.0
    %v382 = vrcp.pop %v381
    %v383 = vmul.f32 1.0, %v382
    %v384 = vtanh.pop %v372
    %386 = vrot.lane.b32.xlu0 %v377, 32
    %v387 = vpop.permute.xlu0 %386
    %v389 = vmul.f32 %v383, %v387
    %391 = vrot.lane.b32.xlu0 %v384, 64
    %v392 = vpop.permute.xlu0 %391
    %v394 = vmul.f32 %v383, %v392
    %396 = vrot.lane.b32.xlu0 %v394, 32
    %v397 = vpop.permute.xlu0 %396
    %v399 = vadd.f32 %v389, %v397
    %v400 = vtanh.pop %v399
    %402 = vrot.lane.b32.xlu0 %v400, 64
    %v403 = vpop.permute.xlu0 %402
    %v405 = vmul.f32 %v383, %v403
    %v406 = vld [vmem:[#allocation5] sm:$0xff]
    %v407 = vxor.u32 %v376, 2147483648
    %v408 = vmul.f32 %v407, 1.442695
    %v409 = vpow.pop %v408
    %v410 = vadd.f32 %v409, 1.0
    %v411 = vrcp.pop %v410
    %v412 = vmul.f32 1.0, %v411
    %v413 = vtanh.pop %v376
    %415 = vrot.lane.b32.xlu0 %v406, 32
    %v416 = vpop.permute.xlu0 %415
    %v418 = vmul.f32 %v412, %v416
    %420 = vrot.lane.b32.xlu0 %v413, 64
    %v421 = vpop.permute.xlu0 %420
    %v423 = vmul.f32 %v412, %v421
    %425 = vrot.lane.b32.xlu0 %v423, 32
    %v426 = vpop.permute.xlu0 %425
    %v428 = vadd.f32 %v418, %v426
    %v429 = vtanh.pop %v428
    %431 = vrot.lane.b32.xlu0 %v429, 64
    %v432 = vpop.permute.xlu0 %431
    %v434 = vmul.f32 %v412, %v432
    %vm435 = vcmp.gt.s32.totalorder %v268, 0
    %vm436 = vcmp.gt.s32.totalorder %v268, 7
    %v437 = vsel %vm435, 1, 0
    %438 = vset.pattern.permute.xlu0 0
    %439 = vperm.xlu0 %438, %v437
    %v440 = vpop.permute.xlu0 %439
    %vm441 = vcmp.eq.s32.totalorder %v440, 1
    %443 = vrot.lane.b32.xlu0 %v284, 96
    %v444 = vpop.permute.xlu0 %443
    %v446 = vsel %vm441, %v405, %v444
    %v447 = vsel %vm436, 1, 0
    %448 = vset.pattern.permute.xlu0 0
    %449 = vperm.xlu0 %448, %v447
    %v450 = vpop.permute.xlu0 %449
    %vm451 = vcmp.eq.s32.totalorder %v450, 1
    %452 = vrot.lane.b32.xlu0 %v284, 64
    %v453 = vpop.permute.xlu0 %452
    %v455 = vsel %vm451, %v434, %v453
    %v456 = vsel %vm441, %v399, %v387
    %458 = vrot.lane.b32.xlu0 %v456, 96
    %v459 = vpop.permute.xlu0 %458
    %461 = vst.msk [vmem:[#allocation4] sm:$0xff] %vm89, %v459
    %v462 = vld [vmem:[#allocation5] sm:$0xff]
    %464 = vrot.lane.b32.xlu0 %v462, 32
    %v465 = vpop.permute.xlu0 %464
    %v467 = vsel %vm451, %v428, %v465
    %469 = vrot.lane.b32.xlu0 %v467, 96
    %v470 = vpop.permute.xlu0 %469
    %472 = vst.msk [vmem:[#allocation5] sm:$0xff] %vm89, %v470
    %474 = vrot.lane.b32.xlu0 %v446, 32
    %v475 = vpop.permute.xlu0 %474
    %478 = vrot.lane.b32.xlu0 %v455, 64
    %v479 = vpop.permute.xlu0 %478
    %v481 = vsel %vm89, %v475, %v479
    %482 = vst.msk [vmem:[#allocation3] sm:$0xff] %vm247, %v481
    %v483 = vsel %vm441, %v405, 0.0
    %v484 = vpack.c.bf16 %v483, %v483
    %v486 = vunpack.c.l.b16 %v484
    %v487 = vpack.c.b16 %v486, %v486
    %488 = vrot.lane.b32.xlu0 %v487, 32
    %v489 = vpop.permute.xlu0 %488
    %491 = vst.msk [vmem:[%s6] sm:$0xf] %vm251, %v489
    %v492 = vsel %vm451, %v434, 0.0
    %v493 = vpack.c.bf16 %v492, %v492
    %v495 = vunpack.c.l.b16 %v493
    %v496 = vpack.c.b16 %v495, %v495
    %497 = vrot.lane.b32.xlu0 %v496, 32
    %v498 = vpop.permute.xlu0 %497
    %s500 = scalar_lea.vmem %s7, 28
    %501 = vst.msk [vmem:[%s500] sm:$0xf] %vm251, %v498
  $region25: #{net_forward.2} parent=0 // pred_fallthru
    _
  %p502 = scmp.gt.s32.totalorder %s269, 1
  %p503 = scmp.gt.s32.totalorder %s269, 6
  %p504 = por %p502, %p503
  // Predicated region
  $region26: #{net_forward.2} parent=0 // pred_check
    %p505 = pneg %p504
  $region27: #{net_forward.2} parent=0 // pred_check_branch
    %507 = sbr.rel (%p505) target = $region29
  $region28: #{net_forward.2} parent=0 // pred_region
    %v508 = vld [vmem:[#allocation3] sm:$0xff]
    %v509 = vpack.c.bf16 %v508, %v508
    %v518 = vunpack.c.l.b16 %v270
    %v519 = vunpack.c.h.b16 %v270
    %v520 = vunpack.c.l.b16 %v271
    %v521 = vunpack.c.h.b16 %v271
    %v522 = vunpack.c.l.b16 %v272
    %v523 = vunpack.c.h.b16 %v272
    %v524 = vunpack.c.l.b16 %v273
    %v525 = vunpack.c.h.b16 %v273
    %v526 = vunpack.c.l.b16 %v274
    %v527 = vunpack.c.h.b16 %v274
    %v528 = vunpack.c.l.b16 %v275
    %v529 = vunpack.c.h.b16 %v275
    %v530 = vunpack.c.l.b16 %v276
    %v531 = vunpack.c.h.b16 %v276
    %v532 = vunpack.c.l.b16 %v277
    %v533 = vunpack.c.h.b16 %v277
    %v534 = vpack.c.b16 %v520, %v518
    %v535 = vpack.c.b16 %v521, %v519
    %v536 = vpack.c.b16 %v524, %v522
    %v537 = vpack.c.b16 %v525, %v523
    %v538 = vpack.c.b16 %v528, %v526
    %v539 = vpack.c.b16 %v529, %v527
    %v540 = vpack.c.b16 %v532, %v530
    %v541 = vpack.c.b16 %v533, %v531
    %v551 = vsel %vm247, %v509, 0
    %553 = vmatprep.subr.bf16.mxu0 %v535
    %554 = vmatpush1.bf16.msra.mxu0 %v534
    %555 = vmatprep.subr.bf16.mxu0 %v537
    %556 = vmatpush1.bf16.msra.mxu0 %v536
    %557 = vmatprep.subr.bf16.mxu0 %v539
    %558 = vmatpush1.bf16.msra.mxu0 %v538
    %559 = vmatprep.subr.bf16.mxu0 %v541
    %560 = vmatpush1.bf16.msra.mxu0 %v540
    %561 = vmatprep.subr.bf16.mxu0 0
    %562 = vmatpush1.bf16.msra.mxu0 0
    %563 = vmatprep.subr.bf16.mxu0 0
    %564 = vmatpush1.bf16.msra.mxu0 0
    %565 = vmatprep.subr.bf16.mxu0 0
    %566 = vmatpush1.bf16.msra.mxu0 0
    %567 = vmatprep.subr.bf16.mxu0 0
    %568 = vmatpush1.bf16.msra.mxu0 0
    %569 = vmatprep.subr.bf16.mxu0 0
    %570 = vmatpush1.bf16.msra.mxu0 0
    %571 = vmatprep.subr.bf16.mxu0 0
    %572 = vmatpush1.bf16.msra.mxu0 0
    %573 = vmatprep.subr.bf16.mxu0 0
    %574 = vmatpush1.bf16.msra.mxu0 0
    %575 = vmatprep.subr.bf16.mxu0 0
    %576 = vmatpush1.bf16.msra.mxu0 0
    %577 = vmatprep.subr.bf16.mxu0 0
    %578 = vmatpush1.bf16.msra.mxu0 0
    %579 = vmatprep.subr.bf16.mxu0 0
    %580 = vmatpush1.bf16.msra.mxu0 0
    %581 = vmatprep.subr.bf16.mxu0 0
    %582 = vmatpush1.bf16.msra.mxu0 0
    %583 = vmatprep.subr.bf16.mxu0 0
    %584 = vmatpush1.bf16.msra.mxu0 0
    %585 = vmatprep.mubr.bf16.mxu0 0
    %586 = vmatmul.mubr.bf16.gmra.mrb[0].mxu0 %v551
    %v587 = vpop.f32.mrb[0].mxu0
    %v588 = vadd.f32 0.0, %v587
    %v589 = vpop.f32.mrb[0].mxu0
    %v590 = vadd.f32 0.0, %v589
    %v591 = vpop.f32.mrb[0].mxu0
    %v592 = vpop.f32.mrb[0].mxu0
    %593 = vdwg.mxu0
    %s594 = scalar_lea.vmem [#allocation2], 8
    %v595 = vld [vmem:[%s594] sm:$0xf]
    %v596 = vunpack.c.l.bf16 %v595
    %v597 = vadd.f32 %v596, %v588
    %s598 = scalar_lea.vmem [#allocation2], 48
    %v599 = vld [vmem:[%s598 + $0x4] sm:$0xf]
    %v600 = vunpack.c.l.bf16 %v599
    %v601 = vadd.f32 %v600, %v590
    %v602 = vld [vmem:[#allocation4] sm:$0xff]
    %v603 = vxor.u32 %v597, 2147483648
    %v604 = vmul.f32 %v603, 1.442695
    %v605 = vpow.pop %v604
    %v606 = vadd.f32 %v605, 1.0
    %v607 = vrcp.pop %v606
    %v608 = vmul.f32 1.0, %v607
    %v609 = vtanh.pop %v597
    %611 = vrot.lane.b32.xlu0 %v602, 32
    %v612 = vpop.permute.xlu0 %611
    %v614 = vmul.f32 %v608, %v612
    %616 = vrot.lane.b32.xlu0 %v609, 64
    %v617 = vpop.permute.xlu0 %616
    %v619 = vmul.f32 %v608, %v617
    %621 = vrot.lane.b32.xlu0 %v619, 32
    %v622 = vpop.permute.xlu0 %621
    %v624 = vadd.f32 %v614, %v622
    %v625 = vtanh.pop %v624
    %627 = vrot.lane.b32.xlu0 %v625, 64
    %v628 = vpop.permute.xlu0 %627
    %v630 = vmul.f32 %v608, %v628
    %v631 = vld [vmem:[#allocation5] sm:$0xff]
    %v632 = vxor.u32 %v601, 2147483648
    %v633 = vmul.f32 %v632, 1.442695
    %v634 = vpow.pop %v633
    %v635 = vadd.f32 %v634, 1.0
    %v636 = vrcp.pop %v635
    %v637 = vmul.f32 1.0, %v636
    %v638 = vtanh.pop %v601
    %640 = vrot.lane.b32.xlu0 %v631, 32
    %v641 = vpop.permute.xlu0 %640
    %v643 = vmul.f32 %v637, %v641
    %645 = vrot.lane.b32.xlu0 %v638, 64
    %v646 = vpop.permute.xlu0 %645
    %v648 = vmul.f32 %v637, %v646
    %650 = vrot.lane.b32.xlu0 %v648, 32
    %v651 = vpop.permute.xlu0 %650
    %v653 = vadd.f32 %v643, %v651
    %v654 = vtanh.pop %v653
    %656 = vrot.lane.b32.xlu0 %v654, 64
    %v657 = vpop.permute.xlu0 %656
    %v659 = vmul.f32 %v637, %v657
    %vm660 = vcmp.gt.s32.totalorder %v268, 1
    %vm661 = vcmp.gt.s32.totalorder %v268, 6
    %v662 = vsel %vm660, 1, 0
    %663 = vset.pattern.permute.xlu0 0
    %664 = vperm.xlu0 %663, %v662
    %v665 = vpop.permute.xlu0 %664
    %vm666 = vcmp.eq.s32.totalorder %v665, 1
    %668 = vrot.lane.b32.xlu0 %v508, 96
    %v669 = vpop.permute.xlu0 %668
    %v671 = vsel %vm666, %v630, %v669
    %v672 = vsel %vm661, 1, 0
    %673 = vset.pattern.permute.xlu0 0
    %674 = vperm.xlu0 %673, %v672
    %v675 = vpop.permute.xlu0 %674
    %vm676 = vcmp.eq.s32.totalorder %v675, 1
    %677 = vrot.lane.b32.xlu0 %v508, 64
    %v678 = vpop.permute.xlu0 %677
    %v680 = vsel %vm676, %v659, %v678
    %v681 = vsel %vm666, %v624, %v612
    %683 = vrot.lane.b32.xlu0 %v681, 96
    %v684 = vpop.permute.xlu0 %683
    %686 = vst.msk [vmem:[#allocation4] sm:$0xff] %vm89, %v684
    %v687 = vld [vmem:[#allocation5] sm:$0xff]
    %689 = vrot.lane.b32.xlu0 %v687, 32
    %v690 = vpop.permute.xlu0 %689
    %v692 = vsel %vm676, %v653, %v690
    %694 = vrot.lane.b32.xlu0 %v692, 96
    %v695 = vpop.permute.xlu0 %694
    %697 = vst.msk [vmem:[#allocation5] sm:$0xff] %vm89, %v695
    %699 = vrot.lane.b32.xlu0 %v671, 32
    %v700 = vpop.permute.xlu0 %699
    %703 = vrot.lane.b32.xlu0 %v680, 64
    %v704 = vpop.permute.xlu0 %703
    %v706 = vsel %vm89, %v700, %v704
    %707 = vst.msk [vmem:[#allocation3] sm:$0xff] %vm247, %v706
    %v708 = vsel %vm666, %v630, 0.0
    %v709 = vpack.c.bf16 %v708, %v708
    %v711 = vunpack.c.l.b16 %v709
    %v712 = vpack.c.b16 %v711, %v711
    %713 = vrot.lane.b32.xlu0 %v712, 32
    %v714 = vpop.permute.xlu0 %713
    %s716 = scalar_lea.vmem %s6, 4
    %717 = vst.msk [vmem:[%s716] sm:$0xf] %vm251, %v714
    %v718 = vsel %vm676, %v659, 0.0
    %v719 = vpack.c.bf16 %v718, %v718
    %v721 = vunpack.c.l.b16 %v719
    %v722 = vpack.c.b16 %v721, %v721
    %723 = vrot.lane.b32.xlu0 %v722, 32
    %v724 = vpop.permute.xlu0 %723
    %s726 = scalar_lea.vmem %s7, 24
    %727 = vst.msk [vmem:[%s726] sm:$0xf] %vm251, %v724
  $region29: #{net_forward.2} parent=0 // pred_fallthru
    _
  %p728 = scmp.gt.s32.totalorder %s269, 2
  %p729 = scmp.gt.s32.totalorder %s269, 5
  %p730 = por %p728, %p729
  // Predicated region
  $region30: #{net_forward.2} parent=0 // pred_check
    %p731 = pneg %p730
  $region31: #{net_forward.2} parent=0 // pred_check_branch
    %733 = sbr.rel (%p731) target = $region33
  $region32: #{net_forward.2} parent=0 // pred_region
    %v734 = vld [vmem:[#allocation3] sm:$0xff]
    %v735 = vpack.c.bf16 %v734, %v734
    %v744 = vunpack.c.l.b16 %v270
    %v745 = vunpack.c.h.b16 %v270
    %v746 = vunpack.c.l.b16 %v271
    %v747 = vunpack.c.h.b16 %v271
    %v748 = vunpack.c.l.b16 %v272
    %v749 = vunpack.c.h.b16 %v272
    %v750 = vunpack.c.l.b16 %v273
    %v751 = vunpack.c.h.b16 %v273
    %v752 = vunpack.c.l.b16 %v274
    %v753 = vunpack.c.h.b16 %v274
    %v754 = vunpack.c.l.b16 %v275
    %v755 = vunpack.c.h.b16 %v275
    %v756 = vunpack.c.l.b16 %v276
    %v757 = vunpack.c.h.b16 %v276
    %v758 = vunpack.c.l.b16 %v277
    %v759 = vunpack.c.h.b16 %v277
    %v760 = vpack.c.b16 %v746, %v744
    %v761 = vpack.c.b16 %v747, %v745
    %v762 = vpack.c.b16 %v750, %v748
    %v763 = vpack.c.b16 %v751, %v749
    %v764 = vpack.c.b16 %v754, %v752
    %v765 = vpack.c.b16 %v755, %v753
    %v766 = vpack.c.b16 %v758, %v756
    %v767 = vpack.c.b16 %v759, %v757
    %v777 = vsel %vm247, %v735, 0
    %779 = vmatprep.subr.bf16.mxu0 %v761
    %780 = vmatpush1.bf16.msra.mxu0 %v760
    %781 = vmatprep.subr.bf16.mxu0 %v763
    %782 = vmatpush1.bf16.msra.mxu0 %v762
    %783 = vmatprep.subr.bf16.mxu0 %v765
    %784 = vmatpush1.bf16.msra.mxu0 %v764
    %785 = vmatprep.subr.bf16.mxu0 %v767
    %786 = vmatpush1.bf16.msra.mxu0 %v766
    %787 = vmatprep.subr.bf16.mxu0 0
    %788 = vmatpush1.bf16.msra.mxu0 0
    %789 = vmatprep.subr.bf16.mxu0 0
    %790 = vmatpush1.bf16.msra.mxu0 0
    %791 = vmatprep.subr.bf16.mxu0 0
    %792 = vmatpush1.bf16.msra.mxu0 0
    %793 = vmatprep.subr.bf16.mxu0 0
    %794 = vmatpush1.bf16.msra.mxu0 0
    %795 = vmatprep.subr.bf16.mxu0 0
    %796 = vmatpush1.bf16.msra.mxu0 0
    %797 = vmatprep.subr.bf16.mxu0 0
    %798 = vmatpush1.bf16.msra.mxu0 0
    %799 = vmatprep.subr.bf16.mxu0 0
    %800 = vmatpush1.bf16.msra.mxu0 0
    %801 = vmatprep.subr.bf16.mxu0 0
    %802 = vmatpush1.bf16.msra.mxu0 0
    %803 = vmatprep.subr.bf16.mxu0 0
    %804 = vmatpush1.bf16.msra.mxu0 0
    %805 = vmatprep.subr.bf16.mxu0 0
    %806 = vmatpush1.bf16.msra.mxu0 0
    %807 = vmatprep.subr.bf16.mxu0 0
    %808 = vmatpush1.bf16.msra.mxu0 0
    %809 = vmatprep.subr.bf16.mxu0 0
    %810 = vmatpush1.bf16.msra.mxu0 0
    %811 = vmatprep.mubr.bf16.mxu0 0
    %812 = vmatmul.mubr.bf16.gmra.mrb[0].mxu0 %v777
    %v813 = vpop.f32.mrb[0].mxu0
    %v814 = vadd.f32 0.0, %v813
    %v815 = vpop.f32.mrb[0].mxu0
    %v816 = vadd.f32 0.0, %v815
    %v817 = vpop.f32.mrb[0].mxu0
    %v818 = vpop.f32.mrb[0].mxu0
    %819 = vdwg.mxu0
    %s820 = scalar_lea.vmem [#allocation2], 16
    %v821 = vld [vmem:[%s820] sm:$0xf]
    %v822 = vunpack.c.l.bf16 %v821
    %v823 = vadd.f32 %v822, %v814
    %s824 = scalar_lea.vmem [#allocation2], 40
    %v825 = vld [vmem:[%s824 + $0x4] sm:$0xf]
    %v826 = vunpack.c.l.bf16 %v825
    %v827 = vadd.f32 %v826, %v816
    %v828 = vld [vmem:[#allocation4] sm:$0xff]
    %v829 = vxor.u32 %v823, 2147483648
    %v830 = vmul.f32 %v829, 1.442695
    %v831 = vpow.pop %v830
    %v832 = vadd.f32 %v831, 1.0
    %v833 = vrcp.pop %v832
    %v834 = vmul.f32 1.0, %v833
    %v835 = vtanh.pop %v823
    %837 = vrot.lane.b32.xlu0 %v828, 32
    %v838 = vpop.permute.xlu0 %837
    %v840 = vmul.f32 %v834, %v838
    %842 = vrot.lane.b32.xlu0 %v835, 64
    %v843 = vpop.permute.xlu0 %842
    %v845 = vmul.f32 %v834, %v843
    %847 = vrot.lane.b32.xlu0 %v845, 32
    %v848 = vpop.permute.xlu0 %847
    %v850 = vadd.f32 %v840, %v848
    %v851 = vtanh.pop %v850
    %853 = vrot.lane.b32.xlu0 %v851, 64
    %v854 = vpop.permute.xlu0 %853
    %v856 = vmul.f32 %v834, %v854
    %v857 = vld [vmem:[#allocation5] sm:$0xff]
    %v858 = vxor.u32 %v827, 2147483648
    %v859 = vmul.f32 %v858, 1.442695
    %v860 = vpow.pop %v859
    %v861 = vadd.f32 %v860, 1.0
    %v862 = vrcp.pop %v861
    %v863 = vmul.f32 1.0, %v862
    %v864 = vtanh.pop %v827
    %866 = vrot.lane.b32.xlu0 %v857, 32
    %v867 = vpop.permute.xlu0 %866
    %v869 = vmul.f32 %v863, %v867
    %871 = vrot.lane.b32.xlu0 %v864, 64
    %v872 = vpop.permute.xlu0 %871
    %v874 = vmul.f32 %v863, %v872
    %876 = vrot.lane.b32.xlu0 %v874, 32
    %v877 = vpop.permute.xlu0 %876
    %v879 = vadd.f32 %v869, %v877
    %v880 = vtanh.pop %v879
    %882 = vrot.lane.b32.xlu0 %v880, 64
    %v883 = vpop.permute.xlu0 %882
    %v885 = vmul.f32 %v863, %v883
    %vm886 = vcmp.gt.s32.totalorder %v268, 2
    %vm887 = vcmp.gt.s32.totalorder %v268, 5
    %v888 = vsel %vm886, 1, 0
    %889 = vset.pattern.permute.xlu0 0
    %890 = vperm.xlu0 %889, %v888
    %v891 = vpop.permute.xlu0 %890
    %vm892 = vcmp.eq.s32.totalorder %v891, 1
    %894 = vrot.lane.b32.xlu0 %v734, 96
    %v895 = vpop.permute.xlu0 %894
    %v897 = vsel %vm892, %v856, %v895
    %v898 = vsel %vm887, 1, 0
    %899 = vset.pattern.permute.xlu0 0
    %900 = vperm.xlu0 %899, %v898
    %v901 = vpop.permute.xlu0 %900
    %vm902 = vcmp.eq.s32.totalorder %v901, 1
    %903 = vrot.lane.b32.xlu0 %v734, 64
    %v904 = vpop.permute.xlu0 %903
    %v906 = vsel %vm902, %v885, %v904
    %v907 = vsel %vm892, %v850, %v838
    %909 = vrot.lane.b32.xlu0 %v907, 96
    %v910 = vpop.permute.xlu0 %909
    %912 = vst.msk [vmem:[#allocation4] sm:$0xff] %vm89, %v910
    %v913 = vld [vmem:[#allocation5] sm:$0xff]
    %915 = vrot.lane.b32.xlu0 %v913, 32
    %v916 = vpop.permute.xlu0 %915
    %v918 = vsel %vm902, %v879, %v916
    %920 = vrot.lane.b32.xlu0 %v918, 96
    %v921 = vpop.permute.xlu0 %920
    %923 = vst.msk [vmem:[#allocation5] sm:$0xff] %vm89, %v921
    %925 = vrot.lane.b32.xlu0 %v897, 32
    %v926 = vpop.permute.xlu0 %925
    %929 = vrot.lane.b32.xlu0 %v906, 64
    %v930 = vpop.permute.xlu0 %929
    %v932 = vsel %vm89, %v926, %v930
    %933 = vst.msk [vmem:[#allocation3] sm:$0xff] %vm247, %v932
    %v934 = vsel %vm892, %v856, 0.0
    %v935 = vpack.c.bf16 %v934, %v934
    %v937 = vunpack.c.l.b16 %v935
    %v938 = vpack.c.b16 %v937, %v937
    %939 = vrot.lane.b32.xlu0 %v938, 32
    %v940 = vpop.permute.xlu0 %939
    %s942 = scalar_lea.vmem %s6, 8
    %943 = vst.msk [vmem:[%s942] sm:$0xf] %vm251, %v940
    %v944 = vsel %vm902, %v885, 0.0
    %v945 = vpack.c.bf16 %v944, %v944
    %v947 = vunpack.c.l.b16 %v945
    %v948 = vpack.c.b16 %v947, %v947
    %949 = vrot.lane.b32.xlu0 %v948, 32
    %v950 = vpop.permute.xlu0 %949
    %s952 = scalar_lea.vmem %s7, 20
    %953 = vst.msk [vmem:[%s952] sm:$0xf] %vm251, %v950
  $region33: #{net_forward.2} parent=0 // pred_fallthru
    _
  %p954 = scmp.gt.s32.totalorder %s269, 3
  %p955 = scmp.gt.s32.totalorder %s269, 4
  %p956 = por %p954, %p955
  // Predicated region
  $region34: #{net_forward.2} parent=0 // pred_check
    %p957 = pneg %p956
  $region35: #{net_forward.2} parent=0 // pred_check_branch
    %959 = sbr.rel (%p957) target = $region37
  $region36: #{net_forward.2} parent=0 // pred_region
    %v960 = vld [vmem:[#allocation3] sm:$0xff]
    %v961 = vpack.c.bf16 %v960, %v960
    %v970 = vunpack.c.l.b16 %v270
    %v971 = vunpack.c.h.b16 %v270
    %v972 = vunpack.c.l.b16 %v271
    %v973 = vunpack.c.h.b16 %v271
    %v974 = vunpack.c.l.b16 %v272
    %v975 = vunpack.c.h.b16 %v272
    %v976 = vunpack.c.l.b16 %v273
    %v977 = vunpack.c.h.b16 %v273
    %v978 = vunpack.c.l.b16 %v274
    %v979 = vunpack.c.h.b16 %v274
    %v980 = vunpack.c.l.b16 %v275
    %v981 = vunpack.c.h.b16 %v275
    %v982 = vunpack.c.l.b16 %v276
    %v983 = vunpack.c.h.b16 %v276
    %v984 = vunpack.c.l.b16 %v277
    %v985 = vunpack.c.h.b16 %v277
    %v986 = vpack.c.b16 %v972, %v970
    %v987 = vpack.c.b16 %v973, %v971
    %v988 = vpack.c.b16 %v976, %v974
    %v989 = vpack.c.b16 %v977, %v975
    %v990 = vpack.c.b16 %v980, %v978
    %v991 = vpack.c.b16 %v981, %v979
    %v992 = vpack.c.b16 %v984, %v982
    %v993 = vpack.c.b16 %v985, %v983
    %v1003 = vsel %vm247, %v961, 0
    %1005 = vmatprep.subr.bf16.mxu0 %v987
    %1006 = vmatpush1.bf16.msra.mxu0 %v986
    %1007 = vmatprep.subr.bf16.mxu0 %v989
    %1008 = vmatpush1.bf16.msra.mxu0 %v988
    %1009 = vmatprep.subr.bf16.mxu0 %v991
    %1010 = vmatpush1.bf16.msra.mxu0 %v990
    %1011 = vmatprep.subr.bf16.mxu0 %v993
    %1012 = vmatpush1.bf16.msra.mxu0 %v992
    %1013 = vmatprep.subr.bf16.mxu0 0
    %1014 = vmatpush1.bf16.msra.mxu0 0
    %1015 = vmatprep.subr.bf16.mxu0 0
    %1016 = vmatpush1.bf16.msra.mxu0 0
    %1017 = vmatprep.subr.bf16.mxu0 0
    %1018 = vmatpush1.bf16.msra.mxu0 0
    %1019 = vmatprep.subr.bf16.mxu0 0
    %1020 = vmatpush1.bf16.msra.mxu0 0
    %1021 = vmatprep.subr.bf16.mxu0 0
    %1022 = vmatpush1.bf16.msra.mxu0 0
    %1023 = vmatprep.subr.bf16.mxu0 0
    %1024 = vmatpush1.bf16.msra.mxu0 0
    %1025 = vmatprep.subr.bf16.mxu0 0
    %1026 = vmatpush1.bf16.msra.mxu0 0
    %1027 = vmatprep.subr.bf16.mxu0 0
    %1028 = vmatpush1.bf16.msra.mxu0 0
    %1029 = vmatprep.subr.bf16.mxu0 0
    %1030 = vmatpush1.bf16.msra.mxu0 0
    %1031 = vmatprep.subr.bf16.mxu0 0
    %1032 = vmatpush1.bf16.msra.mxu0 0
    %1033 = vmatprep.subr.bf16.mxu0 0
    %1034 = vmatpush1.bf16.msra.mxu0 0
    %1035 = vmatprep.subr.bf16.mxu0 0
    %1036 = vmatpush1.bf16.msra.mxu0 0
    %1037 = vmatprep.mubr.bf16.mxu0 0
    %1038 = vmatmul.mubr.bf16.gmra.mrb[0].mxu0 %v1003
    %v1039 = vpop.f32.mrb[0].mxu0
    %v1040 = vadd.f32 0.0, %v1039
    %v1041 = vpop.f32.mrb[0].mxu0
    %v1042 = vadd.f32 0.0, %v1041
    %v1043 = vpop.f32.mrb[0].mxu0
    %v1044 = vpop.f32.mrb[0].mxu0
    %1045 = vdwg.mxu0
    %s1046 = scalar_lea.vmem [#allocation2], 24
    %v1047 = vld [vmem:[%s1046] sm:$0xf]
    %v1048 = vunpack.c.l.bf16 %v1047
    %v1049 = vadd.f32 %v1048, %v1040
    %s1050 = scalar_lea.vmem [#allocation2], 32
    %v1051 = vld [vmem:[%s1050 + $0x4] sm:$0xf]
    %v1052 = vunpack.c.l.bf16 %v1051
    %v1053 = vadd.f32 %v1052, %v1042
    %v1054 = vld [vmem:[#allocation4] sm:$0xff]
    %v1055 = vxor.u32 %v1049, 2147483648
    %v1056 = vmul.f32 %v1055, 1.442695
    %v1057 = vpow.pop %v1056
    %v1058 = vadd.f32 %v1057, 1.0
    %v1059 = vrcp.pop %v1058
    %v1060 = vmul.f32 1.0, %v1059
    %v1061 = vtanh.pop %v1049
    %1063 = vrot.lane.b32.xlu0 %v1054, 32
    %v1064 = vpop.permute.xlu0 %1063
    %v1066 = vmul.f32 %v1060, %v1064
    %1068 = vrot.lane.b32.xlu0 %v1061, 64
    %v1069 = vpop.permute.xlu0 %1068
    %v1071 = vmul.f32 %v1060, %v1069
    %1073 = vrot.lane.b32.xlu0 %v1071, 32
    %v1074 = vpop.permute.xlu0 %1073
    %v1076 = vadd.f32 %v1066, %v1074
    %v1077 = vtanh.pop %v1076
    %1079 = vrot.lane.b32.xlu0 %v1077, 64
    %v1080 = vpop.permute.xlu0 %1079
    %v1082 = vmul.f32 %v1060, %v1080
    %v1083 = vld [vmem:[#allocation5] sm:$0xff]
    %v1084 = vxor.u32 %v1053, 2147483648
    %v1085 = vmul.f32 %v1084, 1.442695
    %v1086 = vpow.pop %v1085
    %v1087 = vadd.f32 %v1086, 1.0
    %v1088 = vrcp.pop %v1087
    %v1089 = vmul.f32 1.0, %v1088
    %v1090 = vtanh.pop %v1053
    %1092 = vrot.lane.b32.xlu0 %v1083, 32
    %v1093 = vpop.permute.xlu0 %1092
    %v1095 = vmul.f32 %v1089, %v1093
    %1097 = vrot.lane.b32.xlu0 %v1090, 64
    %v1098 = vpop.permute.xlu0 %1097
    %v1100 = vmul.f32 %v1089, %v1098
    %1102 = vrot.lane.b32.xlu0 %v1100, 32
    %v1103 = vpop.permute.xlu0 %1102
    %v1105 = vadd.f32 %v1095, %v1103
    %v1106 = vtanh.pop %v1105
    %1108 = vrot.lane.b32.xlu0 %v1106, 64
    %v1109 = vpop.permute.xlu0 %1108
    %v1111 = vmul.f32 %v1089, %v1109
    %vm1112 = vcmp.gt.s32.totalorder %v268, 3
    %vm1113 = vcmp.gt.s32.totalorder %v268, 4
    %v1114 = vsel %vm1112, 1, 0
    %1115 = vset.pattern.permute.xlu0 0
    %1116 = vperm.xlu0 %1115, %v1114
    %v1117 = vpop.permute.xlu0 %1116
    %vm1118 = vcmp.eq.s32.totalorder %v1117, 1
    %1120 = vrot.lane.b32.xlu0 %v960, 96
    %v1121 = vpop.permute.xlu0 %1120
    %v1123 = vsel %vm1118, %v1082, %v1121
    %v1124 = vsel %vm1113, 1, 0
    %1125 = vset.pattern.permute.xlu0 0
    %1126 = vperm.xlu0 %1125, %v1124
    %v1127 = vpop.permute.xlu0 %1126
    %vm1128 = vcmp.eq.s32.totalorder %v1127, 1
    %1129 = vrot.lane.b32.xlu0 %v960, 64
    %v1130 = vpop.permute.xlu0 %1129
    %v1132 = vsel %vm1128, %v1111, %v1130
    %v1133 = vsel %vm1118, %v1076, %v1064
    %1135 = vrot.lane.b32.xlu0 %v1133, 96
    %v1136 = vpop.permute.xlu0 %1135
    %1138 = vst.msk [vmem:[#allocation4] sm:$0xff] %vm89, %v1136
    %v1139 = vld [vmem:[#allocation5] sm:$0xff]
    %1141 = vrot.lane.b32.xlu0 %v1139, 32
    %v1142 = vpop.permute.xlu0 %1141
    %v1144 = vsel %vm1128, %v1105, %v1142
    %1146 = vrot.lane.b32.xlu0 %v1144, 96
    %v1147 = vpop.permute.xlu0 %1146
    %1149 = vst.msk [vmem:[#allocation5] sm:$0xff] %vm89, %v1147
    %1151 = vrot.lane.b32.xlu0 %v1123, 32
    %v1152 = vpop.permute.xlu0 %1151
    %1155 = vrot.lane.b32.xlu0 %v1132, 64
    %v1156 = vpop.permute.xlu0 %1155
    %v1158 = vsel %vm89, %v1152, %v1156
    %1159 = vst.msk [vmem:[#allocation3] sm:$0xff] %vm247, %v1158
    %v1160 = vsel %vm1118, %v1082, 0.0
    %v1161 = vpack.c.bf16 %v1160, %v1160
    %v1163 = vunpack.c.l.b16 %v1161
    %v1164 = vpack.c.b16 %v1163, %v1163
    %1165 = vrot.lane.b32.xlu0 %v1164, 32
    %v1166 = vpop.permute.xlu0 %1165
    %s1168 = scalar_lea.vmem %s6, 12
    %1169 = vst.msk [vmem:[%s1168] sm:$0xf] %vm251, %v1166
    %v1170 = vsel %vm1128, %v1111, 0.0
    %v1171 = vpack.c.bf16 %v1170, %v1170
    %v1173 = vunpack.c.l.b16 %v1171
    %v1174 = vpack.c.b16 %v1173, %v1173
    %1175 = vrot.lane.b32.xlu0 %v1174, 32
    %v1176 = vpop.permute.xlu0 %1175
    %s1178 = scalar_lea.vmem %s7, 16
    %1179 = vst.msk [vmem:[%s1178] sm:$0xf] %vm251, %v1176
    %v1180 = vld [vmem:[#allocation3] sm:$0xff]
    %v1181 = vpack.c.bf16 %v1180, %v1180
    %v1183 = vsel %vm247, %v1181, 0
    %1185 = vmatprep.subr.bf16.mxu0 %v987
    %1186 = vmatpush1.bf16.msra.mxu0 %v986
    %1187 = vmatprep.subr.bf16.mxu0 %v989
    %1188 = vmatpush1.bf16.msra.mxu0 %v988
    %1189 = vmatprep.subr.bf16.mxu0 %v991
    %1190 = vmatpush1.bf16.msra.mxu0 %v990
    %1191 = vmatprep.subr.bf16.mxu0 %v993
    %1192 = vmatpush1.bf16.msra.mxu0 %v992
    %1193 = vmatprep.subr.bf16.mxu0 0
    %1194 = vmatpush1.bf16.msra.mxu0 0
    %1195 = vmatprep.subr.bf16.mxu0 0
    %1196 = vmatpush1.bf16.msra.mxu0 0
    %1197 = vmatprep.subr.bf16.mxu0 0
    %1198 = vmatpush1.bf16.msra.mxu0 0
    %1199 = vmatprep.subr.bf16.mxu0 0
    %1200 = vmatpush1.bf16.msra.mxu0 0
    %1201 = vmatprep.subr.bf16.mxu0 0
    %1202 = vmatpush1.bf16.msra.mxu0 0
    %1203 = vmatprep.subr.bf16.mxu0 0
    %1204 = vmatpush1.bf16.msra.mxu0 0
    %1205 = vmatprep.subr.bf16.mxu0 0
    %1206 = vmatpush1.bf16.msra.mxu0 0
    %1207 = vmatprep.subr.bf16.mxu0 0
    %1208 = vmatpush1.bf16.msra.mxu0 0
    %1209 = vmatprep.subr.bf16.mxu0 0
    %1210 = vmatpush1.bf16.msra.mxu0 0
    %1211 = vmatprep.subr.bf16.mxu0 0
    %1212 = vmatpush1.bf16.msra.mxu0 0
    %1213 = vmatprep.subr.bf16.mxu0 0
    %1214 = vmatpush1.bf16.msra.mxu0 0
    %1215 = vmatprep.subr.bf16.mxu0 0
    %1216 = vmatpush1.bf16.msra.mxu0 0
    %1217 = vmatprep.mubr.bf16.mxu0 0
    %1218 = vmatmul.mubr.bf16.gmra.mrb[0].mxu0 %v1183
    %v1219 = vpop.f32.mrb[0].mxu0
    %v1220 = vadd.f32 0.0, %v1219
    %v1221 = vpop.f32.mrb[0].mxu0
    %v1222 = vadd.f32 0.0, %v1221
    %v1223 = vpop.f32.mrb[0].mxu0
    %v1224 = vpop.f32.mrb[0].mxu0
    %1225 = vdwg.mxu0
    %v1226 = vld [vmem:[%s1050] sm:$0xf]
    %v1227 = vunpack.c.l.bf16 %v1226
    %v1228 = vadd.f32 %v1227, %v1220
    %v1229 = vld [vmem:[%s1046 + $0x4] sm:$0xf]
    %v1230 = vunpack.c.l.bf16 %v1229
    %v1231 = vadd.f32 %v1230, %v1222
    %v1232 = vld [vmem:[#allocation4] sm:$0xff]
    %v1233 = vxor.u32 %v1228, 2147483648
    %v1234 = vmul.f32 %v1233, 1.442695
    %v1235 = vpow.pop %v1234
    %v1236 = vadd.f32 %v1235, 1.0
    %v1237 = vrcp.pop %v1236
    %v1238 = vmul.f32 1.0, %v1237
    %v1239 = vtanh.pop %v1228
    %1241 = vrot.lane.b32.xlu0 %v1232, 32
    %v1242 = vpop.permute.xlu0 %1241
    %v1244 = vmul.f32 %v1238, %v1242
    %1246 = vrot.lane.b32.xlu0 %v1239, 64
    %v1247 = vpop.permute.xlu0 %1246
    %v1249 = vmul.f32 %v1238, %v1247
    %1251 = vrot.lane.b32.xlu0 %v1249, 32
    %v1252 = vpop.permute.xlu0 %1251
    %v1254 = vadd.f32 %v1244, %v1252
    %v1255 = vtanh.pop %v1254
    %1257 = vrot.lane.b32.xlu0 %v1255, 64
    %v1258 = vpop.permute.xlu0 %1257
    %v1260 = vmul.f32 %v1238, %v1258
    %v1261 = vld [vmem:[#allocation5] sm:$0xff]
    %v1262 = vxor.u32 %v1231, 2147483648
    %v1263 = vmul.f32 %v1262, 1.442695
    %v1264 = vpow.pop %v1263
    %v1265 = vadd.f32 %v1264, 1.0
    %v1266 = vrcp.pop %v1265
    %v1267 = vmul.f32 1.0, %v1266
    %v1268 = vtanh.pop %v1231
    %1270 = vrot.lane.b32.xlu0 %v1261, 32
    %v1271 = vpop.permute.xlu0 %1270
    %v1273 = vmul.f32 %v1267, %v1271
    %1275 = vrot.lane.b32.xlu0 %v1268, 64
    %v1276 = vpop.permute.xlu0 %1275
    %v1278 = vmul.f32 %v1267, %v1276
    %1280 = vrot.lane.b32.xlu0 %v1278, 32
    %v1281 = vpop.permute.xlu0 %1280
    %v1283 = vadd.f32 %v1273, %v1281
    %v1284 = vtanh.pop %v1283
    %1286 = vrot.lane.b32.xlu0 %v1284, 64
    %v1287 = vpop.permute.xlu0 %1286
    %v1289 = vmul.f32 %v1267, %v1287
    %1291 = vrot.lane.b32.xlu0 %v1180, 96
    %v1292 = vpop.permute.xlu0 %1291
    %v1294 = vsel %vm1128, %v1260, %v1292
    %1295 = vrot.lane.b32.xlu0 %v1180, 64
    %v1296 = vpop.permute.xlu0 %1295
    %v1298 = vsel %vm1118, %v1289, %v1296
    %v1299 = vsel %vm1128, %v1254, %v1242
    %1301 = vrot.lane.b32.xlu0 %v1299, 96
    %v1302 = vpop.permute.xlu0 %1301
    %1304 = vst.msk [vmem:[#allocation4] sm:$0xff] %vm89, %v1302
    %v1305 = vld [vmem:[#allocation5] sm:$0xff]
    %1307 = vrot.lane.b32.xlu0 %v1305, 32
    %v1308 = vpop.permute.xlu0 %1307
    %v1310 = vsel %vm1118, %v1283, %v1308
    %1312 = vrot.lane.b32.xlu0 %v1310, 96
    %v1313 = vpop.permute.xlu0 %1312
    %1315 = vst.msk [vmem:[#allocation5] sm:$0xff] %vm89, %v1313
    %1317 = vrot.lane.b32.xlu0 %v1294, 32
    %v1318 = vpop.permute.xlu0 %1317
    %1321 = vrot.lane.b32.xlu0 %v1298, 64
    %v1322 = vpop.permute.xlu0 %1321
    %v1324 = vsel %vm89, %v1318, %v1322
    %1325 = vst.msk [vmem:[#allocation3] sm:$0xff] %vm247, %v1324
    %v1326 = vsel %vm1128, %v1260, 0.0
    %v1327 = vpack.c.bf16 %v1326, %v1326
    %v1329 = vunpack.c.l.b16 %v1327
    %v1330 = vpack.c.b16 %v1329, %v1329
    %1331 = vrot.lane.b32.xlu0 %v1330, 32
    %v1332 = vpop.permute.xlu0 %1331
    %s1334 = scalar_lea.vmem %s6, 16
    %1335 = vst.msk [vmem:[%s1334] sm:$0xf] %vm251, %v1332
    %v1336 = vsel %vm1118, %v1289, 0.0
    %v1337 = vpack.c.bf16 %v1336, %v1336
    %v1339 = vunpack.c.l.b16 %v1337
    %v1340 = vpack.c.b16 %v1339, %v1339
    %1341 = vrot.lane.b32.xlu0 %v1340, 32
    %v1342 = vpop.permute.xlu0 %1341
    %s1344 = scalar_lea.vmem %s7, 12
    %1345 = vst.msk [vmem:[%s1344] sm:$0xf] %vm251, %v1342
  $region37: #{net_forward.2} parent=0 // pred_fallthru
    _
  // Predicated region
  $region38: #{net_forward.2} parent=0 // pred_check
    %p1346 = pneg %p730
  $region39: #{net_forward.2} parent=0 // pred_check_branch
    %1348 = sbr.rel (%p1346) target = $region41
  $region40: #{net_forward.2} parent=0 // pred_region
    %v1349 = vld [vmem:[#allocation3] sm:$0xff]
    %v1350 = vpack.c.bf16 %v1349, %v1349
    %v1359 = vunpack.c.l.b16 %v270
    %v1360 = vunpack.c.h.b16 %v270
    %v1361 = vunpack.c.l.b16 %v271
    %v1362 = vunpack.c.h.b16 %v271
    %v1363 = vunpack.c.l.b16 %v272
    %v1364 = vunpack.c.h.b16 %v272
    %v1365 = vunpack.c.l.b16 %v273
    %v1366 = vunpack.c.h.b16 %v273
    %v1367 = vunpack.c.l.b16 %v274
    %v1368 = vunpack.c.h.b16 %v274
    %v1369 = vunpack.c.l.b16 %v275
    %v1370 = vunpack.c.h.b16 %v275
    %v1371 = vunpack.c.l.b16 %v276
    %v1372 = vunpack.c.h.b16 %v276
    %v1373 = vunpack.c.l.b16 %v277
    %v1374 = vunpack.c.h.b16 %v277
    %v1375 = vpack.c.b16 %v1361, %v1359
    %v1376 = vpack.c.b16 %v1362, %v1360
    %v1377 = vpack.c.b16 %v1365, %v1363
    %v1378 = vpack.c.b16 %v1366, %v1364
    %v1379 = vpack.c.b16 %v1369, %v1367
    %v1380 = vpack.c.b16 %v1370, %v1368
    %v1381 = vpack.c.b16 %v1373, %v1371
    %v1382 = vpack.c.b16 %v1374, %v1372
    %v1392 = vsel %vm247, %v1350, 0
    %1394 = vmatprep.subr.bf16.mxu0 %v1376
    %1395 = vmatpush1.bf16.msra.mxu0 %v1375
    %1396 = vmatprep.subr.bf16.mxu0 %v1378
    %1397 = vmatpush1.bf16.msra.mxu0 %v1377
    %1398 = vmatprep.subr.bf16.mxu0 %v1380
    %1399 = vmatpush1.bf16.msra.mxu0 %v1379
    %1400 = vmatprep.subr.bf16.mxu0 %v1382
    %1401 = vmatpush1.bf16.msra.mxu0 %v1381
    %1402 = vmatprep.subr.bf16.mxu0 0
    %1403 = vmatpush1.bf16.msra.mxu0 0
    %1404 = vmatprep.subr.bf16.mxu0 0
    %1405 = vmatpush1.bf16.msra.mxu0 0
    %1406 = vmatprep.subr.bf16.mxu0 0
    %1407 = vmatpush1.bf16.msra.mxu0 0
    %1408 = vmatprep.subr.bf16.mxu0 0
    %1409 = vmatpush1.bf16.msra.mxu0 0
    %1410 = vmatprep.subr.bf16.mxu0 0
    %1411 = vmatpush1.bf16.msra.mxu0 0
    %1412 = vmatprep.subr.bf16.mxu0 0
    %1413 = vmatpush1.bf16.msra.mxu0 0
    %1414 = vmatprep.subr.bf16.mxu0 0
    %1415 = vmatpush1.bf16.msra.mxu0 0
    %1416 = vmatprep.subr.bf16.mxu0 0
    %1417 = vmatpush1.bf16.msra.mxu0 0
    %1418 = vmatprep.subr.bf16.mxu0 0
    %1419 = vmatpush1.bf16.msra.mxu0 0
    %1420 = vmatprep.subr.bf16.mxu0 0
    %1421 = vmatpush1.bf16.msra.mxu0 0
    %1422 = vmatprep.subr.bf16.mxu0 0
    %1423 = vmatpush1.bf16.msra.mxu0 0
    %1424 = vmatprep.subr.bf16.mxu0 0
    %1425 = vmatpush1.bf16.msra.mxu0 0
    %1426 = vmatprep.mubr.bf16.mxu0 0
    %1427 = vmatmul.mubr.bf16.gmra.mrb[0].mxu0 %v1392
    %v1428 = vpop.f32.mrb[0].mxu0
    %v1429 = vadd.f32 0.0, %v1428
    %v1430 = vpop.f32.mrb[0].mxu0
    %v1431 = vadd.f32 0.0, %v1430
    %v1432 = vpop.f32.mrb[0].mxu0
    %v1433 = vpop.f32.mrb[0].mxu0
    %1434 = vdwg.mxu0
    %s1435 = scalar_lea.vmem [#allocation2], 40
    %v1436 = vld [vmem:[%s1435] sm:$0xf]
    %v1437 = vunpack.c.l.bf16 %v1436
    %v1438 = vadd.f32 %v1437, %v1429
    %s1439 = scalar_lea.vmem [#allocation2], 16
    %v1440 = vld [vmem:[%s1439 + $0x4] sm:$0xf]
    %v1441 = vunpack.c.l.bf16 %v1440
    %v1442 = vadd.f32 %v1441, %v1431
    %v1443 = vld [vmem:[#allocation4] sm:$0xff]
    %v1444 = vxor.u32 %v1438, 2147483648
    %v1445 = vmul.f32 %v1444, 1.442695
    %v1446 = vpow.pop %v1445
    %v1447 = vadd.f32 %v1446, 1.0
    %v1448 = vrcp.pop %v1447
    %v1449 = vmul.f32 1.0, %v1448
    %v1450 = vtanh.pop %v1438
    %1452 = vrot.lane.b32.xlu0 %v1443, 32
    %v1453 = vpop.permute.xlu0 %1452
    %v1455 = vmul.f32 %v1449, %v1453
    %1457 = vrot.lane.b32.xlu0 %v1450, 64
    %v1458 = vpop.permute.xlu0 %1457
    %v1460 = vmul.f32 %v1449, %v1458
    %1462 = vrot.lane.b32.xlu0 %v1460, 32
    %v1463 = vpop.permute.xlu0 %1462
    %v1465 = vadd.f32 %v1455, %v1463
    %v1466 = vtanh.pop %v1465
    %1468 = vrot.lane.b32.xlu0 %v1466, 64
    %v1469 = vpop.permute.xlu0 %1468
    %v1471 = vmul.f32 %v1449, %v1469
    %v1472 = vld [vmem:[#allocation5] sm:$0xff]
    %v1473 = vxor.u32 %v1442, 2147483648
    %v1474 = vmul.f32 %v1473, 1.442695
    %v1475 = vpow.pop %v1474
    %v1476 = vadd.f32 %v1475, 1.0
    %v1477 = vrcp.pop %v1476
    %v1478 = vmul.f32 1.0, %v1477
    %v1479 = vtanh.pop %v1442
    %1481 = vrot.lane.b32.xlu0 %v1472, 32
    %v1482 = vpop.permute.xlu0 %1481
    %v1484 = vmul.f32 %v1478, %v1482
    %1486 = vrot.lane.b32.xlu0 %v1479, 64
    %v1487 = vpop.permute.xlu0 %1486
    %v1489 = vmul.f32 %v1478, %v1487
    %1491 = vrot.lane.b32.xlu0 %v1489, 32
    %v1492 = vpop.permute.xlu0 %1491
    %v1494 = vadd.f32 %v1484, %v1492
    %v1495 = vtanh.pop %v1494
    %1497 = vrot.lane.b32.xlu0 %v1495, 64
    %v1498 = vpop.permute.xlu0 %1497
    %v1500 = vmul.f32 %v1478, %v1498
    %vm1501 = vcmp.gt.s32.totalorder %v268, 5
    %vm1502 = vcmp.gt.s32.totalorder %v268, 2
    %v1503 = vsel %vm1501, 1, 0
    %1504 = vset.pattern.permute.xlu0 0
    %1505 = vperm.xlu0 %1504, %v1503
    %v1506 = vpop.permute.xlu0 %1505
    %vm1507 = vcmp.eq.s32.totalorder %v1506, 1
    %1509 = vrot.lane.b32.xlu0 %v1349, 96
    %v1510 = vpop.permute.xlu0 %1509
    %v1512 = vsel %vm1507, %v1471, %v1510
    %v1513 = vsel %vm1502, 1, 0
    %1514 = vset.pattern.permute.xlu0 0
    %1515 = vperm.xlu0 %1514, %v1513
    %v1516 = vpop.permute.xlu0 %1515
    %vm1517 = vcmp.eq.s32.totalorder %v1516, 1
    %1518 = vrot.lane.b32.xlu0 %v1349, 64
    %v1519 = vpop.permute.xlu0 %1518
    %v1521 = vsel %vm1517, %v1500, %v1519
    %v1522 = vsel %vm1507, %v1465, %v1453
    %1524 = vrot.lane.b32.xlu0 %v1522, 96
    %v1525 = vpop.permute.xlu0 %1524
    %1527 = vst.msk [vmem:[#allocation4] sm:$0xff] %vm89, %v1525
    %v1528 = vld [vmem:[#allocation5] sm:$0xff]
    %1530 = vrot.lane.b32.xlu0 %v1528, 32
    %v1531 = vpop.permute.xlu0 %1530
    %v1533 = vsel %vm1517, %v1494, %v1531
    %1535 = vrot.lane.b32.xlu0 %v1533, 96
    %v1536 = vpop.permute.xlu0 %1535
    %1538 = vst.msk [vmem:[#allocation5] sm:$0xff] %vm89, %v1536
    %1540 = vrot.lane.b32.xlu0 %v1512, 32
    %v1541 = vpop.permute.xlu0 %1540
    %1544 = vrot.lane.b32.xlu0 %v1521, 64
    %v1545 = vpop.permute.xlu0 %1544
    %v1547 = vsel %vm89, %v1541, %v1545
    %1548 = vst.msk [vmem:[#allocation3] sm:$0xff] %vm247, %v1547
    %v1549 = vsel %vm1507, %v1471, 0.0
    %v1550 = vpack.c.bf16 %v1549, %v1549
    %v1552 = vunpack.c.l.b16 %v1550
    %v1553 = vpack.c.b16 %v1552, %v1552
    %1554 = vrot.lane.b32.xlu0 %v1553, 32
    %v1555 = vpop.permute.xlu0 %1554
    %s1557 = scalar_lea.vmem %s6, 20
    %1558 = vst.msk [vmem:[%s1557] sm:$0xf] %vm251, %v1555
    %v1559 = vsel %vm1517, %v1500, 0.0
    %v1560 = vpack.c.bf16 %v1559, %v1559
    %v1562 = vunpack.c.l.b16 %v1560
    %v1563 = vpack.c.b16 %v1562, %v1562
    %1564 = vrot.lane.b32.xlu0 %v1563, 32
    %v1565 = vpop.permute.xlu0 %1564
    %s1567 = scalar_lea.vmem %s7, 8
    %1568 = vst.msk [vmem:[%s1567] sm:$0xf] %vm251, %v1565
  $region41: #{net_forward.2} parent=0 // pred_fallthru
    _
  // Predicated region
  $region42: #{net_forward.2} parent=0 // pred_check
    %p1569 = pneg %p504
  $region43: #{net_forward.2} parent=0 // pred_check_branch
    %1571 = sbr.rel (%p1569) target = $region45
  $region44: #{net_forward.2} parent=0 // pred_region
    %v1572 = vld [vmem:[#allocation3] sm:$0xff]
    %v1573 = vpack.c.bf16 %v1572, %v1572
    %v1582 = vunpack.c.l.b16 %v270
    %v1583 = vunpack.c.h.b16 %v270
    %v1584 = vunpack.c.l.b16 %v271
    %v1585 = vunpack.c.h.b16 %v271
    %v1586 = vunpack.c.l.b16 %v272
    %v1587 = vunpack.c.h.b16 %v272
    %v1588 = vunpack.c.l.b16 %v273
    %v1589 = vunpack.c.h.b16 %v273
    %v1590 = vunpack.c.l.b16 %v274
    %v1591 = vunpack.c.h.b16 %v274
    %v1592 = vunpack.c.l.b16 %v275
    %v1593 = vunpack.c.h.b16 %v275
    %v1594 = vunpack.c.l.b16 %v276
    %v1595 = vunpack.c.h.b16 %v276
    %v1596 = vunpack.c.l.b16 %v277
    %v1597 = vunpack.c.h.b16 %v277
    %v1598 = vpack.c.b16 %v1584, %v1582
    %v1599 = vpack.c.b16 %v1585, %v1583
    %v1600 = vpack.c.b16 %v1588, %v1586
    %v1601 = vpack.c.b16 %v1589, %v1587
    %v1602 = vpack.c.b16 %v1592, %v1590
    %v1603 = vpack.c.b16 %v1593, %v1591
    %v1604 = vpack.c.b16 %v1596, %v1594
    %v1605 = vpack.c.b16 %v1597, %v1595
    %v1615 = vsel %vm247, %v1573, 0
    %1617 = vmatprep.subr.bf16.mxu0 %v1599
    %1618 = vmatpush1.bf16.msra.mxu0 %v1598
    %1619 = vmatprep.subr.bf16.mxu0 %v1601
    %1620 = vmatpush1.bf16.msra.mxu0 %v1600
    %1621 = vmatprep.subr.bf16.mxu0 %v1603
    %1622 = vmatpush1.bf16.msra.mxu0 %v1602
    %1623 = vmatprep.subr.bf16.mxu0 %v1605
    %1624 = vmatpush1.bf16.msra.mxu0 %v1604
    %1625 = vmatprep.subr.bf16.mxu0 0
    %1626 = vmatpush1.bf16.msra.mxu0 0
    %1627 = vmatprep.subr.bf16.mxu0 0
    %1628 = vmatpush1.bf16.msra.mxu0 0
    %1629 = vmatprep.subr.bf16.mxu0 0
    %1630 = vmatpush1.bf16.msra.mxu0 0
    %1631 = vmatprep.subr.bf16.mxu0 0
    %1632 = vmatpush1.bf16.msra.mxu0 0
    %1633 = vmatprep.subr.bf16.mxu0 0
    %1634 = vmatpush1.bf16.msra.mxu0 0
    %1635 = vmatprep.subr.bf16.mxu0 0
    %1636 = vmatpush1.bf16.msra.mxu0 0
    %1637 = vmatprep.subr.bf16.mxu0 0
    %1638 = vmatpush1.bf16.msra.mxu0 0
    %1639 = vmatprep.subr.bf16.mxu0 0
    %1640 = vmatpush1.bf16.msra.mxu0 0
    %1641 = vmatprep.subr.bf16.mxu0 0
    %1642 = vmatpush1.bf16.msra.mxu0 0
    %1643 = vmatprep.subr.bf16.mxu0 0
    %1644 = vmatpush1.bf16.msra.mxu0 0
    %1645 = vmatprep.subr.bf16.mxu0 0
    %1646 = vmatpush1.bf16.msra.mxu0 0
    %1647 = vmatprep.subr.bf16.mxu0 0
    %1648 = vmatpush1.bf16.msra.mxu0 0
    %1649 = vmatprep.mubr.bf16.mxu0 0
    %1650 = vmatmul.mubr.bf16.gmra.mrb[0].mxu0 %v1615
    %v1651 = vpop.f32.mrb[0].mxu0
    %v1652 = vadd.f32 0.0, %v1651
    %v1653 = vpop.f32.mrb[0].mxu0
    %v1654 = vadd.f32 0.0, %v1653
    %v1655 = vpop.f32.mrb[0].mxu0
    %v1656 = vpop.f32.mrb[0].mxu0
    %1657 = vdwg.mxu0
    %s1658 = scalar_lea.vmem [#allocation2], 48
    %v1659 = vld [vmem:[%s1658] sm:$0xf]
    %v1660 = vunpack.c.l.bf16 %v1659
    %v1661 = vadd.f32 %v1660, %v1652
    %s1662 = scalar_lea.vmem [#allocation2], 8
    %v1663 = vld [vmem:[%s1662 + $0x4] sm:$0xf]
    %v1664 = vunpack.c.l.bf16 %v1663
    %v1665 = vadd.f32 %v1664, %v1654
    %v1666 = vld [vmem:[#allocation4] sm:$0xff]
    %v1667 = vxor.u32 %v1661, 2147483648
    %v1668 = vmul.f32 %v1667, 1.442695
    %v1669 = vpow.pop %v1668
    %v1670 = vadd.f32 %v1669, 1.0
    %v1671 = vrcp.pop %v1670
    %v1672 = vmul.f32 1.0, %v1671
    %v1673 = vtanh.pop %v1661
    %1675 = vrot.lane.b32.xlu0 %v1666, 32
    %v1676 = vpop.permute.xlu0 %1675
    %v1678 = vmul.f32 %v1672, %v1676
    %1680 = vrot.lane.b32.xlu0 %v1673, 64
    %v1681 = vpop.permute.xlu0 %1680
    %v1683 = vmul.f32 %v1672, %v1681
    %1685 = vrot.lane.b32.xlu0 %v1683, 32
    %v1686 = vpop.permute.xlu0 %1685
    %v1688 = vadd.f32 %v1678, %v1686
    %v1689 = vtanh.pop %v1688
    %1691 = vrot.lane.b32.xlu0 %v1689, 64
    %v1692 = vpop.permute.xlu0 %1691
    %v1694 = vmul.f32 %v1672, %v1692
    %v1695 = vld [vmem:[#allocation5] sm:$0xff]
    %v1696 = vxor.u32 %v1665, 2147483648
    %v1697 = vmul.f32 %v1696, 1.442695
    %v1698 = vpow.pop %v1697
    %v1699 = vadd.f32 %v1698, 1.0
    %v1700 = vrcp.pop %v1699
    %v1701 = vmul.f32 1.0, %v1700
    %v1702 = vtanh.pop %v1665
    %1704 = vrot.lane.b32.xlu0 %v1695, 32
    %v1705 = vpop.permute.xlu0 %1704
    %v1707 = vmul.f32 %v1701, %v1705
    %1709 = vrot.lane.b32.xlu0 %v1702, 64
    %v1710 = vpop.permute.xlu0 %1709
    %v1712 = vmul.f32 %v1701, %v1710
    %1714 = vrot.lane.b32.xlu0 %v1712, 32
    %v1715 = vpop.permute.xlu0 %1714
    %v1717 = vadd.f32 %v1707, %v1715
    %v1718 = vtanh.pop %v1717
    %1720 = vrot.lane.b32.xlu0 %v1718, 64
    %v1721 = vpop.permute.xlu0 %1720
    %v1723 = vmul.f32 %v1701, %v1721
    %vm1724 = vcmp.gt.s32.totalorder %v268, 6
    %vm1725 = vcmp.gt.s32.totalorder %v268, 1
    %v1726 = vsel %vm1724, 1, 0
    %1727 = vset.pattern.permute.xlu0 0
    %1728 = vperm.xlu0 %1727, %v1726
    %v1729 = vpop.permute.xlu0 %1728
    %vm1730 = vcmp.eq.s32.totalorder %v1729, 1
    %1732 = vrot.lane.b32.xlu0 %v1572, 96
    %v1733 = vpop.permute.xlu0 %1732
    %v1735 = vsel %vm1730, %v1694, %v1733
    %v1736 = vsel %vm1725, 1, 0
    %1737 = vset.pattern.permute.xlu0 0
    %1738 = vperm.xlu0 %1737, %v1736
    %v1739 = vpop.permute.xlu0 %1738
    %vm1740 = vcmp.eq.s32.totalorder %v1739, 1
    %1741 = vrot.lane.b32.xlu0 %v1572, 64
    %v1742 = vpop.permute.xlu0 %1741
    %v1744 = vsel %vm1740, %v1723, %v1742
    %v1745 = vsel %vm1730, %v1688, %v1676
    %1747 = vrot.lane.b32.xlu0 %v1745, 96
    %v1748 = vpop.permute.xlu0 %1747
    %1750 = vst.msk [vmem:[#allocation4] sm:$0xff] %vm89, %v1748
    %v1751 = vld [vmem:[#allocation5] sm:$0xff]
    %1753 = vrot.lane.b32.xlu0 %v1751, 32
    %v1754 = vpop.permute.xlu0 %1753
    %v1756 = vsel %vm1740, %v1717, %v1754
    %1758 = vrot.lane.b32.xlu0 %v1756, 96
    %v1759 = vpop.permute.xlu0 %1758
    %1761 = vst.msk [vmem:[#allocation5] sm:$0xff] %vm89, %v1759
    %1763 = vrot.lane.b32.xlu0 %v1735, 32
    %v1764 = vpop.permute.xlu0 %1763
    %1767 = vrot.lane.b32.xlu0 %v1744, 64
    %v1768 = vpop.permute.xlu0 %1767
    %v1770 = vsel %vm89, %v1764, %v1768
    %1771 = vst.msk [vmem:[#allocation3] sm:$0xff] %vm247, %v1770
    %v1772 = vsel %vm1730, %v1694, 0.0
    %v1773 = vpack.c.bf16 %v1772, %v1772
    %v1775 = vunpack.c.l.b16 %v1773
    %v1776 = vpack.c.b16 %v1775, %v1775
    %1777 = vrot.lane.b32.xlu0 %v1776, 32
    %v1778 = vpop.permute.xlu0 %1777
    %s1780 = scalar_lea.vmem %s6, 24
    %1781 = vst.msk [vmem:[%s1780] sm:$0xf] %vm251, %v1778
    %v1782 = vsel %vm1740, %v1723, 0.0
    %v1783 = vpack.c.bf16 %v1782, %v1782
    %v1785 = vunpack.c.l.b16 %v1783
    %v1786 = vpack.c.b16 %v1785, %v1785
    %1787 = vrot.lane.b32.xlu0 %v1786, 32
    %v1788 = vpop.permute.xlu0 %1787
    %s1790 = scalar_lea.vmem %s7, 4
    %1791 = vst.msk [vmem:[%s1790] sm:$0xf] %vm251, %v1788
  $region45: #{net_forward.2} parent=0 // pred_fallthru
    _
  // Predicated region
  $region46: #{net_forward.2} parent=0 // pred_check
    %p1792 = pneg %p280
  $region47: #{net_forward.2} parent=0 // pred_check_branch
    %1794 = sbr.rel (%p1792) target = $region49
  $region48: #{net_forward.2} parent=0 // pred_region
    %v1795 = vld [vmem:[#allocation3] sm:$0xff]
    %v1796 = vpack.c.bf16 %v1795, %v1795
    %v1805 = vunpack.c.l.b16 %v270
    %v1806 = vunpack.c.h.b16 %v270
    %v1807 = vunpack.c.l.b16 %v271
    %v1808 = vunpack.c.h.b16 %v271
    %v1809 = vunpack.c.l.b16 %v272
    %v1810 = vunpack.c.h.b16 %v272
    %v1811 = vunpack.c.l.b16 %v273
    %v1812 = vunpack.c.h.b16 %v273
    %v1813 = vunpack.c.l.b16 %v274
    %v1814 = vunpack.c.h.b16 %v274
    %v1815 = vunpack.c.l.b16 %v275
    %v1816 = vunpack.c.h.b16 %v275
    %v1817 = vunpack.c.l.b16 %v276
    %v1818 = vunpack.c.h.b16 %v276
    %v1819 = vunpack.c.l.b16 %v277
    %v1820 = vunpack.c.h.b16 %v277
    %v1821 = vpack.c.b16 %v1807, %v1805
    %v1822 = vpack.c.b16 %v1808, %v1806
    %v1823 = vpack.c.b16 %v1811, %v1809
    %v1824 = vpack.c.b16 %v1812, %v1810
    %v1825 = vpack.c.b16 %v1815, %v1813
    %v1826 = vpack.c.b16 %v1816, %v1814
    %v1827 = vpack.c.b16 %v1819, %v1817
    %v1828 = vpack.c.b16 %v1820, %v1818
    %v1838 = vsel %vm247, %v1796, 0
    %1840 = vmatprep.subr.bf16.mxu0 %v1822
    %1841 = vmatpush1.bf16.msra.mxu0 %v1821
    %1842 = vmatprep.subr.bf16.mxu0 %v1824
    %1843 = vmatpush1.bf16.msra.mxu0 %v1823
    %1844 = vmatprep.subr.bf16.mxu0 %v1826
    %1845 = vmatpush1.bf16.msra.mxu0 %v1825
    %1846 = vmatprep.subr.bf16.mxu0 %v1828
    %1847 = vmatpush1.bf16.msra.mxu0 %v1827
    %1848 = vmatprep.subr.bf16.mxu0 0
    %1849 = vmatpush1.bf16.msra.mxu0 0
    %1850 = vmatprep.subr.bf16.mxu0 0
    %1851 = vmatpush1.bf16.msra.mxu0 0
    %1852 = vmatprep.subr.bf16.mxu0 0
    %1853 = vmatpush1.bf16.msra.mxu0 0
    %1854 = vmatprep.subr.bf16.mxu0 0
    %1855 = vmatpush1.bf16.msra.mxu0 0
    %1856 = vmatprep.subr.bf16.mxu0 0
    %1857 = vmatpush1.bf16.msra.mxu0 0
    %1858 = vmatprep.subr.bf16.mxu0 0
    %1859 = vmatpush1.bf16.msra.mxu0 0
    %1860 = vmatprep.subr.bf16.mxu0 0
    %1861 = vmatpush1.bf16.msra.mxu0 0
    %1862 = vmatprep.subr.bf16.mxu0 0
    %1863 = vmatpush1.bf16.msra.mxu0 0
    %1864 = vmatprep.subr.bf16.mxu0 0
    %1865 = vmatpush1.bf16.msra.mxu0 0
    %1866 = vmatprep.subr.bf16.mxu0 0
    %1867 = vmatpush1.bf16.msra.mxu0 0
    %1868 = vmatprep.subr.bf16.mxu0 0
    %1869 = vmatpush1.bf16.msra.mxu0 0
    %1870 = vmatprep.subr.bf16.mxu0 0
    %1871 = vmatpush1.bf16.msra.mxu0 0
    %1872 = vmatprep.mubr.bf16.mxu0 0
    %1873 = vmatmul.mubr.bf16.gmra.mrb[0].mxu0 %v1838
    %v1874 = vpop.f32.mrb[0].mxu0
    %v1875 = vadd.f32 0.0, %v1874
    %v1876 = vpop.f32.mrb[0].mxu0
    %v1877 = vadd.f32 0.0, %v1876
    %v1878 = vpop.f32.mrb[0].mxu0
    %v1879 = vpop.f32.mrb[0].mxu0
    %1880 = vdwg.mxu0
    %s1881 = scalar_lea.vmem [#allocation2], 56
    %v1882 = vld [vmem:[%s1881] sm:$0xf]
    %v1883 = vunpack.c.l.bf16 %v1882
    %v1884 = vadd.f32 %v1883, %v1875
    %v1885 = vld [vmem:[#allocation2 + $0x4] sm:$0xf]
    %v1886 = vunpack.c.l.bf16 %v1885
    %v1887 = vadd.f32 %v1886, %v1877
    %v1888 = vld [vmem:[#allocation4] sm:$0xff]
    %v1889 = vxor.u32 %v1884, 2147483648
    %v1890 = vmul.f32 %v1889, 1.442695
    %v1891 = vpow.pop %v1890
    %v1892 = vadd.f32 %v1891, 1.0
    %v1893 = vrcp.pop %v1892
    %v1894 = vmul.f32 1.0, %v1893
    %v1895 = vtanh.pop %v1884
    %1897 = vrot.lane.b32.xlu0 %v1888, 32
    %v1898 = vpop.permute.xlu0 %1897
    %v1900 = vmul.f32 %v1894, %v1898
    %1902 = vrot.lane.b32.xlu0 %v1895, 64
    %v1903 = vpop.permute.xlu0 %1902
    %v1905 = vmul.f32 %v1894, %v1903
    %1907 = vrot.lane.b32.xlu0 %v1905, 32
    %v1908 = vpop.permute.xlu0 %1907
    %v1910 = vadd.f32 %v1900, %v1908
    %v1911 = vtanh.pop %v1910
    %1913 = vrot.lane.b32.xlu0 %v1911, 64
    %v1914 = vpop.permute.xlu0 %1913
    %v1916 = vmul.f32 %v1894, %v1914
    %v1917 = vld [vmem:[#allocation5] sm:$0xff]
    %v1918 = vxor.u32 %v1887, 2147483648
    %v1919 = vmul.f32 %v1918, 1.442695
    %v1920 = vpow.pop %v1919
    %v1921 = vadd.f32 %v1920, 1.0
    %v1922 = vrcp.pop %v1921
    %v1923 = vmul.f32 1.0, %v1922
    %v1924 = vtanh.pop %v1887
    %1926 = vrot.lane.b32.xlu0 %v1917, 32
    %v1927 = vpop.permute.xlu0 %1926
    %v1929 = vmul.f32 %v1923, %v1927
    %1931 = vrot.lane.b32.xlu0 %v1924, 64
    %v1932 = vpop.permute.xlu0 %1931
    %v1934 = vmul.f32 %v1923, %v1932
    %1936 = vrot.lane.b32.xlu0 %v1934, 32
    %v1937 = vpop.permute.xlu0 %1936
    %v1939 = vadd.f32 %v1929, %v1937
    %v1940 = vtanh.pop %v1939
    %1942 = vrot.lane.b32.xlu0 %v1940, 64
    %v1943 = vpop.permute.xlu0 %1942
    %v1945 = vmul.f32 %v1923, %v1943
    %vm1946 = vcmp.gt.s32.totalorder %v268, 7
    %vm1947 = vcmp.gt.s32.totalorder %v268, 0
    %v1948 = vsel %vm1946, 1, 0
    %1949 = vset.pattern.permute.xlu0 0
    %1950 = vperm.xlu0 %1949, %v1948
    %v1951 = vpop.permute.xlu0 %1950
    %vm1952 = vcmp.eq.s32.totalorder %v1951, 1
    %1954 = vrot.lane.b32.xlu0 %v1795, 96
    %v1955 = vpop.permute.xlu0 %1954
    %v1957 = vsel %vm1952, %v1916, %v1955
    %v1958 = vsel %vm1947, 1, 0
    %1959 = vset.pattern.permute.xlu0 0
    %1960 = vperm.xlu0 %1959, %v1958
    %v1961 = vpop.permute.xlu0 %1960
    %vm1962 = vcmp.eq.s32.totalorder %v1961, 1
    %1963 = vrot.lane.b32.xlu0 %v1795, 64
    %v1964 = vpop.permute.xlu0 %1963
    %v1966 = vsel %vm1962, %v1945, %v1964
    %v1967 = vsel %vm1952, %v1910, %v1898
    %1969 = vrot.lane.b32.xlu0 %v1967, 96
    %v1970 = vpop.permute.xlu0 %1969
    %1972 = vst.msk [vmem:[#allocation4] sm:$0xff] %vm89, %v1970
    %v1973 = vld [vmem:[#allocation5] sm:$0xff]
    %1975 = vrot.lane.b32.xlu0 %v1973, 32
    %v1976 = vpop.permute.xlu0 %1975
    %v1978 = vsel %vm1962, %v1939, %v1976
    %1980 = vrot.lane.b32.xlu0 %v1978, 96
    %v1981 = vpop.permute.xlu0 %1980
    %1983 = vst.msk [vmem:[#allocation5] sm:$0xff] %vm89, %v1981
    %1985 = vrot.lane.b32.xlu0 %v1957, 32
    %v1986 = vpop.permute.xlu0 %1985
    %1989 = vrot.lane.b32.xlu0 %v1966, 64
    %v1990 = vpop.permute.xlu0 %1989
    %v1992 = vsel %vm89, %v1986, %v1990
    %1993 = vst.msk [vmem:[#allocation3] sm:$0xff] %vm247, %v1992
    %v1994 = vsel %vm1952, %v1916, 0.0
    %v1995 = vpack.c.bf16 %v1994, %v1994
    %v1997 = vunpack.c.l.b16 %v1995
    %v1998 = vpack.c.b16 %v1997, %v1997
    %1999 = vrot.lane.b32.xlu0 %v1998, 32
    %v2000 = vpop.permute.xlu0 %1999
    %s2002 = scalar_lea.vmem %s6, 28
    %2003 = vst.msk [vmem:[%s2002] sm:$0xf] %vm251, %v2000
    %v2004 = vsel %vm1962, %v1945, 0.0
    %v2005 = vpack.c.bf16 %v2004, %v2004
    %v2007 = vunpack.c.l.b16 %v2005
    %v2008 = vpack.c.b16 %v2007, %v2007
    %2009 = vrot.lane.b32.xlu0 %v2008, 32
    %v2010 = vpop.permute.xlu0 %2009
    %2012 = vst.msk [vmem:[%s7] sm:$0xf] %vm251, %v2010
  $region49: #{net_forward.2} parent=0 // pred_fallthru
    _
  // Predicated region
  $region50: #{net_forward.2} parent=0 // pred_check
    _
  $region51: #{net_forward.2} parent=0 // pred_check_branch
    %2014 = sbr.rel (0) target = $region53
  $region52: #{net_forward.2} parent=0 // pred_region
    _
  $region53: #{net_forward.2} parent=0 // pred_fallthru
    _
  // Predicated region
  $region54: #{net_forward.2} parent=0 // pred_check
    _
  $region55: #{net_forward.2} parent=0 // pred_check_branch
    %2016 = sbr.rel (0) target = $region57
  $region56: #{net_forward.2} parent=0 // pred_region
    _
  $region57: #{net_forward.2} parent=0 // pred_fallthru
    _
  // Predicated region
  $region58: #{net_forward.2} parent=0 // pred_check
    _
  $region59: #{net_forward.2} parent=0 // pred_check_branch
    %2018 = sbr.rel (0) target = $region61
  $region60: #{net_forward.2} parent=0 // pred_region
    _
  $region61: #{net_forward.2} parent=0 // pred_fallthru
    _
  // Predicated region
  $region62: #{net_forward.2} parent=0 // pred_check
    _
  $region63: #{net_forward.2} parent=0 // pred_check_branch
    %2020 = sbr.rel (0) target = $region65
  $region64: #{net_forward.2} parent=0 // pred_region
    _
  $region65: #{net_forward.2} parent=0 // pred_fallthru
    _

// kernel: net_forward.3
$region0: #{net_forward.3}
  #allocation0 [shape = 'u32[]', space=smem, size = 0x4, offset = 0x4, fixed_abs, tag = 'smem constant byte address 0x4 - core index']
  #allocation1 [shape = 'u32[144,128]{1,0:T(1,128)}', space=vmem, size = 0x12000, scoped, tag = 'internal scratch']
  #allocation2 [shape = 'bf16[8,8,256]{2,1,0:T(8,128)(2,1)}', space=vmem, size = 0x8000, scoped, tag = 'scratch operand']
  #allocation3 [shape = 'f32[8,64]{1,0:T(8,128)}', space=vmem, size = 0x1000, scoped, tag = 'scratch operand']
  #allocation4 [shape = 'f32[8,32]{1,0:T(8,128)}', space=vmem, size = 0x1000, scoped, tag = 'scratch operand']
  #allocation5 [shape = 'f32[8,32]{1,0:T(8,128)}', space=vmem, size = 0x1000, scoped, tag = 'scratch operand']
  #allocation6 [shape = 'f32[8,64]{1,0:T(8,128)}', space=vmem, size = 0x1000, scoped, tag = 'scratch operand']
  #allocation7 [shape = 's32[1]{0}', space=sflag, size = 0x4, scoped, tag = 'scoped memory for net_forward.3']
  #allocation8 [shape = 's32[1]{0:T(128)S(6)}', space=smem, size = 0x200, scoped, tag = 'prefetched SMEM operand 0']
  %s0 = inlined_call_operand.<no memory space> [shape: s32[1], index: 0, kind: input, shape index: {}]
  %s1 = inlined_call_operand.vmem [shape: bf16[8,8,32], index: 1, kind: input, shape index: {}]
  %s2 = inlined_call_operand.vmem [shape: bf16[8,8,32], index: 2, kind: input, shape index: {}]
  %s3 = inlined_call_operand.vmem [shape: bf16[64,256], index: 3, kind: input, shape index: {}]
  %s4 = inlined_call_operand.vmem [shape: f32[1,256], index: 4, kind: input, shape index: {}]
  %s5 = inlined_call_operand.vmem [shape: bf16[64,256], index: 5, kind: input, shape index: {}]
  %s6 = inlined_call_operand.vmem [shape: s32[8,1], index: 6, kind: input, shape index: {}]
  %s7 = inlined_call_operand.vmem [shape: f32[64,4], index: 7, kind: input, shape index: {}]
  %s8 = inlined_call_operand.vmem [shape: f32[1,4], index: 8, kind: input, shape index: {}]
  %s9 = inlined_call_operand.vmem [shape: f32[8,4], index: 9, kind: output, shape index: {}]
  %s10 = sld [smem:[#allocation0]]
  $region70: #{net_forward.3} parent=0
    _
  %s12 = ssub.s32 1, %s10
  %s13 = scalar_select 0, %s12, %s10
  %14 = sst [smem:[#allocation8]] %s0
  // Predicated region
  $region2: #{net_forward.3} parent=0 // pred_check
    _
  $region3: #{net_forward.3} parent=0 // pred_check_branch
    %16 = sbr.rel (0) target = $region5
  $region4: #{net_forward.3} parent=0 // pred_region
    _
  $region5: #{net_forward.3} parent=0 // pred_fallthru
    _
  // Predicated region
  $region6: #{net_forward.3} parent=0 // pred_check
    _
  $region7: #{net_forward.3} parent=0 // pred_check_branch
    %18 = sbr.rel (0) target = $region9
  $region8: #{net_forward.3} parent=0 // pred_region
    _
  $region9: #{net_forward.3} parent=0 // pred_fallthru
    _
  // Predicated region
  $region10: #{net_forward.3} parent=0 // pred_check
    _
  $region11: #{net_forward.3} parent=0 // pred_check_branch
    %20 = sbr.rel (0) target = $region13
  $region12: #{net_forward.3} parent=0 // pred_region
    _
  $region13: #{net_forward.3} parent=0 // pred_fallthru
    _
  // Predicated region
  $region14: #{net_forward.3} parent=0 // pred_check
    _
  $region15: #{net_forward.3} parent=0 // pred_check_branch
    %22 = sbr.rel (0) target = $region17
  $region16: #{net_forward.3} parent=0 // pred_region
    _
  $region17: #{net_forward.3} parent=0 // pred_fallthru
    _
  // Predicated region
  $region18: #{net_forward.3} parent=0 // pred_check
    _
  $region19: #{net_forward.3} parent=0 // pred_check_branch
    %24 = sbr.rel (0) target = $region21
  $region20: #{net_forward.3} parent=0 // pred_region
    _
  $region21: #{net_forward.3} parent=0 // pred_fallthru
    _
  // Predicated region
  $region22: #{net_forward.3} parent=0 // pred_check
    _
  $region23: #{net_forward.3} parent=0 // pred_check_branch
    %26 = sbr.rel (0) target = $region25
  $region24: #{net_forward.3} parent=0 // pred_region
    _
  $region25: #{net_forward.3} parent=0 // pred_fallthru
    _
  // Predicated region
  $region26: #{net_forward.3} parent=0 // pred_check
    _
  $region27: #{net_forward.3} parent=0 // pred_check_branch
    %28 = sbr.rel (0) target = $region29
  $region28: #{net_forward.3} parent=0 // pred_region
    _
  $region29: #{net_forward.3} parent=0 // pred_fallthru
    _
  // Predicated region
  $region30: #{net_forward.3} parent=0 // pred_check
    _
  $region31: #{net_forward.3} parent=0 // pred_check_branch
    %30 = sbr.rel (0) target = $region33
  $region32: #{net_forward.3} parent=0 // pred_region
    _
  $region33: #{net_forward.3} parent=0 // pred_fallthru
    _
  %v32 = vld [vmem:[%s3] sm:$0xff]
  %v33 = vld [vmem:[%s3 + $0x8] sm:$0xff]
  %v34 = vld [vmem:[%s3 + $0x10] sm:$0xff]
  %v35 = vld [vmem:[%s3 + $0x18] sm:$0xff]
  %v36 = vld [vmem:[%s3 + $0x20] sm:$0xff]
  %v37 = vld [vmem:[%s3 + $0x28] sm:$0xff]
  %v38 = vld [vmem:[%s3 + $0x30] sm:$0xff]
  %v39 = vld [vmem:[%s3 + $0x38] sm:$0xff]
  %v40 = vld [vmem:[%s1] sm:$0xf]
  %v41 = vld [vmem:[%s1 + $0x4] sm:$0xf]
  %v42 = vld [vmem:[%s1 + $0x8] sm:$0xf]
  %v43 = vld [vmem:[%s1 + $0xc] sm:$0xf]
  %v44 = vld [vmem:[%s1 + $0x10] sm:$0xf]
  %v45 = vld [vmem:[%s1 + $0x14] sm:$0xf]
  %v46 = vld [vmem:[%s1 + $0x18] sm:$0xf]
  %v47 = vld [vmem:[%s1 + $0x1c] sm:$0xf]
  %v48 = vld [vmem:[%s2] sm:$0xf]
  %v49 = vld [vmem:[%s2 + $0x4] sm:$0xf]
  %v50 = vld [vmem:[%s2 + $0x8] sm:$0xf]
  %v51 = vld [vmem:[%s2 + $0xc] sm:$0xf]
  %v52 = vld [vmem:[%s2 + $0x10] sm:$0xf]
  %v53 = vld [vmem:[%s2 + $0x14] sm:$0xf]
  %v54 = vld [vmem:[%s2 + $0x18] sm:$0xf]
  %v55 = vld [vmem:[%s2 + $0x1c] sm:$0xf]
  %v64 = vunpack.c.l.b16 %v48
  %v65 = vunpack.c.l.b16 %v49
  %v66 = vunpack.c.l.b16 %v50
  %v67 = vunpack.c.l.b16 %v51
  %v68 = vunpack.c.l.b16 %v52
  %v69 = vunpack.c.l.b16 %v53
  %v70 = vunpack.c.l.b16 %v54
  %v71 = vunpack.c.l.b16 %v55
  %v72 = vpack.c.b16 %v65, %v64
  %v73 = vpack.c.b16 %v67, %v66
  %v74 = vpack.c.b16 %v69, %v68
  %v75 = vpack.c.b16 %v71, %v70
  %v80 = vunpack.c.l.b16 %v36
  %v81 = vunpack.c.h.b16 %v36
  %v82 = vunpack.c.l.b16 %v37
  %v83 = vunpack.c.h.b16 %v37
  %v84 = vunpack.c.l.b16 %v38
  %v85 = vunpack.c.h.b16 %v38
  %v86 = vunpack.c.l.b16 %v39
  %v87 = vunpack.c.h.b16 %v39
  %v88 = vpack.c.b16 %v82, %v80
  %v89 = vpack.c.b16 %v83, %v81
  %v90 = vpack.c.b16 %v86, %v84
  %v91 = vpack.c.b16 %v87, %v85
  %vm96 = vcmask 261120
  %v98 = vsel %vm96, %v72, 0
  %v101 = vsel %vm96, %v73, 0
  %v104 = vsel %vm96, %v74, 0
  %v107 = vsel %vm96, %v75, 0
  %109 = vmatprep.subr.bf16.mxu0 %v89
  %110 = vmatpush1.bf16.msra.mxu0 %v88
  %111 = vmatprep.subr.bf16.mxu0 %v91
  %112 = vmatpush1.bf16.msra.mxu0 %v90
  %113 = vmatprep.subr.bf16.mxu0 0
  %114 = vmatpush1.bf16.msra.mxu0 0
  %115 = vmatprep.subr.bf16.mxu0 0
  %116 = vmatpush1.bf16.msra.mxu0 0
  %117 = vmatprep.subr.bf16.mxu0 0
  %118 = vmatpush1.bf16.msra.mxu0 0
  %119 = vmatprep.subr.bf16.mxu0 0
  %120 = vmatpush1.bf16.msra.mxu0 0
  %121 = vmatprep.subr.bf16.mxu0 0
  %122 = vmatpush1.bf16.msra.mxu0 0
  %123 = vmatprep.subr.bf16.mxu0 0
  %124 = vmatpush1.bf16.msra.mxu0 0
  %125 = vmatprep.subr.bf16.mxu0 0
  %126 = vmatpush1.bf16.msra.mxu0 0
  %127 = vmatprep.subr.bf16.mxu0 0
  %128 = vmatpush1.bf16.msra.mxu0 0
  %129 = vmatprep.subr.bf16.mxu0 0
  %130 = vmatpush1.bf16.msra.mxu0 0
  %131 = vmatprep.subr.bf16.mxu0 0
  %132 = vmatpush1.bf16.msra.mxu0 0
  %133 = vmatprep.subr.bf16.mxu0 0
  %134 = vmatpush1.bf16.msra.mxu0 0
  %135 = vmatprep.subr.bf16.mxu0 0
  %136 = vmatpush1.bf16.msra.mxu0 0
  %137 = vmatprep.subr.bf16.mxu0 0
  %138 = vmatpush1.bf16.msra.mxu0 0
  %139 = vmatprep.subr.bf16.mxu0 0
  %140 = vmatpush1.bf16.msra.mxu0 0
  %141 = vmatprep.mubr.bf16.mxu0 0
  %142 = vmatmul.mubr.bf16.gmra.mrb[0].mxu0 %v98
  %v143 = vpop.f32.mrb[0].mxu0
  %v144 = vadd.f32 0.0, %v143
  %v145 = vpop.f32.mrb[0].mxu0
  %v146 = vadd.f32 0.0, %v145
  %v147 = vpop.f32.mrb[0].mxu0
  %v148 = vadd.f32 0.0, %v147
  %v149 = vpop.f32.mrb[0].mxu0
  %v150 = vadd.f32 0.0, %v149
  %151 = vmatprep.mubr.bf16.mxu0 0
  %152 = vmatmul.mubr.bf16.gmra.mrb[0].mxu0 %v101
  %v153 = vpop.f32.mrb[0].mxu0
  %v154 = vadd.f32 0.0, %v153
  %v155 = vpop.f32.mrb[0].mxu0
  %v156 = vadd.f32 0.0, %v155
  %v157 = vpop.f32.mrb[0].mxu0
  %v158 = vadd.f32 0.0, %v157
  %v159 = vpop.f32.mrb[0].mxu0
  %v160 = vadd.f32 0.0, %v159
  %161 = vmatprep.mubr.bf16.mxu0 0
  %162 = vmatmul.mubr.bf16.gmra.mrb[0].mxu0 %v104
  %v163 = vpop.f32.mrb[0].mxu0
  %v164 = vadd.f32 0.0, %v163
  %v165 = vpop.f32.mrb[0].mxu0
  %v166 = vadd.f32 0.0, %v165
  %v167 = vpop.f32.mrb[0].mxu0
  %v168 = vadd.f32 0.0, %v167
  %v169 = vpop.f32.mrb[0].mxu0
  %v170 = vadd.f32 0.0, %v169
  %171 = vmatprep.mubr.bf16.mxu0 0
  %172 = vmatmul.mubr.bf16.gmra.mrb[0].mxu0 %v107
  %v173 = vpop.f32.mrb[0].mxu0
  %v174 = vadd.f32 0.0, %v173
  %v175 = vpop.f32.mrb[0].mxu0
  %v176 = vadd.f32 0.0, %v175
  %v177 = vpop.f32.mrb[0].mxu0
  %v178 = vadd.f32 0.0, %v177
  %v179 = vpop.f32.mrb[0].mxu0
  %v180 = vadd.f32 0.0, %v179
  %181 = vdwg.mxu0
  %v190 = vunpack.c.l.b16 %v40
  %v191 = vunpack.c.l.b16 %v41
  %v192 = vunpack.c.l.b16 %v42
  %v193 = vunpack.c.l.b16 %v43
  %v194 = vunpack.c.l.b16 %v44
  %v195 = vunpack.c.l.b16 %v45
  %v196 = vunpack.c.l.b16 %v46
  %v197 = vunpack.c.l.b16 %v47
  %v198 = vpack.c.b16 %v191, %v190
  %v199 = vpack.c.b16 %v193, %v192
  %v200 = vpack.c.b16 %v195, %v194
  %v201 = vpack.c.b16 %v197, %v196
  %v206 = vunpack.c.l.b16 %v32
  %v207 = vunpack.c.h.b16 %v32
  %v208 = vunpack.c.l.b16 %v33
  %v209 = vunpack.c.h.b16 %v33
  %v210 = vunpack.c.l.b16 %v34
  %v211 = vunpack.c.h.b16 %v34
  %v212 = vunpack.c.l.b16 %v35
  %v213 = vunpack.c.h.b16 %v35
  %v214 = vpack.c.b16 %v208, %v206
  %v215 = vpack.c.b16 %v209, %v207
  %v216 = vpack.c.b16 %v212, %v210
  %v217 = vpack.c.b16 %v213, %v211
  %v223 = vsel %vm96, %v198, 0
  %v226 = vsel %vm96, %v199, 0
  %v229 = vsel %vm96, %v200, 0
  %v232 = vsel %vm96, %v201, 0
  %234 = vmatprep.subr.bf16.mxu0 %v215
  %235 = vmatpush1.bf16.msra.mxu0 %v214
  %236 = vmatprep.subr.bf16.mxu0 %v217
  %237 = vmatpush1.bf16.msra.mxu0 %v216
  %238 = vmatprep.subr.bf16.mxu0 0
  %239 = vmatpush1.bf16.msra.mxu0 0
  %240 = vmatprep.subr.bf16.mxu0 0
  %241 = vmatpush1.bf16.msra.mxu0 0
  %242 = vmatprep.subr.bf16.mxu0 0
  %243 = vmatpush1.bf16.msra.mxu0 0
  %244 = vmatprep.subr.bf16.mxu0 0
  %245 = vmatpush1.bf16.msra.mxu0 0
  %246 = vmatprep.subr.bf16.mxu0 0
  %247 = vmatpush1.bf16.msra.mxu0 0
  %248 = vmatprep.subr.bf16.mxu0 0
  %249 = vmatpush1.bf16.msra.mxu0 0
  %250 = vmatprep.subr.bf16.mxu0 0
  %251 = vmatpush1.bf16.msra.mxu0 0
  %252 = vmatprep.subr.bf16.mxu0 0
  %253 = vmatpush1.bf16.msra.mxu0 0
  %254 = vmatprep.subr.bf16.mxu0 0
  %255 = vmatpush1.bf16.msra.mxu0 0
  %256 = vmatprep.subr.bf16.mxu0 0
  %257 = vmatpush1.bf16.msra.mxu0 0
  %258 = vmatprep.subr.bf16.mxu0 0
  %259 = vmatpush1.bf16.msra.mxu0 0
  %260 = vmatprep.subr.bf16.mxu0 0
  %261 = vmatpush1.bf16.msra.mxu0 0
  %262 = vmatprep.subr.bf16.mxu0 0
  %263 = vmatpush1.bf16.msra.mxu0 0
  %264 = vmatprep.subr.bf16.mxu0 0
  %265 = vmatpush1.bf16.msra.mxu0 0
  %266 = vmatprep.mubr.bf16.mxu0 0
  %267 = vmatmul.mubr.bf16.gmra.mrb[0].mxu0 %v223
  %v268 = vpop.f32.mrb[0].mxu0
  %v269 = vadd.f32 %v144, %v268
  %v270 = vpop.f32.mrb[0].mxu0
  %v271 = vadd.f32 %v146, %v270
  %v272 = vpop.f32.mrb[0].mxu0
  %v273 = vadd.f32 %v148, %v272
  %v274 = vpop.f32.mrb[0].mxu0
  %v275 = vadd.f32 %v150, %v274
  %276 = vmatprep.mubr.bf16.mxu0 0
  %277 = vmatmul.mubr.bf16.gmra.mrb[0].mxu0 %v226
  %v278 = vpop.f32.mrb[0].mxu0
  %v279 = vadd.f32 %v154, %v278
  %v280 = vpop.f32.mrb[0].mxu0
  %v281 = vadd.f32 %v156, %v280
  %v282 = vpop.f32.mrb[0].mxu0
  %v283 = vadd.f32 %v158, %v282
  %v284 = vpop.f32.mrb[0].mxu0
  %v285 = vadd.f32 %v160, %v284
  %286 = vmatprep.mubr.bf16.mxu0 0
  %287 = vmatmul.mubr.bf16.gmra.mrb[0].mxu0 %v229
  %v288 = vpop.f32.mrb[0].mxu0
  %v289 = vadd.f32 %v164, %v288
  %v290 = vpop.f32.mrb[0].mxu0
  %v291 = vadd.f32 %v166, %v290
  %v292 = vpop.f32.mrb[0].mxu0
  %v293 = vadd.f32 %v168, %v292
  %v294 = vpop.f32.mrb[0].mxu0
  %v295 = vadd.f32 %v170, %v294
  %296 = vmatprep.mubr.bf16.mxu0 0
  %297 = vmatmul.mubr.bf16.gmra.mrb[0].mxu0 %v232
  %v298 = vpop.f32.mrb[0].mxu0
  %v299 = vadd.f32 %v174, %v298
  %v300 = vpop.f32.mrb[0].mxu0
  %v301 = vadd.f32 %v176, %v300
  %v302 = vpop.f32.mrb[0].mxu0
  %v303 = vadd.f32 %v178, %v302
  %v304 = vpop.f32.mrb[0].mxu0
  %v305 = vadd.f32 %v180, %v304
  %306 = vdwg.mxu0
  %v307 = vld [vmem:[%s4] sm:$0x3]
  %v309 = vlaneseq
  %v310 = vshrl.u32 %v309, 7
  %v311 = vsub.s32 0, %v310
  %v312 = vrot.slane %v307, %v311
  %v313 = vlaneseq
  %v314 = vshrl.u32 %v313, 7
  %v315 = vsub.s32 1, %v314
  %v316 = vrot.slane %v307, %v315
  %v319 = vadd.f32 %v269, %v312
  %v320 = vadd.f32 %v271, %v316
  %v321 = vadd.f32 %v273, %v312
  %v322 = vadd.f32 %v275, %v316
  %v323 = vadd.f32 %v279, %v312
  %v324 = vadd.f32 %v281, %v316
  %v325 = vadd.f32 %v283, %v312
  %v326 = vadd.f32 %v285, %v316
  %v327 = vadd.f32 %v289, %v312
  %v328 = vadd.f32 %v291, %v316
  %v329 = vadd.f32 %v293, %v312
  %v330 = vadd.f32 %v295, %v316
  %v331 = vadd.f32 %v299, %v312
  %v332 = vadd.f32 %v301, %v316
  %v333 = vadd.f32 %v303, %v312
  %v334 = vadd.f32 %v305, %v316
  %v335 = vpack.c.bf16 %v319, %v319
  %v336 = vpack.c.bf16 %v320, %v320
  %v337 = vpack.c.bf16 %v321, %v321
  %v338 = vpack.c.bf16 %v322, %v322
  %v339 = vpack.c.bf16 %v323, %v323
  %v340 = vpack.c.bf16 %v324, %v324
  %v341 = vpack.c.bf16 %v325, %v325
  %v342 = vpack.c.bf16 %v326, %v326
  %v343 = vpack.c.bf16 %v327, %v327
  %v344 = vpack.c.bf16 %v328, %v328
  %v345 = vpack.c.bf16 %v329, %v329
  %v346 = vpack.c.bf16 %v330, %v330
  %v347 = vpack.c.bf16 %v331, %v331
  %v348 = vpack.c.bf16 %v332, %v332
  %v349 = vpack.c.bf16 %v333, %v333
  %v350 = vpack.c.bf16 %v334, %v334
  %v367 = vunpack.c.l.b16 %v335
  %v368 = vunpack.c.l.b16 %v336
  %v369 = vunpack.c.l.b16 %v337
  %v370 = vunpack.c.l.b16 %v338
  %v371 = vunpack.c.l.b16 %v339
  %v372 = vunpack.c.l.b16 %v340
  %v373 = vunpack.c.l.b16 %v341
  %v374 = vunpack.c.l.b16 %v342
  %v375 = vunpack.c.l.b16 %v343
  %v376 = vunpack.c.l.b16 %v344
  %v377 = vunpack.c.l.b16 %v345
  %v378 = vunpack.c.l.b16 %v346
  %v379 = vunpack.c.l.b16 %v347
  %v380 = vunpack.c.l.b16 %v348
  %v381 = vunpack.c.l.b16 %v349
  %v382 = vunpack.c.l.b16 %v350
  %v383 = vpack.c.b16 %v368, %v367
  %v384 = vpack.c.b16 %v370, %v369
  %v385 = vpack.c.b16 %v372, %v371
  %v386 = vpack.c.b16 %v374, %v373
  %v387 = vpack.c.b16 %v376, %v375
  %v388 = vpack.c.b16 %v378, %v377
  %v389 = vpack.c.b16 %v380, %v379
  %v390 = vpack.c.b16 %v382, %v381
  %399 = vst [vmem:[#allocation2] sm:$0xff] %v383
  %400 = vst [vmem:[#allocation2 + $0x8] sm:$0xff] %v384
  %401 = vst [vmem:[#allocation2 + $0x10] sm:$0xff] %v385
  %402 = vst [vmem:[#allocation2 + $0x18] sm:$0xff] %v386
  %403 = vst [vmem:[#allocation2 + $0x20] sm:$0xff] %v387
  %404 = vst [vmem:[#allocation2 + $0x28] sm:$0xff] %v388
  %405 = vst [vmem:[#allocation2 + $0x30] sm:$0xff] %v389
  %406 = vst [vmem:[#allocation2 + $0x38] sm:$0xff] %v390
  %vm407 = vcmask 523264
  %408 = vst.msk [vmem:[#allocation3] sm:$0xff] %vm407, 0.0
  %409 = vst.msk [vmem:[#allocation4] sm:$0xff] %vm96, 0.0
  %410 = vst.msk [vmem:[#allocation5] sm:$0xff] %vm96, 0.0
  %411 = vst.msk [vmem:[#allocation6] sm:$0xff] %vm407, -inf
  %v412 = vld [vmem:[%s6] sm:$0xff]
  %s413 = sld [smem:[#allocation8]]
  %v414 = vld [vmem:[%s5] sm:$0xff]
  %v415 = vld [vmem:[%s5 + $0x8] sm:$0xff]
  %v416 = vld [vmem:[%s5 + $0x10] sm:$0xff]
  %v417 = vld [vmem:[%s5 + $0x18] sm:$0xff]
  %v418 = vld [vmem:[%s5 + $0x20] sm:$0xff]
  %v419 = vld [vmem:[%s5 + $0x28] sm:$0xff]
  %v420 = vld [vmem:[%s5 + $0x30] sm:$0xff]
  %v421 = vld [vmem:[%s5 + $0x38] sm:$0xff]
  %p422 = scmp.gt.s32.totalorder %s413, 0
  %p423 = scmp.gt.s32.totalorder %s413, 7
  %p424 = por %p422, %p423
  // Predicated region
  $region34: #{net_forward.3} parent=0 // pred_check
    %p425 = pneg %p424
  $region35: #{net_forward.3} parent=0 // pred_check_branch
    %427 = sbr.rel (%p425) target = $region37
  $region36: #{net_forward.3} parent=0 // pred_region
    %v428 = vld [vmem:[#allocation3] sm:$0xff]
    %v429 = vpack.c.bf16 %v428, %v428
    %v438 = vunpack.c.l.b16 %v414
    %v439 = vunpack.c.h.b16 %v414
    %v440 = vunpack.c.l.b16 %v415
    %v441 = vunpack.c.h.b16 %v415
    %v442 = vunpack.c.l.b16 %v416
    %v443 = vunpack.c.h.b16 %v416
    %v444 = vunpack.c.l.b16 %v417
    %v445 = vunpack.c.h.b16 %v417
    %v446 = vunpack.c.l.b16 %v418
    %v447 = vunpack.c.h.b16 %v418
    %v448 = vunpack.c.l.b16 %v419
    %v449 = vunpack.c.h.b16 %v419
    %v450 = vunpack.c.l.b16 %v420
    %v451 = vunpack.c.h.b16 %v420
    %v452 = vunpack.c.l.b16 %v421
    %v453 = vunpack.c.h.b16 %v421
    %v454 = vpack.c.b16 %v440, %v438
    %v455 = vpack.c.b16 %v441, %v439
    %v456 = vpack.c.b16 %v444, %v442
    %v457 = vpack.c.b16 %v445, %v443
    %v458 = vpack.c.b16 %v448, %v446
    %v459 = vpack.c.b16 %v449, %v447
    %v460 = vpack.c.b16 %v452, %v450
    %v461 = vpack.c.b16 %v453, %v451
    %v471 = vsel %vm407, %v429, 0
    %473 = vmatprep.subr.bf16.mxu0 %v455
    %474 = vmatpush1.bf16.msra.mxu0 %v454
    %475 = vmatprep.subr.bf16.mxu0 %v457
    %476 = vmatpush1.bf16.msra.mxu0 %v456
    %477 = vmatprep.subr.bf16.mxu0 %v459
    %478 = vmatpush1.bf16.msra.mxu0 %v458
    %479 = vmatprep.subr.bf16.mxu0 %v461
    %480 = vmatpush1.bf16.msra.mxu0 %v460
    %481 = vmatprep.subr.bf16.mxu0 0
    %482 = vmatpush1.bf16.msra.mxu0 0
    %483 = vmatprep.subr.bf16.mxu0 0
    %484 = vmatpush1.bf16.msra.mxu0 0
    %485 = vmatprep.subr.bf16.mxu0 0
    %486 = vmatpush1.bf16.msra.mxu0 0
    %487 = vmatprep.subr.bf16.mxu0 0
    %488 = vmatpush1.bf16.msra.mxu0 0
    %489 = vmatprep.subr.bf16.mxu0 0
    %490 = vmatpush1.bf16.msra.mxu0 0
    %491 = vmatprep.subr.bf16.mxu0 0
    %492 = vmatpush1.bf16.msra.mxu0 0
    %493 = vmatprep.subr.bf16.mxu0 0
    %494 = vmatpush1.bf16.msra.mxu0 0
    %495 = vmatprep.subr.bf16.mxu0 0
    %496 = vmatpush1.bf16.msra.mxu0 0
    %497 = vmatprep.subr.bf16.mxu0 0
    %498 = vmatpush1.bf16.msra.mxu0 0
    %499 = vmatprep.subr.bf16.mxu0 0
    %500 = vmatpush1.bf16.msra.mxu0 0
    %501 = vmatprep.subr.bf16.mxu0 0
    %502 = vmatpush1.bf16.msra.mxu0 0
    %503 = vmatprep.subr.bf16.mxu0 0
    %504 = vmatpush1.bf16.msra.mxu0 0
    %505 = vmatprep.mubr.bf16.mxu0 0
    %506 = vmatmul.mubr.bf16.gmra.mrb[0].mxu0 %v471
    %v507 = vpop.f32.mrb[0].mxu0
    %v508 = vadd.f32 0.0, %v507
    %v509 = vpop.f32.mrb[0].mxu0
    %v510 = vadd.f32 0.0, %v509
    %v511 = vpop.f32.mrb[0].mxu0
    %v512 = vpop.f32.mrb[0].mxu0
    %513 = vdwg.mxu0
    %v514 = vld [vmem:[#allocation2] sm:$0xf]
    %v515 = vunpack.c.l.bf16 %v514
    %v516 = vadd.f32 %v515, %v508
    %s517 = scalar_lea.vmem [#allocation2], 56
    %v518 = vld [vmem:[%s517 + $0x4] sm:$0xf]
    %v519 = vunpack.c.l.bf16 %v518
    %v520 = vadd.f32 %v519, %v510
    %v521 = vld [vmem:[#allocation4] sm:$0xff]
    %v522 = vxor.u32 %v516, 2147483648
    %v523 = vmul.f32 %v522, 1.442695
    %v524 = vpow.pop %v523
    %v525 = vadd.f32 %v524, 1.0
    %v526 = vrcp.pop %v525
    %v527 = vmul.f32 1.0, %v526
    %v528 = vtanh.pop %v516
    %530 = vrot.lane.b32.xlu0 %v521, 32
    %v531 = vpop.permute.xlu0 %530
    %v533 = vmul.f32 %v527, %v531
    %535 = vrot.lane.b32.xlu0 %v528, 64
    %v536 = vpop.permute.xlu0 %535
    %v538 = vmul.f32 %v527, %v536
    %540 = vrot.lane.b32.xlu0 %v538, 32
    %v541 = vpop.permute.xlu0 %540
    %v543 = vadd.f32 %v533, %v541
    %v544 = vtanh.pop %v543
    %546 = vrot.lane.b32.xlu0 %v544, 64
    %v547 = vpop.permute.xlu0 %546
    %v549 = vmul.f32 %v527, %v547
    %v550 = vld [vmem:[#allocation5] sm:$0xff]
    %v551 = vxor.u32 %v520, 2147483648
    %v552 = vmul.f32 %v551, 1.442695
    %v553 = vpow.pop %v552
    %v554 = vadd.f32 %v553, 1.0
    %v555 = vrcp.pop %v554
    %v556 = vmul.f32 1.0, %v555
    %v557 = vtanh.pop %v520
    %559 = vrot.lane.b32.xlu0 %v550, 32
    %v560 = vpop.permute.xlu0 %559
    %v562 = vmul.f32 %v556, %v560
    %564 = vrot.lane.b32.xlu0 %v557, 64
    %v565 = vpop.permute.xlu0 %564
    %v567 = vmul.f32 %v556, %v565
    %569 = vrot.lane.b32.xlu0 %v567, 32
    %v570 = vpop.permute.xlu0 %569
    %v572 = vadd.f32 %v562, %v570
    %v573 = vtanh.pop %v572
    %575 = vrot.lane.b32.xlu0 %v573, 64
    %v576 = vpop.permute.xlu0 %575
    %v578 = vmul.f32 %v556, %v576
    %vm579 = vcmp.gt.s32.totalorder %v412, 0
    %vm580 = vcmp.gt.s32.totalorder %v412, 7
    %v581 = vsel %vm579, 1, 0
    %582 = vset.pattern.permute.xlu0 0
    %583 = vperm.xlu0 %582, %v581
    %v584 = vpop.permute.xlu0 %583
    %vm585 = vcmp.eq.s32.totalorder %v584, 1
    %587 = vrot.lane.b32.xlu0 %v428, 96
    %v588 = vpop.permute.xlu0 %587
    %v590 = vsel %vm585, %v549, %v588
    %v591 = vsel %vm580, 1, 0
    %592 = vset.pattern.permute.xlu0 0
    %593 = vperm.xlu0 %592, %v591
    %v594 = vpop.permute.xlu0 %593
    %vm595 = vcmp.eq.s32.totalorder %v594, 1
    %596 = vrot.lane.b32.xlu0 %v428, 64
    %v597 = vpop.permute.xlu0 %596
    %v599 = vsel %vm595, %v578, %v597
    %v600 = vsel %vm585, %v543, %v531
    %602 = vrot.lane.b32.xlu0 %v600, 96
    %v603 = vpop.permute.xlu0 %602
    %605 = vst.msk [vmem:[#allocation4] sm:$0xff] %vm96, %v603
    %v606 = vld [vmem:[#allocation5] sm:$0xff]
    %608 = vrot.lane.b32.xlu0 %v606, 32
    %v609 = vpop.permute.xlu0 %608
    %v611 = vsel %vm595, %v572, %v609
    %613 = vrot.lane.b32.xlu0 %v611, 96
    %v614 = vpop.permute.xlu0 %613
    %616 = vst.msk [vmem:[#allocation5] sm:$0xff] %vm96, %v614
    %618 = vrot.lane.b32.xlu0 %v590, 32
    %v619 = vpop.permute.xlu0 %618
    %622 = vrot.lane.b32.xlu0 %v599, 64
    %v623 = vpop.permute.xlu0 %622
    %v625 = vsel %vm96, %v619, %v623
    %626 = vst.msk [vmem:[#allocation3] sm:$0xff] %vm407, %v625
    %s627 = scalar_select %p422, 0.0, -inf
    %s628 = scalar_select %p423, 0.0, -inf
    %v629 = vstv %s627
    %v630 = vsel %vm585, %v549, %v629
    %v631 = vstv %s628
    %v632 = vsel %vm595, %v578, %v631
    %634 = vrot.lane.b32.xlu0 %v630, 32
    %v635 = vpop.permute.xlu0 %634
    %638 = vrot.lane.b32.xlu0 %v632, 64
    %v639 = vpop.permute.xlu0 %638
    %v641 = vsel %vm96, %v635, %v639
    %v642 = vld [vmem:[#allocation6] sm:$0xff]
    %v643 = vmax.f32 %v642, %v641
    %644 = vst.msk [vmem:[#allocation6] sm:$0xff] %vm407, %v643
  $region37: #{net_forward.3} parent=0 // pred_fallthru
    _
  %p645 = scmp.gt.s32.totalorder %s413, 1
  %p646 = scmp.gt.s32.totalorder %s413, 6
  %p647 = por %p645, %p646
  // Predicated region
  $region38: #{net_forward.3} parent=0 // pred_check
    %p648 = pneg %p647
  $region39: #{net_forward.3} parent=0 // pred_check_branch
    %650 = sbr.rel (%p648) target = $region41
  $region40: #{net_forward.3} parent=0 // pred_region
    %v651 = vld [vmem:[#allocation3] sm:$0xff]
    %v652 = vpack.c.bf16 %v651, %v651
    %v661 = vunpack.c.l.b16 %v414
    %v662 = vunpack.c.h.b16 %v414
    %v663 = vunpack.c.l.b16 %v415
    %v664 = vunpack.c.h.b16 %v415
    %v665 = vunpack.c.l.b16 %v416
    %v666 = vunpack.c.h.b16 %v416
    %v667 = vunpack.c.l.b16 %v417
    %v668 = vunpack.c.h.b16 %v417
    %v669 = vunpack.c.l.b16 %v418
    %v670 = vunpack.c.h.b16 %v418
    %v671 = vunpack.c.l.b16 %v419
    %v672 = vunpack.c.h.b16 %v419
    %v673 = vunpack.c.l.b16 %v420
    %v674 = vunpack.c.h.b16 %v420
    %v675 = vunpack.c.l.b16 %v421
    %v676 = vunpack.c.h.b16 %v421
    %v677 = vpack.c.b16 %v663, %v661
    %v678 = vpack.c.b16 %v664, %v662
    %v679 = vpack.c.b16 %v667, %v665
    %v680 = vpack.c.b16 %v668, %v666
    %v681 = vpack.c.b16 %v671, %v669
    %v682 = vpack.c.b16 %v672, %v670
    %v683 = vpack.c.b16 %v675, %v673
    %v684 = vpack.c.b16 %v676, %v674
    %v694 = vsel %vm407, %v652, 0
    %696 = vmatprep.subr.bf16.mxu0 %v678
    %697 = vmatpush1.bf16.msra.mxu0 %v677
    %698 = vmatprep.subr.bf16.mxu0 %v680
    %699 = vmatpush1.bf16.msra.mxu0 %v679
    %700 = vmatprep.subr.bf16.mxu0 %v682
    %701 = vmatpush1.bf16.msra.mxu0 %v681
    %702 = vmatprep.subr.bf16.mxu0 %v684
    %703 = vmatpush1.bf16.msra.mxu0 %v683
    %704 = vmatprep.subr.bf16.mxu0 0
    %705 = vmatpush1.bf16.msra.mxu0 0
    %706 = vmatprep.subr.bf16.mxu0 0
    %707 = vmatpush1.bf16.msra.mxu0 0
    %708 = vmatprep.subr.bf16.mxu0 0
    %709 = vmatpush1.bf16.msra.mxu0 0
    %710 = vmatprep.subr.bf16.mxu0 0
    %711 = vmatpush1.bf16.msra.mxu0 0
    %712 = vmatprep.subr.bf16.mxu0 0
    %713 = vmatpush1.bf16.msra.mxu0 0
    %714 = vmatprep.subr.bf16.mxu0 0
    %715 = vmatpush1.bf16.msra.mxu0 0
    %716 = vmatprep.subr.bf16.mxu0 0
    %717 = vmatpush1.bf16.msra.mxu0 0
    %718 = vmatprep.subr.bf16.mxu0 0
    %719 = vmatpush1.bf16.msra.mxu0 0
    %720 = vmatprep.subr.bf16.mxu0 0
    %721 = vmatpush1.bf16.msra.mxu0 0
    %722 = vmatprep.subr.bf16.mxu0 0
    %723 = vmatpush1.bf16.msra.mxu0 0
    %724 = vmatprep.subr.bf16.mxu0 0
    %725 = vmatpush1.bf16.msra.mxu0 0
    %726 = vmatprep.subr.bf16.mxu0 0
    %727 = vmatpush1.bf16.msra.mxu0 0
    %728 = vmatprep.mubr.bf16.mxu0 0
    %729 = vmatmul.mubr.bf16.gmra.mrb[0].mxu0 %v694
    %v730 = vpop.f32.mrb[0].mxu0
    %v731 = vadd.f32 0.0, %v730
    %v732 = vpop.f32.mrb[0].mxu0
    %v733 = vadd.f32 0.0, %v732
    %v734 = vpop.f32.mrb[0].mxu0
    %v735 = vpop.f32.mrb[0].mxu0
    %736 = vdwg.mxu0
    %s737 = scalar_lea.vmem [#allocation2], 8
    %v738 = vld [vmem:[%s737] sm:$0xf]
    %v739 = vunpack.c.l.bf16 %v738
    %v740 = vadd.f32 %v739, %v731
    %s741 = scalar_lea.vmem [#allocation2], 48
    %v742 = vld [vmem:[%s741 + $0x4] sm:$0xf]
    %v743 = vunpack.c.l.bf16 %v742
    %v744 = vadd.f32 %v743, %v733
    %v745 = vld [vmem:[#allocation4] sm:$0xff]
    %v746 = vxor.u32 %v740, 2147483648
    %v747 = vmul.f32 %v746, 1.442695
    %v748 = vpow.pop %v747
    %v749 = vadd.f32 %v748, 1.0
    %v750 = vrcp.pop %v749
    %v751 = vmul.f32 1.0, %v750
    %v752 = vtanh.pop %v740
    %754 = vrot.lane.b32.xlu0 %v745, 32
    %v755 = vpop.permute.xlu0 %754
    %v757 = vmul.f32 %v751, %v755
    %759 = vrot.lane.b32.xlu0 %v752, 64
    %v760 = vpop.permute.xlu0 %759
    %v762 = vmul.f32 %v751, %v760
    %764 = vrot.lane.b32.xlu0 %v762, 32
    %v765 = vpop.permute.xlu0 %764
    %v767 = vadd.f32 %v757, %v765
    %v768 = vtanh.pop %v767
    %770 = vrot.lane.b32.xlu0 %v768, 64
    %v771 = vpop.permute.xlu0 %770
    %v773 = vmul.f32 %v751, %v771
    %v774 = vld [vmem:[#allocation5] sm:$0xff]
    %v775 = vxor.u32 %v744, 2147483648
    %v776 = vmul.f32 %v775, 1.442695
    %v777 = vpow.pop %v776
    %v778 = vadd.f32 %v777, 1.0
    %v779 = vrcp.pop %v778
    %v780 = vmul.f32 1.0, %v779
    %v781 = vtanh.pop %v744
    %783 = vrot.lane.b32.xlu0 %v774, 32
    %v784 = vpop.permute.xlu0 %783
    %v786 = vmul.f32 %v780, %v784
    %788 = vrot.lane.b32.xlu0 %v781, 64
    %v789 = vpop.permute.xlu0 %788
    %v791 = vmul.f32 %v780, %v789
    %793 = vrot.lane.b32.xlu0 %v791, 32
    %v794 = vpop.permute.xlu0 %793
    %v796 = vadd.f32 %v786, %v794
    %v797 = vtanh.pop %v796
    %799 = vrot.lane.b32.xlu0 %v797, 64
    %v800 = vpop.permute.xlu0 %799
    %v802 = vmul.f32 %v780, %v800
    %vm803 = vcmp.gt.s32.totalorder %v412, 1
    %vm804 = vcmp.gt.s32.totalorder %v412, 6
    %v805 = vsel %vm803, 1, 0
    %806 = vset.pattern.permute.xlu0 0
    %807 = vperm.xlu0 %806, %v805
    %v808 = vpop.permute.xlu0 %807
    %vm809 = vcmp.eq.s32.totalorder %v808, 1
    %811 = vrot.lane.b32.xlu0 %v651, 96
    %v812 = vpop.permute.xlu0 %811
    %v814 = vsel %vm809, %v773, %v812
    %v815 = vsel %vm804, 1, 0
    %816 = vset.pattern.permute.xlu0 0
    %817 = vperm.xlu0 %816, %v815
    %v818 = vpop.permute.xlu0 %817
    %vm819 = vcmp.eq.s32.totalorder %v818, 1
    %820 = vrot.lane.b32.xlu0 %v651, 64
    %v821 = vpop.permute.xlu0 %820
    %v823 = vsel %vm819, %v802, %v821
    %v824 = vsel %vm809, %v767, %v755
    %826 = vrot.lane.b32.xlu0 %v824, 96
    %v827 = vpop.permute.xlu0 %826
    %829 = vst.msk [vmem:[#allocation4] sm:$0xff] %vm96, %v827
    %v830 = vld [vmem:[#allocation5] sm:$0xff]
    %832 = vrot.lane.b32.xlu0 %v830, 32
    %v833 = vpop.permute.xlu0 %832
    %v835 = vsel %vm819, %v796, %v833
    %837 = vrot.lane.b32.xlu0 %v835, 96
    %v838 = vpop.permute.xlu0 %837
    %840 = vst.msk [vmem:[#allocation5] sm:$0xff] %vm96, %v838
    %842 = vrot.lane.b32.xlu0 %v814, 32
    %v843 = vpop.permute.xlu0 %842
    %846 = vrot.lane.b32.xlu0 %v823, 64
    %v847 = vpop.permute.xlu0 %846
    %v849 = vsel %vm96, %v843, %v847
    %850 = vst.msk [vmem:[#allocation3] sm:$0xff] %vm407, %v849
    %s851 = scalar_select %p645, 0.0, -inf
    %s852 = scalar_select %p646, 0.0, -inf
    %v853 = vstv %s851
    %v854 = vsel %vm809, %v773, %v853
    %v855 = vstv %s852
    %v856 = vsel %vm819, %v802, %v855
    %858 = vrot.lane.b32.xlu0 %v854, 32
    %v859 = vpop.permute.xlu0 %858
    %862 = vrot.lane.b32.xlu0 %v856, 64
    %v863 = vpop.permute.xlu0 %862
    %v865 = vsel %vm96, %v859, %v863
    %v866 = vld [vmem:[#allocation6] sm:$0xff]
    %v867 = vmax.f32 %v866, %v865
    %868 = vst.msk [vmem:[#allocation6] sm:$0xff] %vm407, %v867
  $region41: #{net_forward.3} parent=0 // pred_fallthru
    _
  %p869 = scmp.gt.s32.totalorder %s413, 2
  %p870 = scmp.gt.s32.totalorder %s413, 5
  %p871 = por %p869, %p870
  // Predicated region
  $region42: #{net_forward.3} parent=0 // pred_check
    %p872 = pneg %p871
  $region43: #{net_forward.3} parent=0 // pred_check_branch
    %874 = sbr.rel (%p872) target = $region45
  $region44: #{net_forward.3} parent=0 // pred_region
    %v875 = vld [vmem:[#allocation3] sm:$0xff]
    %v876 = vpack.c.bf16 %v875, %v875
    %v885 = vunpack.c.l.b16 %v414
    %v886 = vunpack.c.h.b16 %v414
    %v887 = vunpack.c.l.b16 %v415
    %v888 = vunpack.c.h.b16 %v415
    %v889 = vunpack.c.l.b16 %v416
    %v890 = vunpack.c.h.b16 %v416
    %v891 = vunpack.c.l.b16 %v417
    %v892 = vunpack.c.h.b16 %v417
    %v893 = vunpack.c.l.b16 %v418
    %v894 = vunpack.c.h.b16 %v418
    %v895 = vunpack.c.l.b16 %v419
    %v896 = vunpack.c.h.b16 %v419
    %v897 = vunpack.c.l.b16 %v420
    %v898 = vunpack.c.h.b16 %v420
    %v899 = vunpack.c.l.b16 %v421
    %v900 = vunpack.c.h.b16 %v421
    %v901 = vpack.c.b16 %v887, %v885
    %v902 = vpack.c.b16 %v888, %v886
    %v903 = vpack.c.b16 %v891, %v889
    %v904 = vpack.c.b16 %v892, %v890
    %v905 = vpack.c.b16 %v895, %v893
    %v906 = vpack.c.b16 %v896, %v894
    %v907 = vpack.c.b16 %v899, %v897
    %v908 = vpack.c.b16 %v900, %v898
    %v918 = vsel %vm407, %v876, 0
    %920 = vmatprep.subr.bf16.mxu0 %v902
    %921 = vmatpush1.bf16.msra.mxu0 %v901
    %922 = vmatprep.subr.bf16.mxu0 %v904
    %923 = vmatpush1.bf16.msra.mxu0 %v903
    %924 = vmatprep.subr.bf16.mxu0 %v906
    %925 = vmatpush1.bf16.msra.mxu0 %v905
    %926 = vmatprep.subr.bf16.mxu0 %v908
    %927 = vmatpush1.bf16.msra.mxu0 %v907
    %928 = vmatprep.subr.bf16.mxu0 0
    %929 = vmatpush1.bf16.msra.mxu0 0
    %930 = vmatprep.subr.bf16.mxu0 0
    %931 = vmatpush1.bf16.msra.mxu0 0
    %932 = vmatprep.subr.bf16.mxu0 0
    %933 = vmatpush1.bf16.msra.mxu0 0
    %934 = vmatprep.subr.bf16.mxu0 0
    %935 = vmatpush1.bf16.msra.mxu0 0
    %936 = vmatprep.subr.bf16.mxu0 0
    %937 = vmatpush1.bf16.msra.mxu0 0
    %938 = vmatprep.subr.bf16.mxu0 0
    %939 = vmatpush1.bf16.msra.mxu0 0
    %940 = vmatprep.subr.bf16.mxu0 0
    %941 = vmatpush1.bf16.msra.mxu0 0
    %942 = vmatprep.subr.bf16.mxu0 0
    %943 = vmatpush1.bf16.msra.mxu0 0
    %944 = vmatprep.subr.bf16.mxu0 0
    %945 = vmatpush1.bf16.msra.mxu0 0
    %946 = vmatprep.subr.bf16.mxu0 0
    %947 = vmatpush1.bf16.msra.mxu0 0
    %948 = vmatprep.subr.bf16.mxu0 0
    %949 = vmatpush1.bf16.msra.mxu0 0
    %950 = vmatprep.subr.bf16.mxu0 0
    %951 = vmatpush1.bf16.msra.mxu0 0
    %952 = vmatprep.mubr.bf16.mxu0 0
    %953 = vmatmul.mubr.bf16.gmra.mrb[0].mxu0 %v918
    %v954 = vpop.f32.mrb[0].mxu0
    %v955 = vadd.f32 0.0, %v954
    %v956 = vpop.f32.mrb[0].mxu0
    %v957 = vadd.f32 0.0, %v956
    %v958 = vpop.f32.mrb[0].mxu0
    %v959 = vpop.f32.mrb[0].mxu0
    %960 = vdwg.mxu0
    %s961 = scalar_lea.vmem [#allocation2], 16
    %v962 = vld [vmem:[%s961] sm:$0xf]
    %v963 = vunpack.c.l.bf16 %v962
    %v964 = vadd.f32 %v963, %v955
    %s965 = scalar_lea.vmem [#allocation2], 40
    %v966 = vld [vmem:[%s965 + $0x4] sm:$0xf]
    %v967 = vunpack.c.l.bf16 %v966
    %v968 = vadd.f32 %v967, %v957
    %v969 = vld [vmem:[#allocation4] sm:$0xff]
    %v970 = vxor.u32 %v964, 2147483648
    %v971 = vmul.f32 %v970, 1.442695
    %v972 = vpow.pop %v971
    %v973 = vadd.f32 %v972, 1.0
    %v974 = vrcp.pop %v973
    %v975 = vmul.f32 1.0, %v974
    %v976 = vtanh.pop %v964
    %978 = vrot.lane.b32.xlu0 %v969, 32
    %v979 = vpop.permute.xlu0 %978
    %v981 = vmul.f32 %v975, %v979
    %983 = vrot.lane.b32.xlu0 %v976, 64
    %v984 = vpop.permute.xlu0 %983
    %v986 = vmul.f32 %v975, %v984
    %988 = vrot.lane.b32.xlu0 %v986, 32
    %v989 = vpop.permute.xlu0 %988
    %v991 = vadd.f32 %v981, %v989
    %v992 = vtanh.pop %v991
    %994 = vrot.lane.b32.xlu0 %v992, 64
    %v995 = vpop.permute.xlu0 %994
    %v997 = vmul.f32 %v975, %v995
    %v998 = vld [vmem:[#allocation5] sm:$0xff]
    %v999 = vxor.u32 %v968, 2147483648
    %v1000 = vmul.f32 %v999, 1.442695
    %v1001 = vpow.pop %v1000
    %v1002 = vadd.f32 %v1001, 1.0
    %v1003 = vrcp.pop %v1002
    %v1004 = vmul.f32 1.0, %v1003
    %v1005 = vtanh.pop %v968
    %1007 = vrot.lane.b32.xlu0 %v998, 32
    %v1008 = vpop.permute.xlu0 %1007
    %v1010 = vmul.f32 %v1004, %v1008
    %1012 = vrot.lane.b32.xlu0 %v1005, 64
    %v1013 = vpop.permute.xlu0 %1012
    %v1015 = vmul.f32 %v1004, %v1013
    %1017 = vrot.lane.b32.xlu0 %v1015, 32
    %v1018 = vpop.permute.xlu0 %1017
    %v1020 = vadd.f32 %v1010, %v1018
    %v1021 = vtanh.pop %v1020
    %1023 = vrot.lane.b32.xlu0 %v1021, 64
    %v1024 = vpop.permute.xlu0 %1023
    %v1026 = vmul.f32 %v1004, %v1024
    %vm1027 = vcmp.gt.s32.totalorder %v412, 2
    %vm1028 = vcmp.gt.s32.totalorder %v412, 5
    %v1029 = vsel %vm1027, 1, 0
    %1030 = vset.pattern.permute.xlu0 0
    %1031 = vperm.xlu0 %1030, %v1029
    %v1032 = vpop.permute.xlu0 %1031
    %vm1033 = vcmp.eq.s32.totalorder %v1032, 1
    %1035 = vrot.lane.b32.xlu0 %v875, 96
    %v1036 = vpop.permute.xlu0 %1035
    %v1038 = vsel %vm1033, %v997, %v1036
    %v1039 = vsel %vm1028, 1, 0
    %1040 = vset.pattern.permute.xlu0 0
    %1041 = vperm.xlu0 %1040, %v1039
    %v1042 = vpop.permute.xlu0 %1041
    %vm1043 = vcmp.eq.s32.totalorder %v1042, 1
    %1044 = vrot.lane.b32.xlu0 %v875, 64
    %v1045 = vpop.permute.xlu0 %1044
    %v1047 = vsel %vm1043, %v1026, %v1045
    %v1048 = vsel %vm1033, %v991, %v979
    %1050 = vrot.lane.b32.xlu0 %v1048, 96
    %v1051 = vpop.permute.xlu0 %1050
    %1053 = vst.msk [vmem:[#allocation4] sm:$0xff] %vm96, %v1051
    %v1054 = vld [vmem:[#allocation5] sm:$0xff]
    %1056 = vrot.lane.b32.xlu0 %v1054, 32
    %v1057 = vpop.permute.xlu0 %1056
    %v1059 = vsel %vm1043, %v1020, %v1057
    %1061 = vrot.lane.b32.xlu0 %v1059, 96
    %v1062 = vpop.permute.xlu0 %1061
    %1064 = vst.msk [vmem:[#allocation5] sm:$0xff] %vm96, %v1062
    %1066 = vrot.lane.b32.xlu0 %v1038, 32
    %v1067 = vpop.permute.xlu0 %1066
    %1070 = vrot.lane.b32.xlu0 %v1047, 64
    %v1071 = vpop.permute.xlu0 %1070
    %v1073 = vsel %vm96, %v1067, %v1071
    %1074 = vst.msk [vmem:[#allocation3] sm:$0xff] %vm407, %v1073
    %s1075 = scalar_select %p869, 0.0, -inf
    %s1076 = scalar_select %p870, 0.0, -inf
    %v1077 = vstv %s1075
    %v1078 = vsel %vm1033, %v997, %v1077
    %v1079 = vstv %s1076
    %v1080 = vsel %vm1043, %v1026, %v1079
    %1082 = vrot.lane.b32.xlu0 %v1078, 32
    %v1083 = vpop.permute.xlu0 %1082
    %1086 = vrot.lane.b32.xlu0 %v1080, 64
    %v1087 = vpop.permute.xlu0 %1086
    %v1089 = vsel %vm96, %v1083, %v1087
    %v1090 = vld [vmem:[#allocation6] sm:$0xff]
    %v1091 = vmax.f32 %v1090, %v1089
    %1092 = vst.msk [vmem:[#allocation6] sm:$0xff] %vm407, %v1091
  $region45: #{net_forward.3} parent=0 // pred_fallthru
    _
  %p1093 = scmp.gt.s32.totalorder %s413, 3
  %p1094 = scmp.gt.s32.totalorder %s413, 4
  %p1095 = por %p1093, %p1094
  // Predicated region
  $region46: #{net_forward.3} parent=0 // pred_check
    %p1096 = pneg %p1095
  $region47: #{net_forward.3} parent=0 // pred_check_branch
    %1098 = sbr.rel (%p1096) target = $region49
  $region48: #{net_forward.3} parent=0 // pred_region
    %v1099 = vld [vmem:[#allocation3] sm:$0xff]
    %v1100 = vpack.c.bf16 %v1099, %v1099
    %v1109 = vunpack.c.l.b16 %v414
    %v1110 = vunpack.c.h.b16 %v414
    %v1111 = vunpack.c.l.b16 %v415
    %v1112 = vunpack.c.h.b16 %v415
    %v1113 = vunpack.c.l.b16 %v416
    %v1114 = vunpack.c.h.b16 %v416
    %v1115 = vunpack.c.l.b16 %v417
    %v1116 = vunpack.c.h.b16 %v417
    %v1117 = vunpack.c.l.b16 %v418
    %v1118 = vunpack.c.h.b16 %v418
    %v1119 = vunpack.c.l.b16 %v419
    %v1120 = vunpack.c.h.b16 %v419
    %v1121 = vunpack.c.l.b16 %v420
    %v1122 = vunpack.c.h.b16 %v420
    %v1123 = vunpack.c.l.b16 %v421
    %v1124 = vunpack.c.h.b16 %v421
    %v1125 = vpack.c.b16 %v1111, %v1109
    %v1126 = vpack.c.b16 %v1112, %v1110
    %v1127 = vpack.c.b16 %v1115, %v1113
    %v1128 = vpack.c.b16 %v1116, %v1114
    %v1129 = vpack.c.b16 %v1119, %v1117
    %v1130 = vpack.c.b16 %v1120, %v1118
    %v1131 = vpack.c.b16 %v1123, %v1121
    %v1132 = vpack.c.b16 %v1124, %v1122
    %v1142 = vsel %vm407, %v1100, 0
    %1144 = vmatprep.subr.bf16.mxu0 %v1126
    %1145 = vmatpush1.bf16.msra.mxu0 %v1125
    %1146 = vmatprep.subr.bf16.mxu0 %v1128
    %1147 = vmatpush1.bf16.msra.mxu0 %v1127
    %1148 = vmatprep.subr.bf16.mxu0 %v1130
    %1149 = vmatpush1.bf16.msra.mxu0 %v1129
    %1150 = vmatprep.subr.bf16.mxu0 %v1132
    %1151 = vmatpush1.bf16.msra.mxu0 %v1131
    %1152 = vmatprep.subr.bf16.mxu0 0
    %1153 = vmatpush1.bf16.msra.mxu0 0
    %1154 = vmatprep.subr.bf16.mxu0 0
    %1155 = vmatpush1.bf16.msra.mxu0 0
    %1156 = vmatprep.subr.bf16.mxu0 0
    %1157 = vmatpush1.bf16.msra.mxu0 0
    %1158 = vmatprep.subr.bf16.mxu0 0
    %1159 = vmatpush1.bf16.msra.mxu0 0
    %1160 = vmatprep.subr.bf16.mxu0 0
    %1161 = vmatpush1.bf16.msra.mxu0 0
    %1162 = vmatprep.subr.bf16.mxu0 0
    %1163 = vmatpush1.bf16.msra.mxu0 0
    %1164 = vmatprep.subr.bf16.mxu0 0
    %1165 = vmatpush1.bf16.msra.mxu0 0
    %1166 = vmatprep.subr.bf16.mxu0 0
    %1167 = vmatpush1.bf16.msra.mxu0 0
    %1168 = vmatprep.subr.bf16.mxu0 0
    %1169 = vmatpush1.bf16.msra.mxu0 0
    %1170 = vmatprep.subr.bf16.mxu0 0
    %1171 = vmatpush1.bf16.msra.mxu0 0
    %1172 = vmatprep.subr.bf16.mxu0 0
    %1173 = vmatpush1.bf16.msra.mxu0 0
    %1174 = vmatprep.subr.bf16.mxu0 0
    %1175 = vmatpush1.bf16.msra.mxu0 0
    %1176 = vmatprep.mubr.bf16.mxu0 0
    %1177 = vmatmul.mubr.bf16.gmra.mrb[0].mxu0 %v1142
    %v1178 = vpop.f32.mrb[0].mxu0
    %v1179 = vadd.f32 0.0, %v1178
    %v1180 = vpop.f32.mrb[0].mxu0
    %v1181 = vadd.f32 0.0, %v1180
    %v1182 = vpop.f32.mrb[0].mxu0
    %v1183 = vpop.f32.mrb[0].mxu0
    %1184 = vdwg.mxu0
    %s1185 = scalar_lea.vmem [#allocation2], 24
    %v1186 = vld [vmem:[%s1185] sm:$0xf]
    %v1187 = vunpack.c.l.bf16 %v1186
    %v1188 = vadd.f32 %v1187, %v1179
    %s1189 = scalar_lea.vmem [#allocation2], 32
    %v1190 = vld [vmem:[%s1189 + $0x4] sm:$0xf]
    %v1191 = vunpack.c.l.bf16 %v1190
    %v1192 = vadd.f32 %v1191, %v1181
    %v1193 = vld [vmem:[#allocation4] sm:$0xff]
    %v1194 = vxor.u32 %v1188, 2147483648
    %v1195 = vmul.f32 %v1194, 1.442695
    %v1196 = vpow.pop %v1195
    %v1197 = vadd.f32 %v1196, 1.0
    %v1198 = vrcp.pop %v1197
    %v1199 = vmul.f32 1.0, %v1198
    %v1200 = vtanh.pop %v1188
    %1202 = vrot.lane.b32.xlu0 %v1193, 32
    %v1203 = vpop.permute.xlu0 %1202
    %v1205 = vmul.f32 %v1199, %v1203
    %1207 = vrot.lane.b32.xlu0 %v1200, 64
    %v1208 = vpop.permute.xlu0 %1207
    %v1210 = vmul.f32 %v1199, %v1208
    %1212 = vrot.lane.b32.xlu0 %v1210, 32
    %v1213 = vpop.permute.xlu0 %1212
    %v1215 = vadd.f32 %v1205, %v1213
    %v1216 = vtanh.pop %v1215
    %1218 = vrot.lane.b32.xlu0 %v1216, 64
    %v1219 = vpop.permute.xlu0 %1218
    %v1221 = vmul.f32 %v1199, %v1219
    %v1222 = vld [vmem:[#allocation5] sm:$0xff]
    %v1223 = vxor.u32 %v1192, 2147483648
    %v1224 = vmul.f32 %v1223, 1.442695
    %v1225 = vpow.pop %v1224
    %v1226 = vadd.f32 %v1225, 1.0
    %v1227 = vrcp.pop %v1226
    %v1228 = vmul.f32 1.0, %v1227
    %v1229 = vtanh.pop %v1192
    %1231 = vrot.lane.b32.xlu0 %v1222, 32
    %v1232 = vpop.permute.xlu0 %1231
    %v1234 = vmul.f32 %v1228, %v1232
    %1236 = vrot.lane.b32.xlu0 %v1229, 64
    %v1237 = vpop.permute.xlu0 %1236
    %v1239 = vmul.f32 %v1228, %v1237
    %1241 = vrot.lane.b32.xlu0 %v1239, 32
    %v1242 = vpop.permute.xlu0 %1241
    %v1244 = vadd.f32 %v1234, %v1242
    %v1245 = vtanh.pop %v1244
    %1247 = vrot.lane.b32.xlu0 %v1245, 64
    %v1248 = vpop.permute.xlu0 %1247
    %v1250 = vmul.f32 %v1228, %v1248
    %vm1251 = vcmp.gt.s32.totalorder %v412, 3
    %vm1252 = vcmp.gt.s32.totalorder %v412, 4
    %v1253 = vsel %vm1251, 1, 0
    %1254 = vset.pattern.permute.xlu0 0
    %1255 = vperm.xlu0 %1254, %v1253
    %v1256 = vpop.permute.xlu0 %1255
    %vm1257 = vcmp.eq.s32.totalorder %v1256, 1
    %1259 = vrot.lane.b32.xlu0 %v1099, 96
    %v1260 = vpop.permute.xlu0 %1259
    %v1262 = vsel %vm1257, %v1221, %v1260
    %v1263 = vsel %vm1252, 1, 0
    %1264 = vset.pattern.permute.xlu0 0
    %1265 = vperm.xlu0 %1264, %v1263
    %v1266 = vpop.permute.xlu0 %1265
    %vm1267 = vcmp.eq.s32.totalorder %v1266, 1
    %1268 = vrot.lane.b32.xlu0 %v1099, 64
    %v1269 = vpop.permute.xlu0 %1268
    %v1271 = vsel %vm1267, %v1250, %v1269
    %v1272 = vsel %vm1257, %v1215, %v1203
    %1274 = vrot.lane.b32.xlu0 %v1272, 96
    %v1275 = vpop.permute.xlu0 %1274
    %1277 = vst.msk [vmem:[#allocation4] sm:$0xff] %vm96, %v1275
    %v1278 = vld [vmem:[#allocation5] sm:$0xff]
    %1280 = vrot.lane.b32.xlu0 %v1278, 32
    %v1281 = vpop.permute.xlu0 %1280
    %v1283 = vsel %vm1267, %v1244, %v1281
    %1285 = vrot.lane.b32.xlu0 %v1283, 96
    %v1286 = vpop.permute.xlu0 %1285
    %1288 = vst.msk [vmem:[#allocation5] sm:$0xff] %vm96, %v1286
    %1290 = vrot.lane.b32.xlu0 %v1262, 32
    %v1291 = vpop.permute.xlu0 %1290
    %1294 = vrot.lane.b32.xlu0 %v1271, 64
    %v1295 = vpop.permute.xlu0 %1294
    %v1297 = vsel %vm96, %v1291, %v1295
    %1298 = vst.msk [vmem:[#allocation3] sm:$0xff] %vm407, %v1297
    %s1299 = scalar_select %p1093, 0.0, -inf
    %s1300 = scalar_select %p1094, 0.0, -inf
    %v1301 = vstv %s1299
    %v1302 = vsel %vm1257, %v1221, %v1301
    %v1303 = vstv %s1300
    %v1304 = vsel %vm1267, %v1250, %v1303
    %1306 = vrot.lane.b32.xlu0 %v1302, 32
    %v1307 = vpop.permute.xlu0 %1306
    %1310 = vrot.lane.b32.xlu0 %v1304, 64
    %v1311 = vpop.permute.xlu0 %1310
    %v1313 = vsel %vm96, %v1307, %v1311
    %v1314 = vld [vmem:[#allocation6] sm:$0xff]
    %v1315 = vmax.f32 %v1314, %v1313
    %1316 = vst.msk [vmem:[#allocation6] sm:$0xff] %vm407, %v1315
    %v1317 = vld [vmem:[#allocation3] sm:$0xff]
    %v1318 = vpack.c.bf16 %v1317, %v1317
    %v1320 = vsel %vm407, %v1318, 0
    %1322 = vmatprep.subr.bf16.mxu0 %v1126
    %1323 = vmatpush1.bf16.msra.mxu0 %v1125
    %1324 = vmatprep.subr.bf16.mxu0 %v1128
    %1325 = vmatpush1.bf16.msra.mxu0 %v1127
    %1326 = vmatprep.subr.bf16.mxu0 %v1130
    %1327 = vmatpush1.bf16.msra.mxu0 %v1129
    %1328 = vmatprep.subr.bf16.mxu0 %v1132
    %1329 = vmatpush1.bf16.msra.mxu0 %v1131
    %1330 = vmatprep.subr.bf16.mxu0 0
    %1331 = vmatpush1.bf16.msra.mxu0 0
    %1332 = vmatprep.subr.bf16.mxu0 0
    %1333 = vmatpush1.bf16.msra.mxu0 0
    %1334 = vmatprep.subr.bf16.mxu0 0
    %1335 = vmatpush1.bf16.msra.mxu0 0
    %1336 = vmatprep.subr.bf16.mxu0 0
    %1337 = vmatpush1.bf16.msra.mxu0 0
    %1338 = vmatprep.subr.bf16.mxu0 0
    %1339 = vmatpush1.bf16.msra.mxu0 0
    %1340 = vmatprep.subr.bf16.mxu0 0
    %1341 = vmatpush1.bf16.msra.mxu0 0
    %1342 = vmatprep.subr.bf16.mxu0 0
    %1343 = vmatpush1.bf16.msra.mxu0 0
    %1344 = vmatprep.subr.bf16.mxu0 0
    %1345 = vmatpush1.bf16.msra.mxu0 0
    %1346 = vmatprep.subr.bf16.mxu0 0
    %1347 = vmatpush1.bf16.msra.mxu0 0
    %1348 = vmatprep.subr.bf16.mxu0 0
    %1349 = vmatpush1.bf16.msra.mxu0 0
    %1350 = vmatprep.subr.bf16.mxu0 0
    %1351 = vmatpush1.bf16.msra.mxu0 0
    %1352 = vmatprep.subr.bf16.mxu0 0
    %1353 = vmatpush1.bf16.msra.mxu0 0
    %1354 = vmatprep.mubr.bf16.mxu0 0
    %1355 = vmatmul.mubr.bf16.gmra.mrb[0].mxu0 %v1320
    %v1356 = vpop.f32.mrb[0].mxu0
    %v1357 = vadd.f32 0.0, %v1356
    %v1358 = vpop.f32.mrb[0].mxu0
    %v1359 = vadd.f32 0.0, %v1358
    %v1360 = vpop.f32.mrb[0].mxu0
    %v1361 = vpop.f32.mrb[0].mxu0
    %1362 = vdwg.mxu0
    %v1363 = vld [vmem:[%s1189] sm:$0xf]
    %v1364 = vunpack.c.l.bf16 %v1363
    %v1365 = vadd.f32 %v1364, %v1357
    %v1366 = vld [vmem:[%s1185 + $0x4] sm:$0xf]
    %v1367 = vunpack.c.l.bf16 %v1366
    %v1368 = vadd.f32 %v1367, %v1359
    %v1369 = vld [vmem:[#allocation4] sm:$0xff]
    %v1370 = vxor.u32 %v1365, 2147483648
    %v1371 = vmul.f32 %v1370, 1.442695
    %v1372 = vpow.pop %v1371
    %v1373 = vadd.f32 %v1372, 1.0
    %v1374 = vrcp.pop %v1373
    %v1375 = vmul.f32 1.0, %v1374
    %v1376 = vtanh.pop %v1365
    %1378 = vrot.lane.b32.xlu0 %v1369, 32
    %v1379 = vpop.permute.xlu0 %1378
    %v1381 = vmul.f32 %v1375, %v1379
    %1383 = vrot.lane.b32.xlu0 %v1376, 64
    %v1384 = vpop.permute.xlu0 %1383
    %v1386 = vmul.f32 %v1375, %v1384
    %1388 = vrot.lane.b32.xlu0 %v1386, 32
    %v1389 = vpop.permute.xlu0 %1388
    %v1391 = vadd.f32 %v1381, %v1389
    %v1392 = vtanh.pop %v1391
    %1394 = vrot.lane.b32.xlu0 %v1392, 64
    %v1395 = vpop.permute.xlu0 %1394
    %v1397 = vmul.f32 %v1375, %v1395
    %v1398 = vld [vmem:[#allocation5] sm:$0xff]
    %v1399 = vxor.u32 %v1368, 2147483648
    %v1400 = vmul.f32 %v1399, 1.442695
    %v1401 = vpow.pop %v1400
    %v1402 = vadd.f32 %v1401, 1.0
    %v1403 = vrcp.pop %v1402
    %v1404 = vmul.f32 1.0, %v1403
    %v1405 = vtanh.pop %v1368
    %1407 = vrot.lane.b32.xlu0 %v1398, 32
    %v1408 = vpop.permute.xlu0 %1407
    %v1410 = vmul.f32 %v1404, %v1408
    %1412 = vrot.lane.b32.xlu0 %v1405, 64
    %v1413 = vpop.permute.xlu0 %1412
    %v1415 = vmul.f32 %v1404, %v1413
    %1417 = vrot.lane.b32.xlu0 %v1415, 32
    %v1418 = vpop.permute.xlu0 %1417
    %v1420 = vadd.f32 %v1410, %v1418
    %v1421 = vtanh.pop %v1420
    %1423 = vrot.lane.b32.xlu0 %v1421, 64
    %v1424 = vpop.permute.xlu0 %1423
    %v1426 = vmul.f32 %v1404, %v1424
    %1428 = vrot.lane.b32.xlu0 %v1317, 96
    %v1429 = vpop.permute.xlu0 %1428
    %v1431 = vsel %vm1267, %v1397, %v1429
    %1432 = vrot.lane.b32.xlu0 %v1317, 64
    %v1433 = vpop.permute.xlu0 %1432
    %v1435 = vsel %vm1257, %v1426, %v1433
    %v1436 = vsel %vm1267, %v1391, %v1379
    %1438 = vrot.lane.b32.xlu0 %v1436, 96
    %v1439 = vpop.permute.xlu0 %1438
    %1441 = vst.msk [vmem:[#allocation4] sm:$0xff] %vm96, %v1439
    %v1442 = vld [vmem:[#allocation5] sm:$0xff]
    %1444 = vrot.lane.b32.xlu0 %v1442, 32
    %v1445 = vpop.permute.xlu0 %1444
    %v1447 = vsel %vm1257, %v1420, %v1445
    %1449 = vrot.lane.b32.xlu0 %v1447, 96
    %v1450 = vpop.permute.xlu0 %1449
    %1452 = vst.msk [vmem:[#allocation5] sm:$0xff] %vm96, %v1450
    %1454 = vrot.lane.b32.xlu0 %v1431, 32
    %v1455 = vpop.permute.xlu0 %1454
    %1458 = vrot.lane.b32.xlu0 %v1435, 64
    %v1459 = vpop.permute.xlu0 %1458
    %v1461 = vsel %vm96, %v1455, %v1459
    %1462 = vst.msk [vmem:[#allocation3] sm:$0xff] %vm407, %v1461
    %v1463 = vsel %vm1267, %v1397, %v1303
    %v1464 = vsel %vm1257, %v1426, %v1301
    %1466 = vrot.lane.b32.xlu0 %v1463, 32
    %v1467 = vpop.permute.xlu0 %1466
    %1470 = vrot.lane.b32.xlu0 %v1464, 64
    %v1471 = vpop.permute.xlu0 %1470
    %v1473 = vsel %vm96, %v1467, %v1471
    %v1474 = vld [vmem:[#allocation6] sm:$0xff]
    %v1475 = vmax.f32 %v1474, %v1473
    %1476 = vst.msk [vmem:[#allocation6] sm:$0xff] %vm407, %v1475
  $region49: #{net_forward.3} parent=0 // pred_fallthru
    _
  // Predicated region
  $region50: #{net_forward.3} parent=0 // pred_check
    %p1477 = pneg %p871
  $region51: #{net_forward.3} parent=0 // pred_check_branch
    %1479 = sbr.rel (%p1477) target = $region53
  $region52: #{net_forward.3} parent=0 // pred_region
    %v1480 = vld [vmem:[#allocation3] sm:$0xff]
    %v1481 = vpack.c.bf16 %v1480, %v1480
    %v1490 = vunpack.c.l.b16 %v414
    %v1491 = vunpack.c.h.b16 %v414
    %v1492 = vunpack.c.l.b16 %v415
    %v1493 = vunpack.c.h.b16 %v415
    %v1494 = vunpack.c.l.b16 %v416
    %v1495 = vunpack.c.h.b16 %v416
    %v1496 = vunpack.c.l.b16 %v417
    %v1497 = vunpack.c.h.b16 %v417
    %v1498 = vunpack.c.l.b16 %v418
    %v1499 = vunpack.c.h.b16 %v418
    %v1500 = vunpack.c.l.b16 %v419
    %v1501 = vunpack.c.h.b16 %v419
    %v1502 = vunpack.c.l.b16 %v420
    %v1503 = vunpack.c.h.b16 %v420
    %v1504 = vunpack.c.l.b16 %v421
    %v1505 = vunpack.c.h.b16 %v421
    %v1506 = vpack.c.b16 %v1492, %v1490
    %v1507 = vpack.c.b16 %v1493, %v1491
    %v1508 = vpack.c.b16 %v1496, %v1494
    %v1509 = vpack.c.b16 %v1497, %v1495
    %v1510 = vpack.c.b16 %v1500, %v1498
    %v1511 = vpack.c.b16 %v1501, %v1499
    %v1512 = vpack.c.b16 %v1504, %v1502
    %v1513 = vpack.c.b16 %v1505, %v1503
    %v1523 = vsel %vm407, %v1481, 0
    %1525 = vmatprep.subr.bf16.mxu0 %v1507
    %1526 = vmatpush1.bf16.msra.mxu0 %v1506
    %1527 = vmatprep.subr.bf16.mxu0 %v1509
    %1528 = vmatpush1.bf16.msra.mxu0 %v1508
    %1529 = vmatprep.subr.bf16.mxu0 %v1511
    %1530 = vmatpush1.bf16.msra.mxu0 %v1510
    %1531 = vmatprep.subr.bf16.mxu0 %v1513
    %1532 = vmatpush1.bf16.msra.mxu0 %v1512
    %1533 = vmatprep.subr.bf16.mxu0 0
    %1534 = vmatpush1.bf16.msra.mxu0 0
    %1535 = vmatprep.subr.bf16.mxu0 0
    %1536 = vmatpush1.bf16.msra.mxu0 0
    %1537 = vmatprep.subr.bf16.mxu0 0
    %1538 = vmatpush1.bf16.msra.mxu0 0
    %1539 = vmatprep.subr.bf16.mxu0 0
    %1540 = vmatpush1.bf16.msra.mxu0 0
    %1541 = vmatprep.subr.bf16.mxu0 0
    %1542 = vmatpush1.bf16.msra.mxu0 0
    %1543 = vmatprep.subr.bf16.mxu0 0
    %1544 = vmatpush1.bf16.msra.mxu0 0
    %1545 = vmatprep.subr.bf16.mxu0 0
    %1546 = vmatpush1.bf16.msra.mxu0 0
    %1547 = vmatprep.subr.bf16.mxu0 0
    %1548 = vmatpush1.bf16.msra.mxu0 0
    %1549 = vmatprep.subr.bf16.mxu0 0
    %1550 = vmatpush1.bf16.msra.mxu0 0
    %1551 = vmatprep.subr.bf16.mxu0 0
    %1552 = vmatpush1.bf16.msra.mxu0 0
    %1553 = vmatprep.subr.bf16.mxu0 0
    %1554 = vmatpush1.bf16.msra.mxu0 0
    %1555 = vmatprep.subr.bf16.mxu0 0
    %1556 = vmatpush1.bf16.msra.mxu0 0
    %1557 = vmatprep.mubr.bf16.mxu0 0
    %1558 = vmatmul.mubr.bf16.gmra.mrb[0].mxu0 %v1523
    %v1559 = vpop.f32.mrb[0].mxu0
    %v1560 = vadd.f32 0.0, %v1559
    %v1561 = vpop.f32.mrb[0].mxu0
    %v1562 = vadd.f32 0.0, %v1561
    %v1563 = vpop.f32.mrb[0].mxu0
    %v1564 = vpop.f32.mrb[0].mxu0
    %1565 = vdwg.mxu0
    %s1566 = scalar_lea.vmem [#allocation2], 40
    %v1567 = vld [vmem:[%s1566] sm:$0xf]
    %v1568 = vunpack.c.l.bf16 %v1567
    %v1569 = vadd.f32 %v1568, %v1560
    %s1570 = scalar_lea.vmem [#allocation2], 16
    %v1571 = vld [vmem:[%s1570 + $0x4] sm:$0xf]
    %v1572 = vunpack.c.l.bf16 %v1571
    %v1573 = vadd.f32 %v1572, %v1562
    %v1574 = vld [vmem:[#allocation4] sm:$0xff]
    %v1575 = vxor.u32 %v1569, 2147483648
    %v1576 = vmul.f32 %v1575, 1.442695
    %v1577 = vpow.pop %v1576
    %v1578 = vadd.f32 %v1577, 1.0
    %v1579 = vrcp.pop %v1578
    %v1580 = vmul.f32 1.0, %v1579
    %v1581 = vtanh.pop %v1569
    %1583 = vrot.lane.b32.xlu0 %v1574, 32
    %v1584 = vpop.permute.xlu0 %1583
    %v1586 = vmul.f32 %v1580, %v1584
    %1588 = vrot.lane.b32.xlu0 %v1581, 64
    %v1589 = vpop.permute.xlu0 %1588
    %v1591 = vmul.f32 %v1580, %v1589
    %1593 = vrot.lane.b32.xlu0 %v1591, 32
    %v1594 = vpop.permute.xlu0 %1593
    %v1596 = vadd.f32 %v1586, %v1594
    %v1597 = vtanh.pop %v1596
    %1599 = vrot.lane.b32.xlu0 %v1597, 64
    %v1600 = vpop.permute.xlu0 %1599
    %v1602 = vmul.f32 %v1580, %v1600
    %v1603 = vld [vmem:[#allocation5] sm:$0xff]
    %v1604 = vxor.u32 %v1573, 2147483648
    %v1605 = vmul.f32 %v1604, 1.442695
    %v1606 = vpow.pop %v1605
    %v1607 = vadd.f32 %v1606, 1.0
    %v1608 = vrcp.pop %v1607
    %v1609 = vmul.f32 1.0, %v1608
    %v1610 = vtanh.pop %v1573
    %1612 = vrot.lane.b32.xlu0 %v1603, 32
    %v1613 = vpop.permute.xlu0 %1612
    %v1615 = vmul.f32 %v1609, %v1613
    %1617 = vrot.lane.b32.xlu0 %v1610, 64
    %v1618 = vpop.permute.xlu0 %1617
    %v1620 = vmul.f32 %v1609, %v1618
    %1622 = vrot.lane.b32.xlu0 %v1620, 32
    %v1623 = vpop.permute.xlu0 %1622
    %v1625 = vadd.f32 %v1615, %v1623
    %v1626 = vtanh.pop %v1625
    %1628 = vrot.lane.b32.xlu0 %v1626, 64
    %v1629 = vpop.permute.xlu0 %1628
    %v1631 = vmul.f32 %v1609, %v1629
    %vm1632 = vcmp.gt.s32.totalorder %v412, 5
    %vm1633 = vcmp.gt.s32.totalorder %v412, 2
    %v1634 = vsel %vm1632, 1, 0
    %1635 = vset.pattern.permute.xlu0 0
    %1636 = vperm.xlu0 %1635, %v1634
    %v1637 = vpop.permute.xlu0 %1636
    %vm1638 = vcmp.eq.s32.totalorder %v1637, 1
    %1640 = vrot.lane.b32.xlu0 %v1480, 96
    %v1641 = vpop.permute.xlu0 %1640
    %v1643 = vsel %vm1638, %v1602, %v1641
    %v1644 = vsel %vm1633, 1, 0
    %1645 = vset.pattern.permute.xlu0 0
    %1646 = vperm.xlu0 %1645, %v1644
    %v1647 = vpop.permute.xlu0 %1646
    %vm1648 = vcmp.eq.s32.totalorder %v1647, 1
    %1649 = vrot.lane.b32.xlu0 %v1480, 64
    %v1650 = vpop.permute.xlu0 %1649
    %v1652 = vsel %vm1648, %v1631, %v1650
    %v1653 = vsel %vm1638, %v1596, %v1584
    %1655 = vrot.lane.b32.xlu0 %v1653, 96
    %v1656 = vpop.permute.xlu0 %1655
    %1658 = vst.msk [vmem:[#allocation4] sm:$0xff] %vm96, %v1656
    %v1659 = vld [vmem:[#allocation5] sm:$0xff]
    %1661 = vrot.lane.b32.xlu0 %v1659, 32
    %v1662 = vpop.permute.xlu0 %1661
    %v1664 = vsel %vm1648, %v1625, %v1662
    %1666 = vrot.lane.b32.xlu0 %v1664, 96
    %v1667 = vpop.permute.xlu0 %1666
    %1669 = vst.msk [vmem:[#allocation5] sm:$0xff] %vm96, %v1667
    %1671 = vrot.lane.b32.xlu0 %v1643, 32
    %v1672 = vpop.permute.xlu0 %1671
    %1675 = vrot.lane.b32.xlu0 %v1652, 64
    %v1676 = vpop.permute.xlu0 %1675
    %v1678 = vsel %vm96, %v1672, %v1676
    %1679 = vst.msk [vmem:[#allocation3] sm:$0xff] %vm407, %v1678
    %s1680 = scalar_select %p870, 0.0, -inf
    %s1681 = scalar_select %p869, 0.0, -inf
    %v1682 = vstv %s1680
    %v1683 = vsel %vm1638, %v1602, %v1682
    %v1684 = vstv %s1681
    %v1685 = vsel %vm1648, %v1631, %v1684
    %1687 = vrot.lane.b32.xlu0 %v1683, 32
    %v1688 = vpop.permute.xlu0 %1687
    %1691 = vrot.lane.b32.xlu0 %v1685, 64
    %v1692 = vpop.permute.xlu0 %1691
    %v1694 = vsel %vm96, %v1688, %v1692
    %v1695 = vld [vmem:[#allocation6] sm:$0xff]
    %v1696 = vmax.f32 %v1695, %v1694
    %1697 = vst.msk [vmem:[#allocation6] sm:$0xff] %vm407, %v1696
  $region53: #{net_forward.3} parent=0 // pred_fallthru
    _
  // Predicated region
  $region54: #{net_forward.3} parent=0 // pred_check
    %p1698 = pneg %p647
  $region55: #{net_forward.3} parent=0 // pred_check_branch
    %1700 = sbr.rel (%p1698) target = $region57
  $region56: #{net_forward.3} parent=0 // pred_region
    %v1701 = vld [vmem:[#allocation3] sm:$0xff]
    %v1702 = vpack.c.bf16 %v1701, %v1701
    %v1711 = vunpack.c.l.b16 %v414
    %v1712 = vunpack.c.h.b16 %v414
    %v1713 = vunpack.c.l.b16 %v415
    %v1714 = vunpack.c.h.b16 %v415
    %v1715 = vunpack.c.l.b16 %v416
    %v1716 = vunpack.c.h.b16 %v416
    %v1717 = vunpack.c.l.b16 %v417
    %v1718 = vunpack.c.h.b16 %v417
    %v1719 = vunpack.c.l.b16 %v418
    %v1720 = vunpack.c.h.b16 %v418
    %v1721 = vunpack.c.l.b16 %v419
    %v1722 = vunpack.c.h.b16 %v419
    %v1723 = vunpack.c.l.b16 %v420
    %v1724 = vunpack.c.h.b16 %v420
    %v1725 = vunpack.c.l.b16 %v421
    %v1726 = vunpack.c.h.b16 %v421
    %v1727 = vpack.c.b16 %v1713, %v1711
    %v1728 = vpack.c.b16 %v1714, %v1712
    %v1729 = vpack.c.b16 %v1717, %v1715
    %v1730 = vpack.c.b16 %v1718, %v1716
    %v1731 = vpack.c.b16 %v1721, %v1719
    %v1732 = vpack.c.b16 %v1722, %v1720
    %v1733 = vpack.c.b16 %v1725, %v1723
    %v1734 = vpack.c.b16 %v1726, %v1724
    %v1744 = vsel %vm407, %v1702, 0
    %1746 = vmatprep.subr.bf16.mxu0 %v1728
    %1747 = vmatpush1.bf16.msra.mxu0 %v1727
    %1748 = vmatprep.subr.bf16.mxu0 %v1730
    %1749 = vmatpush1.bf16.msra.mxu0 %v1729
    %1750 = vmatprep.subr.bf16.mxu0 %v1732
    %1751 = vmatpush1.bf16.msra.mxu0 %v1731
    %1752 = vmatprep.subr.bf16.mxu0 %v1734
    %1753 = vmatpush1.bf16.msra.mxu0 %v1733
    %1754 = vmatprep.subr.bf16.mxu0 0
    %1755 = vmatpush1.bf16.msra.mxu0 0
    %1756 = vmatprep.subr.bf16.mxu0 0
    %1757 = vmatpush1.bf16.msra.mxu0 0
    %1758 = vmatprep.subr.bf16.mxu0 0
    %1759 = vmatpush1.bf16.msra.mxu0 0
    %1760 = vmatprep.subr.bf16.mxu0 0
    %1761 = vmatpush1.bf16.msra.mxu0 0
    %1762 = vmatprep.subr.bf16.mxu0 0
    %1763 = vmatpush1.bf16.msra.mxu0 0
    %1764 = vmatprep.subr.bf16.mxu0 0
    %1765 = vmatpush1.bf16.msra.mxu0 0
    %1766 = vmatprep.subr.bf16.mxu0 0
    %1767 = vmatpush1.bf16.msra.mxu0 0
    %1768 = vmatprep.subr.bf16.mxu0 0
    %1769 = vmatpush1.bf16.msra.mxu0 0
    %1770 = vmatprep.subr.bf16.mxu0 0
    %1771 = vmatpush1.bf16.msra.mxu0 0
    %1772 = vmatprep.subr.bf16.mxu0 0
    %1773 = vmatpush1.bf16.msra.mxu0 0
    %1774 = vmatprep.subr.bf16.mxu0 0
    %1775 = vmatpush1.bf16.msra.mxu0 0
    %1776 = vmatprep.subr.bf16.mxu0 0
    %1777 = vmatpush1.bf16.msra.mxu0 0
    %1778 = vmatprep.mubr.bf16.mxu0 0
    %1779 = vmatmul.mubr.bf16.gmra.mrb[0].mxu0 %v1744
    %v1780 = vpop.f32.mrb[0].mxu0
    %v1781 = vadd.f32 0.0, %v1780
    %v1782 = vpop.f32.mrb[0].mxu0
    %v1783 = vadd.f32 0.0, %v1782
    %v1784 = vpop.f32.mrb[0].mxu0
    %v1785 = vpop.f32.mrb[0].mxu0
    %1786 = vdwg.mxu0
    %s1787 = scalar_lea.vmem [#allocation2], 48
    %v1788 = vld [vmem:[%s1787] sm:$0xf]
    %v1789 = vunpack.c.l.bf16 %v1788
    %v1790 = vadd.f32 %v1789, %v1781
    %s1791 = scalar_lea.vmem [#allocation2], 8
    %v1792 = vld [vmem:[%s1791 + $0x4] sm:$0xf]
    %v1793 = vunpack.c.l.bf16 %v1792
    %v1794 = vadd.f32 %v1793, %v1783
    %v1795 = vld [vmem:[#allocation4] sm:$0xff]
    %v1796 = vxor.u32 %v1790, 2147483648
    %v1797 = vmul.f32 %v1796, 1.442695
    %v1798 = vpow.pop %v1797
    %v1799 = vadd.f32 %v1798, 1.0
    %v1800 = vrcp.pop %v1799
    %v1801 = vmul.f32 1.0, %v1800
    %v1802 = vtanh.pop %v1790
    %1804 = vrot.lane.b32.xlu0 %v1795, 32
    %v1805 = vpop.permute.xlu0 %1804
    %v1807 = vmul.f32 %v1801, %v1805
    %1809 = vrot.lane.b32.xlu0 %v1802, 64
    %v1810 = vpop.permute.xlu0 %1809
    %v1812 = vmul.f32 %v1801, %v1810
    %1814 = vrot.lane.b32.xlu0 %v1812, 32
    %v1815 = vpop.permute.xlu0 %1814
    %v1817 = vadd.f32 %v1807, %v1815
    %v1818 = vtanh.pop %v1817
    %1820 = vrot.lane.b32.xlu0 %v1818, 64
    %v1821 = vpop.permute.xlu0 %1820
    %v1823 = vmul.f32 %v1801, %v1821
    %v1824 = vld [vmem:[#allocation5] sm:$0xff]
    %v1825 = vxor.u32 %v1794, 2147483648
    %v1826 = vmul.f32 %v1825, 1.442695
    %v1827 = vpow.pop %v1826
    %v1828 = vadd.f32 %v1827, 1.0
    %v1829 = vrcp.pop %v1828
    %v1830 = vmul.f32 1.0, %v1829
    %v1831 = vtanh.pop %v1794
    %1833 = vrot.lane.b32.xlu0 %v1824, 32
    %v1834 = vpop.permute.xlu0 %1833
    %v1836 = vmul.f32 %v1830, %v1834
    %1838 = vrot.lane.b32.xlu0 %v1831, 64
    %v1839 = vpop.permute.xlu0 %1838
    %v1841 = vmul.f32 %v1830, %v1839
    %1843 = vrot.lane.b32.xlu0 %v1841, 32
    %v1844 = vpop.permute.xlu0 %1843
    %v1846 = vadd.f32 %v1836, %v1844
    %v1847 = vtanh.pop %v1846
    %1849 = vrot.lane.b32.xlu0 %v1847, 64
    %v1850 = vpop.permute.xlu0 %1849
    %v1852 = vmul.f32 %v1830, %v1850
    %vm1853 = vcmp.gt.s32.totalorder %v412, 6
    %vm1854 = vcmp.gt.s32.totalorder %v412, 1
    %v1855 = vsel %vm1853, 1, 0
    %1856 = vset.pattern.permute.xlu0 0
    %1857 = vperm.xlu0 %1856, %v1855
    %v1858 = vpop.permute.xlu0 %1857
    %vm1859 = vcmp.eq.s32.totalorder %v1858, 1
    %1861 = vrot.lane.b32.xlu0 %v1701, 96
    %v1862 = vpop.permute.xlu0 %1861
    %v1864 = vsel %vm1859, %v1823, %v1862
    %v1865 = vsel %vm1854, 1, 0
    %1866 = vset.pattern.permute.xlu0 0
    %1867 = vperm.xlu0 %1866, %v1865
    %v1868 = vpop.permute.xlu0 %1867
    %vm1869 = vcmp.eq.s32.totalorder %v1868, 1
    %1870 = vrot.lane.b32.xlu0 %v1701, 64
    %v1871 = vpop.permute.xlu0 %1870
    %v1873 = vsel %vm1869, %v1852, %v1871
    %v1874 = vsel %vm1859, %v1817, %v1805
    %1876 = vrot.lane.b32.xlu0 %v1874, 96
    %v1877 = vpop.permute.xlu0 %1876
    %1879 = vst.msk [vmem:[#allocation4] sm:$0xff] %vm96, %v1877
    %v1880 = vld [vmem:[#allocation5] sm:$0xff]
    %1882 = vrot.lane.b32.xlu0 %v1880, 32
    %v1883 = vpop.permute.xlu0 %1882
    %v1885 = vsel %vm1869, %v1846, %v1883
    %1887 = vrot.lane.b32.xlu0 %v1885, 96
    %v1888 = vpop.permute.xlu0 %1887
    %1890 = vst.msk [vmem:[#allocation5] sm:$0xff] %vm96, %v1888
    %1892 = vrot.lane.b32.xlu0 %v1864, 32
    %v1893 = vpop.permute.xlu0 %1892
    %1896 = vrot.lane.b32.xlu0 %v1873, 64
    %v1897 = vpop.permute.xlu0 %1896
    %v1899 = vsel %vm96, %v1893, %v1897
    %1900 = vst.msk [vmem:[#allocation3] sm:$0xff] %vm407, %v1899
    %s1901 = scalar_select %p646, 0.0, -inf
    %s1902 = scalar_select %p645, 0.0, -inf
    %v1903 = vstv %s1901
    %v1904 = vsel %vm1859, %v1823, %v1903
    %v1905 = vstv %s1902
    %v1906 = vsel %vm1869, %v1852, %v1905
    %1908 = vrot.lane.b32.xlu0 %v1904, 32
    %v1909 = vpop.permute.xlu0 %1908
    %1912 = vrot.lane.b32.xlu0 %v1906, 64
    %v1913 = vpop.permute.xlu0 %1912
    %v1915 = vsel %vm96, %v1909, %v1913
    %v1916 = vld [vmem:[#allocation6] sm:$0xff]
    %v1917 = vmax.f32 %v1916, %v1915
    %1918 = vst.msk [vmem:[#allocation6] sm:$0xff] %vm407, %v1917
  $region57: #{net_forward.3} parent=0 // pred_fallthru
    _
  // Predicated region
  $region58: #{net_forward.3} parent=0 // pred_check
    %p1919 = pneg %p424
  $region59: #{net_forward.3} parent=0 // pred_check_branch
    %1921 = sbr.rel (%p1919) target = $region61
  $region60: #{net_forward.3} parent=0 // pred_region
    %v1922 = vld [vmem:[#allocation3] sm:$0xff]
    %v1923 = vpack.c.bf16 %v1922, %v1922
    %v1932 = vunpack.c.l.b16 %v414
    %v1933 = vunpack.c.h.b16 %v414
    %v1934 = vunpack.c.l.b16 %v415
    %v1935 = vunpack.c.h.b16 %v415
    %v1936 = vunpack.c.l.b16 %v416
    %v1937 = vunpack.c.h.b16 %v416
    %v1938 = vunpack.c.l.b16 %v417
    %v1939 = vunpack.c.h.b16 %v417
    %v1940 = vunpack.c.l.b16 %v418
    %v1941 = vunpack.c.h.b16 %v418
    %v1942 = vunpack.c.l.b16 %v419
    %v1943 = vunpack.c.h.b16 %v419
    %v1944 = vunpack.c.l.b16 %v420
    %v1945 = vunpack.c.h.b16 %v420
    %v1946 = vunpack.c.l.b16 %v421
    %v1947 = vunpack.c.h.b16 %v421
    %v1948 = vpack.c.b16 %v1934, %v1932
    %v1949 = vpack.c.b16 %v1935, %v1933
    %v1950 = vpack.c.b16 %v1938, %v1936
    %v1951 = vpack.c.b16 %v1939, %v1937
    %v1952 = vpack.c.b16 %v1942, %v1940
    %v1953 = vpack.c.b16 %v1943, %v1941
    %v1954 = vpack.c.b16 %v1946, %v1944
    %v1955 = vpack.c.b16 %v1947, %v1945
    %v1965 = vsel %vm407, %v1923, 0
    %1967 = vmatprep.subr.bf16.mxu0 %v1949
    %1968 = vmatpush1.bf16.msra.mxu0 %v1948
    %1969 = vmatprep.subr.bf16.mxu0 %v1951
    %1970 = vmatpush1.bf16.msra.mxu0 %v1950
    %1971 = vmatprep.subr.bf16.mxu0 %v1953
    %1972 = vmatpush1.bf16.msra.mxu0 %v1952
    %1973 = vmatprep.subr.bf16.mxu0 %v1955
    %1974 = vmatpush1.bf16.msra.mxu0 %v1954
    %1975 = vmatprep.subr.bf16.mxu0 0
    %1976 = vmatpush1.bf16.msra.mxu0 0
    %1977 = vmatprep.subr.bf16.mxu0 0
    %1978 = vmatpush1.bf16.msra.mxu0 0
    %1979 = vmatprep.subr.bf16.mxu0 0
    %1980 = vmatpush1.bf16.msra.mxu0 0
    %1981 = vmatprep.subr.bf16.mxu0 0
    %1982 = vmatpush1.bf16.msra.mxu0 0
    %1983 = vmatprep.subr.bf16.mxu0 0
    %1984 = vmatpush1.bf16.msra.mxu0 0
    %1985 = vmatprep.subr.bf16.mxu0 0
    %1986 = vmatpush1.bf16.msra.mxu0 0
    %1987 = vmatprep.subr.bf16.mxu0 0
    %1988 = vmatpush1.bf16.msra.mxu0 0
    %1989 = vmatprep.subr.bf16.mxu0 0
    %1990 = vmatpush1.bf16.msra.mxu0 0
    %1991 = vmatprep.subr.bf16.mxu0 0
    %1992 = vmatpush1.bf16.msra.mxu0 0
    %1993 = vmatprep.subr.bf16.mxu0 0
    %1994 = vmatpush1.bf16.msra.mxu0 0
    %1995 = vmatprep.subr.bf16.mxu0 0
    %1996 = vmatpush1.bf16.msra.mxu0 0
    %1997 = vmatprep.subr.bf16.mxu0 0
    %1998 = vmatpush1.bf16.msra.mxu0 0
    %1999 = vmatprep.mubr.bf16.mxu0 0
    %2000 = vmatmul.mubr.bf16.gmra.mrb[0].mxu0 %v1965
    %v2001 = vpop.f32.mrb[0].mxu0
    %v2002 = vadd.f32 0.0, %v2001
    %v2003 = vpop.f32.mrb[0].mxu0
    %v2004 = vadd.f32 0.0, %v2003
    %v2005 = vpop.f32.mrb[0].mxu0
    %v2006 = vpop.f32.mrb[0].mxu0
    %2007 = vdwg.mxu0
    %s2008 = scalar_lea.vmem [#allocation2], 56
    %v2009 = vld [vmem:[%s2008] sm:$0xf]
    %v2010 = vunpack.c.l.bf16 %v2009
    %v2011 = vadd.f32 %v2010, %v2002
    %v2012 = vld [vmem:[#allocation2 + $0x4] sm:$0xf]
    %v2013 = vunpack.c.l.bf16 %v2012
    %v2014 = vadd.f32 %v2013, %v2004
    %v2015 = vld [vmem:[#allocation4] sm:$0xff]
    %v2016 = vxor.u32 %v2011, 2147483648
    %v2017 = vmul.f32 %v2016, 1.442695
    %v2018 = vpow.pop %v2017
    %v2019 = vadd.f32 %v2018, 1.0
    %v2020 = vrcp.pop %v2019
    %v2021 = vmul.f32 1.0, %v2020
    %v2022 = vtanh.pop %v2011
    %2024 = vrot.lane.b32.xlu0 %v2015, 32
    %v2025 = vpop.permute.xlu0 %2024
    %v2027 = vmul.f32 %v2021, %v2025
    %2029 = vrot.lane.b32.xlu0 %v2022, 64
    %v2030 = vpop.permute.xlu0 %2029
    %v2032 = vmul.f32 %v2021, %v2030
    %2034 = vrot.lane.b32.xlu0 %v2032, 32
    %v2035 = vpop.permute.xlu0 %2034
    %v2037 = vadd.f32 %v2027, %v2035
    %v2038 = vtanh.pop %v2037
    %2040 = vrot.lane.b32.xlu0 %v2038, 64
    %v2041 = vpop.permute.xlu0 %2040
    %v2043 = vmul.f32 %v2021, %v2041
    %v2044 = vld [vmem:[#allocation5] sm:$0xff]
    %v2045 = vxor.u32 %v2014, 2147483648
    %v2046 = vmul.f32 %v2045, 1.442695
    %v2047 = vpow.pop %v2046
    %v2048 = vadd.f32 %v2047, 1.0
    %v2049 = vrcp.pop %v2048
    %v2050 = vmul.f32 1.0, %v2049
    %v2051 = vtanh.pop %v2014
    %2053 = vrot.lane.b32.xlu0 %v2044, 32
    %v2054 = vpop.permute.xlu0 %2053
    %v2056 = vmul.f32 %v2050, %v2054
    %2058 = vrot.lane.b32.xlu0 %v2051, 64
    %v2059 = vpop.permute.xlu0 %2058
    %v2061 = vmul.f32 %v2050, %v2059
    %2063 = vrot.lane.b32.xlu0 %v2061, 32
    %v2064 = vpop.permute.xlu0 %2063
    %v2066 = vadd.f32 %v2056, %v2064
    %v2067 = vtanh.pop %v2066
    %2069 = vrot.lane.b32.xlu0 %v2067, 64
    %v2070 = vpop.permute.xlu0 %2069
    %v2072 = vmul.f32 %v2050, %v2070
    %vm2073 = vcmp.gt.s32.totalorder %v412, 7
    %vm2074 = vcmp.gt.s32.totalorder %v412, 0
    %v2075 = vsel %vm2073, 1, 0
    %2076 = vset.pattern.permute.xlu0 0
    %2077 = vperm.xlu0 %2076, %v2075
    %v2078 = vpop.permute.xlu0 %2077
    %vm2079 = vcmp.eq.s32.totalorder %v2078, 1
    %2081 = vrot.lane.b32.xlu0 %v1922, 96
    %v2082 = vpop.permute.xlu0 %2081
    %v2084 = vsel %vm2079, %v2043, %v2082
    %v2085 = vsel %vm2074, 1, 0
    %2086 = vset.pattern.permute.xlu0 0
    %2087 = vperm.xlu0 %2086, %v2085
    %v2088 = vpop.permute.xlu0 %2087
    %vm2089 = vcmp.eq.s32.totalorder %v2088, 1
    %2090 = vrot.lane.b32.xlu0 %v1922, 64
    %v2091 = vpop.permute.xlu0 %2090
    %v2093 = vsel %vm2089, %v2072, %v2091
    %v2094 = vsel %vm2079, %v2037, %v2025
    %2096 = vrot.lane.b32.xlu0 %v2094, 96
    %v2097 = vpop.permute.xlu0 %2096
    %2099 = vst.msk [vmem:[#allocation4] sm:$0xff] %vm96, %v2097
    %v2100 = vld [vmem:[#allocation5] sm:$0xff]
    %2102 = vrot.lane.b32.xlu0 %v2100, 32
    %v2103 = vpop.permute.xlu0 %2102
    %v2105 = vsel %vm2089, %v2066, %v2103
    %2107 = vrot.lane.b32.xlu0 %v2105, 96
    %v2108 = vpop.permute.xlu0 %2107
    %2110 = vst.msk [vmem:[#allocation5] sm:$0xff] %vm96, %v2108
    %2112 = vrot.lane.b32.xlu0 %v2084, 32
    %v2113 = vpop.permute.xlu0 %2112
    %2116 = vrot.lane.b32.xlu0 %v2093, 64
    %v2117 = vpop.permute.xlu0 %2116
    %v2119 = vsel %vm96, %v2113, %v2117
    %2120 = vst.msk [vmem:[#allocation3] sm:$0xff] %vm407, %v2119
    %s2121 = scalar_select %p423, 0.0, -inf
    %s2122 = scalar_select %p422, 0.0, -inf
    %v2123 = vstv %s2121
    %v2124 = vsel %vm2079, %v2043, %v2123
    %v2125 = vstv %s2122
    %v2126 = vsel %vm2089, %v2072, %v2125
    %2128 = vrot.lane.b32.xlu0 %v2124, 32
    %v2129 = vpop.permute.xlu0 %2128
    %2132 = vrot.lane.b32.xlu0 %v2126, 64
    %v2133 = vpop.permute.xlu0 %2132
    %v2135 = vsel %vm96, %v2129, %v2133
    %v2136 = vld [vmem:[#allocation6] sm:$0xff]
    %v2137 = vmax.f32 %v2136, %v2135
    %2138 = vst.msk [vmem:[#allocation6] sm:$0xff] %vm407, %v2137
  $region61: #{net_forward.3} parent=0 // pred_fallthru
    _
  %v2139 = vld [vmem:[#allocation6] sm:$0xff]
  %v2140 = vld [vmem:[%s7] sm:$0xff]
  %v2141 = vld [vmem:[%s7 + $0x8] sm:$0xff]
  %v2142 = vld [vmem:[%s7 + $0x10] sm:$0xff]
  %v2143 = vld [vmem:[%s7 + $0x18] sm:$0xff]
  %v2144 = vld [vmem:[%s7 + $0x20] sm:$0xff]
  %v2145 = vld [vmem:[%s7 + $0x28] sm:$0xff]
  %v2146 = vld [vmem:[%s7 + $0x30] sm:$0xff]
  %v2147 = vld [vmem:[%s7 + $0x38] sm:$0xff]
  %v2148 = vld [vmem:[%s8] sm:$0x1]
  %v2150 = vlaneseq
  %v2151 = vshrl.u32 %v2150, 7
  %v2152 = vsub.s32 0, %v2151
  %v2153 = vrot.slane %v2148, %v2152
  %v2156 = vsel %vm407, %v2139, 0
  %2158 = vmatprep.subr.mxu0 0.0
  %2159 = vmatpush1.msra.mxu0 %v2140
  %2160 = vmatprep.subr.mxu0 0.0
  %2161 = vmatpush1.msra.mxu0 %v2141
  %2162 = vmatprep.subr.mxu0 0.0
  %2163 = vmatpush1.msra.mxu0 %v2142
  %2164 = vmatprep.subr.mxu0 0.0
  %2165 = vmatpush1.msra.mxu0 %v2143
  %2166 = vmatprep.subr.mxu0 0.0
  %2167 = vmatpush1.msra.mxu0 %v2144
  %2168 = vmatprep.subr.mxu0 0.0
  %2169 = vmatpush1.msra.mxu0 %v2145
  %2170 = vmatprep.subr.mxu0 0.0
  %2171 = vmatpush1.msra.mxu0 %v2146
  %2172 = vmatprep.subr.mxu0 0.0
  %2173 = vmatpush1.msra.mxu0 %v2147
  %2174 = vmatprep.subr.mxu0 0.0
  %2175 = vmatpush1.msra.mxu0 0.0
  %2176 = vmatprep.subr.mxu0 0.0
  %2177 = vmatpush1.msra.mxu0 0.0
  %2178 = vmatprep.subr.mxu0 0.0
  %2179 = vmatpush1.msra.mxu0 0.0
  %2180 = vmatprep.subr.mxu0 0.0
  %2181 = vmatpush1.msra.mxu0 0.0
  %2182 = vmatprep.subr.mxu0 0.0
  %2183 = vmatpush1.msra.mxu0 0.0
  %2184 = vmatprep.subr.mxu0 0.0
  %2185 = vmatpush1.msra.mxu0 0.0
  %2186 = vmatprep.subr.mxu0 0.0
  %2187 = vmatpush1.msra.mxu0 0.0
  %2188 = vmatprep.subr.mxu0 0.0
  %2189 = vmatpush1.msra.mxu0 0.0
  %2190 = vmatprep.subr.mxu0 0.0
  %2191 = vmatpush1.msra.mxu0 0.0
  %2192 = vmatprep.subr.mxu0 0.0
  %2193 = vmatpush1.msra.mxu0 0.0
  %2194 = vmatprep.subr.mxu0 0.0
  %2195 = vmatpush1.msra.mxu0 0.0
  %2196 = vmatprep.subr.mxu0 0.0
  %2197 = vmatpush1.msra.mxu0 0.0
  %2198 = vmatprep.subr.mxu0 0.0
  %2199 = vmatpush1.msra.mxu0 0.0
  %2200 = vmatprep.subr.mxu0 0.0
  %2201 = vmatpush1.msra.mxu0 0.0
  %2202 = vmatprep.subr.mxu0 0.0
  %2203 = vmatpush1.msra.mxu0 0.0
  %2204 = vmatprep.subr.mxu0 0.0
  %2205 = vmatpush1.msra.mxu0 0.0
  %2206 = vmatprep.subr.mxu0 0.0
  %2207 = vmatpush1.msra.mxu0 0.0
  %2208 = vmatprep.subr.mxu0 0.0
  %2209 = vmatpush1.msra.mxu0 0.0
  %2210 = vmatprep.subr.mxu0 0.0
  %2211 = vmatpush1.msra.mxu0 0.0
  %2212 = vmatprep.subr.mxu0 0.0
  %2213 = vmatpush1.msra.mxu0 0.0
  %2214 = vmatprep.subr.mxu0 0.0
  %2215 = vmatpush1.msra.mxu0 0.0
  %2216 = vmatprep.subr.mxu0 0.0
  %2217 = vmatpush1.msra.mxu0 0.0
  %2218 = vmatprep.subr.mxu0 0.0
  %2219 = vmatpush1.msra.mxu0 0.0
  %2220 = vmatprep.subr.mxu0 0.0
  %2221 = vmatpush1.msra.mxu0 0.0
  %2222 = vmatprep.mubr.f32.mxu0 0.0
  %2223 = vmatmul.mubr.f32.gmra.mrb[0].mxu0 %v2156
  %v2224 = vpop.f32.mrb[0].mxu0
  %v2225 = vadd.f32 %v2153, %v2224
  %v2226 = vpop.f32.mrb[0].mxu0
  %2227 = vdwg.mxu0
  %vm2228 = vcmask 31744
  %2229 = vst.msk [vmem:[%s9] sm:$0xff] %vm2228, %v2225
  // Predicated region
  $region62: #{net_forward.3} parent=0 // pred_check
    _
  $region63: #{net_forward.3} parent=0 // pred_check_branch
    %2231 = sbr.rel (0) target = $region65
  $region64: #{net_forward.3} parent=0 // pred_region
    _
  $region65: #{net_forward.3} parent=0 // pred_fallthru
    _
  // Predicated region
  $region66: #{net_forward.3} parent=0 // pred_check
    _
  $region67: #{net_forward.3} parent=0 // pred_check_branch
    %2233 = sbr.rel (0) target = $region69
  $region68: #{net_forward.3} parent=0 // pred_region
    _
  $region69: #{net_forward.3} parent=0 // pred_fallthru
    _

</llo_original>
